<compile_context>
chip_gen: v6e
topology: v6e:2x2x1
jax: 0.10.0
libtpu: 0.0.40
codegen_flags: <defaults>
</compile_context>

<pallas_src>
import functools

import jax
import jax.numpy as jnp
from jax import lax
from jax.experimental import pallas as pl
from jax.experimental.pallas import tpu as pltpu

PAD = 4                      # shared zero-pad frame = 9 // 2 (largest kernel)
K1, K2, K3 = 9, 5, 5
C0, C1, C2, C3 = 3, 64, 32, 3
C3P = 8                      # conv3 Cout zero-padded 3 -> 8 (tile friendly)
K1F = 256                    # conv1 folded contraction: 9*9*3 = 243 -> 256


def _srcnn_kernel(x_ref, w1_ref, b1_ref, w2_ref, b2_ref, w3t_ref, b3_ref,
                  o_ref, buf2, s2, buf3, s3, *, H, W):
    Wp = W + 2 * PAD                      # padded row width (24 for W=16)
    R = H * Wp                            # over-computed rows: h in [0,H), w in [0,Wp)
    R2 = R + (K2 - 1) * Wp                # rows covered by the kw-folded staging
    DOFF = (-(PAD * (Wp + 1))) % 8        # dummy rows -> 8-aligned frame store
    FOFF = DOFF + PAD * (Wp + 1)          # frame row of activation pixel (0,0); % 8 == 0
    SOFF = DOFF + (PAD - K2 // 2) * (Wp + 1)   # first frame row conv2/3 reads (kh=kw=0)
    FR = buf2.shape[0]                    # padded frame rows (DOFF + Hp*Wp, rounded to 8)

    # Valid-column mask (w < W): the over-computed columns w in [W, Wp) must
    # re-enter the next padded frame as zeros (they land in its pad region).
    col_ok = (lax.broadcasted_iota(jnp.int32, (R, 1), 0) % Wp) < W

    # Zero only the never-written border rows of the persistent frames; the
    # interior [FOFF, FOFF+R) is fully overwritten (masked) below every step.
    buf2[0:FOFF, :] = jnp.zeros((FOFF, C1), jnp.float32)
    buf2[FOFF + R:FR, :] = jnp.zeros((FR - FOFF - R, C1), jnp.float32)
    buf3[0:FOFF, :] = jnp.zeros((FOFF, C2), jnp.float32)
    buf3[FOFF + R:FR, :] = jnp.zeros((FR - FOFF - R, C2), jnp.float32)

    # ---- conv1: taps pre-folded host-side -> a single K=256 matmul ----
    y1 = jnp.dot(x_ref[...], w1_ref[...], preferred_element_type=jnp.float32)
    a1 = jnp.where(col_ok, jnp.maximum(y1 + b1_ref[...], 0.0), 0.0)
    buf2[FOFF:FOFF + R, :] = a1           # 8-aligned interior frame store

    # ---- conv2: 5 kw taps folded via staging -> 5 matmuls with K = 320 ----
    for kw in range(K2):                  # lane-concatenate kw-shifted frame rows
        s2[:, kw * C1:(kw + 1) * C1] = buf2[SOFF + kw:SOFF + kw + R2, :]
    acc2 = jnp.dot(s2[0:R, :], w2_ref[0], preferred_element_type=jnp.float32)
    for kh in range(1, K2):               # register accumulation, aligned lhs slices
        acc2 = acc2 + jnp.dot(s2[kh * Wp:kh * Wp + R, :], w2_ref[kh],
                              preferred_element_type=jnp.float32)
    a2 = jnp.where(col_ok, jnp.maximum(acc2 + b2_ref[...], 0.0), 0.0)
    buf3[FOFF:FOFF + R, :] = a2

    # ---- conv3: same staging trick, channel-major NT matmuls, no ReLU ----
    for kw in range(K3):
        s3[:, kw * C2:(kw + 1) * C2] = buf3[SOFF + kw:SOFF + kw + R2, :]
    nt = (((1,), (1,)), ((), ()))         # contract last dims -> (C3P, R) output
    acc3 = lax.dot_general(w3t_ref[0], s3[0:R, :], nt,
                           preferred_element_type=jnp.float32)
    for kh in range(1, K3):
        acc3 = acc3 + lax.dot_general(w3t_ref[kh], s3[kh * Wp:kh * Wp + R, :], nt,
                                      preferred_element_type=jnp.float32)
    # Lane-dense output: (8, R) with R = 384 = 3 * 128 lanes, unmasked stores.
    o_ref[...] = acc3 + b3_ref[...]


@jax.jit
def sr_cnn_forward(x_nchw, params):
    N, C, H, W = x_nchw.shape
    assert C == C0
    Hp, Wp = H + 2 * PAD, W + 2 * PAD
    # TODO(synk): layout assumes Wp % 8 == 0 (true for W=16); general W needs
    # extra column padding, and large H,W need a row-band grid axis.
    assert Wp % 8 == 0
    R = H * Wp
    R2 = R + (K2 - 1) * Wp
    DOFF = (-(PAD * (Wp + 1))) % 8
    FR = -(-(DOFF + Hp * Wp) // 8) * 8

    # --- tiny host-side prep (all on KB-sized tensors) ---
    x = jnp.transpose(x_nchw, (0, 2, 3, 1)).astype(jnp.float32)       # NHWC
    xp = jnp.pad(x, ((0, 0), (PAD, PAD), (PAD, PAD), (0, 0)))         # (N, Hp, Wp, 3)
    xf = xp.reshape(N, Hp * Wp, C0)
    xf = jnp.pad(xf, ((0, 0), (0, (K1 - 1) * Wp + K1 - 1), (0, 0)))
    # full conv1 im2col: contraction index = kh*K1*C0 + kw*C0 + c (243) -> pad 256
    x_fold = jnp.concatenate(
        [xf[:, kh * Wp + kw:kh * Wp + kw + R, :]
         for kh in range(K1) for kw in range(K1)], axis=-1)           # (N, R, 243)
    x_fold = jnp.pad(x_fold, ((0, 0), (0, 0), (0, K1F - K1 * K1 * C0)))

    w1 = jnp.pad(params["w1"].reshape(K1 * K1 * C0, C1),
                 ((0, K1F - K1 * K1 * C0), (0, 0)))                   # (256, 64)
    w2 = params["w2"].reshape(K2, K2 * C1, C2)                        # (5, 320, 32)
    w3 = jnp.pad(params["w3"], ((0, 0), (0, 0), (0, 0), (0, C3P - C3)))
    w3t = jnp.transpose(w3.reshape(K3, K3 * C2, C3P), (0, 2, 1))      # (5, 8, 160)
    b1 = params["b1"].reshape(1, C1)
    b2 = params["b2"].reshape(1, C2)
    b3 = jnp.pad(params["b3"], (0, C3P - C3)).reshape(C3P, 1)

    kernel = functools.partial(_srcnn_kernel, H=H, W=W)
    out = pl.pallas_call(
        kernel,
        out_shape=jax.ShapeDtypeStruct((N, C3P, R), jnp.float32),
        grid_spec=pltpu.PrefetchScalarGridSpec(
            num_scalar_prefetch=0,
            grid=(N,),
            in_specs=[
                pl.BlockSpec((None, R, K1F), lambda n: (n, 0, 0)),
                pl.BlockSpec((K1F, C1), lambda n: (0, 0)),
                pl.BlockSpec((1, C1), lambda n: (0, 0)),
                pl.BlockSpec((K2, K2 * C1, C2), lambda n: (0, 0, 0)),
                pl.BlockSpec((1, C2), lambda n: (0, 0)),
                pl.BlockSpec((K3, C3P, K3 * C2), lambda n: (0, 0, 0)),
                pl.BlockSpec((C3P, 1), lambda n: (0, 0)),
            ],
            out_specs=pl.BlockSpec((None, C3P, R), lambda n: (n, 0, 0)),
            scratch_shapes=[
                pltpu.VMEM((FR, C1), jnp.float32),        # buf2: layer-2 padded frame
                pltpu.VMEM((R2, K2 * C1), jnp.float32),   # s2: conv2 kw-fold staging
                pltpu.VMEM((FR, C2), jnp.float32),        # buf3: layer-3 padded frame
                pltpu.VMEM((R2, K3 * C2), jnp.float32),   # s3: conv3 kw-fold staging
            ],
        ),
        compiler_params=pltpu.CompilerParams(
            dimension_semantics=("parallel",)),
    )(x_fold, w1, b1, w2, b2, w3t, b3)

    # (N, 8, H*Wp): drop padded channels / over-computed columns -> NCHW.
    return out.reshape(N, C3P, H, Wp)[:, :C3, :, :W]


def init_params(key):
    """Deterministic synthetic parameters matching SR_CNN's shapes (HWIO)."""
    ks = jax.random.split(key, 6)

    def winit(k, shape):
        fan_in = shape[0] * shape[1] * shape[2]
        return jax.random.normal(k, shape, jnp.float32) / jnp.sqrt(fan_in)

    return {
        "w1": winit(ks[0], (9, 9, 3, 64)),
        "b1": 0.01 * jax.random.normal(ks[1], (64,), jnp.float32),
        "w2": winit(ks[2], (5, 5, 64, 32)),
        "b2": 0.01 * jax.random.normal(ks[3], (32,), jnp.float32),
        "w3": winit(ks[4], (5, 5, 32, 3)),
        "b3": 0.01 * jax.random.normal(ks[5], (3,), jnp.float32),
    }


def _reference(x_nchw, params):
    x = jnp.transpose(x_nchw, (0, 2, 3, 1)).astype(jnp.float32)
    dn = ("NHWC", "HWIO", "NHWC")

    def conv(x, w, b, relu):
        y = lax.conv_general_dilated(x, w, (1, 1), "SAME", dimension_numbers=dn,
                                     precision=lax.Precision.HIGHEST) + b
        return jnp.maximum(y, 0.0) if relu else y

    x = conv(x, params["w1"], params["b1"], True)
    x = conv(x, params["w2"], params["b2"], True)
    x = conv(x, params["w3"], params["b3"], False)
    return jnp.transpose(x, (0, 3, 1, 2))


if __name__ == "__main__":
    key = jax.random.PRNGKey(0)
    k_x, k_p = jax.random.split(key)

    # Input consistent with nn.Conv2d(3, ...): batch=2, channels=3, 16x16 spatial.
    x = jax.random.normal(k_x, (2, 3, 16, 16), jnp.float32)
    params = init_params(k_p)

    out = jax.block_until_ready(sr_cnn_forward(x, params))
    assert out.shape == (2, 3, 16, 16), out.shape

    ref = jax.block_until_ready(_reference(x, params))
    err = float(jnp.max(jnp.abs(out - ref)))
    assert jnp.allclose(out, ref, atol=2e-3, rtol=2e-3), err

    print("KERNEL_OK")
</pallas_src>

<mosaic_0001>
module attributes {stable_mosaic.version = 11 : i64} {
  func.func @_srcnn_kernel(%arg0: i32, %arg1: memref<1x384x256xf32, #tpu.memory_space<vmem>>, %arg2: memref<256x64xf32, #tpu.memory_space<vmem>>, %arg3: memref<1x64xf32, #tpu.memory_space<vmem>>, %arg4: memref<5x320x32xf32, #tpu.memory_space<vmem>>, %arg5: memref<1x32xf32, #tpu.memory_space<vmem>>, %arg6: memref<5x8x160xf32, #tpu.memory_space<vmem>>, %arg7: memref<8x1xf32, #tpu.memory_space<vmem>>, %arg8: memref<1x8x384xf32, #tpu.memory_space<vmem>>, %arg9: memref<584x64xf32, #tpu.memory_space<vmem>>, %arg10: memref<480x320xf32, #tpu.memory_space<vmem>>, %arg11: memref<584x32xf32, #tpu.memory_space<vmem>>, %arg12: memref<480x160xf32, #tpu.memory_space<vmem>>) attributes {dimension_semantics = [#tpu.dimension_semantics<parallel>], iteration_bounds = array<i64: 2>, scalar_prefetch = 0 : i64, scratch_operands = 4 : i64, tpu.core_type = #tpu.core_type<tc>, window_params = [{transform_indices = @transform_0, window_bounds = array<i64: 1, 384, 256>}, {pipeline_mode = #tpu.pipeline_mode<synchronous>, transform_indices = @transform_1, window_bounds = array<i64: 256, 64>}, {pipeline_mode = #tpu.pipeline_mode<synchronous>, transform_indices = @transform_2, window_bounds = array<i64: 1, 64>}, {pipeline_mode = #tpu.pipeline_mode<synchronous>, transform_indices = @transform_3, window_bounds = array<i64: 5, 320, 32>}, {pipeline_mode = #tpu.pipeline_mode<synchronous>, transform_indices = @transform_4, window_bounds = array<i64: 1, 32>}, {pipeline_mode = #tpu.pipeline_mode<synchronous>, transform_indices = @transform_5, window_bounds = array<i64: 5, 8, 160>}, {pipeline_mode = #tpu.pipeline_mode<synchronous>, transform_indices = @transform_6, window_bounds = array<i64: 8, 1>}, {transform_indices = @transform_7, window_bounds = array<i64: 1, 8, 384>}]} {
    %0 = tpu.iota {dimensions = array<i32: 0>} : vector<384x1xi32>
    %c24_i32 = arith.constant 24 : i32
    %c0_i32 = arith.constant 0 : i32
    %1 = arith.cmpi eq, %c24_i32, %c0_i32 : i32
    %c1_i32 = arith.constant 1 : i32
    %2 = arith.select %1, %c1_i32, %c24_i32 : i32
    %3 = vector.broadcast %2 : i32 to vector<384x1xi32>
    %4 = arith.remsi %0, %3 : vector<384x1xi32>
    %c0_i32_0 = arith.constant 0 : i32
    %5 = vector.broadcast %c0_i32_0 : i32 to vector<384x1xi32>
    %6 = arith.cmpi ne, %4, %5 : vector<384x1xi32>
    %c0_i32_1 = arith.constant 0 : i32
    %7 = vector.broadcast %c0_i32_1 : i32 to vector<384x1xi32>
    %8 = arith.cmpi slt, %4, %7 : vector<384x1xi32>
    %c0_i32_2 = arith.constant 0 : i32
    %9 = arith.cmpi slt, %2, %c0_i32_2 : i32
    %10 = vector.broadcast %9 : i1 to vector<384x1xi1>
    %11 = vector.broadcast %10 : vector<384x1xi1> to vector<384x1xi1>
    %12 = arith.xori %8, %11 : vector<384x1xi1>
    %13 = arith.andi %12, %6 : vector<384x1xi1>
    %14 = vector.broadcast %2 : i32 to vector<384x1xi32>
    %15 = arith.addi %4, %14 : vector<384x1xi32>
    %16 = arith.select %13, %15, %4 : vector<384x1xi1>, vector<384x1xi32>
    %c16_i32 = arith.constant 16 : i32
    %17 = vector.broadcast %c16_i32 : i32 to vector<384x1xi32>
    %18 = arith.cmpi slt, %16, %17 : vector<384x1xi32>
    %cst = arith.constant 0.000000e+00 : f32
    %19 = vector.broadcast %cst : f32 to vector<104x64xf32>
    %c0 = arith.constant 0 : index
    %c0_3 = arith.constant 0 : index
    %20 = vector.load %arg9[%c0, %c0_3] : memref<584x64xf32, #tpu.memory_space<vmem>>, vector<104x64xf32>
    tpu.vector_store %arg9[%c0, %c0_3], %19 {strides = array<i32>} : memref<584x64xf32, #tpu.memory_space<vmem>>, vector<104x64xf32>,
    %cst_4 = arith.constant 0.000000e+00 : f32
    %21 = vector.broadcast %cst_4 : f32 to vector<96x64xf32>
    %c488 = arith.constant 488 : index
    %c0_5 = arith.constant 0 : index
    %22 = vector.load %arg9[%c488, %c0_5] : memref<584x64xf32, #tpu.memory_space<vmem>>, vector<96x64xf32>
    tpu.vector_store %arg9[%c488, %c0_5], %21 {strides = array<i32>} : memref<584x64xf32, #tpu.memory_space<vmem>>, vector<96x64xf32>,
    %cst_6 = arith.constant 0.000000e+00 : f32
    %23 = vector.broadcast %cst_6 : f32 to vector<104x32xf32>
    %c0_7 = arith.constant 0 : index
    %c0_8 = arith.constant 0 : index
    %24 = vector.load %arg11[%c0_7, %c0_8] : memref<584x32xf32, #tpu.memory_space<vmem>>, vector<104x32xf32>
    tpu.vector_store %arg11[%c0_7, %c0_8], %23 {strides = array<i32>} : memref<584x32xf32, #tpu.memory_space<vmem>>, vector<104x32xf32>,
    %cst_9 = arith.constant 0.000000e+00 : f32
    %25 = vector.broadcast %cst_9 : f32 to vector<96x32xf32>
    %c488_10 = arith.constant 488 : index
    %c0_11 = arith.constant 0 : index
    %26 = vector.load %arg11[%c488_10, %c0_11] : memref<584x32xf32, #tpu.memory_space<vmem>>, vector<96x32xf32>
    tpu.vector_store %arg11[%c488_10, %c0_11], %25 {strides = array<i32>} : memref<584x32xf32, #tpu.memory_space<vmem>>, vector<96x32xf32>,
    %c0_12 = arith.constant 0 : index
    %c0_13 = arith.constant 0 : index
    %c0_14 = arith.constant 0 : index
    %27 = vector.load %arg1[%c0_12, %c0_13, %c0_14] : memref<1x384x256xf32, #tpu.memory_space<vmem>>, vector<1x384x256xf32>
    %28 = vector.shape_cast %27 : vector<1x384x256xf32> to vector<384x256xf32>
    %c0_15 = arith.constant 0 : index
    %c0_16 = arith.constant 0 : index
    %29 = vector.load %arg2[%c0_15, %c0_16] : memref<256x64xf32, #tpu.memory_space<vmem>>, vector<256x64xf32>
    %cst_17 = arith.constant dense<0.000000e+00> : vector<384x64xf32>
    %30 = tpu.matmul %28, %29, %cst_17 {dimension_numbers = #tpu.dot_dimension_numbers<[1], [0], [0], [1], [0, 0, 1, 1], [], []>} : vector<384x256xf32>, vector<256x64xf32>, vector<384x64xf32> -> vector<384x64xf32>
    %c0_18 = arith.constant 0 : index
    %c0_19 = arith.constant 0 : index
    %31 = vector.load %arg3[%c0_18, %c0_19] : memref<1x64xf32, #tpu.memory_space<vmem>>, vector<1x64xf32>
    %32 = vector.broadcast %31 : vector<1x64xf32> to vector<384x64xf32>
    %33 = arith.addf %30, %32 : vector<384x64xf32>
    %cst_20 = arith.constant 0.000000e+00 : f32
    %34 = vector.broadcast %cst_20 : f32 to vector<384x64xf32>
    %35 = arith.maximumf %33, %34 : vector<384x64xf32>
    %cst_21 = arith.constant 0.000000e+00 : f32
    %36 = vector.shape_cast %18 : vector<384x1xi1> to vector<384x1xi1>
    %37 = vector.broadcast %36 : vector<384x1xi1> to vector<384x64xi1>
    %38 = vector.broadcast %cst_21 : f32 to vector<384x64xf32>
    %39 = arith.select %37, %35, %38 : vector<384x64xi1>, vector<384x64xf32>
    %c104 = arith.constant 104 : index
    %c0_22 = arith.constant 0 : index
    %40 = vector.load %arg9[%c104, %c0_22] : memref<584x64xf32, #tpu.memory_space<vmem>>, vector<384x64xf32>
    tpu.vector_store %arg9[%c104, %c0_22], %39 {strides = array<i32>} : memref<584x64xf32, #tpu.memory_space<vmem>>, vector<384x64xf32>,
    %c54 = arith.constant 54 : index
    %c0_23 = arith.constant 0 : index
    %41 = vector.load %arg9[%c54, %c0_23] : memref<584x64xf32, #tpu.memory_space<vmem>>, vector<480x64xf32>
    %c0_24 = arith.constant 0 : index
    %c0_25 = arith.constant 0 : index
    %42 = vector.load %arg10[%c0_24, %c0_25] : memref<480x320xf32, #tpu.memory_space<vmem>>, vector<480x64xf32>
    tpu.vector_store %arg10[%c0_24, %c0_25], %41 {strides = array<i32>} : memref<480x320xf32, #tpu.memory_space<vmem>>, vector<480x64xf32>,
    %c55 = arith.constant 55 : index
    %c0_26 = arith.constant 0 : index
    %43 = vector.load %arg9[%c55, %c0_26] : memref<584x64xf32, #tpu.memory_space<vmem>>, vector<480x64xf32>
    %c0_27 = arith.constant 0 : index
    %c64 = arith.constant 64 : index
    %44 = vector.load %arg10[%c0_27, %c64] : memref<480x320xf32, #tpu.memory_space<vmem>>, vector<480x64xf32>
    tpu.vector_store %arg10[%c0_27, %c64], %43 {strides = array<i32>} : memref<480x320xf32, #tpu.memory_space<vmem>>, vector<480x64xf32>,
    %c56 = arith.constant 56 : index
    %c0_28 = arith.constant 0 : index
    %45 = vector.load %arg9[%c56, %c0_28] : memref<584x64xf32, #tpu.memory_space<vmem>>, vector<480x64xf32>
    %c0_29 = arith.constant 0 : index
    %c128 = arith.constant 128 : index
    %46 = vector.load %arg10[%c0_29, %c128] : memref<480x320xf32, #tpu.memory_space<vmem>>, vector<480x64xf32>
    tpu.vector_store %arg10[%c0_29, %c128], %45 {strides = array<i32>} : memref<480x320xf32, #tpu.memory_space<vmem>>, vector<480x64xf32>,
    %c57 = arith.constant 57 : index
    %c0_30 = arith.constant 0 : index
    %47 = vector.load %arg9[%c57, %c0_30] : memref<584x64xf32, #tpu.memory_space<vmem>>, vector<480x64xf32>
    %c0_31 = arith.constant 0 : index
    %c192 = arith.constant 192 : index
    %48 = vector.load %arg10[%c0_31, %c192] : memref<480x320xf32, #tpu.memory_space<vmem>>, vector<480x64xf32>
    tpu.vector_store %arg10[%c0_31, %c192], %47 {strides = array<i32>} : memref<480x320xf32, #tpu.memory_space<vmem>>, vector<480x64xf32>,
    %c58 = arith.constant 58 : index
    %c0_32 = arith.constant 0 : index
    %49 = vector.load %arg9[%c58, %c0_32] : memref<584x64xf32, #tpu.memory_space<vmem>>, vector<480x64xf32>
    %c0_33 = arith.constant 0 : index
    %c256 = arith.constant 256 : index
    %50 = vector.load %arg10[%c0_33, %c256] : memref<480x320xf32, #tpu.memory_space<vmem>>, vector<480x64xf32>
    tpu.vector_store %arg10[%c0_33, %c256], %49 {strides = array<i32>} : memref<480x320xf32, #tpu.memory_space<vmem>>, vector<480x64xf32>,
    %c0_34 = arith.constant 0 : index
    %c0_35 = arith.constant 0 : index
    %51 = vector.load %arg10[%c0_34, %c0_35] : memref<480x320xf32, #tpu.memory_space<vmem>>, vector<384x320xf32>
    %c0_36 = arith.constant 0 : index
    %c0_37 = arith.constant 0 : index
    %c0_38 = arith.constant 0 : index
    %52 = vector.load %arg4[%c0_36, %c0_37, %c0_38] : memref<5x320x32xf32, #tpu.memory_space<vmem>>, vector<1x320x32xf32>
    %53 = vector.shape_cast %52 : vector<1x320x32xf32> to vector<320x32xf32>
    %cst_39 = arith.constant dense<0.000000e+00> : vector<384x32xf32>
    %54 = tpu.matmul %51, %53, %cst_39 {dimension_numbers = #tpu.dot_dimension_numbers<[1], [0], [0], [1], [0, 0, 1, 1], [], []>} : vector<384x320xf32>, vector<320x32xf32>, vector<384x32xf32> -> vector<384x32xf32>
    %c24 = arith.constant 24 : index
    %c0_40 = arith.constant 0 : index
    %55 = vector.load %arg10[%c24, %c0_40] : memref<480x320xf32, #tpu.memory_space<vmem>>, vector<384x320xf32>
    %c1 = arith.constant 1 : index
    %c0_41 = arith.constant 0 : index
    %c0_42 = arith.constant 0 : index
    %56 = vector.load %arg4[%c1, %c0_41, %c0_42] : memref<5x320x32xf32, #tpu.memory_space<vmem>>, vector<1x320x32xf32>
    %57 = vector.shape_cast %56 : vector<1x320x32xf32> to vector<320x32xf32>
    %cst_43 = arith.constant dense<0.000000e+00> : vector<384x32xf32>
    %58 = tpu.matmul %55, %57, %cst_43 {dimension_numbers = #tpu.dot_dimension_numbers<[1], [0], [0], [1], [0, 0, 1, 1], [], []>} : vector<384x320xf32>, vector<320x32xf32>, vector<384x32xf32> -> vector<384x32xf32>
    %59 = arith.addf %54, %58 : vector<384x32xf32>
    %c48 = arith.constant 48 : index
    %c0_44 = arith.constant 0 : index
    %60 = vector.load %arg10[%c48, %c0_44] : memref<480x320xf32, #tpu.memory_space<vmem>>, vector<384x320xf32>
    %c2 = arith.constant 2 : index
    %c0_45 = arith.constant 0 : index
    %c0_46 = arith.constant 0 : index
    %61 = vector.load %arg4[%c2, %c0_45, %c0_46] : memref<5x320x32xf32, #tpu.memory_space<vmem>>, vector<1x320x32xf32>
    %62 = vector.shape_cast %61 : vector<1x320x32xf32> to vector<320x32xf32>
    %cst_47 = arith.constant dense<0.000000e+00> : vector<384x32xf32>
    %63 = tpu.matmul %60, %62, %cst_47 {dimension_numbers = #tpu.dot_dimension_numbers<[1], [0], [0], [1], [0, 0, 1, 1], [], []>} : vector<384x320xf32>, vector<320x32xf32>, vector<384x32xf32> -> vector<384x32xf32>
    %64 = arith.addf %59, %63 : vector<384x32xf32>
    %c72 = arith.constant 72 : index
    %c0_48 = arith.constant 0 : index
    %65 = vector.load %arg10[%c72, %c0_48] : memref<480x320xf32, #tpu.memory_space<vmem>>, vector<384x320xf32>
    %c3 = arith.constant 3 : index
    %c0_49 = arith.constant 0 : index
    %c0_50 = arith.constant 0 : index
    %66 = vector.load %arg4[%c3, %c0_49, %c0_50] : memref<5x320x32xf32, #tpu.memory_space<vmem>>, vector<1x320x32xf32>
    %67 = vector.shape_cast %66 : vector<1x320x32xf32> to vector<320x32xf32>
    %cst_51 = arith.constant dense<0.000000e+00> : vector<384x32xf32>
    %68 = tpu.matmul %65, %67, %cst_51 {dimension_numbers = #tpu.dot_dimension_numbers<[1], [0], [0], [1], [0, 0, 1, 1], [], []>} : vector<384x320xf32>, vector<320x32xf32>, vector<384x32xf32> -> vector<384x32xf32>
    %69 = arith.addf %64, %68 : vector<384x32xf32>
    %c96 = arith.constant 96 : index
    %c0_52 = arith.constant 0 : index
    %70 = vector.load %arg10[%c96, %c0_52] : memref<480x320xf32, #tpu.memory_space<vmem>>, vector<384x320xf32>
    %c4 = arith.constant 4 : index
    %c0_53 = arith.constant 0 : index
    %c0_54 = arith.constant 0 : index
    %71 = vector.load %arg4[%c4, %c0_53, %c0_54] : memref<5x320x32xf32, #tpu.memory_space<vmem>>, vector<1x320x32xf32>
    %72 = vector.shape_cast %71 : vector<1x320x32xf32> to vector<320x32xf32>
    %cst_55 = arith.constant dense<0.000000e+00> : vector<384x32xf32>
    %73 = tpu.matmul %70, %72, %cst_55 {dimension_numbers = #tpu.dot_dimension_numbers<[1], [0], [0], [1], [0, 0, 1, 1], [], []>} : vector<384x320xf32>, vector<320x32xf32>, vector<384x32xf32> -> vector<384x32xf32>
    %74 = arith.addf %69, %73 : vector<384x32xf32>
    %c0_56 = arith.constant 0 : index
    %c0_57 = arith.constant 0 : index
    %75 = vector.load %arg5[%c0_56, %c0_57] : memref<1x32xf32, #tpu.memory_space<vmem>>, vector<1x32xf32>
    %76 = vector.broadcast %75 : vector<1x32xf32> to vector<384x32xf32>
    %77 = arith.addf %74, %76 : vector<384x32xf32>
    %cst_58 = arith.constant 0.000000e+00 : f32
    %78 = vector.broadcast %cst_58 : f32 to vector<384x32xf32>
    %79 = arith.maximumf %77, %78 : vector<384x32xf32>
    %cst_59 = arith.constant 0.000000e+00 : f32
    %80 = vector.shape_cast %18 : vector<384x1xi1> to vector<384x1xi1>
    %81 = vector.broadcast %80 : vector<384x1xi1> to vector<384x32xi1>
    %82 = vector.broadcast %cst_59 : f32 to vector<384x32xf32>
    %83 = arith.select %81, %79, %82 : vector<384x32xi1>, vector<384x32xf32>
    %c104_60 = arith.constant 104 : index
    %c0_61 = arith.constant 0 : index
    %84 = vector.load %arg11[%c104_60, %c0_61] : memref<584x32xf32, #tpu.memory_space<vmem>>, vector<384x32xf32>
    tpu.vector_store %arg11[%c104_60, %c0_61], %83 {strides = array<i32>} : memref<584x32xf32, #tpu.memory_space<vmem>>, vector<384x32xf32>,
    %c54_62 = arith.constant 54 : index
    %c0_63 = arith.constant 0 : index
    %85 = vector.load %arg11[%c54_62, %c0_63] : memref<584x32xf32, #tpu.memory_space<vmem>>, vector<480x32xf32>
    %c0_64 = arith.constant 0 : index
    %c0_65 = arith.constant 0 : index
    %86 = vector.load %arg12[%c0_64, %c0_65] : memref<480x160xf32, #tpu.memory_space<vmem>>, vector<480x32xf32>
    tpu.vector_store %arg12[%c0_64, %c0_65], %85 {strides = array<i32>} : memref<480x160xf32, #tpu.memory_space<vmem>>, vector<480x32xf32>,
    %c55_66 = arith.constant 55 : index
    %c0_67 = arith.constant 0 : index
    %87 = vector.load %arg11[%c55_66, %c0_67] : memref<584x32xf32, #tpu.memory_space<vmem>>, vector<480x32xf32>
    %c0_68 = arith.constant 0 : index
    %c32 = arith.constant 32 : index
    %88 = vector.load %arg12[%c0_68, %c32] : memref<480x160xf32, #tpu.memory_space<vmem>>, vector<480x32xf32>
    tpu.vector_store %arg12[%c0_68, %c32], %87 {strides = array<i32>} : memref<480x160xf32, #tpu.memory_space<vmem>>, vector<480x32xf32>,
    %c56_69 = arith.constant 56 : index
    %c0_70 = arith.constant 0 : index
    %89 = vector.load %arg11[%c56_69, %c0_70] : memref<584x32xf32, #tpu.memory_space<vmem>>, vector<480x32xf32>
    %c0_71 = arith.constant 0 : index
    %c64_72 = arith.constant 64 : index
    %90 = vector.load %arg12[%c0_71, %c64_72] : memref<480x160xf32, #tpu.memory_space<vmem>>, vector<480x32xf32>
    tpu.vector_store %arg12[%c0_71, %c64_72], %89 {strides = array<i32>} : memref<480x160xf32, #tpu.memory_space<vmem>>, vector<480x32xf32>,
    %c57_73 = arith.constant 57 : index
    %c0_74 = arith.constant 0 : index
    %91 = vector.load %arg11[%c57_73, %c0_74] : memref<584x32xf32, #tpu.memory_space<vmem>>, vector<480x32xf32>
    %c0_75 = arith.constant 0 : index
    %c96_76 = arith.constant 96 : index
    %92 = vector.load %arg12[%c0_75, %c96_76] : memref<480x160xf32, #tpu.memory_space<vmem>>, vector<480x32xf32>
    tpu.vector_store %arg12[%c0_75, %c96_76], %91 {strides = array<i32>} : memref<480x160xf32, #tpu.memory_space<vmem>>, vector<480x32xf32>,
    %c58_77 = arith.constant 58 : index
    %c0_78 = arith.constant 0 : index
    %93 = vector.load %arg11[%c58_77, %c0_78] : memref<584x32xf32, #tpu.memory_space<vmem>>, vector<480x32xf32>
    %c0_79 = arith.constant 0 : index
    %c128_80 = arith.constant 128 : index
    %94 = vector.load %arg12[%c0_79, %c128_80] : memref<480x160xf32, #tpu.memory_space<vmem>>, vector<480x32xf32>
    tpu.vector_store %arg12[%c0_79, %c128_80], %93 {strides = array<i32>} : memref<480x160xf32, #tpu.memory_space<vmem>>, vector<480x32xf32>,
    %c0_81 = arith.constant 0 : index
    %c0_82 = arith.constant 0 : index
    %c0_83 = arith.constant 0 : index
    %95 = vector.load %arg6[%c0_81, %c0_82, %c0_83] : memref<5x8x160xf32, #tpu.memory_space<vmem>>, vector<1x8x160xf32>
    %96 = vector.shape_cast %95 : vector<1x8x160xf32> to vector<8x160xf32>
    %c0_84 = arith.constant 0 : index
    %c0_85 = arith.constant 0 : index
    %97 = vector.load %arg12[%c0_84, %c0_85] : memref<480x160xf32, #tpu.memory_space<vmem>>, vector<384x160xf32>
    %cst_86 = arith.constant dense<0.000000e+00> : vector<8x384xf32>
    %98 = tpu.matmul %96, %97, %cst_86 {dimension_numbers = #tpu.dot_dimension_numbers<[1], [1], [0], [0], [0, 0, 1, 0], [], []>} : vector<8x160xf32>, vector<384x160xf32>, vector<8x384xf32> -> vector<8x384xf32>
    %c1_87 = arith.constant 1 : index
    %c0_88 = arith.constant 0 : index
    %c0_89 = arith.constant 0 : index
    %99 = vector.load %arg6[%c1_87, %c0_88, %c0_89] : memref<5x8x160xf32, #tpu.memory_space<vmem>>, vector<1x8x160xf32>
    %100 = vector.shape_cast %99 : vector<1x8x160xf32> to vector<8x160xf32>
    %c24_90 = arith.constant 24 : index
    %c0_91 = arith.constant 0 : index
    %101 = vector.load %arg12[%c24_90, %c0_91] : memref<480x160xf32, #tpu.memory_space<vmem>>, vector<384x160xf32>
    %cst_92 = arith.constant dense<0.000000e+00> : vector<8x384xf32>
    %102 = tpu.matmul %100, %101, %cst_92 {dimension_numbers = #tpu.dot_dimension_numbers<[1], [1], [0], [0], [0, 0, 1, 0], [], []>} : vector<8x160xf32>, vector<384x160xf32>, vector<8x384xf32> -> vector<8x384xf32>
    %103 = arith.addf %98, %102 : vector<8x384xf32>
    %c2_93 = arith.constant 2 : index
    %c0_94 = arith.constant 0 : index
    %c0_95 = arith.constant 0 : index
    %104 = vector.load %arg6[%c2_93, %c0_94, %c0_95] : memref<5x8x160xf32, #tpu.memory_space<vmem>>, vector<1x8x160xf32>
    %105 = vector.shape_cast %104 : vector<1x8x160xf32> to vector<8x160xf32>
    %c48_96 = arith.constant 48 : index
    %c0_97 = arith.constant 0 : index
    %106 = vector.load %arg12[%c48_96, %c0_97] : memref<480x160xf32, #tpu.memory_space<vmem>>, vector<384x160xf32>
    %cst_98 = arith.constant dense<0.000000e+00> : vector<8x384xf32>
    %107 = tpu.matmul %105, %106, %cst_98 {dimension_numbers = #tpu.dot_dimension_numbers<[1], [1], [0], [0], [0, 0, 1, 0], [], []>} : vector<8x160xf32>, vector<384x160xf32>, vector<8x384xf32> -> vector<8x384xf32>
    %108 = arith.addf %103, %107 : vector<8x384xf32>
    %c3_99 = arith.constant 3 : index
    %c0_100 = arith.constant 0 : index
    %c0_101 = arith.constant 0 : index
    %109 = vector.load %arg6[%c3_99, %c0_100, %c0_101] : memref<5x8x160xf32, #tpu.memory_space<vmem>>, vector<1x8x160xf32>
    %110 = vector.shape_cast %109 : vector<1x8x160xf32> to vector<8x160xf32>
    %c72_102 = arith.constant 72 : index
    %c0_103 = arith.constant 0 : index
    %111 = vector.load %arg12[%c72_102, %c0_103] : memref<480x160xf32, #tpu.memory_space<vmem>>, vector<384x160xf32>
    %cst_104 = arith.constant dense<0.000000e+00> : vector<8x384xf32>
    %112 = tpu.matmul %110, %111, %cst_104 {dimension_numbers = #tpu.dot_dimension_numbers<[1], [1], [0], [0], [0, 0, 1, 0], [], []>} : vector<8x160xf32>, vector<384x160xf32>, vector<8x384xf32> -> vector<8x384xf32>
    %113 = arith.addf %108, %112 : vector<8x384xf32>
    %c4_105 = arith.constant 4 : index
    %c0_106 = arith.constant 0 : index
    %c0_107 = arith.constant 0 : index
    %114 = vector.load %arg6[%c4_105, %c0_106, %c0_107] : memref<5x8x160xf32, #tpu.memory_space<vmem>>, vector<1x8x160xf32>
    %115 = vector.shape_cast %114 : vector<1x8x160xf32> to vector<8x160xf32>
    %c96_108 = arith.constant 96 : index
    %c0_109 = arith.constant 0 : index
    %116 = vector.load %arg12[%c96_108, %c0_109] : memref<480x160xf32, #tpu.memory_space<vmem>>, vector<384x160xf32>
    %cst_110 = arith.constant dense<0.000000e+00> : vector<8x384xf32>
    %117 = tpu.matmul %115, %116, %cst_110 {dimension_numbers = #tpu.dot_dimension_numbers<[1], [1], [0], [0], [0, 0, 1, 0], [], []>} : vector<8x160xf32>, vector<384x160xf32>, vector<8x384xf32> -> vector<8x384xf32>
    %118 = arith.addf %113, %117 : vector<8x384xf32>
    %c0_111 = arith.constant 0 : index
    %c0_112 = arith.constant 0 : index
    %119 = vector.load %arg7[%c0_111, %c0_112] : memref<8x1xf32, #tpu.memory_space<vmem>>, vector<8x1xf32>
    %120 = vector.broadcast %119 : vector<8x1xf32> to vector<8x384xf32>
    %121 = arith.addf %118, %120 : vector<8x384xf32>
    %c0_113 = arith.constant 0 : index
    %c0_114 = arith.constant 0 : index
    %c0_115 = arith.constant 0 : index
    %122 = vector.load %arg8[%c0_113, %c0_114, %c0_115] : memref<1x8x384xf32, #tpu.memory_space<vmem>>, vector<1x8x384xf32>
    %123 = vector.shape_cast %122 : vector<1x8x384xf32> to vector<8x384xf32>
    %124 = vector.shape_cast %121 : vector<8x384xf32> to vector<1x8x384xf32>
    tpu.vector_store %arg8[%c0_113, %c0_114, %c0_115], %124 {strides = array<i32>} : memref<1x8x384xf32, #tpu.memory_space<vmem>>, vector<1x8x384xf32>,
    return
  }
  func.func @transform_0(%arg0: i32) -> (i32, i32, i32) {
    %c0_i32 = arith.constant 0 : i32
    %c0_i32_0 = arith.constant 0 : i32
    %c0_i32_1 = arith.constant 0 : i32
    return %arg0, %c0_i32, %c0_i32_0 : i32, i32, i32
  }
  func.func @transform_1(%arg0: i32) -> (i32, i32) {
    %c0_i32 = arith.constant 0 : i32
    %c0_i32_0 = arith.constant 0 : i32
    %c0_i32_1 = arith.constant 0 : i32
    return %c0_i32, %c0_i32_0 : i32, i32
  }
  func.func @transform_2(%arg0: i32) -> (i32, i32) {
    %c0_i32 = arith.constant 0 : i32
    %c0_i32_0 = arith.constant 0 : i32
    %c0_i32_1 = arith.constant 0 : i32
    return %c0_i32, %c0_i32_0 : i32, i32
  }
  func.func @transform_3(%arg0: i32) -> (i32, i32, i32) {
    %c0_i32 = arith.constant 0 : i32
    %c0_i32_0 = arith.constant 0 : i32
    %c0_i32_1 = arith.constant 0 : i32
    %c0_i32_2 = arith.constant 0 : i32
    return %c0_i32, %c0_i32_0, %c0_i32_1 : i32, i32, i32
  }
  func.func @transform_4(%arg0: i32) -> (i32, i32) {
    %c0_i32 = arith.constant 0 : i32
    %c0_i32_0 = arith.constant 0 : i32
    %c0_i32_1 = arith.constant 0 : i32
    return %c0_i32, %c0_i32_0 : i32, i32
  }
  func.func @transform_5(%arg0: i32) -> (i32, i32, i32) {
    %c0_i32 = arith.constant 0 : i32
    %c0_i32_0 = arith.constant 0 : i32
    %c0_i32_1 = arith.constant 0 : i32
    %c0_i32_2 = arith.constant 0 : i32
    return %c0_i32, %c0_i32_0, %c0_i32_1 : i32, i32, i32
  }
  func.func @transform_6(%arg0: i32) -> (i32, i32) {
    %c0_i32 = arith.constant 0 : i32
    %c0_i32_0 = arith.constant 0 : i32
    %c0_i32_1 = arith.constant 0 : i32
    return %c0_i32, %c0_i32_0 : i32, i32
  }
  func.func @transform_7(%arg0: i32) -> (i32, i32, i32) {
    %c0_i32 = arith.constant 0 : i32
    %c0_i32_0 = arith.constant 0 : i32
    %c0_i32_1 = arith.constant 0 : i32
    return %arg0, %c0_i32, %c0_i32_0 : i32, i32, i32
  }
}

</mosaic_0001>

<llo_original>
// kernel: sr_cnn_forward.1
$region0: #{sr_cnn_forward.1}
  #allocation0 [shape = 'u32[]', space=smem, size = 0x4, offset = 0x4, fixed_abs, tag = 'smem constant byte address 0x4 - core index']
  #allocation1 [shape = 'u32[144,128]{1,0:T(1,128)}', space=vmem, size = 0x12000, scoped, tag = 'internal scratch']
  #allocation2 [shape = 'f32[584,64]{1,0:T(8,128)}', space=vmem, size = 0x49000, scoped, tag = 'scratch operand']
  #allocation3 [shape = 'f32[480,320]{1,0:T(8,128)}', space=vmem, size = 0xb4000, scoped, tag = 'scratch operand']
  #allocation4 [shape = 'f32[584,32]{1,0:T(8,128)}', space=vmem, size = 0x49000, scoped, tag = 'scratch operand']
  #allocation5 [shape = 'f32[480,160]{1,0:T(8,128)}', space=vmem, size = 0x78000, scoped, tag = 'scratch operand']
  %s0 = inlined_call_operand.vmem [shape: f32[2,384,256], index: 0, kind: input, shape index: {}]
  %s1 = inlined_call_operand.vmem [shape: f32[256,64], index: 1, kind: input, shape index: {}]
  %s2 = inlined_call_operand.vmem [shape: f32[1,64], index: 2, kind: input, shape index: {}]
  %s3 = inlined_call_operand.vmem [shape: f32[5,320,32], index: 3, kind: input, shape index: {}]
  %s4 = inlined_call_operand.vmem [shape: f32[1,32], index: 4, kind: input, shape index: {}]
  %s5 = inlined_call_operand.vmem [shape: f32[5,8,160], index: 5, kind: input, shape index: {}]
  %s6 = inlined_call_operand.vmem [shape: f32[8,1], index: 6, kind: input, shape index: {}]
  %s7 = inlined_call_operand.vmem [shape: f32[2,8,384], index: 7, kind: output, shape index: {}]
  %s8 = sld [smem:[#allocation0]]
  $region61: #{sr_cnn_forward.1} parent=0
    _
  %s10 = ssub.s32 1, %s8
  %s11 = scalar_select 0, %s10, %s8
  loop: start=0, step=1, limit=4
  $region2: #{sr_cnn_forward.1} parent=0 // loop_pre_header
    _
  $region3: #{sr_cnn_forward.1} parent=0 // loop_header
    %s13 = sphi 0, %s17
    %p14 = scmp.ge.s32.totalorder %s13, 4
    %s23 = sphi 0, %s25
    %s26 = sphi 0, %s23
    %s27 = sphi 0, %s26
    %s43 = sphi 0, %s27
    %s47 = sphi 0, %s47
    %s49 = sphi 0, %s47
    %s50 = sphi 0, %s49
    %s64 = sphi 0, %s50
    %s68 = sphi 0, %s68
    %s70 = sphi 0, %s68
    %s71 = sphi 0, %s70
    %s85 = sphi 0, %s71
    %s89 = sphi 0, %s89
    %s91 = sphi 0, %s89
    %s92 = sphi 0, %s91
    %s106 = sphi 0, %s92
    %s110 = sphi 0, %s110
    %s112 = sphi 0, %s110
    %s113 = sphi 0, %s112
    %s127 = sphi 0, %s113
    %s131 = sphi 0, %s131
    %s133 = sphi 0, %s131
    %s134 = sphi 0, %s133
    %s148 = sphi 0, %s134
    %s152 = sphi 0, %s152
    %s154 = sphi 0, %s152
    %s155 = sphi 0, %s154
    %s169 = sphi 0, %s155
    %s175 = sphi 0, %s177
    %s178 = sphi 0, %s175
    %s179 = sphi 0, %s178
    %s195 = sphi 0, %s179
  $region4: #{sr_cnn_forward.1} parent=0 // loop_header_branch
    %16 = sbr.rel (%p14) target = $region8
  $region5: #{sr_cnn_forward.1} parent=0 // loop_body
    %s18 = ssub.s32 %s13, 1
    %s19 = ssub.s32 %s13, 2
    %s20 = sadd.s32 %s13, 1
    %s21 = ssub.s32 %s13, %s20
    %p22 = scmp.eq.s32.totalorder %s21, 0
    %s24 = sadd.s32 %s23, 1
    %s25 = scalar_select %p22, %s23, %s24
    %p28 = pneg %p22
    %p29 = scmp.eq.s32.totalorder %s13, 1
    %p30 = por %p28, %p29
    %p31 = scmp.ne.s32.totalorder %s23, %s26
    %p32 = scmp.eq.s32.totalorder %s13, 0
    %p33 = por %p31, %p32
    %p34 = scmp.ne.s32.totalorder %s23, %s26
    %p35 = scmp.eq.s32.totalorder %s18, 1
    %p36 = por %p34, %p35
    %p37 = scmp.ne.s32.totalorder %s26, %s27
    %p38 = scmp.eq.s32.totalorder %s18, 0
    %p39 = por %p37, %p38
    %p40 = scmp.ne.s32.totalorder %s26, %s27
    %p41 = scmp.eq.s32.totalorder %s19, 1
    %p42 = por %p40, %p41
    %p44 = scmp.ne.s32.totalorder %s27, %s43
    %p45 = scmp.eq.s32.totalorder %s19, 0
    %p46 = por %p44, %p45
    %s48 = sadd.s32 %s47, 1
    %p51 = scmp.eq.s32.totalorder %s13, 1
    %p52 = scmp.ne.s32.totalorder %s47, %s49
    %p53 = scmp.eq.s32.totalorder %s13, 0
    %p54 = por %p52, %p53
    %p55 = scmp.ne.s32.totalorder %s47, %s49
    %p56 = scmp.eq.s32.totalorder %s18, 1
    %p57 = por %p55, %p56
    %p58 = scmp.ne.s32.totalorder %s49, %s50
    %p59 = scmp.eq.s32.totalorder %s18, 0
    %p60 = por %p58, %p59
    %p61 = scmp.ne.s32.totalorder %s49, %s50
    %p62 = scmp.eq.s32.totalorder %s19, 1
    %p63 = por %p61, %p62
    %p65 = scmp.ne.s32.totalorder %s50, %s64
    %p66 = scmp.eq.s32.totalorder %s19, 0
    %p67 = por %p65, %p66
    %s69 = sadd.s32 %s68, 1
    %p72 = scmp.eq.s32.totalorder %s13, 1
    %p73 = scmp.ne.s32.totalorder %s68, %s70
    %p74 = scmp.eq.s32.totalorder %s13, 0
    %p75 = por %p73, %p74
    %p76 = scmp.ne.s32.totalorder %s68, %s70
    %p77 = scmp.eq.s32.totalorder %s18, 1
    %p78 = por %p76, %p77
    %p79 = scmp.ne.s32.totalorder %s70, %s71
    %p80 = scmp.eq.s32.totalorder %s18, 0
    %p81 = por %p79, %p80
    %p82 = scmp.ne.s32.totalorder %s70, %s71
    %p83 = scmp.eq.s32.totalorder %s19, 1
    %p84 = por %p82, %p83
    %p86 = scmp.ne.s32.totalorder %s71, %s85
    %p87 = scmp.eq.s32.totalorder %s19, 0
    %p88 = por %p86, %p87
    %s90 = sadd.s32 %s89, 1
    %p93 = scmp.eq.s32.totalorder %s13, 1
    %p94 = scmp.ne.s32.totalorder %s89, %s91
    %p95 = scmp.eq.s32.totalorder %s13, 0
    %p96 = por %p94, %p95
    %p97 = scmp.ne.s32.totalorder %s89, %s91
    %p98 = scmp.eq.s32.totalorder %s18, 1
    %p99 = por %p97, %p98
    %p100 = scmp.ne.s32.totalorder %s91, %s92
    %p101 = scmp.eq.s32.totalorder %s18, 0
    %p102 = por %p100, %p101
    %p103 = scmp.ne.s32.totalorder %s91, %s92
    %p104 = scmp.eq.s32.totalorder %s19, 1
    %p105 = por %p103, %p104
    %p107 = scmp.ne.s32.totalorder %s92, %s106
    %p108 = scmp.eq.s32.totalorder %s19, 0
    %p109 = por %p107, %p108
    %s111 = sadd.s32 %s110, 1
    %p114 = scmp.eq.s32.totalorder %s13, 1
    %p115 = scmp.ne.s32.totalorder %s110, %s112
    %p116 = scmp.eq.s32.totalorder %s13, 0
    %p117 = por %p115, %p116
    %p118 = scmp.ne.s32.totalorder %s110, %s112
    %p119 = scmp.eq.s32.totalorder %s18, 1
    %p120 = por %p118, %p119
    %p121 = scmp.ne.s32.totalorder %s112, %s113
    %p122 = scmp.eq.s32.totalorder %s18, 0
    %p123 = por %p121, %p122
    %p124 = scmp.ne.s32.totalorder %s112, %s113
    %p125 = scmp.eq.s32.totalorder %s19, 1
    %p126 = por %p124, %p125
    %p128 = scmp.ne.s32.totalorder %s113, %s127
    %p129 = scmp.eq.s32.totalorder %s19, 0
    %p130 = por %p128, %p129
    %s132 = sadd.s32 %s131, 1
    %p135 = scmp.eq.s32.totalorder %s13, 1
    %p136 = scmp.ne.s32.totalorder %s131, %s133
    %p137 = scmp.eq.s32.totalorder %s13, 0
    %p138 = por %p136, %p137
    %p139 = scmp.ne.s32.totalorder %s131, %s133
    %p140 = scmp.eq.s32.totalorder %s18, 1
    %p141 = por %p139, %p140
    %p142 = scmp.ne.s32.totalorder %s133, %s134
    %p143 = scmp.eq.s32.totalorder %s18, 0
    %p144 = por %p142, %p143
    %p145 = scmp.ne.s32.totalorder %s133, %s134
    %p146 = scmp.eq.s32.totalorder %s19, 1
    %p147 = por %p145, %p146
    %p149 = scmp.ne.s32.totalorder %s134, %s148
    %p150 = scmp.eq.s32.totalorder %s19, 0
    %p151 = por %p149, %p150
    %s153 = sadd.s32 %s152, 1
    %p156 = scmp.eq.s32.totalorder %s13, 1
    %p157 = scmp.ne.s32.totalorder %s152, %s154
    %p158 = scmp.eq.s32.totalorder %s13, 0
    %p159 = por %p157, %p158
    %p160 = scmp.ne.s32.totalorder %s152, %s154
    %p161 = scmp.eq.s32.totalorder %s18, 1
    %p162 = por %p160, %p161
    %p163 = scmp.ne.s32.totalorder %s154, %s155
    %p164 = scmp.eq.s32.totalorder %s18, 0
    %p165 = por %p163, %p164
    %p166 = scmp.ne.s32.totalorder %s154, %s155
    %p167 = scmp.eq.s32.totalorder %s19, 1
    %p168 = por %p166, %p167
    %p170 = scmp.ne.s32.totalorder %s155, %s169
    %p171 = scmp.eq.s32.totalorder %s19, 0
    %p172 = por %p170, %p171
    %s173 = ssub.s32 %s13, %s20
    %p174 = scmp.eq.s32.totalorder %s173, 0
    %s176 = sadd.s32 %s175, 1
    %s177 = scalar_select %p174, %s175, %s176
    %p180 = pneg %p174
    %p181 = scmp.eq.s32.totalorder %s13, 1
    %p182 = por %p180, %p181
    %p183 = scmp.ne.s32.totalorder %s175, %s178
    %p184 = scmp.eq.s32.totalorder %s13, 0
    %p185 = por %p183, %p184
    %p186 = scmp.ne.s32.totalorder %s175, %s178
    %p187 = scmp.eq.s32.totalorder %s18, 1
    %p188 = por %p186, %p187
    %p189 = scmp.ne.s32.totalorder %s178, %s179
    %p190 = scmp.eq.s32.totalorder %s18, 0
    %p191 = por %p189, %p190
    %p192 = scmp.ne.s32.totalorder %s178, %s179
    %p193 = scmp.eq.s32.totalorder %s19, 1
    %p194 = por %p192, %p193
    %p196 = scmp.ne.s32.totalorder %s179, %s195
    %p197 = scmp.eq.s32.totalorder %s19, 0
    %p198 = por %p196, %p197
    %p199 = scmp.le.s32.totalorder 1, %s13
    %p200 = scmp.lt.s32.totalorder %s13, 3
    %p201 = pnand %p199, %p200
    %p202 = pneg %p201
    // Predicated region
    $region9: #{sr_cnn_forward.1} parent=5 // pred_check
      _
    $region10: #{sr_cnn_forward.1} parent=5 // pred_check_branch
      %204 = sbr.rel (%p201) target = $region12
    $region11: #{sr_cnn_forward.1} parent=5 // pred_region
      %s205 = ssub.s32 %s13, 1
      // Predicated region
      $region13: #{sr_cnn_forward.1} parent=11 // pred_check
        %p206 = pneg %p60
      $region14: #{sr_cnn_forward.1} parent=11 // pred_check_branch
        %208 = sbr.rel (%p206) target = $region16
      $region15: #{sr_cnn_forward.1} parent=11 // pred_region
        _
      $region16: #{sr_cnn_forward.1} parent=11 // pred_fallthru
        _
      // Predicated region
      $region17: #{sr_cnn_forward.1} parent=11 // pred_check
        %p209 = pneg %p81
      $region18: #{sr_cnn_forward.1} parent=11 // pred_check_branch
        %211 = sbr.rel (%p209) target = $region20
      $region19: #{sr_cnn_forward.1} parent=11 // pred_region
        _
      $region20: #{sr_cnn_forward.1} parent=11 // pred_fallthru
        _
      // Predicated region
      $region21: #{sr_cnn_forward.1} parent=11 // pred_check
        %p212 = pneg %p102
      $region22: #{sr_cnn_forward.1} parent=11 // pred_check_branch
        %214 = sbr.rel (%p212) target = $region24
      $region23: #{sr_cnn_forward.1} parent=11 // pred_region
        _
      $region24: #{sr_cnn_forward.1} parent=11 // pred_fallthru
        _
      // Predicated region
      $region25: #{sr_cnn_forward.1} parent=11 // pred_check
        %p215 = pneg %p123
      $region26: #{sr_cnn_forward.1} parent=11 // pred_check_branch
        %217 = sbr.rel (%p215) target = $region28
      $region27: #{sr_cnn_forward.1} parent=11 // pred_region
        _
      $region28: #{sr_cnn_forward.1} parent=11 // pred_fallthru
        _
      // Predicated region
      $region29: #{sr_cnn_forward.1} parent=11 // pred_check
        %p218 = pneg %p144
      $region30: #{sr_cnn_forward.1} parent=11 // pred_check_branch
        %220 = sbr.rel (%p218) target = $region32
      $region31: #{sr_cnn_forward.1} parent=11 // pred_region
        _
      $region32: #{sr_cnn_forward.1} parent=11 // pred_fallthru
        _
      // Predicated region
      $region33: #{sr_cnn_forward.1} parent=11 // pred_check
        %p221 = pneg %p165
      $region34: #{sr_cnn_forward.1} parent=11 // pred_check_branch
        %223 = sbr.rel (%p221) target = $region36
      $region35: #{sr_cnn_forward.1} parent=11 // pred_region
        _
      $region36: #{sr_cnn_forward.1} parent=11 // pred_fallthru
        _
    $region12: #{sr_cnn_forward.1} parent=5 // pred_fallthru
      _
    %p224 = scmp.lt.s32.totalorder %s13, 2
    // Predicated region
    $region37: #{sr_cnn_forward.1} parent=5 // pred_check
      %p225 = pneg %p224
    $region38: #{sr_cnn_forward.1} parent=5 // pred_check_branch
      %227 = sbr.rel (%p225) target = $region40
    $region39: #{sr_cnn_forward.1} parent=5 // pred_region
      // Predicated region
      $region41: #{sr_cnn_forward.1} parent=39 // pred_check
        %p228 = pneg %p33
      $region42: #{sr_cnn_forward.1} parent=39 // pred_check_branch
        %230 = sbr.rel (%p228) target = $region44
      $region43: #{sr_cnn_forward.1} parent=39 // pred_region
        %p231 = scmp.lt.s32.totalorder %s13, 1
        %s232 = scalar_select %p231, %s13, 1
        %s233 = smul.addr %s232, 96
        %s234 = smul.addr %s233, 8
        %s235 = scalar_lea.vmem %s0, %s234
      $region44: #{sr_cnn_forward.1} parent=39 // pred_fallthru
        _
    $region40: #{sr_cnn_forward.1} parent=5 // pred_fallthru
      _
    %p236 = scmp.le.s32.totalorder 1, %s13
    %p237 = scmp.lt.s32.totalorder %s13, 3
    %p238 = pnand %p236, %p237
    %p239 = pneg %p238
    // Predicated region
    $region45: #{sr_cnn_forward.1} parent=5 // pred_check
      _
    $region46: #{sr_cnn_forward.1} parent=5 // pred_check_branch
      %241 = sbr.rel (%p238) target = $region48
    $region47: #{sr_cnn_forward.1} parent=5 // pred_region
      %s242 = ssub.s32 %s13, 1
      %p243 = scmp.lt.s32.totalorder %s18, 1
      %s244 = scalar_select %p243, %s18, 1
      %s245 = smul.addr %s244, 96
      %s246 = smul.addr %s245, 8
      %s247 = scalar_lea.vmem %s0, %s246
      %p248 = pneg %p39
      %p249 = pneg %p36
      %p250 = pneg %p60
      %p251 = pneg %p57
      %p252 = pneg %p81
      %p253 = pneg %p78
      %p254 = pneg %p102
      %p255 = pneg %p99
      %p256 = pneg %p123
      %p257 = pneg %p120
      %p258 = pneg %p144
      %p259 = pneg %p141
      %p260 = pneg %p165
      %p261 = pneg %p162
      %p262 = pneg %p191
      %p263 = pneg %p188
      %p264 = scmp.lt.s32.totalorder %s18, 1
      %s265 = scalar_select %p264, %s18, 1
      %s266 = smul.addr %s265, 3
      %s267 = smul.addr %s266, 8
      %s268 = scalar_lea.vmem %s7, %s267
      %p269 = scmp.lt.s32.totalorder %s18, 1
      %s270 = scalar_select %p269, %s18, 1
      %s271 = smul.addr %s270, 96
      %s272 = smul.addr %s271, 8
      %s273 = scalar_lea.vmem %s0, %s272
      %p274 = scmp.lt.s32.totalorder %s18, 1
      %s275 = scalar_select %p274, %s18, 1
      %s276 = smul.addr %s275, 3
      %s277 = smul.addr %s276, 8
      %s278 = scalar_lea.vmem %s7, %s277
      %v279 = vlaneseq
      %v280 = vshrl.u32 %v279, 7
      %v281 = vadd.s32 %v280, 8
      %v282 = vadd.s32 %v280, 16
      %v283 = vadd.s32 %v280, 24
      %v284 = vadd.s32 %v280, 32
      %v285 = vadd.s32 %v280, 40
      %v286 = vadd.s32 %v280, 48
      %v287 = vadd.s32 %v280, 56
      %v288 = vadd.s32 %v280, 64
      %v289 = vadd.s32 %v280, 72
      %v290 = vadd.s32 %v280, 80
      %v291 = vadd.s32 %v280, 88
      %v292 = vadd.s32 %v280, 96
      %v293 = vadd.s32 %v280, 104
      %v294 = vadd.s32 %v280, 112
      %v295 = vadd.s32 %v280, 120
      %v296 = vadd.s32 %v280, 128
      %v297 = vadd.s32 %v280, 136
      %v298 = vadd.s32 %v280, 144
      %v299 = vadd.s32 %v280, 152
      %v300 = vadd.s32 %v280, 160
      %v301 = vadd.s32 %v280, 168
      %v302 = vadd.s32 %v280, 176
      %v303 = vadd.s32 %v280, 184
      %v304 = vadd.s32 %v280, 192
      %v305 = vadd.s32 %v280, 200
      %v306 = vadd.s32 %v280, 208
      %v307 = vadd.s32 %v280, 216
      %v308 = vadd.s32 %v280, 224
      %v309 = vadd.s32 %v280, 232
      %v310 = vadd.s32 %v280, 240
      %v311 = vadd.s32 %v280, 248
      %v312 = vadd.s32 %v280, 256
      %v313 = vadd.s32 %v280, 264
      %v314 = vadd.s32 %v280, 272
      %v315 = vadd.s32 %v280, 280
      %v316 = vadd.s32 %v280, 288
      %v317 = vadd.s32 %v280, 296
      %v318 = vadd.s32 %v280, 304
      %v319 = vadd.s32 %v280, 312
      %v320 = vadd.s32 %v280, 320
      %v321 = vadd.s32 %v280, 328
      %v322 = vadd.s32 %v280, 336
      %v323 = vadd.s32 %v280, 344
      %v324 = vadd.s32 %v280, 352
      %v325 = vadd.s32 %v280, 360
      %v326 = vadd.s32 %v280, 368
      %v327 = vadd.s32 %v280, 376
      %vm328 = vcmp.lt.s32.totalorder %v280, 0
      %v329 = vsub.s32 0, %v280
      %v330 = vsel %vm328, %v329, %v280
      %v331 = vmul.u32.u64.compose %v330, 2863311531
      %v332 = vextract.low.u32 %v331
      %v333 = vextract.high.u32 %v331
      %v334 = vshrl.u32 %v333, 4
      %v335 = vmul.u32 %v334, 24
      %v336 = vsub.s32 %v330, %v335
      %v337 = vsub.s32 0, %v336
      %v338 = vsel %vm328, %v337, %v336
      %vm339 = vcmp.lt.s32.totalorder %v281, 0
      %v340 = vsub.s32 0, %v281
      %v341 = vsel %vm339, %v340, %v281
      %v342 = vmul.u32.u64.compose %v341, 2863311531
      %v343 = vextract.low.u32 %v342
      %v344 = vextract.high.u32 %v342
      %v345 = vshrl.u32 %v344, 4
      %v346 = vmul.u32 %v345, 24
      %v347 = vsub.s32 %v341, %v346
      %v348 = vsub.s32 0, %v347
      %v349 = vsel %vm339, %v348, %v347
      %vm350 = vcmp.lt.s32.totalorder %v282, 0
      %v351 = vsub.s32 0, %v282
      %v352 = vsel %vm350, %v351, %v282
      %v353 = vmul.u32.u64.compose %v352, 2863311531
      %v354 = vextract.low.u32 %v353
      %v355 = vextract.high.u32 %v353
      %v356 = vshrl.u32 %v355, 4
      %v357 = vmul.u32 %v356, 24
      %v358 = vsub.s32 %v352, %v357
      %v359 = vsub.s32 0, %v358
      %v360 = vsel %vm350, %v359, %v358
      %vm361 = vcmp.lt.s32.totalorder %v283, 0
      %v362 = vsub.s32 0, %v283
      %v363 = vsel %vm361, %v362, %v283
      %v364 = vmul.u32.u64.compose %v363, 2863311531
      %v365 = vextract.low.u32 %v364
      %v366 = vextract.high.u32 %v364
      %v367 = vshrl.u32 %v366, 4
      %v368 = vmul.u32 %v367, 24
      %v369 = vsub.s32 %v363, %v368
      %v370 = vsub.s32 0, %v369
      %v371 = vsel %vm361, %v370, %v369
      %vm372 = vcmp.lt.s32.totalorder %v284, 0
      %v373 = vsub.s32 0, %v284
      %v374 = vsel %vm372, %v373, %v284
      %v375 = vmul.u32.u64.compose %v374, 2863311531
      %v376 = vextract.low.u32 %v375
      %v377 = vextract.high.u32 %v375
      %v378 = vshrl.u32 %v377, 4
      %v379 = vmul.u32 %v378, 24
      %v380 = vsub.s32 %v374, %v379
      %v381 = vsub.s32 0, %v380
      %v382 = vsel %vm372, %v381, %v380
      %vm383 = vcmp.lt.s32.totalorder %v285, 0
      %v384 = vsub.s32 0, %v285
      %v385 = vsel %vm383, %v384, %v285
      %v386 = vmul.u32.u64.compose %v385, 2863311531
      %v387 = vextract.low.u32 %v386
      %v388 = vextract.high.u32 %v386
      %v389 = vshrl.u32 %v388, 4
      %v390 = vmul.u32 %v389, 24
      %v391 = vsub.s32 %v385, %v390
      %v392 = vsub.s32 0, %v391
      %v393 = vsel %vm383, %v392, %v391
      %vm394 = vcmp.lt.s32.totalorder %v286, 0
      %v395 = vsub.s32 0, %v286
      %v396 = vsel %vm394, %v395, %v286
      %v397 = vmul.u32.u64.compose %v396, 2863311531
      %v398 = vextract.low.u32 %v397
      %v399 = vextract.high.u32 %v397
      %v400 = vshrl.u32 %v399, 4
      %v401 = vmul.u32 %v400, 24
      %v402 = vsub.s32 %v396, %v401
      %v403 = vsub.s32 0, %v402
      %v404 = vsel %vm394, %v403, %v402
      %vm405 = vcmp.lt.s32.totalorder %v287, 0
      %v406 = vsub.s32 0, %v287
      %v407 = vsel %vm405, %v406, %v287
      %v408 = vmul.u32.u64.compose %v407, 2863311531
      %v409 = vextract.low.u32 %v408
      %v410 = vextract.high.u32 %v408
      %v411 = vshrl.u32 %v410, 4
      %v412 = vmul.u32 %v411, 24
      %v413 = vsub.s32 %v407, %v412
      %v414 = vsub.s32 0, %v413
      %v415 = vsel %vm405, %v414, %v413
      %vm416 = vcmp.lt.s32.totalorder %v288, 0
      %v417 = vsub.s32 0, %v288
      %v418 = vsel %vm416, %v417, %v288
      %v419 = vmul.u32.u64.compose %v418, 2863311531
      %v420 = vextract.low.u32 %v419
      %v421 = vextract.high.u32 %v419
      %v422 = vshrl.u32 %v421, 4
      %v423 = vmul.u32 %v422, 24
      %v424 = vsub.s32 %v418, %v423
      %v425 = vsub.s32 0, %v424
      %v426 = vsel %vm416, %v425, %v424
      %vm427 = vcmp.lt.s32.totalorder %v289, 0
      %v428 = vsub.s32 0, %v289
      %v429 = vsel %vm427, %v428, %v289
      %v430 = vmul.u32.u64.compose %v429, 2863311531
      %v431 = vextract.low.u32 %v430
      %v432 = vextract.high.u32 %v430
      %v433 = vshrl.u32 %v432, 4
      %v434 = vmul.u32 %v433, 24
      %v435 = vsub.s32 %v429, %v434
      %v436 = vsub.s32 0, %v435
      %v437 = vsel %vm427, %v436, %v435
      %vm438 = vcmp.lt.s32.totalorder %v290, 0
      %v439 = vsub.s32 0, %v290
      %v440 = vsel %vm438, %v439, %v290
      %v441 = vmul.u32.u64.compose %v440, 2863311531
      %v442 = vextract.low.u32 %v441
      %v443 = vextract.high.u32 %v441
      %v444 = vshrl.u32 %v443, 4
      %v445 = vmul.u32 %v444, 24
      %v446 = vsub.s32 %v440, %v445
      %v447 = vsub.s32 0, %v446
      %v448 = vsel %vm438, %v447, %v446
      %vm449 = vcmp.lt.s32.totalorder %v291, 0
      %v450 = vsub.s32 0, %v291
      %v451 = vsel %vm449, %v450, %v291
      %v452 = vmul.u32.u64.compose %v451, 2863311531
      %v453 = vextract.low.u32 %v452
      %v454 = vextract.high.u32 %v452
      %v455 = vshrl.u32 %v454, 4
      %v456 = vmul.u32 %v455, 24
      %v457 = vsub.s32 %v451, %v456
      %v458 = vsub.s32 0, %v457
      %v459 = vsel %vm449, %v458, %v457
      %vm460 = vcmp.lt.s32.totalorder %v292, 0
      %v461 = vsub.s32 0, %v292
      %v462 = vsel %vm460, %v461, %v292
      %v463 = vmul.u32.u64.compose %v462, 2863311531
      %v464 = vextract.low.u32 %v463
      %v465 = vextract.high.u32 %v463
      %v466 = vshrl.u32 %v465, 4
      %v467 = vmul.u32 %v466, 24
      %v468 = vsub.s32 %v462, %v467
      %v469 = vsub.s32 0, %v468
      %v470 = vsel %vm460, %v469, %v468
      %vm471 = vcmp.lt.s32.totalorder %v293, 0
      %v472 = vsub.s32 0, %v293
      %v473 = vsel %vm471, %v472, %v293
      %v474 = vmul.u32.u64.compose %v473, 2863311531
      %v475 = vextract.low.u32 %v474
      %v476 = vextract.high.u32 %v474
      %v477 = vshrl.u32 %v476, 4
      %v478 = vmul.u32 %v477, 24
      %v479 = vsub.s32 %v473, %v478
      %v480 = vsub.s32 0, %v479
      %v481 = vsel %vm471, %v480, %v479
      %vm482 = vcmp.lt.s32.totalorder %v294, 0
      %v483 = vsub.s32 0, %v294
      %v484 = vsel %vm482, %v483, %v294
      %v485 = vmul.u32.u64.compose %v484, 2863311531
      %v486 = vextract.low.u32 %v485
      %v487 = vextract.high.u32 %v485
      %v488 = vshrl.u32 %v487, 4
      %v489 = vmul.u32 %v488, 24
      %v490 = vsub.s32 %v484, %v489
      %v491 = vsub.s32 0, %v490
      %v492 = vsel %vm482, %v491, %v490
      %vm493 = vcmp.lt.s32.totalorder %v295, 0
      %v494 = vsub.s32 0, %v295
      %v495 = vsel %vm493, %v494, %v295
      %v496 = vmul.u32.u64.compose %v495, 2863311531
      %v497 = vextract.low.u32 %v496
      %v498 = vextract.high.u32 %v496
      %v499 = vshrl.u32 %v498, 4
      %v500 = vmul.u32 %v499, 24
      %v501 = vsub.s32 %v495, %v500
      %v502 = vsub.s32 0, %v501
      %v503 = vsel %vm493, %v502, %v501
      %vm504 = vcmp.lt.s32.totalorder %v296, 0
      %v505 = vsub.s32 0, %v296
      %v506 = vsel %vm504, %v505, %v296
      %v507 = vmul.u32.u64.compose %v506, 2863311531
      %v508 = vextract.low.u32 %v507
      %v509 = vextract.high.u32 %v507
      %v510 = vshrl.u32 %v509, 4
      %v511 = vmul.u32 %v510, 24
      %v512 = vsub.s32 %v506, %v511
      %v513 = vsub.s32 0, %v512
      %v514 = vsel %vm504, %v513, %v512
      %vm515 = vcmp.lt.s32.totalorder %v297, 0
      %v516 = vsub.s32 0, %v297
      %v517 = vsel %vm515, %v516, %v297
      %v518 = vmul.u32.u64.compose %v517, 2863311531
      %v519 = vextract.low.u32 %v518
      %v520 = vextract.high.u32 %v518
      %v521 = vshrl.u32 %v520, 4
      %v522 = vmul.u32 %v521, 24
      %v523 = vsub.s32 %v517, %v522
      %v524 = vsub.s32 0, %v523
      %v525 = vsel %vm515, %v524, %v523
      %vm526 = vcmp.lt.s32.totalorder %v298, 0
      %v527 = vsub.s32 0, %v298
      %v528 = vsel %vm526, %v527, %v298
      %v529 = vmul.u32.u64.compose %v528, 2863311531
      %v530 = vextract.low.u32 %v529
      %v531 = vextract.high.u32 %v529
      %v532 = vshrl.u32 %v531, 4
      %v533 = vmul.u32 %v532, 24
      %v534 = vsub.s32 %v528, %v533
      %v535 = vsub.s32 0, %v534
      %v536 = vsel %vm526, %v535, %v534
      %vm537 = vcmp.lt.s32.totalorder %v299, 0
      %v538 = vsub.s32 0, %v299
      %v539 = vsel %vm537, %v538, %v299
      %v540 = vmul.u32.u64.compose %v539, 2863311531
      %v541 = vextract.low.u32 %v540
      %v542 = vextract.high.u32 %v540
      %v543 = vshrl.u32 %v542, 4
      %v544 = vmul.u32 %v543, 24
      %v545 = vsub.s32 %v539, %v544
      %v546 = vsub.s32 0, %v545
      %v547 = vsel %vm537, %v546, %v545
      %vm548 = vcmp.lt.s32.totalorder %v300, 0
      %v549 = vsub.s32 0, %v300
      %v550 = vsel %vm548, %v549, %v300
      %v551 = vmul.u32.u64.compose %v550, 2863311531
      %v552 = vextract.low.u32 %v551
      %v553 = vextract.high.u32 %v551
      %v554 = vshrl.u32 %v553, 4
      %v555 = vmul.u32 %v554, 24
      %v556 = vsub.s32 %v550, %v555
      %v557 = vsub.s32 0, %v556
      %v558 = vsel %vm548, %v557, %v556
      %vm559 = vcmp.lt.s32.totalorder %v301, 0
      %v560 = vsub.s32 0, %v301
      %v561 = vsel %vm559, %v560, %v301
      %v562 = vmul.u32.u64.compose %v561, 2863311531
      %v563 = vextract.low.u32 %v562
      %v564 = vextract.high.u32 %v562
      %v565 = vshrl.u32 %v564, 4
      %v566 = vmul.u32 %v565, 24
      %v567 = vsub.s32 %v561, %v566
      %v568 = vsub.s32 0, %v567
      %v569 = vsel %vm559, %v568, %v567
      %vm570 = vcmp.lt.s32.totalorder %v302, 0
      %v571 = vsub.s32 0, %v302
      %v572 = vsel %vm570, %v571, %v302
      %v573 = vmul.u32.u64.compose %v572, 2863311531
      %v574 = vextract.low.u32 %v573
      %v575 = vextract.high.u32 %v573
      %v576 = vshrl.u32 %v575, 4
      %v577 = vmul.u32 %v576, 24
      %v578 = vsub.s32 %v572, %v577
      %v579 = vsub.s32 0, %v578
      %v580 = vsel %vm570, %v579, %v578
      %vm581 = vcmp.lt.s32.totalorder %v303, 0
      %v582 = vsub.s32 0, %v303
      %v583 = vsel %vm581, %v582, %v303
      %v584 = vmul.u32.u64.compose %v583, 2863311531
      %v585 = vextract.low.u32 %v584
      %v586 = vextract.high.u32 %v584
      %v587 = vshrl.u32 %v586, 4
      %v588 = vmul.u32 %v587, 24
      %v589 = vsub.s32 %v583, %v588
      %v590 = vsub.s32 0, %v589
      %v591 = vsel %vm581, %v590, %v589
      %vm592 = vcmp.lt.s32.totalorder %v304, 0
      %v593 = vsub.s32 0, %v304
      %v594 = vsel %vm592, %v593, %v304
      %v595 = vmul.u32.u64.compose %v594, 2863311531
      %v596 = vextract.low.u32 %v595
      %v597 = vextract.high.u32 %v595
      %v598 = vshrl.u32 %v597, 4
      %v599 = vmul.u32 %v598, 24
      %v600 = vsub.s32 %v594, %v599
      %v601 = vsub.s32 0, %v600
      %v602 = vsel %vm592, %v601, %v600
      %vm603 = vcmp.lt.s32.totalorder %v305, 0
      %v604 = vsub.s32 0, %v305
      %v605 = vsel %vm603, %v604, %v305
      %v606 = vmul.u32.u64.compose %v605, 2863311531
      %v607 = vextract.low.u32 %v606
      %v608 = vextract.high.u32 %v606
      %v609 = vshrl.u32 %v608, 4
      %v610 = vmul.u32 %v609, 24
      %v611 = vsub.s32 %v605, %v610
      %v612 = vsub.s32 0, %v611
      %v613 = vsel %vm603, %v612, %v611
      %vm614 = vcmp.lt.s32.totalorder %v306, 0
      %v615 = vsub.s32 0, %v306
      %v616 = vsel %vm614, %v615, %v306
      %v617 = vmul.u32.u64.compose %v616, 2863311531
      %v618 = vextract.low.u32 %v617
      %v619 = vextract.high.u32 %v617
      %v620 = vshrl.u32 %v619, 4
      %v621 = vmul.u32 %v620, 24
      %v622 = vsub.s32 %v616, %v621
      %v623 = vsub.s32 0, %v622
      %v624 = vsel %vm614, %v623, %v622
      %vm625 = vcmp.lt.s32.totalorder %v307, 0
      %v626 = vsub.s32 0, %v307
      %v627 = vsel %vm625, %v626, %v307
      %v628 = vmul.u32.u64.compose %v627, 2863311531
      %v629 = vextract.low.u32 %v628
      %v630 = vextract.high.u32 %v628
      %v631 = vshrl.u32 %v630, 4
      %v632 = vmul.u32 %v631, 24
      %v633 = vsub.s32 %v627, %v632
      %v634 = vsub.s32 0, %v633
      %v635 = vsel %vm625, %v634, %v633
      %vm636 = vcmp.lt.s32.totalorder %v308, 0
      %v637 = vsub.s32 0, %v308
      %v638 = vsel %vm636, %v637, %v308
      %v639 = vmul.u32.u64.compose %v638, 2863311531
      %v640 = vextract.low.u32 %v639
      %v641 = vextract.high.u32 %v639
      %v642 = vshrl.u32 %v641, 4
      %v643 = vmul.u32 %v642, 24
      %v644 = vsub.s32 %v638, %v643
      %v645 = vsub.s32 0, %v644
      %v646 = vsel %vm636, %v645, %v644
      %vm647 = vcmp.lt.s32.totalorder %v309, 0
      %v648 = vsub.s32 0, %v309
      %v649 = vsel %vm647, %v648, %v309
      %v650 = vmul.u32.u64.compose %v649, 2863311531
      %v651 = vextract.low.u32 %v650
      %v652 = vextract.high.u32 %v650
      %v653 = vshrl.u32 %v652, 4
      %v654 = vmul.u32 %v653, 24
      %v655 = vsub.s32 %v649, %v654
      %v656 = vsub.s32 0, %v655
      %v657 = vsel %vm647, %v656, %v655
      %vm658 = vcmp.lt.s32.totalorder %v310, 0
      %v659 = vsub.s32 0, %v310
      %v660 = vsel %vm658, %v659, %v310
      %v661 = vmul.u32.u64.compose %v660, 2863311531
      %v662 = vextract.low.u32 %v661
      %v663 = vextract.high.u32 %v661
      %v664 = vshrl.u32 %v663, 4
      %v665 = vmul.u32 %v664, 24
      %v666 = vsub.s32 %v660, %v665
      %v667 = vsub.s32 0, %v666
      %v668 = vsel %vm658, %v667, %v666
      %vm669 = vcmp.lt.s32.totalorder %v311, 0
      %v670 = vsub.s32 0, %v311
      %v671 = vsel %vm669, %v670, %v311
      %v672 = vmul.u32.u64.compose %v671, 2863311531
      %v673 = vextract.low.u32 %v672
      %v674 = vextract.high.u32 %v672
      %v675 = vshrl.u32 %v674, 4
      %v676 = vmul.u32 %v675, 24
      %v677 = vsub.s32 %v671, %v676
      %v678 = vsub.s32 0, %v677
      %v679 = vsel %vm669, %v678, %v677
      %vm680 = vcmp.lt.s32.totalorder %v312, 0
      %v681 = vsub.s32 0, %v312
      %v682 = vsel %vm680, %v681, %v312
      %v683 = vmul.u32.u64.compose %v682, 2863311531
      %v684 = vextract.low.u32 %v683
      %v685 = vextract.high.u32 %v683
      %v686 = vshrl.u32 %v685, 4
      %v687 = vmul.u32 %v686, 24
      %v688 = vsub.s32 %v682, %v687
      %v689 = vsub.s32 0, %v688
      %v690 = vsel %vm680, %v689, %v688
      %vm691 = vcmp.lt.s32.totalorder %v313, 0
      %v692 = vsub.s32 0, %v313
      %v693 = vsel %vm691, %v692, %v313
      %v694 = vmul.u32.u64.compose %v693, 2863311531
      %v695 = vextract.low.u32 %v694
      %v696 = vextract.high.u32 %v694
      %v697 = vshrl.u32 %v696, 4
      %v698 = vmul.u32 %v697, 24
      %v699 = vsub.s32 %v693, %v698
      %v700 = vsub.s32 0, %v699
      %v701 = vsel %vm691, %v700, %v699
      %vm702 = vcmp.lt.s32.totalorder %v314, 0
      %v703 = vsub.s32 0, %v314
      %v704 = vsel %vm702, %v703, %v314
      %v705 = vmul.u32.u64.compose %v704, 2863311531
      %v706 = vextract.low.u32 %v705
      %v707 = vextract.high.u32 %v705
      %v708 = vshrl.u32 %v707, 4
      %v709 = vmul.u32 %v708, 24
      %v710 = vsub.s32 %v704, %v709
      %v711 = vsub.s32 0, %v710
      %v712 = vsel %vm702, %v711, %v710
      %vm713 = vcmp.lt.s32.totalorder %v315, 0
      %v714 = vsub.s32 0, %v315
      %v715 = vsel %vm713, %v714, %v315
      %v716 = vmul.u32.u64.compose %v715, 2863311531
      %v717 = vextract.low.u32 %v716
      %v718 = vextract.high.u32 %v716
      %v719 = vshrl.u32 %v718, 4
      %v720 = vmul.u32 %v719, 24
      %v721 = vsub.s32 %v715, %v720
      %v722 = vsub.s32 0, %v721
      %v723 = vsel %vm713, %v722, %v721
      %vm724 = vcmp.lt.s32.totalorder %v316, 0
      %v725 = vsub.s32 0, %v316
      %v726 = vsel %vm724, %v725, %v316
      %v727 = vmul.u32.u64.compose %v726, 2863311531
      %v728 = vextract.low.u32 %v727
      %v729 = vextract.high.u32 %v727
      %v730 = vshrl.u32 %v729, 4
      %v731 = vmul.u32 %v730, 24
      %v732 = vsub.s32 %v726, %v731
      %v733 = vsub.s32 0, %v732
      %v734 = vsel %vm724, %v733, %v732
      %vm735 = vcmp.lt.s32.totalorder %v317, 0
      %v736 = vsub.s32 0, %v317
      %v737 = vsel %vm735, %v736, %v317
      %v738 = vmul.u32.u64.compose %v737, 2863311531
      %v739 = vextract.low.u32 %v738
      %v740 = vextract.high.u32 %v738
      %v741 = vshrl.u32 %v740, 4
      %v742 = vmul.u32 %v741, 24
      %v743 = vsub.s32 %v737, %v742
      %v744 = vsub.s32 0, %v743
      %v745 = vsel %vm735, %v744, %v743
      %vm746 = vcmp.lt.s32.totalorder %v318, 0
      %v747 = vsub.s32 0, %v318
      %v748 = vsel %vm746, %v747, %v318
      %v749 = vmul.u32.u64.compose %v748, 2863311531
      %v750 = vextract.low.u32 %v749
      %v751 = vextract.high.u32 %v749
      %v752 = vshrl.u32 %v751, 4
      %v753 = vmul.u32 %v752, 24
      %v754 = vsub.s32 %v748, %v753
      %v755 = vsub.s32 0, %v754
      %v756 = vsel %vm746, %v755, %v754
      %vm757 = vcmp.lt.s32.totalorder %v319, 0
      %v758 = vsub.s32 0, %v319
      %v759 = vsel %vm757, %v758, %v319
      %v760 = vmul.u32.u64.compose %v759, 2863311531
      %v761 = vextract.low.u32 %v760
      %v762 = vextract.high.u32 %v760
      %v763 = vshrl.u32 %v762, 4
      %v764 = vmul.u32 %v763, 24
      %v765 = vsub.s32 %v759, %v764
      %v766 = vsub.s32 0, %v765
      %v767 = vsel %vm757, %v766, %v765
      %vm768 = vcmp.lt.s32.totalorder %v320, 0
      %v769 = vsub.s32 0, %v320
      %v770 = vsel %vm768, %v769, %v320
      %v771 = vmul.u32.u64.compose %v770, 2863311531
      %v772 = vextract.low.u32 %v771
      %v773 = vextract.high.u32 %v771
      %v774 = vshrl.u32 %v773, 4
      %v775 = vmul.u32 %v774, 24
      %v776 = vsub.s32 %v770, %v775
      %v777 = vsub.s32 0, %v776
      %v778 = vsel %vm768, %v777, %v776
      %vm779 = vcmp.lt.s32.totalorder %v321, 0
      %v780 = vsub.s32 0, %v321
      %v781 = vsel %vm779, %v780, %v321
      %v782 = vmul.u32.u64.compose %v781, 2863311531
      %v783 = vextract.low.u32 %v782
      %v784 = vextract.high.u32 %v782
      %v785 = vshrl.u32 %v784, 4
      %v786 = vmul.u32 %v785, 24
      %v787 = vsub.s32 %v781, %v786
      %v788 = vsub.s32 0, %v787
      %v789 = vsel %vm779, %v788, %v787
      %vm790 = vcmp.lt.s32.totalorder %v322, 0
      %v791 = vsub.s32 0, %v322
      %v792 = vsel %vm790, %v791, %v322
      %v793 = vmul.u32.u64.compose %v792, 2863311531
      %v794 = vextract.low.u32 %v793
      %v795 = vextract.high.u32 %v793
      %v796 = vshrl.u32 %v795, 4
      %v797 = vmul.u32 %v796, 24
      %v798 = vsub.s32 %v792, %v797
      %v799 = vsub.s32 0, %v798
      %v800 = vsel %vm790, %v799, %v798
      %vm801 = vcmp.lt.s32.totalorder %v323, 0
      %v802 = vsub.s32 0, %v323
      %v803 = vsel %vm801, %v802, %v323
      %v804 = vmul.u32.u64.compose %v803, 2863311531
      %v805 = vextract.low.u32 %v804
      %v806 = vextract.high.u32 %v804
      %v807 = vshrl.u32 %v806, 4
      %v808 = vmul.u32 %v807, 24
      %v809 = vsub.s32 %v803, %v808
      %v810 = vsub.s32 0, %v809
      %v811 = vsel %vm801, %v810, %v809
      %vm812 = vcmp.lt.s32.totalorder %v324, 0
      %v813 = vsub.s32 0, %v324
      %v814 = vsel %vm812, %v813, %v324
      %v815 = vmul.u32.u64.compose %v814, 2863311531
      %v816 = vextract.low.u32 %v815
      %v817 = vextract.high.u32 %v815
      %v818 = vshrl.u32 %v817, 4
      %v819 = vmul.u32 %v818, 24
      %v820 = vsub.s32 %v814, %v819
      %v821 = vsub.s32 0, %v820
      %v822 = vsel %vm812, %v821, %v820
      %vm823 = vcmp.lt.s32.totalorder %v325, 0
      %v824 = vsub.s32 0, %v325
      %v825 = vsel %vm823, %v824, %v325
      %v826 = vmul.u32.u64.compose %v825, 2863311531
      %v827 = vextract.low.u32 %v826
      %v828 = vextract.high.u32 %v826
      %v829 = vshrl.u32 %v828, 4
      %v830 = vmul.u32 %v829, 24
      %v831 = vsub.s32 %v825, %v830
      %v832 = vsub.s32 0, %v831
      %v833 = vsel %vm823, %v832, %v831
      %vm834 = vcmp.lt.s32.totalorder %v326, 0
      %v835 = vsub.s32 0, %v326
      %v836 = vsel %vm834, %v835, %v326
      %v837 = vmul.u32.u64.compose %v836, 2863311531
      %v838 = vextract.low.u32 %v837
      %v839 = vextract.high.u32 %v837
      %v840 = vshrl.u32 %v839, 4
      %v841 = vmul.u32 %v840, 24
      %v842 = vsub.s32 %v836, %v841
      %v843 = vsub.s32 0, %v842
      %v844 = vsel %vm834, %v843, %v842
      %vm845 = vcmp.lt.s32.totalorder %v327, 0
      %v846 = vsub.s32 0, %v327
      %v847 = vsel %vm845, %v846, %v327
      %v848 = vmul.u32.u64.compose %v847, 2863311531
      %v849 = vextract.low.u32 %v848
      %v850 = vextract.high.u32 %v848
      %v851 = vshrl.u32 %v850, 4
      %v852 = vmul.u32 %v851, 24
      %v853 = vsub.s32 %v847, %v852
      %v854 = vsub.s32 0, %v853
      %v855 = vsel %vm845, %v854, %v853
      %vm856 = vcmp.ne.s32.totalorder %v338, 0
      %vm857 = vcmp.ne.s32.totalorder %v349, 0
      %vm858 = vcmp.ne.s32.totalorder %v360, 0
      %vm859 = vcmp.ne.s32.totalorder %v371, 0
      %vm860 = vcmp.ne.s32.totalorder %v382, 0
      %vm861 = vcmp.ne.s32.totalorder %v393, 0
      %vm862 = vcmp.ne.s32.totalorder %v404, 0
      %vm863 = vcmp.ne.s32.totalorder %v415, 0
      %vm864 = vcmp.ne.s32.totalorder %v426, 0
      %vm865 = vcmp.ne.s32.totalorder %v437, 0
      %vm866 = vcmp.ne.s32.totalorder %v448, 0
      %vm867 = vcmp.ne.s32.totalorder %v459, 0
      %vm868 = vcmp.ne.s32.totalorder %v470, 0
      %vm869 = vcmp.ne.s32.totalorder %v481, 0
      %vm870 = vcmp.ne.s32.totalorder %v492, 0
      %vm871 = vcmp.ne.s32.totalorder %v503, 0
      %vm872 = vcmp.ne.s32.totalorder %v514, 0
      %vm873 = vcmp.ne.s32.totalorder %v525, 0
      %vm874 = vcmp.ne.s32.totalorder %v536, 0
      %vm875 = vcmp.ne.s32.totalorder %v547, 0
      %vm876 = vcmp.ne.s32.totalorder %v558, 0
      %vm877 = vcmp.ne.s32.totalorder %v569, 0
      %vm878 = vcmp.ne.s32.totalorder %v580, 0
      %vm879 = vcmp.ne.s32.totalorder %v591, 0
      %vm880 = vcmp.ne.s32.totalorder %v602, 0
      %vm881 = vcmp.ne.s32.totalorder %v613, 0
      %vm882 = vcmp.ne.s32.totalorder %v624, 0
      %vm883 = vcmp.ne.s32.totalorder %v635, 0
      %vm884 = vcmp.ne.s32.totalorder %v646, 0
      %vm885 = vcmp.ne.s32.totalorder %v657, 0
      %vm886 = vcmp.ne.s32.totalorder %v668, 0
      %vm887 = vcmp.ne.s32.totalorder %v679, 0
      %vm888 = vcmp.ne.s32.totalorder %v690, 0
      %vm889 = vcmp.ne.s32.totalorder %v701, 0
      %vm890 = vcmp.ne.s32.totalorder %v712, 0
      %vm891 = vcmp.ne.s32.totalorder %v723, 0
      %vm892 = vcmp.ne.s32.totalorder %v734, 0
      %vm893 = vcmp.ne.s32.totalorder %v745, 0
      %vm894 = vcmp.ne.s32.totalorder %v756, 0
      %vm895 = vcmp.ne.s32.totalorder %v767, 0
      %vm896 = vcmp.ne.s32.totalorder %v778, 0
      %vm897 = vcmp.ne.s32.totalorder %v789, 0
      %vm898 = vcmp.ne.s32.totalorder %v800, 0
      %vm899 = vcmp.ne.s32.totalorder %v811, 0
      %vm900 = vcmp.ne.s32.totalorder %v822, 0
      %vm901 = vcmp.ne.s32.totalorder %v833, 0
      %vm902 = vcmp.ne.s32.totalorder %v844, 0
      %vm903 = vcmp.ne.s32.totalorder %v855, 0
      %vm904 = vcmp.lt.s32.totalorder %v338, 0
      %vm905 = vcmp.lt.s32.totalorder %v349, 0
      %vm906 = vcmp.lt.s32.totalorder %v360, 0
      %vm907 = vcmp.lt.s32.totalorder %v371, 0
      %vm908 = vcmp.lt.s32.totalorder %v382, 0
      %vm909 = vcmp.lt.s32.totalorder %v393, 0
      %vm910 = vcmp.lt.s32.totalorder %v404, 0
      %vm911 = vcmp.lt.s32.totalorder %v415, 0
      %vm912 = vcmp.lt.s32.totalorder %v426, 0
      %vm913 = vcmp.lt.s32.totalorder %v437, 0
      %vm914 = vcmp.lt.s32.totalorder %v448, 0
      %vm915 = vcmp.lt.s32.totalorder %v459, 0
      %vm916 = vcmp.lt.s32.totalorder %v470, 0
      %vm917 = vcmp.lt.s32.totalorder %v481, 0
      %vm918 = vcmp.lt.s32.totalorder %v492, 0
      %vm919 = vcmp.lt.s32.totalorder %v503, 0
      %vm920 = vcmp.lt.s32.totalorder %v514, 0
      %vm921 = vcmp.lt.s32.totalorder %v525, 0
      %vm922 = vcmp.lt.s32.totalorder %v536, 0
      %vm923 = vcmp.lt.s32.totalorder %v547, 0
      %vm924 = vcmp.lt.s32.totalorder %v558, 0
      %vm925 = vcmp.lt.s32.totalorder %v569, 0
      %vm926 = vcmp.lt.s32.totalorder %v580, 0
      %vm927 = vcmp.lt.s32.totalorder %v591, 0
      %vm928 = vcmp.lt.s32.totalorder %v602, 0
      %vm929 = vcmp.lt.s32.totalorder %v613, 0
      %vm930 = vcmp.lt.s32.totalorder %v624, 0
      %vm931 = vcmp.lt.s32.totalorder %v635, 0
      %vm932 = vcmp.lt.s32.totalorder %v646, 0
      %vm933 = vcmp.lt.s32.totalorder %v657, 0
      %vm934 = vcmp.lt.s32.totalorder %v668, 0
      %vm935 = vcmp.lt.s32.totalorder %v679, 0
      %vm936 = vcmp.lt.s32.totalorder %v690, 0
      %vm937 = vcmp.lt.s32.totalorder %v701, 0
      %vm938 = vcmp.lt.s32.totalorder %v712, 0
      %vm939 = vcmp.lt.s32.totalorder %v723, 0
      %vm940 = vcmp.lt.s32.totalorder %v734, 0
      %vm941 = vcmp.lt.s32.totalorder %v745, 0
      %vm942 = vcmp.lt.s32.totalorder %v756, 0
      %vm943 = vcmp.lt.s32.totalorder %v767, 0
      %vm944 = vcmp.lt.s32.totalorder %v778, 0
      %vm945 = vcmp.lt.s32.totalorder %v789, 0
      %vm946 = vcmp.lt.s32.totalorder %v800, 0
      %vm947 = vcmp.lt.s32.totalorder %v811, 0
      %vm948 = vcmp.lt.s32.totalorder %v822, 0
      %vm949 = vcmp.lt.s32.totalorder %v833, 0
      %vm950 = vcmp.lt.s32.totalorder %v844, 0
      %vm951 = vcmp.lt.s32.totalorder %v855, 0
      %vm952 = vmand %vm904, %vm856
      %vm953 = vmand %vm905, %vm857
      %vm954 = vmand %vm906, %vm858
      %vm955 = vmand %vm907, %vm859
      %vm956 = vmand %vm908, %vm860
      %vm957 = vmand %vm909, %vm861
      %vm958 = vmand %vm910, %vm862
      %vm959 = vmand %vm911, %vm863
      %vm960 = vmand %vm912, %vm864
      %vm961 = vmand %vm913, %vm865
      %vm962 = vmand %vm914, %vm866
      %vm963 = vmand %vm915, %vm867
      %vm964 = vmand %vm916, %vm868
      %vm965 = vmand %vm917, %vm869
      %vm966 = vmand %vm918, %vm870
      %vm967 = vmand %vm919, %vm871
      %vm968 = vmand %vm920, %vm872
      %vm969 = vmand %vm921, %vm873
      %vm970 = vmand %vm922, %vm874
      %vm971 = vmand %vm923, %vm875
      %vm972 = vmand %vm924, %vm876
      %vm973 = vmand %vm925, %vm877
      %vm974 = vmand %vm926, %vm878
      %vm975 = vmand %vm927, %vm879
      %vm976 = vmand %vm928, %vm880
      %vm977 = vmand %vm929, %vm881
      %vm978 = vmand %vm930, %vm882
      %vm979 = vmand %vm931, %vm883
      %vm980 = vmand %vm932, %vm884
      %vm981 = vmand %vm933, %vm885
      %vm982 = vmand %vm934, %vm886
      %vm983 = vmand %vm935, %vm887
      %vm984 = vmand %vm936, %vm888
      %vm985 = vmand %vm937, %vm889
      %vm986 = vmand %vm938, %vm890
      %vm987 = vmand %vm939, %vm891
      %vm988 = vmand %vm940, %vm892
      %vm989 = vmand %vm941, %vm893
      %vm990 = vmand %vm942, %vm894
      %vm991 = vmand %vm943, %vm895
      %vm992 = vmand %vm944, %vm896
      %vm993 = vmand %vm945, %vm897
      %vm994 = vmand %vm946, %vm898
      %vm995 = vmand %vm947, %vm899
      %vm996 = vmand %vm948, %vm900
      %vm997 = vmand %vm949, %vm901
      %vm998 = vmand %vm950, %vm902
      %vm999 = vmand %vm951, %vm903
      %v1000 = vadd.s32 %v338, 24
      %v1001 = vadd.s32 %v349, 24
      %v1002 = vadd.s32 %v360, 24
      %v1003 = vadd.s32 %v371, 24
      %v1004 = vadd.s32 %v382, 24
      %v1005 = vadd.s32 %v393, 24
      %v1006 = vadd.s32 %v404, 24
      %v1007 = vadd.s32 %v415, 24
      %v1008 = vadd.s32 %v426, 24
      %v1009 = vadd.s32 %v437, 24
      %v1010 = vadd.s32 %v448, 24
      %v1011 = vadd.s32 %v459, 24
      %v1012 = vadd.s32 %v470, 24
      %v1013 = vadd.s32 %v481, 24
      %v1014 = vadd.s32 %v492, 24
      %v1015 = vadd.s32 %v503, 24
      %v1016 = vadd.s32 %v514, 24
      %v1017 = vadd.s32 %v525, 24
      %v1018 = vadd.s32 %v536, 24
      %v1019 = vadd.s32 %v547, 24
      %v1020 = vadd.s32 %v558, 24
      %v1021 = vadd.s32 %v569, 24
      %v1022 = vadd.s32 %v580, 24
      %v1023 = vadd.s32 %v591, 24
      %v1024 = vadd.s32 %v602, 24
      %v1025 = vadd.s32 %v613, 24
      %v1026 = vadd.s32 %v624, 24
      %v1027 = vadd.s32 %v635, 24
      %v1028 = vadd.s32 %v646, 24
      %v1029 = vadd.s32 %v657, 24
      %v1030 = vadd.s32 %v668, 24
      %v1031 = vadd.s32 %v679, 24
      %v1032 = vadd.s32 %v690, 24
      %v1033 = vadd.s32 %v701, 24
      %v1034 = vadd.s32 %v712, 24
      %v1035 = vadd.s32 %v723, 24
      %v1036 = vadd.s32 %v734, 24
      %v1037 = vadd.s32 %v745, 24
      %v1038 = vadd.s32 %v756, 24
      %v1039 = vadd.s32 %v767, 24
      %v1040 = vadd.s32 %v778, 24
      %v1041 = vadd.s32 %v789, 24
      %v1042 = vadd.s32 %v800, 24
      %v1043 = vadd.s32 %v811, 24
      %v1044 = vadd.s32 %v822, 24
      %v1045 = vadd.s32 %v833, 24
      %v1046 = vadd.s32 %v844, 24
      %v1047 = vadd.s32 %v855, 24
      %v1048 = vsel %vm952, %v1000, %v338
      %v1049 = vsel %vm953, %v1001, %v349
      %v1050 = vsel %vm954, %v1002, %v360
      %v1051 = vsel %vm955, %v1003, %v371
      %v1052 = vsel %vm956, %v1004, %v382
      %v1053 = vsel %vm957, %v1005, %v393
      %v1054 = vsel %vm958, %v1006, %v404
      %v1055 = vsel %vm959, %v1007, %v415
      %v1056 = vsel %vm960, %v1008, %v426
      %v1057 = vsel %vm961, %v1009, %v437
      %v1058 = vsel %vm962, %v1010, %v448
      %v1059 = vsel %vm963, %v1011, %v459
      %v1060 = vsel %vm964, %v1012, %v470
      %v1061 = vsel %vm965, %v1013, %v481
      %v1062 = vsel %vm966, %v1014, %v492
      %v1063 = vsel %vm967, %v1015, %v503
      %v1064 = vsel %vm968, %v1016, %v514
      %v1065 = vsel %vm969, %v1017, %v525
      %v1066 = vsel %vm970, %v1018, %v536
      %v1067 = vsel %vm971, %v1019, %v547
      %v1068 = vsel %vm972, %v1020, %v558
      %v1069 = vsel %vm973, %v1021, %v569
      %v1070 = vsel %vm974, %v1022, %v580
      %v1071 = vsel %vm975, %v1023, %v591
      %v1072 = vsel %vm976, %v1024, %v602
      %v1073 = vsel %vm977, %v1025, %v613
      %v1074 = vsel %vm978, %v1026, %v624
      %v1075 = vsel %vm979, %v1027, %v635
      %v1076 = vsel %vm980, %v1028, %v646
      %v1077 = vsel %vm981, %v1029, %v657
      %v1078 = vsel %vm982, %v1030, %v668
      %v1079 = vsel %vm983, %v1031, %v679
      %v1080 = vsel %vm984, %v1032, %v690
      %v1081 = vsel %vm985, %v1033, %v701
      %v1082 = vsel %vm986, %v1034, %v712
      %v1083 = vsel %vm987, %v1035, %v723
      %v1084 = vsel %vm988, %v1036, %v734
      %v1085 = vsel %vm989, %v1037, %v745
      %v1086 = vsel %vm990, %v1038, %v756
      %v1087 = vsel %vm991, %v1039, %v767
      %v1088 = vsel %vm992, %v1040, %v778
      %v1089 = vsel %vm993, %v1041, %v789
      %v1090 = vsel %vm994, %v1042, %v800
      %v1091 = vsel %vm995, %v1043, %v811
      %v1092 = vsel %vm996, %v1044, %v822
      %v1093 = vsel %vm997, %v1045, %v833
      %v1094 = vsel %vm998, %v1046, %v844
      %v1095 = vsel %vm999, %v1047, %v855
      %vm1096 = vcmp.lt.s32.totalorder %v1048, 16
      %vm1097 = vcmp.lt.s32.totalorder %v1049, 16
      %vm1098 = vcmp.lt.s32.totalorder %v1050, 16
      %vm1099 = vcmp.lt.s32.totalorder %v1051, 16
      %vm1100 = vcmp.lt.s32.totalorder %v1052, 16
      %vm1101 = vcmp.lt.s32.totalorder %v1053, 16
      %vm1102 = vcmp.lt.s32.totalorder %v1054, 16
      %vm1103 = vcmp.lt.s32.totalorder %v1055, 16
      %vm1104 = vcmp.lt.s32.totalorder %v1056, 16
      %vm1105 = vcmp.lt.s32.totalorder %v1057, 16
      %vm1106 = vcmp.lt.s32.totalorder %v1058, 16
      %vm1107 = vcmp.lt.s32.totalorder %v1059, 16
      %vm1108 = vcmp.lt.s32.totalorder %v1060, 16
      %vm1109 = vcmp.lt.s32.totalorder %v1061, 16
      %vm1110 = vcmp.lt.s32.totalorder %v1062, 16
      %vm1111 = vcmp.lt.s32.totalorder %v1063, 16
      %vm1112 = vcmp.lt.s32.totalorder %v1064, 16
      %vm1113 = vcmp.lt.s32.totalorder %v1065, 16
      %vm1114 = vcmp.lt.s32.totalorder %v1066, 16
      %vm1115 = vcmp.lt.s32.totalorder %v1067, 16
      %vm1116 = vcmp.lt.s32.totalorder %v1068, 16
      %vm1117 = vcmp.lt.s32.totalorder %v1069, 16
      %vm1118 = vcmp.lt.s32.totalorder %v1070, 16
      %vm1119 = vcmp.lt.s32.totalorder %v1071, 16
      %vm1120 = vcmp.lt.s32.totalorder %v1072, 16
      %vm1121 = vcmp.lt.s32.totalorder %v1073, 16
      %vm1122 = vcmp.lt.s32.totalorder %v1074, 16
      %vm1123 = vcmp.lt.s32.totalorder %v1075, 16
      %vm1124 = vcmp.lt.s32.totalorder %v1076, 16
      %vm1125 = vcmp.lt.s32.totalorder %v1077, 16
      %vm1126 = vcmp.lt.s32.totalorder %v1078, 16
      %vm1127 = vcmp.lt.s32.totalorder %v1079, 16
      %vm1128 = vcmp.lt.s32.totalorder %v1080, 16
      %vm1129 = vcmp.lt.s32.totalorder %v1081, 16
      %vm1130 = vcmp.lt.s32.totalorder %v1082, 16
      %vm1131 = vcmp.lt.s32.totalorder %v1083, 16
      %vm1132 = vcmp.lt.s32.totalorder %v1084, 16
      %vm1133 = vcmp.lt.s32.totalorder %v1085, 16
      %vm1134 = vcmp.lt.s32.totalorder %v1086, 16
      %vm1135 = vcmp.lt.s32.totalorder %v1087, 16
      %vm1136 = vcmp.lt.s32.totalorder %v1088, 16
      %vm1137 = vcmp.lt.s32.totalorder %v1089, 16
      %vm1138 = vcmp.lt.s32.totalorder %v1090, 16
      %vm1139 = vcmp.lt.s32.totalorder %v1091, 16
      %vm1140 = vcmp.lt.s32.totalorder %v1092, 16
      %vm1141 = vcmp.lt.s32.totalorder %v1093, 16
      %vm1142 = vcmp.lt.s32.totalorder %v1094, 16
      %vm1143 = vcmp.lt.s32.totalorder %v1095, 16
      %vm1144 = vcmask 523264
      %1145 = vst.msk [vmem:[#allocation2] sm:$0xff] %vm1144, 0.0
      %1146 = vst.msk [vmem:[#allocation2 + $0x8] sm:$0xff] %vm1144, 0.0
      %1147 = vst.msk [vmem:[#allocation2 + $0x10] sm:$0xff] %vm1144, 0.0
      %1148 = vst.msk [vmem:[#allocation2 + $0x18] sm:$0xff] %vm1144, 0.0
      %1149 = vst.msk [vmem:[#allocation2 + $0x20] sm:$0xff] %vm1144, 0.0
      %1150 = vst.msk [vmem:[#allocation2 + $0x28] sm:$0xff] %vm1144, 0.0
      %1151 = vst.msk [vmem:[#allocation2 + $0x30] sm:$0xff] %vm1144, 0.0
      %1152 = vst.msk [vmem:[#allocation2 + $0x38] sm:$0xff] %vm1144, 0.0
      %1153 = vst.msk [vmem:[#allocation2 + $0x40] sm:$0xff] %vm1144, 0.0
      %1154 = vst.msk [vmem:[#allocation2 + $0x48] sm:$0xff] %vm1144, 0.0
      %1155 = vst.msk [vmem:[#allocation2 + $0x50] sm:$0xff] %vm1144, 0.0
      %1156 = vst.msk [vmem:[#allocation2 + $0x58] sm:$0xff] %vm1144, 0.0
      %1157 = vst.msk [vmem:[#allocation2 + $0x60] sm:$0xff] %vm1144, 0.0
      %1158 = vst.msk [vmem:[#allocation2 + $0x1e8] sm:$0xff] %vm1144, 0.0
      %1159 = vst.msk [vmem:[#allocation2 + $0x1f0] sm:$0xff] %vm1144, 0.0
      %1160 = vst.msk [vmem:[#allocation2 + $0x1f8] sm:$0xff] %vm1144, 0.0
      %1161 = vst.msk [vmem:[#allocation2 + $0x200] sm:$0xff] %vm1144, 0.0
      %1162 = vst.msk [vmem:[#allocation2 + $0x208] sm:$0xff] %vm1144, 0.0
      %1163 = vst.msk [vmem:[#allocation2 + $0x210] sm:$0xff] %vm1144, 0.0
      %1164 = vst.msk [vmem:[#allocation2 + $0x218] sm:$0xff] %vm1144, 0.0
      %1165 = vst.msk [vmem:[#allocation2 + $0x220] sm:$0xff] %vm1144, 0.0
      %1166 = vst.msk [vmem:[#allocation2 + $0x228] sm:$0xff] %vm1144, 0.0
      %1167 = vst.msk [vmem:[#allocation2 + $0x230] sm:$0xff] %vm1144, 0.0
      %1168 = vst.msk [vmem:[#allocation2 + $0x238] sm:$0xff] %vm1144, 0.0
      %1169 = vst.msk [vmem:[#allocation2 + $0x240] sm:$0xff] %vm1144, 0.0
      %vm1170 = vcmask 261120
      %1171 = vst.msk [vmem:[#allocation4] sm:$0xff] %vm1170, 0.0
      %1172 = vst.msk [vmem:[#allocation4 + $0x8] sm:$0xff] %vm1170, 0.0
      %1173 = vst.msk [vmem:[#allocation4 + $0x10] sm:$0xff] %vm1170, 0.0
      %1174 = vst.msk [vmem:[#allocation4 + $0x18] sm:$0xff] %vm1170, 0.0
      %1175 = vst.msk [vmem:[#allocation4 + $0x20] sm:$0xff] %vm1170, 0.0
      %1176 = vst.msk [vmem:[#allocation4 + $0x28] sm:$0xff] %vm1170, 0.0
      %1177 = vst.msk [vmem:[#allocation4 + $0x30] sm:$0xff] %vm1170, 0.0
      %1178 = vst.msk [vmem:[#allocation4 + $0x38] sm:$0xff] %vm1170, 0.0
      %1179 = vst.msk [vmem:[#allocation4 + $0x40] sm:$0xff] %vm1170, 0.0
      %1180 = vst.msk [vmem:[#allocation4 + $0x48] sm:$0xff] %vm1170, 0.0
      %1181 = vst.msk [vmem:[#allocation4 + $0x50] sm:$0xff] %vm1170, 0.0
      %1182 = vst.msk [vmem:[#allocation4 + $0x58] sm:$0xff] %vm1170, 0.0
      %1183 = vst.msk [vmem:[#allocation4 + $0x60] sm:$0xff] %vm1170, 0.0
      %1184 = vst.msk [vmem:[#allocation4 + $0x1e8] sm:$0xff] %vm1170, 0.0
      %1185 = vst.msk [vmem:[#allocation4 + $0x1f0] sm:$0xff] %vm1170, 0.0
      %1186 = vst.msk [vmem:[#allocation4 + $0x1f8] sm:$0xff] %vm1170, 0.0
      %1187 = vst.msk [vmem:[#allocation4 + $0x200] sm:$0xff] %vm1170, 0.0
      %1188 = vst.msk [vmem:[#allocation4 + $0x208] sm:$0xff] %vm1170, 0.0
      %1189 = vst.msk [vmem:[#allocation4 + $0x210] sm:$0xff] %vm1170, 0.0
      %1190 = vst.msk [vmem:[#allocation4 + $0x218] sm:$0xff] %vm1170, 0.0
      %1191 = vst.msk [vmem:[#allocation4 + $0x220] sm:$0xff] %vm1170, 0.0
      %1192 = vst.msk [vmem:[#allocation4 + $0x228] sm:$0xff] %vm1170, 0.0
      %1193 = vst.msk [vmem:[#allocation4 + $0x230] sm:$0xff] %vm1170, 0.0
      %1194 = vst.msk [vmem:[#allocation4 + $0x238] sm:$0xff] %vm1170, 0.0
      %1195 = vst.msk [vmem:[#allocation4 + $0x240] sm:$0xff] %vm1170, 0.0
      %v1196 = vld [vmem:[%s273] sm:$0xff]
      %v1197 = vld [vmem:[%s273 + $0x8] sm:$0xff]
      %v1198 = vld [vmem:[%s273 + $0x10] sm:$0xff]
      %v1199 = vld [vmem:[%s273 + $0x18] sm:$0xff]
      %v1200 = vld [vmem:[%s273 + $0x20] sm:$0xff]
      %v1201 = vld [vmem:[%s273 + $0x28] sm:$0xff]
      %v1202 = vld [vmem:[%s273 + $0x30] sm:$0xff]
      %v1203 = vld [vmem:[%s273 + $0x38] sm:$0xff]
      %v1204 = vld [vmem:[%s273 + $0x40] sm:$0xff]
      %v1205 = vld [vmem:[%s273 + $0x48] sm:$0xff]
      %v1206 = vld [vmem:[%s273 + $0x50] sm:$0xff]
      %v1207 = vld [vmem:[%s273 + $0x58] sm:$0xff]
      %v1208 = vld [vmem:[%s273 + $0x60] sm:$0xff]
      %v1209 = vld [vmem:[%s273 + $0x68] sm:$0xff]
      %v1210 = vld [vmem:[%s273 + $0x70] sm:$0xff]
      %v1211 = vld [vmem:[%s273 + $0x78] sm:$0xff]
      %v1212 = vld [vmem:[%s273 + $0x80] sm:$0xff]
      %v1213 = vld [vmem:[%s273 + $0x88] sm:$0xff]
      %v1214 = vld [vmem:[%s273 + $0x90] sm:$0xff]
      %v1215 = vld [vmem:[%s273 + $0x98] sm:$0xff]
      %v1216 = vld [vmem:[%s273 + $0xa0] sm:$0xff]
      %v1217 = vld [vmem:[%s273 + $0xa8] sm:$0xff]
      %v1218 = vld [vmem:[%s273 + $0xb0] sm:$0xff]
      %v1219 = vld [vmem:[%s273 + $0xb8] sm:$0xff]
      %v1220 = vld [vmem:[%s273 + $0xc0] sm:$0xff]
      %v1221 = vld [vmem:[%s273 + $0xc8] sm:$0xff]
      %v1222 = vld [vmem:[%s273 + $0xd0] sm:$0xff]
      %v1223 = vld [vmem:[%s273 + $0xd8] sm:$0xff]
      %v1224 = vld [vmem:[%s273 + $0xe0] sm:$0xff]
      %v1225 = vld [vmem:[%s273 + $0xe8] sm:$0xff]
      %v1226 = vld [vmem:[%s273 + $0xf0] sm:$0xff]
      %v1227 = vld [vmem:[%s273 + $0xf8] sm:$0xff]
      %v1228 = vld [vmem:[%s273 + $0x100] sm:$0xff]
      %v1229 = vld [vmem:[%s273 + $0x108] sm:$0xff]
      %v1230 = vld [vmem:[%s273 + $0x110] sm:$0xff]
      %v1231 = vld [vmem:[%s273 + $0x118] sm:$0xff]
      %v1232 = vld [vmem:[%s273 + $0x120] sm:$0xff]
      %v1233 = vld [vmem:[%s273 + $0x128] sm:$0xff]
      %v1234 = vld [vmem:[%s273 + $0x130] sm:$0xff]
      %v1235 = vld [vmem:[%s273 + $0x138] sm:$0xff]
      %v1236 = vld [vmem:[%s273 + $0x140] sm:$0xff]
      %v1237 = vld [vmem:[%s273 + $0x148] sm:$0xff]
      %v1238 = vld [vmem:[%s273 + $0x150] sm:$0xff]
      %v1239 = vld [vmem:[%s273 + $0x158] sm:$0xff]
      %v1240 = vld [vmem:[%s273 + $0x160] sm:$0xff]
      %v1241 = vld [vmem:[%s273 + $0x168] sm:$0xff]
      %v1242 = vld [vmem:[%s273 + $0x170] sm:$0xff]
      %v1243 = vld [vmem:[%s273 + $0x178] sm:$0xff]
      %v1244 = vld [vmem:[%s273 + $0x180] sm:$0xff]
      %v1245 = vld [vmem:[%s273 + $0x188] sm:$0xff]
      %v1246 = vld [vmem:[%s273 + $0x190] sm:$0xff]
      %v1247 = vld [vmem:[%s273 + $0x198] sm:$0xff]
      %v1248 = vld [vmem:[%s273 + $0x1a0] sm:$0xff]
      %v1249 = vld [vmem:[%s273 + $0x1a8] sm:$0xff]
      %v1250 = vld [vmem:[%s273 + $0x1b0] sm:$0xff]
      %v1251 = vld [vmem:[%s273 + $0x1b8] sm:$0xff]
      %v1252 = vld [vmem:[%s273 + $0x1c0] sm:$0xff]
      %v1253 = vld [vmem:[%s273 + $0x1c8] sm:$0xff]
      %v1254 = vld [vmem:[%s273 + $0x1d0] sm:$0xff]
      %v1255 = vld [vmem:[%s273 + $0x1d8] sm:$0xff]
      %v1256 = vld [vmem:[%s273 + $0x1e0] sm:$0xff]
      %v1257 = vld [vmem:[%s273 + $0x1e8] sm:$0xff]
      %v1258 = vld [vmem:[%s273 + $0x1f0] sm:$0xff]
      %v1259 = vld [vmem:[%s273 + $0x1f8] sm:$0xff]
      %v1260 = vld [vmem:[%s273 + $0x200] sm:$0xff]
      %v1261 = vld [vmem:[%s273 + $0x208] sm:$0xff]
      %v1262 = vld [vmem:[%s273 + $0x210] sm:$0xff]
      %v1263 = vld [vmem:[%s273 + $0x218] sm:$0xff]
      %v1264 = vld [vmem:[%s273 + $0x220] sm:$0xff]
      %v1265 = vld [vmem:[%s273 + $0x228] sm:$0xff]
      %v1266 = vld [vmem:[%s273 + $0x230] sm:$0xff]
      %v1267 = vld [vmem:[%s273 + $0x238] sm:$0xff]
      %v1268 = vld [vmem:[%s273 + $0x240] sm:$0xff]
      %v1269 = vld [vmem:[%s273 + $0x248] sm:$0xff]
      %v1270 = vld [vmem:[%s273 + $0x250] sm:$0xff]
      %v1271 = vld [vmem:[%s273 + $0x258] sm:$0xff]
      %v1272 = vld [vmem:[%s273 + $0x260] sm:$0xff]
      %v1273 = vld [vmem:[%s273 + $0x268] sm:$0xff]
      %v1274 = vld [vmem:[%s273 + $0x270] sm:$0xff]
      %v1275 = vld [vmem:[%s273 + $0x278] sm:$0xff]
      %v1276 = vld [vmem:[%s273 + $0x280] sm:$0xff]
      %v1277 = vld [vmem:[%s273 + $0x288] sm:$0xff]
      %v1278 = vld [vmem:[%s273 + $0x290] sm:$0xff]
      %v1279 = vld [vmem:[%s273 + $0x298] sm:$0xff]
      %v1280 = vld [vmem:[%s273 + $0x2a0] sm:$0xff]
      %v1281 = vld [vmem:[%s273 + $0x2a8] sm:$0xff]
      %v1282 = vld [vmem:[%s273 + $0x2b0] sm:$0xff]
      %v1283 = vld [vmem:[%s273 + $0x2b8] sm:$0xff]
      %v1284 = vld [vmem:[%s273 + $0x2c0] sm:$0xff]
      %v1285 = vld [vmem:[%s273 + $0x2c8] sm:$0xff]
      %v1286 = vld [vmem:[%s273 + $0x2d0] sm:$0xff]
      %v1287 = vld [vmem:[%s273 + $0x2d8] sm:$0xff]
      %v1288 = vld [vmem:[%s273 + $0x2e0] sm:$0xff]
      %v1289 = vld [vmem:[%s273 + $0x2e8] sm:$0xff]
      %v1290 = vld [vmem:[%s273 + $0x2f0] sm:$0xff]
      %v1291 = vld [vmem:[%s273 + $0x2f8] sm:$0xff]
      %v1292 = vld [vmem:[%s1] sm:$0xff]
      %v1293 = vld [vmem:[%s1 + $0x8] sm:$0xff]
      %v1294 = vld [vmem:[%s1 + $0x10] sm:$0xff]
      %v1295 = vld [vmem:[%s1 + $0x18] sm:$0xff]
      %v1296 = vld [vmem:[%s1 + $0x20] sm:$0xff]
      %v1297 = vld [vmem:[%s1 + $0x28] sm:$0xff]
      %v1298 = vld [vmem:[%s1 + $0x30] sm:$0xff]
      %v1299 = vld [vmem:[%s1 + $0x38] sm:$0xff]
      %v1300 = vld [vmem:[%s1 + $0x40] sm:$0xff]
      %v1301 = vld [vmem:[%s1 + $0x48] sm:$0xff]
      %v1302 = vld [vmem:[%s1 + $0x50] sm:$0xff]
      %v1303 = vld [vmem:[%s1 + $0x58] sm:$0xff]
      %v1304 = vld [vmem:[%s1 + $0x60] sm:$0xff]
      %v1305 = vld [vmem:[%s1 + $0x68] sm:$0xff]
      %v1306 = vld [vmem:[%s1 + $0x70] sm:$0xff]
      %v1307 = vld [vmem:[%s1 + $0x78] sm:$0xff]
      %v1308 = vld [vmem:[%s1 + $0x80] sm:$0xff]
      %v1309 = vld [vmem:[%s1 + $0x88] sm:$0xff]
      %v1310 = vld [vmem:[%s1 + $0x90] sm:$0xff]
      %v1311 = vld [vmem:[%s1 + $0x98] sm:$0xff]
      %v1312 = vld [vmem:[%s1 + $0xa0] sm:$0xff]
      %v1313 = vld [vmem:[%s1 + $0xa8] sm:$0xff]
      %v1314 = vld [vmem:[%s1 + $0xb0] sm:$0xff]
      %v1315 = vld [vmem:[%s1 + $0xb8] sm:$0xff]
      %v1316 = vld [vmem:[%s1 + $0xc0] sm:$0xff]
      %v1317 = vld [vmem:[%s1 + $0xc8] sm:$0xff]
      %v1318 = vld [vmem:[%s1 + $0xd0] sm:$0xff]
      %v1319 = vld [vmem:[%s1 + $0xd8] sm:$0xff]
      %v1320 = vld [vmem:[%s1 + $0xe0] sm:$0xff]
      %v1321 = vld [vmem:[%s1 + $0xe8] sm:$0xff]
      %v1322 = vld [vmem:[%s1 + $0xf0] sm:$0xff]
      %v1323 = vld [vmem:[%s1 + $0xf8] sm:$0xff]
      %v1324 = vld [vmem:[%s2] sm:$0x1]
      %v1326 = vlaneseq
      %v1327 = vshrl.u32 %v1326, 7
      %v1328 = vsub.s32 0, %v1327
      %v1329 = vrot.slane %v1324, %v1328
      %1331 = vmatprep.subr.mxu0 0.0
      %1332 = vmatpush1.msra.mxu0 %v1307
      %1333 = vmatprep.subr.mxu0 0.0
      %1334 = vmatpush1.msra.mxu0 %v1306
      %1335 = vmatprep.subr.mxu0 0.0
      %1336 = vmatpush1.msra.mxu0 %v1305
      %1337 = vmatprep.subr.mxu0 0.0
      %1338 = vmatpush1.msra.mxu0 %v1304
      %1339 = vmatprep.subr.mxu0 0.0
      %1340 = vmatpush1.msra.mxu0 %v1303
      %1341 = vmatprep.subr.mxu0 0.0
      %1342 = vmatpush1.msra.mxu0 %v1302
      %1343 = vmatprep.subr.mxu0 0.0
      %1344 = vmatpush1.msra.mxu0 %v1301
      %1345 = vmatprep.subr.mxu0 0.0
      %1346 = vmatpush1.msra.mxu0 %v1300
      %1347 = vmatprep.subr.mxu0 0.0
      %1348 = vmatpush1.msra.mxu0 %v1299
      %1349 = vmatprep.subr.mxu0 0.0
      %1350 = vmatpush1.msra.mxu0 %v1298
      %1351 = vmatprep.subr.mxu0 0.0
      %1352 = vmatpush1.msra.mxu0 %v1297
      %1353 = vmatprep.subr.mxu0 0.0
      %1354 = vmatpush1.msra.mxu0 %v1296
      %1355 = vmatprep.subr.mxu0 0.0
      %1356 = vmatpush1.msra.mxu0 %v1295
      %1357 = vmatprep.subr.mxu0 0.0
      %1358 = vmatpush1.msra.mxu0 %v1294
      %1359 = vmatprep.subr.mxu0 0.0
      %1360 = vmatpush1.msra.mxu0 %v1293
      %1361 = vmatprep.subr.mxu0 0.0
      %1362 = vmatpush1.msra.mxu0 %v1292
      %1363 = vmatprep.subr.mxu0 0.0
      %1364 = vmatpush2.msra.mxu0 %v1323
      %1365 = vmatprep.subr.mxu0 0.0
      %1366 = vmatpush2.msra.mxu0 %v1322
      %1367 = vmatprep.subr.mxu0 0.0
      %1368 = vmatpush2.msra.mxu0 %v1321
      %1369 = vmatprep.subr.mxu0 0.0
      %1370 = vmatpush2.msra.mxu0 %v1320
      %1371 = vmatprep.subr.mxu0 0.0
      %1372 = vmatpush2.msra.mxu0 %v1319
      %1373 = vmatprep.subr.mxu0 0.0
      %1374 = vmatpush2.msra.mxu0 %v1318
      %1375 = vmatprep.subr.mxu0 0.0
      %1376 = vmatpush2.msra.mxu0 %v1317
      %1377 = vmatprep.subr.mxu0 0.0
      %1378 = vmatpush2.msra.mxu0 %v1316
      %1379 = vmatprep.subr.mxu0 0.0
      %1380 = vmatpush2.msra.mxu0 %v1315
      %1381 = vmatprep.subr.mxu0 0.0
      %1382 = vmatpush2.msra.mxu0 %v1314
      %1383 = vmatprep.subr.mxu0 0.0
      %1384 = vmatpush2.msra.mxu0 %v1313
      %1385 = vmatprep.subr.mxu0 0.0
      %1386 = vmatpush2.msra.mxu0 %v1312
      %1387 = vmatprep.subr.mxu0 0.0
      %1388 = vmatpush2.msra.mxu0 %v1311
      %1389 = vmatprep.subr.mxu0 0.0
      %1390 = vmatpush2.msra.mxu0 %v1310
      %1391 = vmatprep.subr.mxu0 0.0
      %1392 = vmatpush2.msra.mxu0 %v1309
      %1393 = vmatprep.subr.mxu0 0.0
      %1394 = vmatpush2.msra.mxu0 %v1308
      %1395 = vmatprep.mubr.f32.mxu0 %v1197
      %1396 = vmatmul.mubr.f32.gmra.mxu0 %v1196
      %v1397 = vpop.f32.mrf.mxu0
      %v1398 = vadd.f32 %v1329, %v1397
      %v1399 = vpop.f32.mrf.mxu0
      %1400 = vmatprep.mubr.f32.mxu0 %v1199
      %1401 = vmatmul.mubr.f32.gmra.mxu0 %v1198
      %v1402 = vpop.f32.mrf.mxu0
      %v1403 = vadd.f32 %v1329, %v1402
      %v1404 = vpop.f32.mrf.mxu0
      %1405 = vmatprep.mubr.f32.mxu0 %v1201
      %1406 = vmatmul.mubr.f32.gmra.mxu0 %v1200
      %v1407 = vpop.f32.mrf.mxu0
      %v1408 = vadd.f32 %v1329, %v1407
      %v1409 = vpop.f32.mrf.mxu0
      %1410 = vmatprep.mubr.f32.mxu0 %v1203
      %1411 = vmatmul.mubr.f32.gmra.mxu0 %v1202
      %v1412 = vpop.f32.mrf.mxu0
      %v1413 = vadd.f32 %v1329, %v1412
      %v1414 = vpop.f32.mrf.mxu0
      %1415 = vmatprep.mubr.f32.mxu0 %v1205
      %1416 = vmatmul.mubr.f32.gmra.mxu0 %v1204
      %v1417 = vpop.f32.mrf.mxu0
      %v1418 = vadd.f32 %v1329, %v1417
      %v1419 = vpop.f32.mrf.mxu0
      %1420 = vmatprep.mubr.f32.mxu0 %v1207
      %1421 = vmatmul.mubr.f32.gmra.mxu0 %v1206
      %v1422 = vpop.f32.mrf.mxu0
      %v1423 = vadd.f32 %v1329, %v1422
      %v1424 = vpop.f32.mrf.mxu0
      %1425 = vmatprep.mubr.f32.mxu0 %v1209
      %1426 = vmatmul.mubr.f32.gmra.mxu0 %v1208
      %v1427 = vpop.f32.mrf.mxu0
      %v1428 = vadd.f32 %v1329, %v1427
      %v1429 = vpop.f32.mrf.mxu0
      %1430 = vmatprep.mubr.f32.mxu0 %v1211
      %1431 = vmatmul.mubr.f32.gmra.mxu0 %v1210
      %v1432 = vpop.f32.mrf.mxu0
      %v1433 = vadd.f32 %v1329, %v1432
      %v1434 = vpop.f32.mrf.mxu0
      %1435 = vmatprep.mubr.f32.mxu0 %v1213
      %1436 = vmatmul.mubr.f32.gmra.mxu0 %v1212
      %v1437 = vpop.f32.mrf.mxu0
      %v1438 = vadd.f32 %v1329, %v1437
      %v1439 = vpop.f32.mrf.mxu0
      %1440 = vmatprep.mubr.f32.mxu0 %v1215
      %1441 = vmatmul.mubr.f32.gmra.mxu0 %v1214
      %v1442 = vpop.f32.mrf.mxu0
      %v1443 = vadd.f32 %v1329, %v1442
      %v1444 = vpop.f32.mrf.mxu0
      %1445 = vmatprep.mubr.f32.mxu0 %v1217
      %1446 = vmatmul.mubr.f32.gmra.mxu0 %v1216
      %v1447 = vpop.f32.mrf.mxu0
      %v1448 = vadd.f32 %v1329, %v1447
      %v1449 = vpop.f32.mrf.mxu0
      %1450 = vmatprep.mubr.f32.mxu0 %v1219
      %1451 = vmatmul.mubr.f32.gmra.mxu0 %v1218
      %v1452 = vpop.f32.mrf.mxu0
      %v1453 = vadd.f32 %v1329, %v1452
      %v1454 = vpop.f32.mrf.mxu0
      %1455 = vmatprep.mubr.f32.mxu0 %v1221
      %1456 = vmatmul.mubr.f32.gmra.mxu0 %v1220
      %v1457 = vpop.f32.mrf.mxu0
      %v1458 = vadd.f32 %v1329, %v1457
      %v1459 = vpop.f32.mrf.mxu0
      %1460 = vmatprep.mubr.f32.mxu0 %v1223
      %1461 = vmatmul.mubr.f32.gmra.mxu0 %v1222
      %v1462 = vpop.f32.mrf.mxu0
      %v1463 = vadd.f32 %v1329, %v1462
      %v1464 = vpop.f32.mrf.mxu0
      %1465 = vmatprep.mubr.f32.mxu0 %v1225
      %1466 = vmatmul.mubr.f32.gmra.mxu0 %v1224
      %v1467 = vpop.f32.mrf.mxu0
      %v1468 = vadd.f32 %v1329, %v1467
      %v1469 = vpop.f32.mrf.mxu0
      %1470 = vmatprep.mubr.f32.mxu0 %v1227
      %1471 = vmatmul.mubr.f32.gmra.mxu0 %v1226
      %v1472 = vpop.f32.mrf.mxu0
      %v1473 = vadd.f32 %v1329, %v1472
      %v1474 = vpop.f32.mrf.mxu0
      %1475 = vmatprep.mubr.f32.mxu0 %v1229
      %1476 = vmatmul.mubr.f32.gmra.mxu0 %v1228
      %v1477 = vpop.f32.mrf.mxu0
      %v1478 = vadd.f32 %v1329, %v1477
      %v1479 = vpop.f32.mrf.mxu0
      %1480 = vmatprep.mubr.f32.mxu0 %v1231
      %1481 = vmatmul.mubr.f32.gmra.mxu0 %v1230
      %v1482 = vpop.f32.mrf.mxu0
      %v1483 = vadd.f32 %v1329, %v1482
      %v1484 = vpop.f32.mrf.mxu0
      %1485 = vmatprep.mubr.f32.mxu0 %v1233
      %1486 = vmatmul.mubr.f32.gmra.mxu0 %v1232
      %v1487 = vpop.f32.mrf.mxu0
      %v1488 = vadd.f32 %v1329, %v1487
      %v1489 = vpop.f32.mrf.mxu0
      %1490 = vmatprep.mubr.f32.mxu0 %v1235
      %1491 = vmatmul.mubr.f32.gmra.mxu0 %v1234
      %v1492 = vpop.f32.mrf.mxu0
      %v1493 = vadd.f32 %v1329, %v1492
      %v1494 = vpop.f32.mrf.mxu0
      %1495 = vmatprep.mubr.f32.mxu0 %v1237
      %1496 = vmatmul.mubr.f32.gmra.mxu0 %v1236
      %v1497 = vpop.f32.mrf.mxu0
      %v1498 = vadd.f32 %v1329, %v1497
      %v1499 = vpop.f32.mrf.mxu0
      %1500 = vmatprep.mubr.f32.mxu0 %v1239
      %1501 = vmatmul.mubr.f32.gmra.mxu0 %v1238
      %v1502 = vpop.f32.mrf.mxu0
      %v1503 = vadd.f32 %v1329, %v1502
      %v1504 = vpop.f32.mrf.mxu0
      %1505 = vmatprep.mubr.f32.mxu0 %v1241
      %1506 = vmatmul.mubr.f32.gmra.mxu0 %v1240
      %v1507 = vpop.f32.mrf.mxu0
      %v1508 = vadd.f32 %v1329, %v1507
      %v1509 = vpop.f32.mrf.mxu0
      %1510 = vmatprep.mubr.f32.mxu0 %v1243
      %1511 = vmatmul.mubr.f32.gmra.mxu0 %v1242
      %v1512 = vpop.f32.mrf.mxu0
      %v1513 = vadd.f32 %v1329, %v1512
      %v1514 = vpop.f32.mrf.mxu0
      %1515 = vmatprep.mubr.f32.mxu0 %v1245
      %1516 = vmatmul.mubr.f32.gmra.mxu0 %v1244
      %v1517 = vpop.f32.mrf.mxu0
      %v1518 = vadd.f32 %v1329, %v1517
      %v1519 = vpop.f32.mrf.mxu0
      %1520 = vmatprep.mubr.f32.mxu0 %v1247
      %1521 = vmatmul.mubr.f32.gmra.mxu0 %v1246
      %v1522 = vpop.f32.mrf.mxu0
      %v1523 = vadd.f32 %v1329, %v1522
      %v1524 = vpop.f32.mrf.mxu0
      %1525 = vmatprep.mubr.f32.mxu0 %v1249
      %1526 = vmatmul.mubr.f32.gmra.mxu0 %v1248
      %v1527 = vpop.f32.mrf.mxu0
      %v1528 = vadd.f32 %v1329, %v1527
      %v1529 = vpop.f32.mrf.mxu0
      %1530 = vmatprep.mubr.f32.mxu0 %v1251
      %1531 = vmatmul.mubr.f32.gmra.mxu0 %v1250
      %v1532 = vpop.f32.mrf.mxu0
      %v1533 = vadd.f32 %v1329, %v1532
      %v1534 = vpop.f32.mrf.mxu0
      %1535 = vmatprep.mubr.f32.mxu0 %v1253
      %1536 = vmatmul.mubr.f32.gmra.mxu0 %v1252
      %v1537 = vpop.f32.mrf.mxu0
      %v1538 = vadd.f32 %v1329, %v1537
      %v1539 = vpop.f32.mrf.mxu0
      %1540 = vmatprep.mubr.f32.mxu0 %v1255
      %1541 = vmatmul.mubr.f32.gmra.mxu0 %v1254
      %v1542 = vpop.f32.mrf.mxu0
      %v1543 = vadd.f32 %v1329, %v1542
      %v1544 = vpop.f32.mrf.mxu0
      %1545 = vmatprep.mubr.f32.mxu0 %v1257
      %1546 = vmatmul.mubr.f32.gmra.mxu0 %v1256
      %v1547 = vpop.f32.mrf.mxu0
      %v1548 = vadd.f32 %v1329, %v1547
      %v1549 = vpop.f32.mrf.mxu0
      %1550 = vmatprep.mubr.f32.mxu0 %v1259
      %1551 = vmatmul.mubr.f32.gmra.mxu0 %v1258
      %v1552 = vpop.f32.mrf.mxu0
      %v1553 = vadd.f32 %v1329, %v1552
      %v1554 = vpop.f32.mrf.mxu0
      %1555 = vmatprep.mubr.f32.mxu0 %v1261
      %1556 = vmatmul.mubr.f32.gmra.mxu0 %v1260
      %v1557 = vpop.f32.mrf.mxu0
      %v1558 = vadd.f32 %v1329, %v1557
      %v1559 = vpop.f32.mrf.mxu0
      %1560 = vmatprep.mubr.f32.mxu0 %v1263
      %1561 = vmatmul.mubr.f32.gmra.mxu0 %v1262
      %v1562 = vpop.f32.mrf.mxu0
      %v1563 = vadd.f32 %v1329, %v1562
      %v1564 = vpop.f32.mrf.mxu0
      %1565 = vmatprep.mubr.f32.mxu0 %v1265
      %1566 = vmatmul.mubr.f32.gmra.mxu0 %v1264
      %v1567 = vpop.f32.mrf.mxu0
      %v1568 = vadd.f32 %v1329, %v1567
      %v1569 = vpop.f32.mrf.mxu0
      %1570 = vmatprep.mubr.f32.mxu0 %v1267
      %1571 = vmatmul.mubr.f32.gmra.mxu0 %v1266
      %v1572 = vpop.f32.mrf.mxu0
      %v1573 = vadd.f32 %v1329, %v1572
      %v1574 = vpop.f32.mrf.mxu0
      %1575 = vmatprep.mubr.f32.mxu0 %v1269
      %1576 = vmatmul.mubr.f32.gmra.mxu0 %v1268
      %v1577 = vpop.f32.mrf.mxu0
      %v1578 = vadd.f32 %v1329, %v1577
      %v1579 = vpop.f32.mrf.mxu0
      %1580 = vmatprep.mubr.f32.mxu0 %v1271
      %1581 = vmatmul.mubr.f32.gmra.mxu0 %v1270
      %v1582 = vpop.f32.mrf.mxu0
      %v1583 = vadd.f32 %v1329, %v1582
      %v1584 = vpop.f32.mrf.mxu0
      %1585 = vmatprep.mubr.f32.mxu0 %v1273
      %1586 = vmatmul.mubr.f32.gmra.mxu0 %v1272
      %v1587 = vpop.f32.mrf.mxu0
      %v1588 = vadd.f32 %v1329, %v1587
      %v1589 = vpop.f32.mrf.mxu0
      %1590 = vmatprep.mubr.f32.mxu0 %v1275
      %1591 = vmatmul.mubr.f32.gmra.mxu0 %v1274
      %v1592 = vpop.f32.mrf.mxu0
      %v1593 = vadd.f32 %v1329, %v1592
      %v1594 = vpop.f32.mrf.mxu0
      %1595 = vmatprep.mubr.f32.mxu0 %v1277
      %1596 = vmatmul.mubr.f32.gmra.mxu0 %v1276
      %v1597 = vpop.f32.mrf.mxu0
      %v1598 = vadd.f32 %v1329, %v1597
      %v1599 = vpop.f32.mrf.mxu0
      %1600 = vmatprep.mubr.f32.mxu0 %v1279
      %1601 = vmatmul.mubr.f32.gmra.mxu0 %v1278
      %v1602 = vpop.f32.mrf.mxu0
      %v1603 = vadd.f32 %v1329, %v1602
      %v1604 = vpop.f32.mrf.mxu0
      %1605 = vmatprep.mubr.f32.mxu0 %v1281
      %1606 = vmatmul.mubr.f32.gmra.mxu0 %v1280
      %v1607 = vpop.f32.mrf.mxu0
      %v1608 = vadd.f32 %v1329, %v1607
      %v1609 = vpop.f32.mrf.mxu0
      %1610 = vmatprep.mubr.f32.mxu0 %v1283
      %1611 = vmatmul.mubr.f32.gmra.mxu0 %v1282
      %v1612 = vpop.f32.mrf.mxu0
      %v1613 = vadd.f32 %v1329, %v1612
      %v1614 = vpop.f32.mrf.mxu0
      %1615 = vmatprep.mubr.f32.mxu0 %v1285
      %1616 = vmatmul.mubr.f32.gmra.mxu0 %v1284
      %v1617 = vpop.f32.mrf.mxu0
      %v1618 = vadd.f32 %v1329, %v1617
      %v1619 = vpop.f32.mrf.mxu0
      %1620 = vmatprep.mubr.f32.mxu0 %v1287
      %1621 = vmatmul.mubr.f32.gmra.mxu0 %v1286
      %v1622 = vpop.f32.mrf.mxu0
      %v1623 = vadd.f32 %v1329, %v1622
      %v1624 = vpop.f32.mrf.mxu0
      %1625 = vmatprep.mubr.f32.mxu0 %v1289
      %1626 = vmatmul.mubr.f32.gmra.mxu0 %v1288
      %v1627 = vpop.f32.mrf.mxu0
      %v1628 = vadd.f32 %v1329, %v1627
      %v1629 = vpop.f32.mrf.mxu0
      %1630 = vmatprep.mubr.f32.mxu0 %v1291
      %1631 = vmatmul.mubr.f32.gmra.mxu0 %v1290
      %v1632 = vpop.f32.mrf.mxu0
      %v1633 = vadd.f32 %v1329, %v1632
      %v1634 = vpop.f32.mrf.mxu0
      %1635 = vdwg.mxu0
      %v1636 = vmax.f32 %v1398, 0.0
      %v1637 = vmax.f32 %v1403, 0.0
      %v1638 = vmax.f32 %v1408, 0.0
      %v1639 = vmax.f32 %v1413, 0.0
      %v1640 = vmax.f32 %v1418, 0.0
      %v1641 = vmax.f32 %v1423, 0.0
      %v1642 = vmax.f32 %v1428, 0.0
      %v1643 = vmax.f32 %v1433, 0.0
      %v1644 = vmax.f32 %v1438, 0.0
      %v1645 = vmax.f32 %v1443, 0.0
      %v1646 = vmax.f32 %v1448, 0.0
      %v1647 = vmax.f32 %v1453, 0.0
      %v1648 = vmax.f32 %v1458, 0.0
      %v1649 = vmax.f32 %v1463, 0.0
      %v1650 = vmax.f32 %v1468, 0.0
      %v1651 = vmax.f32 %v1473, 0.0
      %v1652 = vmax.f32 %v1478, 0.0
      %v1653 = vmax.f32 %v1483, 0.0
      %v1654 = vmax.f32 %v1488, 0.0
      %v1655 = vmax.f32 %v1493, 0.0
      %v1656 = vmax.f32 %v1498, 0.0
      %v1657 = vmax.f32 %v1503, 0.0
      %v1658 = vmax.f32 %v1508, 0.0
      %v1659 = vmax.f32 %v1513, 0.0
      %v1660 = vmax.f32 %v1518, 0.0
      %v1661 = vmax.f32 %v1523, 0.0
      %v1662 = vmax.f32 %v1528, 0.0
      %v1663 = vmax.f32 %v1533, 0.0
      %v1664 = vmax.f32 %v1538, 0.0
      %v1665 = vmax.f32 %v1543, 0.0
      %v1666 = vmax.f32 %v1548, 0.0
      %v1667 = vmax.f32 %v1553, 0.0
      %v1668 = vmax.f32 %v1558, 0.0
      %v1669 = vmax.f32 %v1563, 0.0
      %v1670 = vmax.f32 %v1568, 0.0
      %v1671 = vmax.f32 %v1573, 0.0
      %v1672 = vmax.f32 %v1578, 0.0
      %v1673 = vmax.f32 %v1583, 0.0
      %v1674 = vmax.f32 %v1588, 0.0
      %v1675 = vmax.f32 %v1593, 0.0
      %v1676 = vmax.f32 %v1598, 0.0
      %v1677 = vmax.f32 %v1603, 0.0
      %v1678 = vmax.f32 %v1608, 0.0
      %v1679 = vmax.f32 %v1613, 0.0
      %v1680 = vmax.f32 %v1618, 0.0
      %v1681 = vmax.f32 %v1623, 0.0
      %v1682 = vmax.f32 %v1628, 0.0
      %v1683 = vmax.f32 %v1633, 0.0
      %v1684 = vsel %vm1096, 1, 0
      %v1685 = vsel %vm1097, 1, 0
      %v1686 = vsel %vm1098, 1, 0
      %v1687 = vsel %vm1099, 1, 0
      %v1688 = vsel %vm1100, 1, 0
      %v1689 = vsel %vm1101, 1, 0
      %v1690 = vsel %vm1102, 1, 0
      %v1691 = vsel %vm1103, 1, 0
      %v1692 = vsel %vm1104, 1, 0
      %v1693 = vsel %vm1105, 1, 0
      %v1694 = vsel %vm1106, 1, 0
      %v1695 = vsel %vm1107, 1, 0
      %v1696 = vsel %vm1108, 1, 0
      %v1697 = vsel %vm1109, 1, 0
      %v1698 = vsel %vm1110, 1, 0
      %v1699 = vsel %vm1111, 1, 0
      %v1700 = vsel %vm1112, 1, 0
      %v1701 = vsel %vm1113, 1, 0
      %v1702 = vsel %vm1114, 1, 0
      %v1703 = vsel %vm1115, 1, 0
      %v1704 = vsel %vm1116, 1, 0
      %v1705 = vsel %vm1117, 1, 0
      %v1706 = vsel %vm1118, 1, 0
      %v1707 = vsel %vm1119, 1, 0
      %v1708 = vsel %vm1120, 1, 0
      %v1709 = vsel %vm1121, 1, 0
      %v1710 = vsel %vm1122, 1, 0
      %v1711 = vsel %vm1123, 1, 0
      %v1712 = vsel %vm1124, 1, 0
      %v1713 = vsel %vm1125, 1, 0
      %v1714 = vsel %vm1126, 1, 0
      %v1715 = vsel %vm1127, 1, 0
      %v1716 = vsel %vm1128, 1, 0
      %v1717 = vsel %vm1129, 1, 0
      %v1718 = vsel %vm1130, 1, 0
      %v1719 = vsel %vm1131, 1, 0
      %v1720 = vsel %vm1132, 1, 0
      %v1721 = vsel %vm1133, 1, 0
      %v1722 = vsel %vm1134, 1, 0
      %v1723 = vsel %vm1135, 1, 0
      %v1724 = vsel %vm1136, 1, 0
      %v1725 = vsel %vm1137, 1, 0
      %v1726 = vsel %vm1138, 1, 0
      %v1727 = vsel %vm1139, 1, 0
      %v1728 = vsel %vm1140, 1, 0
      %v1729 = vsel %vm1141, 1, 0
      %v1730 = vsel %vm1142, 1, 0
      %v1731 = vsel %vm1143, 1, 0
      %vm1732 = vcmp.eq.s32.totalorder %v1684, 1
      %vm1733 = vcmp.eq.s32.totalorder %v1685, 1
      %vm1734 = vcmp.eq.s32.totalorder %v1686, 1
      %vm1735 = vcmp.eq.s32.totalorder %v1687, 1
      %vm1736 = vcmp.eq.s32.totalorder %v1688, 1
      %vm1737 = vcmp.eq.s32.totalorder %v1689, 1
      %vm1738 = vcmp.eq.s32.totalorder %v1690, 1
      %vm1739 = vcmp.eq.s32.totalorder %v1691, 1
      %vm1740 = vcmp.eq.s32.totalorder %v1692, 1
      %vm1741 = vcmp.eq.s32.totalorder %v1693, 1
      %vm1742 = vcmp.eq.s32.totalorder %v1694, 1
      %vm1743 = vcmp.eq.s32.totalorder %v1695, 1
      %vm1744 = vcmp.eq.s32.totalorder %v1696, 1
      %vm1745 = vcmp.eq.s32.totalorder %v1697, 1
      %vm1746 = vcmp.eq.s32.totalorder %v1698, 1
      %vm1747 = vcmp.eq.s32.totalorder %v1699, 1
      %vm1748 = vcmp.eq.s32.totalorder %v1700, 1
      %vm1749 = vcmp.eq.s32.totalorder %v1701, 1
      %vm1750 = vcmp.eq.s32.totalorder %v1702, 1
      %vm1751 = vcmp.eq.s32.totalorder %v1703, 1
      %vm1752 = vcmp.eq.s32.totalorder %v1704, 1
      %vm1753 = vcmp.eq.s32.totalorder %v1705, 1
      %vm1754 = vcmp.eq.s32.totalorder %v1706, 1
      %vm1755 = vcmp.eq.s32.totalorder %v1707, 1
      %vm1756 = vcmp.eq.s32.totalorder %v1708, 1
      %vm1757 = vcmp.eq.s32.totalorder %v1709, 1
      %vm1758 = vcmp.eq.s32.totalorder %v1710, 1
      %vm1759 = vcmp.eq.s32.totalorder %v1711, 1
      %vm1760 = vcmp.eq.s32.totalorder %v1712, 1
      %vm1761 = vcmp.eq.s32.totalorder %v1713, 1
      %vm1762 = vcmp.eq.s32.totalorder %v1714, 1
      %vm1763 = vcmp.eq.s32.totalorder %v1715, 1
      %vm1764 = vcmp.eq.s32.totalorder %v1716, 1
      %vm1765 = vcmp.eq.s32.totalorder %v1717, 1
      %vm1766 = vcmp.eq.s32.totalorder %v1718, 1
      %vm1767 = vcmp.eq.s32.totalorder %v1719, 1
      %vm1768 = vcmp.eq.s32.totalorder %v1720, 1
      %vm1769 = vcmp.eq.s32.totalorder %v1721, 1
      %vm1770 = vcmp.eq.s32.totalorder %v1722, 1
      %vm1771 = vcmp.eq.s32.totalorder %v1723, 1
      %vm1772 = vcmp.eq.s32.totalorder %v1724, 1
      %vm1773 = vcmp.eq.s32.totalorder %v1725, 1
      %vm1774 = vcmp.eq.s32.totalorder %v1726, 1
      %vm1775 = vcmp.eq.s32.totalorder %v1727, 1
      %vm1776 = vcmp.eq.s32.totalorder %v1728, 1
      %vm1777 = vcmp.eq.s32.totalorder %v1729, 1
      %vm1778 = vcmp.eq.s32.totalorder %v1730, 1
      %vm1779 = vcmp.eq.s32.totalorder %v1731, 1
      %v1780 = vsel %vm1732, %v1636, 0.0
      %v1781 = vsel %vm1733, %v1637, 0.0
      %v1782 = vsel %vm1734, %v1638, 0.0
      %v1783 = vsel %vm1735, %v1639, 0.0
      %v1784 = vsel %vm1736, %v1640, 0.0
      %v1785 = vsel %vm1737, %v1641, 0.0
      %v1786 = vsel %vm1738, %v1642, 0.0
      %v1787 = vsel %vm1739, %v1643, 0.0
      %v1788 = vsel %vm1740, %v1644, 0.0
      %v1789 = vsel %vm1741, %v1645, 0.0
      %v1790 = vsel %vm1742, %v1646, 0.0
      %v1791 = vsel %vm1743, %v1647, 0.0
      %v1792 = vsel %vm1744, %v1648, 0.0
      %v1793 = vsel %vm1745, %v1649, 0.0
      %v1794 = vsel %vm1746, %v1650, 0.0
      %v1795 = vsel %vm1747, %v1651, 0.0
      %v1796 = vsel %vm1748, %v1652, 0.0
      %v1797 = vsel %vm1749, %v1653, 0.0
      %v1798 = vsel %vm1750, %v1654, 0.0
      %v1799 = vsel %vm1751, %v1655, 0.0
      %v1800 = vsel %vm1752, %v1656, 0.0
      %v1801 = vsel %vm1753, %v1657, 0.0
      %v1802 = vsel %vm1754, %v1658, 0.0
      %v1803 = vsel %vm1755, %v1659, 0.0
      %v1804 = vsel %vm1756, %v1660, 0.0
      %v1805 = vsel %vm1757, %v1661, 0.0
      %v1806 = vsel %vm1758, %v1662, 0.0
      %v1807 = vsel %vm1759, %v1663, 0.0
      %v1808 = vsel %vm1760, %v1664, 0.0
      %v1809 = vsel %vm1761, %v1665, 0.0
      %v1810 = vsel %vm1762, %v1666, 0.0
      %v1811 = vsel %vm1763, %v1667, 0.0
      %v1812 = vsel %vm1764, %v1668, 0.0
      %v1813 = vsel %vm1765, %v1669, 0.0
      %v1814 = vsel %vm1766, %v1670, 0.0
      %v1815 = vsel %vm1767, %v1671, 0.0
      %v1816 = vsel %vm1768, %v1672, 0.0
      %v1817 = vsel %vm1769, %v1673, 0.0
      %v1818 = vsel %vm1770, %v1674, 0.0
      %v1819 = vsel %vm1771, %v1675, 0.0
      %v1820 = vsel %vm1772, %v1676, 0.0
      %v1821 = vsel %vm1773, %v1677, 0.0
      %v1822 = vsel %vm1774, %v1678, 0.0
      %v1823 = vsel %vm1775, %v1679, 0.0
      %v1824 = vsel %vm1776, %v1680, 0.0
      %v1825 = vsel %vm1777, %v1681, 0.0
      %v1826 = vsel %vm1778, %v1682, 0.0
      %v1827 = vsel %vm1779, %v1683, 0.0
      %1828 = vst.msk [vmem:[#allocation2 + $0x68] sm:$0xff] %vm1144, %v1780
      %1829 = vst.msk [vmem:[#allocation2 + $0x70] sm:$0xff] %vm1144, %v1781
      %1830 = vst.msk [vmem:[#allocation2 + $0x78] sm:$0xff] %vm1144, %v1782
      %1831 = vst.msk [vmem:[#allocation2 + $0x80] sm:$0xff] %vm1144, %v1783
      %1832 = vst.msk [vmem:[#allocation2 + $0x88] sm:$0xff] %vm1144, %v1784
      %1833 = vst.msk [vmem:[#allocation2 + $0x90] sm:$0xff] %vm1144, %v1785
      %1834 = vst.msk [vmem:[#allocation2 + $0x98] sm:$0xff] %vm1144, %v1786
      %1835 = vst.msk [vmem:[#allocation2 + $0xa0] sm:$0xff] %vm1144, %v1787
      %1836 = vst.msk [vmem:[#allocation2 + $0xa8] sm:$0xff] %vm1144, %v1788
      %1837 = vst.msk [vmem:[#allocation2 + $0xb0] sm:$0xff] %vm1144, %v1789
      %1838 = vst.msk [vmem:[#allocation2 + $0xb8] sm:$0xff] %vm1144, %v1790
      %1839 = vst.msk [vmem:[#allocation2 + $0xc0] sm:$0xff] %vm1144, %v1791
      %1840 = vst.msk [vmem:[#allocation2 + $0xc8] sm:$0xff] %vm1144, %v1792
      %1841 = vst.msk [vmem:[#allocation2 + $0xd0] sm:$0xff] %vm1144, %v1793
      %1842 = vst.msk [vmem:[#allocation2 + $0xd8] sm:$0xff] %vm1144, %v1794
      %1843 = vst.msk [vmem:[#allocation2 + $0xe0] sm:$0xff] %vm1144, %v1795
      %1844 = vst.msk [vmem:[#allocation2 + $0xe8] sm:$0xff] %vm1144, %v1796
      %1845 = vst.msk [vmem:[#allocation2 + $0xf0] sm:$0xff] %vm1144, %v1797
      %1846 = vst.msk [vmem:[#allocation2 + $0xf8] sm:$0xff] %vm1144, %v1798
      %1847 = vst.msk [vmem:[#allocation2 + $0x100] sm:$0xff] %vm1144, %v1799
      %1848 = vst.msk [vmem:[#allocation2 + $0x108] sm:$0xff] %vm1144, %v1800
      %1849 = vst.msk [vmem:[#allocation2 + $0x110] sm:$0xff] %vm1144, %v1801
      %1850 = vst.msk [vmem:[#allocation2 + $0x118] sm:$0xff] %vm1144, %v1802
      %1851 = vst.msk [vmem:[#allocation2 + $0x120] sm:$0xff] %vm1144, %v1803
      %1852 = vst.msk [vmem:[#allocation2 + $0x128] sm:$0xff] %vm1144, %v1804
      %1853 = vst.msk [vmem:[#allocation2 + $0x130] sm:$0xff] %vm1144, %v1805
      %1854 = vst.msk [vmem:[#allocation2 + $0x138] sm:$0xff] %vm1144, %v1806
      %1855 = vst.msk [vmem:[#allocation2 + $0x140] sm:$0xff] %vm1144, %v1807
      %1856 = vst.msk [vmem:[#allocation2 + $0x148] sm:$0xff] %vm1144, %v1808
      %1857 = vst.msk [vmem:[#allocation2 + $0x150] sm:$0xff] %vm1144, %v1809
      %1858 = vst.msk [vmem:[#allocation2 + $0x158] sm:$0xff] %vm1144, %v1810
      %1859 = vst.msk [vmem:[#allocation2 + $0x160] sm:$0xff] %vm1144, %v1811
      %1860 = vst.msk [vmem:[#allocation2 + $0x168] sm:$0xff] %vm1144, %v1812
      %1861 = vst.msk [vmem:[#allocation2 + $0x170] sm:$0xff] %vm1144, %v1813
      %1862 = vst.msk [vmem:[#allocation2 + $0x178] sm:$0xff] %vm1144, %v1814
      %1863 = vst.msk [vmem:[#allocation2 + $0x180] sm:$0xff] %vm1144, %v1815
      %1864 = vst.msk [vmem:[#allocation2 + $0x188] sm:$0xff] %vm1144, %v1816
      %1865 = vst.msk [vmem:[#allocation2 + $0x190] sm:$0xff] %vm1144, %v1817
      %1866 = vst.msk [vmem:[#allocation2 + $0x198] sm:$0xff] %vm1144, %v1818
      %1867 = vst.msk [vmem:[#allocation2 + $0x1a0] sm:$0xff] %vm1144, %v1819
      %1868 = vst.msk [vmem:[#allocation2 + $0x1a8] sm:$0xff] %vm1144, %v1820
      %1869 = vst.msk [vmem:[#allocation2 + $0x1b0] sm:$0xff] %vm1144, %v1821
      %1870 = vst.msk [vmem:[#allocation2 + $0x1b8] sm:$0xff] %vm1144, %v1822
      %1871 = vst.msk [vmem:[#allocation2 + $0x1c0] sm:$0xff] %vm1144, %v1823
      %1872 = vst.msk [vmem:[#allocation2 + $0x1c8] sm:$0xff] %vm1144, %v1824
      %1873 = vst.msk [vmem:[#allocation2 + $0x1d0] sm:$0xff] %vm1144, %v1825
      %1874 = vst.msk [vmem:[#allocation2 + $0x1d8] sm:$0xff] %vm1144, %v1826
      %1875 = vst.msk [vmem:[#allocation2 + $0x1e0] sm:$0xff] %vm1144, %v1827
      %v1876 = vld [vmem:[#allocation2 + $0x36] sm:$0xff]
      %v1877 = vld [vmem:[#allocation2 + $0x3e] sm:$0xff]
      %v1878 = vld [vmem:[#allocation2 + $0x46] sm:$0xff]
      %v1879 = vld [vmem:[#allocation2 + $0x4e] sm:$0xff]
      %v1880 = vld [vmem:[#allocation2 + $0x56] sm:$0xff]
      %v1881 = vld [vmem:[#allocation2 + $0x5e] sm:$0xff]
      %v1882 = vld [vmem:[#allocation2 + $0x66] sm:$0xff]
      %v1883 = vld [vmem:[#allocation2 + $0x6e] sm:$0xff]
      %v1884 = vld [vmem:[#allocation2 + $0x76] sm:$0xff]
      %v1885 = vld [vmem:[#allocation2 + $0x7e] sm:$0xff]
      %v1886 = vld [vmem:[#allocation2 + $0x86] sm:$0xff]
      %v1887 = vld [vmem:[#allocation2 + $0x8e] sm:$0xff]
      %v1888 = vld [vmem:[#allocation2 + $0x96] sm:$0xff]
      %v1889 = vld [vmem:[#allocation2 + $0x9e] sm:$0xff]
      %v1890 = vld [vmem:[#allocation2 + $0xa6] sm:$0xff]
      %v1891 = vld [vmem:[#allocation2 + $0xae] sm:$0xff]
      %v1892 = vld [vmem:[#allocation2 + $0xb6] sm:$0xff]
      %v1893 = vld [vmem:[#allocation2 + $0xbe] sm:$0xff]
      %v1894 = vld [vmem:[#allocation2 + $0xc6] sm:$0xff]
      %v1895 = vld [vmem:[#allocation2 + $0xce] sm:$0xff]
      %v1896 = vld [vmem:[#allocation2 + $0xd6] sm:$0xff]
      %v1897 = vld [vmem:[#allocation2 + $0xde] sm:$0xff]
      %v1898 = vld [vmem:[#allocation2 + $0xe6] sm:$0xff]
      %v1899 = vld [vmem:[#allocation2 + $0xee] sm:$0xff]
      %v1900 = vld [vmem:[#allocation2 + $0xf6] sm:$0xff]
      %v1901 = vld [vmem:[#allocation2 + $0xfe] sm:$0xff]
      %v1902 = vld [vmem:[#allocation2 + $0x106] sm:$0xff]
      %v1903 = vld [vmem:[#allocation2 + $0x10e] sm:$0xff]
      %v1904 = vld [vmem:[#allocation2 + $0x116] sm:$0xff]
      %v1905 = vld [vmem:[#allocation2 + $0x11e] sm:$0xff]
      %v1906 = vld [vmem:[#allocation2 + $0x126] sm:$0xff]
      %v1907 = vld [vmem:[#allocation2 + $0x12e] sm:$0xff]
      %v1908 = vld [vmem:[#allocation2 + $0x136] sm:$0xff]
      %v1909 = vld [vmem:[#allocation2 + $0x13e] sm:$0xff]
      %v1910 = vld [vmem:[#allocation2 + $0x146] sm:$0xff]
      %v1911 = vld [vmem:[#allocation2 + $0x14e] sm:$0xff]
      %v1912 = vld [vmem:[#allocation2 + $0x156] sm:$0xff]
      %v1913 = vld [vmem:[#allocation2 + $0x15e] sm:$0xff]
      %v1914 = vld [vmem:[#allocation2 + $0x166] sm:$0xff]
      %v1915 = vld [vmem:[#allocation2 + $0x16e] sm:$0xff]
      %v1916 = vld [vmem:[#allocation2 + $0x176] sm:$0xff]
      %v1917 = vld [vmem:[#allocation2 + $0x17e] sm:$0xff]
      %v1918 = vld [vmem:[#allocation2 + $0x186] sm:$0xff]
      %v1919 = vld [vmem:[#allocation2 + $0x18e] sm:$0xff]
      %v1920 = vld [vmem:[#allocation2 + $0x196] sm:$0xff]
      %v1921 = vld [vmem:[#allocation2 + $0x19e] sm:$0xff]
      %v1922 = vld [vmem:[#allocation2 + $0x1a6] sm:$0xff]
      %v1923 = vld [vmem:[#allocation2 + $0x1ae] sm:$0xff]
      %v1924 = vld [vmem:[#allocation2 + $0x1b6] sm:$0xff]
      %v1925 = vld [vmem:[#allocation2 + $0x1be] sm:$0xff]
      %v1926 = vld [vmem:[#allocation2 + $0x1c6] sm:$0xff]
      %v1927 = vld [vmem:[#allocation2 + $0x1ce] sm:$0xff]
      %v1928 = vld [vmem:[#allocation2 + $0x1d6] sm:$0xff]
      %v1929 = vld [vmem:[#allocation2 + $0x1de] sm:$0xff]
      %v1930 = vld [vmem:[#allocation2 + $0x1e6] sm:$0xff]
      %v1931 = vld [vmem:[#allocation2 + $0x1ee] sm:$0xff]
      %v1932 = vld [vmem:[#allocation2 + $0x1f6] sm:$0xff]
      %v1933 = vld [vmem:[#allocation2 + $0x1fe] sm:$0xff]
      %v1934 = vld [vmem:[#allocation2 + $0x206] sm:$0xff]
      %v1935 = vld [vmem:[#allocation2 + $0x20e] sm:$0xff]
      %1936 = vst.msk [vmem:[#allocation3] sm:$0xff] %vm1144, %v1876
      %1937 = vst.msk [vmem:[#allocation3 + $0x18] sm:$0xff] %vm1144, %v1877
      %1938 = vst.msk [vmem:[#allocation3 + $0x30] sm:$0xff] %vm1144, %v1878
      %1939 = vst.msk [vmem:[#allocation3 + $0x48] sm:$0xff] %vm1144, %v1879
      %1940 = vst.msk [vmem:[#allocation3 + $0x60] sm:$0xff] %vm1144, %v1880
      %1941 = vst.msk [vmem:[#allocation3 + $0x78] sm:$0xff] %vm1144, %v1881
      %1942 = vst.msk [vmem:[#allocation3 + $0x90] sm:$0xff] %vm1144, %v1882
      %1943 = vst.msk [vmem:[#allocation3 + $0xa8] sm:$0xff] %vm1144, %v1883
      %1944 = vst.msk [vmem:[#allocation3 + $0xc0] sm:$0xff] %vm1144, %v1884
      %1945 = vst.msk [vmem:[#allocation3 + $0xd8] sm:$0xff] %vm1144, %v1885
      %1946 = vst.msk [vmem:[#allocation3 + $0xf0] sm:$0xff] %vm1144, %v1886
      %1947 = vst.msk [vmem:[#allocation3 + $0x108] sm:$0xff] %vm1144, %v1887
      %1948 = vst.msk [vmem:[#allocation3 + $0x120] sm:$0xff] %vm1144, %v1888
      %1949 = vst.msk [vmem:[#allocation3 + $0x138] sm:$0xff] %vm1144, %v1889
      %1950 = vst.msk [vmem:[#allocation3 + $0x150] sm:$0xff] %vm1144, %v1890
      %1951 = vst.msk [vmem:[#allocation3 + $0x168] sm:$0xff] %vm1144, %v1891
      %1952 = vst.msk [vmem:[#allocation3 + $0x180] sm:$0xff] %vm1144, %v1892
      %1953 = vst.msk [vmem:[#allocation3 + $0x198] sm:$0xff] %vm1144, %v1893
      %1954 = vst.msk [vmem:[#allocation3 + $0x1b0] sm:$0xff] %vm1144, %v1894
      %1955 = vst.msk [vmem:[#allocation3 + $0x1c8] sm:$0xff] %vm1144, %v1895
      %1956 = vst.msk [vmem:[#allocation3 + $0x1e0] sm:$0xff] %vm1144, %v1896
      %1957 = vst.msk [vmem:[#allocation3 + $0x1f8] sm:$0xff] %vm1144, %v1897
      %1958 = vst.msk [vmem:[#allocation3 + $0x210] sm:$0xff] %vm1144, %v1898
      %1959 = vst.msk [vmem:[#allocation3 + $0x228] sm:$0xff] %vm1144, %v1899
      %1960 = vst.msk [vmem:[#allocation3 + $0x240] sm:$0xff] %vm1144, %v1900
      %1961 = vst.msk [vmem:[#allocation3 + $0x258] sm:$0xff] %vm1144, %v1901
      %1962 = vst.msk [vmem:[#allocation3 + $0x270] sm:$0xff] %vm1144, %v1902
      %1963 = vst.msk [vmem:[#allocation3 + $0x288] sm:$0xff] %vm1144, %v1903
      %1964 = vst.msk [vmem:[#allocation3 + $0x2a0] sm:$0xff] %vm1144, %v1904
      %1965 = vst.msk [vmem:[#allocation3 + $0x2b8] sm:$0xff] %vm1144, %v1905
      %1966 = vst.msk [vmem:[#allocation3 + $0x2d0] sm:$0xff] %vm1144, %v1906
      %1967 = vst.msk [vmem:[#allocation3 + $0x2e8] sm:$0xff] %vm1144, %v1907
      %1968 = vst.msk [vmem:[#allocation3 + $0x300] sm:$0xff] %vm1144, %v1908
      %1969 = vst.msk [vmem:[#allocation3 + $0x318] sm:$0xff] %vm1144, %v1909
      %1970 = vst.msk [vmem:[#allocation3 + $0x330] sm:$0xff] %vm1144, %v1910
      %1971 = vst.msk [vmem:[#allocation3 + $0x348] sm:$0xff] %vm1144, %v1911
      %1972 = vst.msk [vmem:[#allocation3 + $0x360] sm:$0xff] %vm1144, %v1912
      %1973 = vst.msk [vmem:[#allocation3 + $0x378] sm:$0xff] %vm1144, %v1913
      %1974 = vst.msk [vmem:[#allocation3 + $0x390] sm:$0xff] %vm1144, %v1914
      %1975 = vst.msk [vmem:[#allocation3 + $0x3a8] sm:$0xff] %vm1144, %v1915
      %1976 = vst.msk [vmem:[#allocation3 + $0x3c0] sm:$0xff] %vm1144, %v1916
      %1977 = vst.msk [vmem:[#allocation3 + $0x3d8] sm:$0xff] %vm1144, %v1917
      %1978 = vst.msk [vmem:[#allocation3 + $0x3f0] sm:$0xff] %vm1144, %v1918
      %1979 = vst.msk [vmem:[#allocation3 + $0x408] sm:$0xff] %vm1144, %v1919
      %1980 = vst.msk [vmem:[#allocation3 + $0x420] sm:$0xff] %vm1144, %v1920
      %1981 = vst.msk [vmem:[#allocation3 + $0x438] sm:$0xff] %vm1144, %v1921
      %1982 = vst.msk [vmem:[#allocation3 + $0x450] sm:$0xff] %vm1144, %v1922
      %1983 = vst.msk [vmem:[#allocation3 + $0x468] sm:$0xff] %vm1144, %v1923
      %1984 = vst.msk [vmem:[#allocation3 + $0x480] sm:$0xff] %vm1144, %v1924
      %1985 = vst.msk [vmem:[#allocation3 + $0x498] sm:$0xff] %vm1144, %v1925
      %1986 = vst.msk [vmem:[#allocation3 + $0x4b0] sm:$0xff] %vm1144, %v1926
      %1987 = vst.msk [vmem:[#allocation3 + $0x4c8] sm:$0xff] %vm1144, %v1927
      %1988 = vst.msk [vmem:[#allocation3 + $0x4e0] sm:$0xff] %vm1144, %v1928
      %1989 = vst.msk [vmem:[#allocation3 + $0x4f8] sm:$0xff] %vm1144, %v1929
      %1990 = vst.msk [vmem:[#allocation3 + $0x510] sm:$0xff] %vm1144, %v1930
      %1991 = vst.msk [vmem:[#allocation3 + $0x528] sm:$0xff] %vm1144, %v1931
      %1992 = vst.msk [vmem:[#allocation3 + $0x540] sm:$0xff] %vm1144, %v1932
      %1993 = vst.msk [vmem:[#allocation3 + $0x558] sm:$0xff] %vm1144, %v1933
      %1994 = vst.msk [vmem:[#allocation3 + $0x570] sm:$0xff] %vm1144, %v1934
      %1995 = vst.msk [vmem:[#allocation3 + $0x588] sm:$0xff] %vm1144, %v1935
      %v1996 = vld [vmem:[#allocation2 + $0x37] sm:$0xff]
      %v1997 = vld [vmem:[#allocation2 + $0x3f] sm:$0xff]
      %v1998 = vld [vmem:[#allocation2 + $0x47] sm:$0xff]
      %v1999 = vld [vmem:[#allocation2 + $0x4f] sm:$0xff]
      %v2000 = vld [vmem:[#allocation2 + $0x57] sm:$0xff]
      %v2001 = vld [vmem:[#allocation2 + $0x5f] sm:$0xff]
      %v2002 = vld [vmem:[#allocation2 + $0x67] sm:$0xff]
      %v2003 = vld [vmem:[#allocation2 + $0x6f] sm:$0xff]
      %v2004 = vld [vmem:[#allocation2 + $0x77] sm:$0xff]
      %v2005 = vld [vmem:[#allocation2 + $0x7f] sm:$0xff]
      %v2006 = vld [vmem:[#allocation2 + $0x87] sm:$0xff]
      %v2007 = vld [vmem:[#allocation2 + $0x8f] sm:$0xff]
      %v2008 = vld [vmem:[#allocation2 + $0x97] sm:$0xff]
      %v2009 = vld [vmem:[#allocation2 + $0x9f] sm:$0xff]
      %v2010 = vld [vmem:[#allocation2 + $0xa7] sm:$0xff]
      %v2011 = vld [vmem:[#allocation2 + $0xaf] sm:$0xff]
      %v2012 = vld [vmem:[#allocation2 + $0xb7] sm:$0xff]
      %v2013 = vld [vmem:[#allocation2 + $0xbf] sm:$0xff]
      %v2014 = vld [vmem:[#allocation2 + $0xc7] sm:$0xff]
      %v2015 = vld [vmem:[#allocation2 + $0xcf] sm:$0xff]
      %v2016 = vld [vmem:[#allocation2 + $0xd7] sm:$0xff]
      %v2017 = vld [vmem:[#allocation2 + $0xdf] sm:$0xff]
      %v2018 = vld [vmem:[#allocation2 + $0xe7] sm:$0xff]
      %v2019 = vld [vmem:[#allocation2 + $0xef] sm:$0xff]
      %v2020 = vld [vmem:[#allocation2 + $0xf7] sm:$0xff]
      %v2021 = vld [vmem:[#allocation2 + $0xff] sm:$0xff]
      %v2022 = vld [vmem:[#allocation2 + $0x107] sm:$0xff]
      %v2023 = vld [vmem:[#allocation2 + $0x10f] sm:$0xff]
      %v2024 = vld [vmem:[#allocation2 + $0x117] sm:$0xff]
      %v2025 = vld [vmem:[#allocation2 + $0x11f] sm:$0xff]
      %v2026 = vld [vmem:[#allocation2 + $0x127] sm:$0xff]
      %v2027 = vld [vmem:[#allocation2 + $0x12f] sm:$0xff]
      %v2028 = vld [vmem:[#allocation2 + $0x137] sm:$0xff]
      %v2029 = vld [vmem:[#allocation2 + $0x13f] sm:$0xff]
      %v2030 = vld [vmem:[#allocation2 + $0x147] sm:$0xff]
      %v2031 = vld [vmem:[#allocation2 + $0x14f] sm:$0xff]
      %v2032 = vld [vmem:[#allocation2 + $0x157] sm:$0xff]
      %v2033 = vld [vmem:[#allocation2 + $0x15f] sm:$0xff]
      %v2034 = vld [vmem:[#allocation2 + $0x167] sm:$0xff]
      %v2035 = vld [vmem:[#allocation2 + $0x16f] sm:$0xff]
      %v2036 = vld [vmem:[#allocation2 + $0x177] sm:$0xff]
      %v2037 = vld [vmem:[#allocation2 + $0x17f] sm:$0xff]
      %v2038 = vld [vmem:[#allocation2 + $0x187] sm:$0xff]
      %v2039 = vld [vmem:[#allocation2 + $0x18f] sm:$0xff]
      %v2040 = vld [vmem:[#allocation2 + $0x197] sm:$0xff]
      %v2041 = vld [vmem:[#allocation2 + $0x19f] sm:$0xff]
      %v2042 = vld [vmem:[#allocation2 + $0x1a7] sm:$0xff]
      %v2043 = vld [vmem:[#allocation2 + $0x1af] sm:$0xff]
      %v2044 = vld [vmem:[#allocation2 + $0x1b7] sm:$0xff]
      %v2045 = vld [vmem:[#allocation2 + $0x1bf] sm:$0xff]
      %v2046 = vld [vmem:[#allocation2 + $0x1c7] sm:$0xff]
      %v2047 = vld [vmem:[#allocation2 + $0x1cf] sm:$0xff]
      %v2048 = vld [vmem:[#allocation2 + $0x1d7] sm:$0xff]
      %v2049 = vld [vmem:[#allocation2 + $0x1df] sm:$0xff]
      %v2050 = vld [vmem:[#allocation2 + $0x1e7] sm:$0xff]
      %v2051 = vld [vmem:[#allocation2 + $0x1ef] sm:$0xff]
      %v2052 = vld [vmem:[#allocation2 + $0x1f7] sm:$0xff]
      %v2053 = vld [vmem:[#allocation2 + $0x1ff] sm:$0xff]
      %v2054 = vld [vmem:[#allocation2 + $0x207] sm:$0xff]
      %v2055 = vld [vmem:[#allocation2 + $0x20f] sm:$0xff]
      %2116 = vrot.lane.b32.xlu0 %v1996, 64
      %v2117 = vpop.permute.xlu0 %2116
      %2118 = vrot.lane.b32.xlu0 %v1997, 64
      %v2119 = vpop.permute.xlu0 %2118
      %2120 = vrot.lane.b32.xlu0 %v1998, 64
      %v2121 = vpop.permute.xlu0 %2120
      %2122 = vrot.lane.b32.xlu0 %v1999, 64
      %v2123 = vpop.permute.xlu0 %2122
      %2124 = vrot.lane.b32.xlu0 %v2000, 64
      %v2125 = vpop.permute.xlu0 %2124
      %2126 = vrot.lane.b32.xlu0 %v2001, 64
      %v2127 = vpop.permute.xlu0 %2126
      %2128 = vrot.lane.b32.xlu0 %v2002, 64
      %v2129 = vpop.permute.xlu0 %2128
      %2130 = vrot.lane.b32.xlu0 %v2003, 64
      %v2131 = vpop.permute.xlu0 %2130
      %2132 = vrot.lane.b32.xlu0 %v2004, 64
      %v2133 = vpop.permute.xlu0 %2132
      %2134 = vrot.lane.b32.xlu0 %v2005, 64
      %v2135 = vpop.permute.xlu0 %2134
      %2136 = vrot.lane.b32.xlu0 %v2006, 64
      %v2137 = vpop.permute.xlu0 %2136
      %2138 = vrot.lane.b32.xlu0 %v2007, 64
      %v2139 = vpop.permute.xlu0 %2138
      %2140 = vrot.lane.b32.xlu0 %v2008, 64
      %v2141 = vpop.permute.xlu0 %2140
      %2142 = vrot.lane.b32.xlu0 %v2009, 64
      %v2143 = vpop.permute.xlu0 %2142
      %2144 = vrot.lane.b32.xlu0 %v2010, 64
      %v2145 = vpop.permute.xlu0 %2144
      %2146 = vrot.lane.b32.xlu0 %v2011, 64
      %v2147 = vpop.permute.xlu0 %2146
      %2148 = vrot.lane.b32.xlu0 %v2012, 64
      %v2149 = vpop.permute.xlu0 %2148
      %2150 = vrot.lane.b32.xlu0 %v2013, 64
      %v2151 = vpop.permute.xlu0 %2150
      %2152 = vrot.lane.b32.xlu0 %v2014, 64
      %v2153 = vpop.permute.xlu0 %2152
      %2154 = vrot.lane.b32.xlu0 %v2015, 64
      %v2155 = vpop.permute.xlu0 %2154
      %2156 = vrot.lane.b32.xlu0 %v2016, 64
      %v2157 = vpop.permute.xlu0 %2156
      %2158 = vrot.lane.b32.xlu0 %v2017, 64
      %v2159 = vpop.permute.xlu0 %2158
      %2160 = vrot.lane.b32.xlu0 %v2018, 64
      %v2161 = vpop.permute.xlu0 %2160
      %2162 = vrot.lane.b32.xlu0 %v2019, 64
      %v2163 = vpop.permute.xlu0 %2162
      %2164 = vrot.lane.b32.xlu0 %v2020, 64
      %v2165 = vpop.permute.xlu0 %2164
      %2166 = vrot.lane.b32.xlu0 %v2021, 64
      %v2167 = vpop.permute.xlu0 %2166
      %2168 = vrot.lane.b32.xlu0 %v2022, 64
      %v2169 = vpop.permute.xlu0 %2168
      %2170 = vrot.lane.b32.xlu0 %v2023, 64
      %v2171 = vpop.permute.xlu0 %2170
      %2172 = vrot.lane.b32.xlu0 %v2024, 64
      %v2173 = vpop.permute.xlu0 %2172
      %2174 = vrot.lane.b32.xlu0 %v2025, 64
      %v2175 = vpop.permute.xlu0 %2174
      %2176 = vrot.lane.b32.xlu0 %v2026, 64
      %v2177 = vpop.permute.xlu0 %2176
      %2178 = vrot.lane.b32.xlu0 %v2027, 64
      %v2179 = vpop.permute.xlu0 %2178
      %2180 = vrot.lane.b32.xlu0 %v2028, 64
      %v2181 = vpop.permute.xlu0 %2180
      %2182 = vrot.lane.b32.xlu0 %v2029, 64
      %v2183 = vpop.permute.xlu0 %2182
      %2184 = vrot.lane.b32.xlu0 %v2030, 64
      %v2185 = vpop.permute.xlu0 %2184
      %2186 = vrot.lane.b32.xlu0 %v2031, 64
      %v2187 = vpop.permute.xlu0 %2186
      %2188 = vrot.lane.b32.xlu0 %v2032, 64
      %v2189 = vpop.permute.xlu0 %2188
      %2190 = vrot.lane.b32.xlu0 %v2033, 64
      %v2191 = vpop.permute.xlu0 %2190
      %2192 = vrot.lane.b32.xlu0 %v2034, 64
      %v2193 = vpop.permute.xlu0 %2192
      %2194 = vrot.lane.b32.xlu0 %v2035, 64
      %v2195 = vpop.permute.xlu0 %2194
      %2196 = vrot.lane.b32.xlu0 %v2036, 64
      %v2197 = vpop.permute.xlu0 %2196
      %2198 = vrot.lane.b32.xlu0 %v2037, 64
      %v2199 = vpop.permute.xlu0 %2198
      %2200 = vrot.lane.b32.xlu0 %v2038, 64
      %v2201 = vpop.permute.xlu0 %2200
      %2202 = vrot.lane.b32.xlu0 %v2039, 64
      %v2203 = vpop.permute.xlu0 %2202
      %2204 = vrot.lane.b32.xlu0 %v2040, 64
      %v2205 = vpop.permute.xlu0 %2204
      %2206 = vrot.lane.b32.xlu0 %v2041, 64
      %v2207 = vpop.permute.xlu0 %2206
      %2208 = vrot.lane.b32.xlu0 %v2042, 64
      %v2209 = vpop.permute.xlu0 %2208
      %2210 = vrot.lane.b32.xlu0 %v2043, 64
      %v2211 = vpop.permute.xlu0 %2210
      %2212 = vrot.lane.b32.xlu0 %v2044, 64
      %v2213 = vpop.permute.xlu0 %2212
      %2214 = vrot.lane.b32.xlu0 %v2045, 64
      %v2215 = vpop.permute.xlu0 %2214
      %2216 = vrot.lane.b32.xlu0 %v2046, 64
      %v2217 = vpop.permute.xlu0 %2216
      %2218 = vrot.lane.b32.xlu0 %v2047, 64
      %v2219 = vpop.permute.xlu0 %2218
      %2220 = vrot.lane.b32.xlu0 %v2048, 64
      %v2221 = vpop.permute.xlu0 %2220
      %2222 = vrot.lane.b32.xlu0 %v2049, 64
      %v2223 = vpop.permute.xlu0 %2222
      %2224 = vrot.lane.b32.xlu0 %v2050, 64
      %v2225 = vpop.permute.xlu0 %2224
      %2226 = vrot.lane.b32.xlu0 %v2051, 64
      %v2227 = vpop.permute.xlu0 %2226
      %2228 = vrot.lane.b32.xlu0 %v2052, 64
      %v2229 = vpop.permute.xlu0 %2228
      %2230 = vrot.lane.b32.xlu0 %v2053, 64
      %v2231 = vpop.permute.xlu0 %2230
      %2232 = vrot.lane.b32.xlu0 %v2054, 64
      %v2233 = vpop.permute.xlu0 %2232
      %2234 = vrot.lane.b32.xlu0 %v2055, 64
      %v2235 = vpop.permute.xlu0 %2234
      %vm2296 = vcmask 1048064
      %2297 = vst.msk [vmem:[#allocation3] sm:$0xff] %vm2296, %v2117
      %2298 = vst.msk [vmem:[#allocation3 + $0x18] sm:$0xff] %vm2296, %v2119
      %2299 = vst.msk [vmem:[#allocation3 + $0x30] sm:$0xff] %vm2296, %v2121
      %2300 = vst.msk [vmem:[#allocation3 + $0x48] sm:$0xff] %vm2296, %v2123
      %2301 = vst.msk [vmem:[#allocation3 + $0x60] sm:$0xff] %vm2296, %v2125
      %2302 = vst.msk [vmem:[#allocation3 + $0x78] sm:$0xff] %vm2296, %v2127
      %2303 = vst.msk [vmem:[#allocation3 + $0x90] sm:$0xff] %vm2296, %v2129
      %2304 = vst.msk [vmem:[#allocation3 + $0xa8] sm:$0xff] %vm2296, %v2131
      %2305 = vst.msk [vmem:[#allocation3 + $0xc0] sm:$0xff] %vm2296, %v2133
      %2306 = vst.msk [vmem:[#allocation3 + $0xd8] sm:$0xff] %vm2296, %v2135
      %2307 = vst.msk [vmem:[#allocation3 + $0xf0] sm:$0xff] %vm2296, %v2137
      %2308 = vst.msk [vmem:[#allocation3 + $0x108] sm:$0xff] %vm2296, %v2139
      %2309 = vst.msk [vmem:[#allocation3 + $0x120] sm:$0xff] %vm2296, %v2141
      %2310 = vst.msk [vmem:[#allocation3 + $0x138] sm:$0xff] %vm2296, %v2143
      %2311 = vst.msk [vmem:[#allocation3 + $0x150] sm:$0xff] %vm2296, %v2145
      %2312 = vst.msk [vmem:[#allocation3 + $0x168] sm:$0xff] %vm2296, %v2147
      %2313 = vst.msk [vmem:[#allocation3 + $0x180] sm:$0xff] %vm2296, %v2149
      %2314 = vst.msk [vmem:[#allocation3 + $0x198] sm:$0xff] %vm2296, %v2151
      %2315 = vst.msk [vmem:[#allocation3 + $0x1b0] sm:$0xff] %vm2296, %v2153
      %2316 = vst.msk [vmem:[#allocation3 + $0x1c8] sm:$0xff] %vm2296, %v2155
      %2317 = vst.msk [vmem:[#allocation3 + $0x1e0] sm:$0xff] %vm2296, %v2157
      %2318 = vst.msk [vmem:[#allocation3 + $0x1f8] sm:$0xff] %vm2296, %v2159
      %2319 = vst.msk [vmem:[#allocation3 + $0x210] sm:$0xff] %vm2296, %v2161
      %2320 = vst.msk [vmem:[#allocation3 + $0x228] sm:$0xff] %vm2296, %v2163
      %2321 = vst.msk [vmem:[#allocation3 + $0x240] sm:$0xff] %vm2296, %v2165
      %2322 = vst.msk [vmem:[#allocation3 + $0x258] sm:$0xff] %vm2296, %v2167
      %2323 = vst.msk [vmem:[#allocation3 + $0x270] sm:$0xff] %vm2296, %v2169
      %2324 = vst.msk [vmem:[#allocation3 + $0x288] sm:$0xff] %vm2296, %v2171
      %2325 = vst.msk [vmem:[#allocation3 + $0x2a0] sm:$0xff] %vm2296, %v2173
      %2326 = vst.msk [vmem:[#allocation3 + $0x2b8] sm:$0xff] %vm2296, %v2175
      %2327 = vst.msk [vmem:[#allocation3 + $0x2d0] sm:$0xff] %vm2296, %v2177
      %2328 = vst.msk [vmem:[#allocation3 + $0x2e8] sm:$0xff] %vm2296, %v2179
      %2329 = vst.msk [vmem:[#allocation3 + $0x300] sm:$0xff] %vm2296, %v2181
      %2330 = vst.msk [vmem:[#allocation3 + $0x318] sm:$0xff] %vm2296, %v2183
      %2331 = vst.msk [vmem:[#allocation3 + $0x330] sm:$0xff] %vm2296, %v2185
      %2332 = vst.msk [vmem:[#allocation3 + $0x348] sm:$0xff] %vm2296, %v2187
      %2333 = vst.msk [vmem:[#allocation3 + $0x360] sm:$0xff] %vm2296, %v2189
      %2334 = vst.msk [vmem:[#allocation3 + $0x378] sm:$0xff] %vm2296, %v2191
      %2335 = vst.msk [vmem:[#allocation3 + $0x390] sm:$0xff] %vm2296, %v2193
      %2336 = vst.msk [vmem:[#allocation3 + $0x3a8] sm:$0xff] %vm2296, %v2195
      %2337 = vst.msk [vmem:[#allocation3 + $0x3c0] sm:$0xff] %vm2296, %v2197
      %2338 = vst.msk [vmem:[#allocation3 + $0x3d8] sm:$0xff] %vm2296, %v2199
      %2339 = vst.msk [vmem:[#allocation3 + $0x3f0] sm:$0xff] %vm2296, %v2201
      %2340 = vst.msk [vmem:[#allocation3 + $0x408] sm:$0xff] %vm2296, %v2203
      %2341 = vst.msk [vmem:[#allocation3 + $0x420] sm:$0xff] %vm2296, %v2205
      %2342 = vst.msk [vmem:[#allocation3 + $0x438] sm:$0xff] %vm2296, %v2207
      %2343 = vst.msk [vmem:[#allocation3 + $0x450] sm:$0xff] %vm2296, %v2209
      %2344 = vst.msk [vmem:[#allocation3 + $0x468] sm:$0xff] %vm2296, %v2211
      %2345 = vst.msk [vmem:[#allocation3 + $0x480] sm:$0xff] %vm2296, %v2213
      %2346 = vst.msk [vmem:[#allocation3 + $0x498] sm:$0xff] %vm2296, %v2215
      %2347 = vst.msk [vmem:[#allocation3 + $0x4b0] sm:$0xff] %vm2296, %v2217
      %2348 = vst.msk [vmem:[#allocation3 + $0x4c8] sm:$0xff] %vm2296, %v2219
      %2349 = vst.msk [vmem:[#allocation3 + $0x4e0] sm:$0xff] %vm2296, %v2221
      %2350 = vst.msk [vmem:[#allocation3 + $0x4f8] sm:$0xff] %vm2296, %v2223
      %2351 = vst.msk [vmem:[#allocation3 + $0x510] sm:$0xff] %vm2296, %v2225
      %2352 = vst.msk [vmem:[#allocation3 + $0x528] sm:$0xff] %vm2296, %v2227
      %2353 = vst.msk [vmem:[#allocation3 + $0x540] sm:$0xff] %vm2296, %v2229
      %2354 = vst.msk [vmem:[#allocation3 + $0x558] sm:$0xff] %vm2296, %v2231
      %2355 = vst.msk [vmem:[#allocation3 + $0x570] sm:$0xff] %vm2296, %v2233
      %2356 = vst.msk [vmem:[#allocation3 + $0x588] sm:$0xff] %vm2296, %v2235
      %v2357 = vld [vmem:[#allocation2 + $0x38] sm:$0xff]
      %v2358 = vld [vmem:[#allocation2 + $0x40] sm:$0xff]
      %v2359 = vld [vmem:[#allocation2 + $0x48] sm:$0xff]
      %v2360 = vld [vmem:[#allocation2 + $0x50] sm:$0xff]
      %v2361 = vld [vmem:[#allocation2 + $0x58] sm:$0xff]
      %v2362 = vld [vmem:[#allocation2 + $0x60] sm:$0xff]
      %v2363 = vld [vmem:[#allocation2 + $0x68] sm:$0xff]
      %v2364 = vld [vmem:[#allocation2 + $0x70] sm:$0xff]
      %v2365 = vld [vmem:[#allocation2 + $0x78] sm:$0xff]
      %v2366 = vld [vmem:[#allocation2 + $0x80] sm:$0xff]
      %v2367 = vld [vmem:[#allocation2 + $0x88] sm:$0xff]
      %v2368 = vld [vmem:[#allocation2 + $0x90] sm:$0xff]
      %v2369 = vld [vmem:[#allocation2 + $0x98] sm:$0xff]
      %v2370 = vld [vmem:[#allocation2 + $0xa0] sm:$0xff]
      %v2371 = vld [vmem:[#allocation2 + $0xa8] sm:$0xff]
      %v2372 = vld [vmem:[#allocation2 + $0xb0] sm:$0xff]
      %v2373 = vld [vmem:[#allocation2 + $0xb8] sm:$0xff]
      %v2374 = vld [vmem:[#allocation2 + $0xc0] sm:$0xff]
      %v2375 = vld [vmem:[#allocation2 + $0xc8] sm:$0xff]
      %v2376 = vld [vmem:[#allocation2 + $0xd0] sm:$0xff]
      %v2377 = vld [vmem:[#allocation2 + $0xd8] sm:$0xff]
      %v2378 = vld [vmem:[#allocation2 + $0xe0] sm:$0xff]
      %v2379 = vld [vmem:[#allocation2 + $0xe8] sm:$0xff]
      %v2380 = vld [vmem:[#allocation2 + $0xf0] sm:$0xff]
      %v2381 = vld [vmem:[#allocation2 + $0xf8] sm:$0xff]
      %v2382 = vld [vmem:[#allocation2 + $0x100] sm:$0xff]
      %v2383 = vld [vmem:[#allocation2 + $0x108] sm:$0xff]
      %v2384 = vld [vmem:[#allocation2 + $0x110] sm:$0xff]
      %v2385 = vld [vmem:[#allocation2 + $0x118] sm:$0xff]
      %v2386 = vld [vmem:[#allocation2 + $0x120] sm:$0xff]
      %v2387 = vld [vmem:[#allocation2 + $0x128] sm:$0xff]
      %v2388 = vld [vmem:[#allocation2 + $0x130] sm:$0xff]
      %v2389 = vld [vmem:[#allocation2 + $0x138] sm:$0xff]
      %v2390 = vld [vmem:[#allocation2 + $0x140] sm:$0xff]
      %v2391 = vld [vmem:[#allocation2 + $0x148] sm:$0xff]
      %v2392 = vld [vmem:[#allocation2 + $0x150] sm:$0xff]
      %v2393 = vld [vmem:[#allocation2 + $0x158] sm:$0xff]
      %v2394 = vld [vmem:[#allocation2 + $0x160] sm:$0xff]
      %v2395 = vld [vmem:[#allocation2 + $0x168] sm:$0xff]
      %v2396 = vld [vmem:[#allocation2 + $0x170] sm:$0xff]
      %v2397 = vld [vmem:[#allocation2 + $0x178] sm:$0xff]
      %v2398 = vld [vmem:[#allocation2 + $0x180] sm:$0xff]
      %v2399 = vld [vmem:[#allocation2 + $0x188] sm:$0xff]
      %v2400 = vld [vmem:[#allocation2 + $0x190] sm:$0xff]
      %v2401 = vld [vmem:[#allocation2 + $0x198] sm:$0xff]
      %v2402 = vld [vmem:[#allocation2 + $0x1a0] sm:$0xff]
      %v2403 = vld [vmem:[#allocation2 + $0x1a8] sm:$0xff]
      %v2404 = vld [vmem:[#allocation2 + $0x1b0] sm:$0xff]
      %v2405 = vld [vmem:[#allocation2 + $0x1b8] sm:$0xff]
      %v2406 = vld [vmem:[#allocation2 + $0x1c0] sm:$0xff]
      %v2407 = vld [vmem:[#allocation2 + $0x1c8] sm:$0xff]
      %v2408 = vld [vmem:[#allocation2 + $0x1d0] sm:$0xff]
      %v2409 = vld [vmem:[#allocation2 + $0x1d8] sm:$0xff]
      %v2410 = vld [vmem:[#allocation2 + $0x1e0] sm:$0xff]
      %v2411 = vld [vmem:[#allocation2 + $0x1e8] sm:$0xff]
      %v2412 = vld [vmem:[#allocation2 + $0x1f0] sm:$0xff]
      %v2413 = vld [vmem:[#allocation2 + $0x1f8] sm:$0xff]
      %v2414 = vld [vmem:[#allocation2 + $0x200] sm:$0xff]
      %v2415 = vld [vmem:[#allocation2 + $0x208] sm:$0xff]
      %v2416 = vld [vmem:[#allocation2 + $0x210] sm:$0xff]
      %2417 = vst.msk [vmem:[#allocation3 + $0x8] sm:$0xff] %vm1144, %v2357
      %2418 = vst.msk [vmem:[#allocation3 + $0x20] sm:$0xff] %vm1144, %v2358
      %2419 = vst.msk [vmem:[#allocation3 + $0x38] sm:$0xff] %vm1144, %v2359
      %2420 = vst.msk [vmem:[#allocation3 + $0x50] sm:$0xff] %vm1144, %v2360
      %2421 = vst.msk [vmem:[#allocation3 + $0x68] sm:$0xff] %vm1144, %v2361
      %2422 = vst.msk [vmem:[#allocation3 + $0x80] sm:$0xff] %vm1144, %v2362
      %2423 = vst.msk [vmem:[#allocation3 + $0x98] sm:$0xff] %vm1144, %v2363
      %2424 = vst.msk [vmem:[#allocation3 + $0xb0] sm:$0xff] %vm1144, %v2364
      %2425 = vst.msk [vmem:[#allocation3 + $0xc8] sm:$0xff] %vm1144, %v2365
      %2426 = vst.msk [vmem:[#allocation3 + $0xe0] sm:$0xff] %vm1144, %v2366
      %2427 = vst.msk [vmem:[#allocation3 + $0xf8] sm:$0xff] %vm1144, %v2367
      %2428 = vst.msk [vmem:[#allocation3 + $0x110] sm:$0xff] %vm1144, %v2368
      %2429 = vst.msk [vmem:[#allocation3 + $0x128] sm:$0xff] %vm1144, %v2369
      %2430 = vst.msk [vmem:[#allocation3 + $0x140] sm:$0xff] %vm1144, %v2370
      %2431 = vst.msk [vmem:[#allocation3 + $0x158] sm:$0xff] %vm1144, %v2371
      %2432 = vst.msk [vmem:[#allocation3 + $0x170] sm:$0xff] %vm1144, %v2372
      %2433 = vst.msk [vmem:[#allocation3 + $0x188] sm:$0xff] %vm1144, %v2373
      %2434 = vst.msk [vmem:[#allocation3 + $0x1a0] sm:$0xff] %vm1144, %v2374
      %2435 = vst.msk [vmem:[#allocation3 + $0x1b8] sm:$0xff] %vm1144, %v2375
      %2436 = vst.msk [vmem:[#allocation3 + $0x1d0] sm:$0xff] %vm1144, %v2376
      %2437 = vst.msk [vmem:[#allocation3 + $0x1e8] sm:$0xff] %vm1144, %v2377
      %2438 = vst.msk [vmem:[#allocation3 + $0x200] sm:$0xff] %vm1144, %v2378
      %2439 = vst.msk [vmem:[#allocation3 + $0x218] sm:$0xff] %vm1144, %v2379
      %2440 = vst.msk [vmem:[#allocation3 + $0x230] sm:$0xff] %vm1144, %v2380
      %2441 = vst.msk [vmem:[#allocation3 + $0x248] sm:$0xff] %vm1144, %v2381
      %2442 = vst.msk [vmem:[#allocation3 + $0x260] sm:$0xff] %vm1144, %v2382
      %2443 = vst.msk [vmem:[#allocation3 + $0x278] sm:$0xff] %vm1144, %v2383
      %2444 = vst.msk [vmem:[#allocation3 + $0x290] sm:$0xff] %vm1144, %v2384
      %2445 = vst.msk [vmem:[#allocation3 + $0x2a8] sm:$0xff] %vm1144, %v2385
      %2446 = vst.msk [vmem:[#allocation3 + $0x2c0] sm:$0xff] %vm1144, %v2386
      %2447 = vst.msk [vmem:[#allocation3 + $0x2d8] sm:$0xff] %vm1144, %v2387
      %2448 = vst.msk [vmem:[#allocation3 + $0x2f0] sm:$0xff] %vm1144, %v2388
      %2449 = vst.msk [vmem:[#allocation3 + $0x308] sm:$0xff] %vm1144, %v2389
      %2450 = vst.msk [vmem:[#allocation3 + $0x320] sm:$0xff] %vm1144, %v2390
      %2451 = vst.msk [vmem:[#allocation3 + $0x338] sm:$0xff] %vm1144, %v2391
      %2452 = vst.msk [vmem:[#allocation3 + $0x350] sm:$0xff] %vm1144, %v2392
      %2453 = vst.msk [vmem:[#allocation3 + $0x368] sm:$0xff] %vm1144, %v2393
      %2454 = vst.msk [vmem:[#allocation3 + $0x380] sm:$0xff] %vm1144, %v2394
      %2455 = vst.msk [vmem:[#allocation3 + $0x398] sm:$0xff] %vm1144, %v2395
      %2456 = vst.msk [vmem:[#allocation3 + $0x3b0] sm:$0xff] %vm1144, %v2396
      %2457 = vst.msk [vmem:[#allocation3 + $0x3c8] sm:$0xff] %vm1144, %v2397
      %2458 = vst.msk [vmem:[#allocation3 + $0x3e0] sm:$0xff] %vm1144, %v2398
      %2459 = vst.msk [vmem:[#allocation3 + $0x3f8] sm:$0xff] %vm1144, %v2399
      %2460 = vst.msk [vmem:[#allocation3 + $0x410] sm:$0xff] %vm1144, %v2400
      %2461 = vst.msk [vmem:[#allocation3 + $0x428] sm:$0xff] %vm1144, %v2401
      %2462 = vst.msk [vmem:[#allocation3 + $0x440] sm:$0xff] %vm1144, %v2402
      %2463 = vst.msk [vmem:[#allocation3 + $0x458] sm:$0xff] %vm1144, %v2403
      %2464 = vst.msk [vmem:[#allocation3 + $0x470] sm:$0xff] %vm1144, %v2404
      %2465 = vst.msk [vmem:[#allocation3 + $0x488] sm:$0xff] %vm1144, %v2405
      %2466 = vst.msk [vmem:[#allocation3 + $0x4a0] sm:$0xff] %vm1144, %v2406
      %2467 = vst.msk [vmem:[#allocation3 + $0x4b8] sm:$0xff] %vm1144, %v2407
      %2468 = vst.msk [vmem:[#allocation3 + $0x4d0] sm:$0xff] %vm1144, %v2408
      %2469 = vst.msk [vmem:[#allocation3 + $0x4e8] sm:$0xff] %vm1144, %v2409
      %2470 = vst.msk [vmem:[#allocation3 + $0x500] sm:$0xff] %vm1144, %v2410
      %2471 = vst.msk [vmem:[#allocation3 + $0x518] sm:$0xff] %vm1144, %v2411
      %2472 = vst.msk [vmem:[#allocation3 + $0x530] sm:$0xff] %vm1144, %v2412
      %2473 = vst.msk [vmem:[#allocation3 + $0x548] sm:$0xff] %vm1144, %v2413
      %2474 = vst.msk [vmem:[#allocation3 + $0x560] sm:$0xff] %vm1144, %v2414
      %2475 = vst.msk [vmem:[#allocation3 + $0x578] sm:$0xff] %vm1144, %v2415
      %2476 = vst.msk [vmem:[#allocation3 + $0x590] sm:$0xff] %vm1144, %v2416
      %v2477 = vld [vmem:[#allocation2 + $0x39] sm:$0xff]
      %v2478 = vld [vmem:[#allocation2 + $0x41] sm:$0xff]
      %v2479 = vld [vmem:[#allocation2 + $0x49] sm:$0xff]
      %v2480 = vld [vmem:[#allocation2 + $0x51] sm:$0xff]
      %v2481 = vld [vmem:[#allocation2 + $0x59] sm:$0xff]
      %v2482 = vld [vmem:[#allocation2 + $0x61] sm:$0xff]
      %v2483 = vld [vmem:[#allocation2 + $0x69] sm:$0xff]
      %v2484 = vld [vmem:[#allocation2 + $0x71] sm:$0xff]
      %v2485 = vld [vmem:[#allocation2 + $0x79] sm:$0xff]
      %v2486 = vld [vmem:[#allocation2 + $0x81] sm:$0xff]
      %v2487 = vld [vmem:[#allocation2 + $0x89] sm:$0xff]
      %v2488 = vld [vmem:[#allocation2 + $0x91] sm:$0xff]
      %v2489 = vld [vmem:[#allocation2 + $0x99] sm:$0xff]
      %v2490 = vld [vmem:[#allocation2 + $0xa1] sm:$0xff]
      %v2491 = vld [vmem:[#allocation2 + $0xa9] sm:$0xff]
      %v2492 = vld [vmem:[#allocation2 + $0xb1] sm:$0xff]
      %v2493 = vld [vmem:[#allocation2 + $0xb9] sm:$0xff]
      %v2494 = vld [vmem:[#allocation2 + $0xc1] sm:$0xff]
      %v2495 = vld [vmem:[#allocation2 + $0xc9] sm:$0xff]
      %v2496 = vld [vmem:[#allocation2 + $0xd1] sm:$0xff]
      %v2497 = vld [vmem:[#allocation2 + $0xd9] sm:$0xff]
      %v2498 = vld [vmem:[#allocation2 + $0xe1] sm:$0xff]
      %v2499 = vld [vmem:[#allocation2 + $0xe9] sm:$0xff]
      %v2500 = vld [vmem:[#allocation2 + $0xf1] sm:$0xff]
      %v2501 = vld [vmem:[#allocation2 + $0xf9] sm:$0xff]
      %v2502 = vld [vmem:[#allocation2 + $0x101] sm:$0xff]
      %v2503 = vld [vmem:[#allocation2 + $0x109] sm:$0xff]
      %v2504 = vld [vmem:[#allocation2 + $0x111] sm:$0xff]
      %v2505 = vld [vmem:[#allocation2 + $0x119] sm:$0xff]
      %v2506 = vld [vmem:[#allocation2 + $0x121] sm:$0xff]
      %v2507 = vld [vmem:[#allocation2 + $0x129] sm:$0xff]
      %v2508 = vld [vmem:[#allocation2 + $0x131] sm:$0xff]
      %v2509 = vld [vmem:[#allocation2 + $0x139] sm:$0xff]
      %v2510 = vld [vmem:[#allocation2 + $0x141] sm:$0xff]
      %v2511 = vld [vmem:[#allocation2 + $0x149] sm:$0xff]
      %v2512 = vld [vmem:[#allocation2 + $0x151] sm:$0xff]
      %v2513 = vld [vmem:[#allocation2 + $0x159] sm:$0xff]
      %v2514 = vld [vmem:[#allocation2 + $0x161] sm:$0xff]
      %v2515 = vld [vmem:[#allocation2 + $0x169] sm:$0xff]
      %v2516 = vld [vmem:[#allocation2 + $0x171] sm:$0xff]
      %v2517 = vld [vmem:[#allocation2 + $0x179] sm:$0xff]
      %v2518 = vld [vmem:[#allocation2 + $0x181] sm:$0xff]
      %v2519 = vld [vmem:[#allocation2 + $0x189] sm:$0xff]
      %v2520 = vld [vmem:[#allocation2 + $0x191] sm:$0xff]
      %v2521 = vld [vmem:[#allocation2 + $0x199] sm:$0xff]
      %v2522 = vld [vmem:[#allocation2 + $0x1a1] sm:$0xff]
      %v2523 = vld [vmem:[#allocation2 + $0x1a9] sm:$0xff]
      %v2524 = vld [vmem:[#allocation2 + $0x1b1] sm:$0xff]
      %v2525 = vld [vmem:[#allocation2 + $0x1b9] sm:$0xff]
      %v2526 = vld [vmem:[#allocation2 + $0x1c1] sm:$0xff]
      %v2527 = vld [vmem:[#allocation2 + $0x1c9] sm:$0xff]
      %v2528 = vld [vmem:[#allocation2 + $0x1d1] sm:$0xff]
      %v2529 = vld [vmem:[#allocation2 + $0x1d9] sm:$0xff]
      %v2530 = vld [vmem:[#allocation2 + $0x1e1] sm:$0xff]
      %v2531 = vld [vmem:[#allocation2 + $0x1e9] sm:$0xff]
      %v2532 = vld [vmem:[#allocation2 + $0x1f1] sm:$0xff]
      %v2533 = vld [vmem:[#allocation2 + $0x1f9] sm:$0xff]
      %v2534 = vld [vmem:[#allocation2 + $0x201] sm:$0xff]
      %v2535 = vld [vmem:[#allocation2 + $0x209] sm:$0xff]
      %v2536 = vld [vmem:[#allocation2 + $0x211] sm:$0xff]
      %2597 = vrot.lane.b32.xlu0 %v2477, 64
      %v2598 = vpop.permute.xlu0 %2597
      %2599 = vrot.lane.b32.xlu0 %v2478, 64
      %v2600 = vpop.permute.xlu0 %2599
      %2601 = vrot.lane.b32.xlu0 %v2479, 64
      %v2602 = vpop.permute.xlu0 %2601
      %2603 = vrot.lane.b32.xlu0 %v2480, 64
      %v2604 = vpop.permute.xlu0 %2603
      %2605 = vrot.lane.b32.xlu0 %v2481, 64
      %v2606 = vpop.permute.xlu0 %2605
      %2607 = vrot.lane.b32.xlu0 %v2482, 64
      %v2608 = vpop.permute.xlu0 %2607
      %2609 = vrot.lane.b32.xlu0 %v2483, 64
      %v2610 = vpop.permute.xlu0 %2609
      %2611 = vrot.lane.b32.xlu0 %v2484, 64
      %v2612 = vpop.permute.xlu0 %2611
      %2613 = vrot.lane.b32.xlu0 %v2485, 64
      %v2614 = vpop.permute.xlu0 %2613
      %2615 = vrot.lane.b32.xlu0 %v2486, 64
      %v2616 = vpop.permute.xlu0 %2615
      %2617 = vrot.lane.b32.xlu0 %v2487, 64
      %v2618 = vpop.permute.xlu0 %2617
      %2619 = vrot.lane.b32.xlu0 %v2488, 64
      %v2620 = vpop.permute.xlu0 %2619
      %2621 = vrot.lane.b32.xlu0 %v2489, 64
      %v2622 = vpop.permute.xlu0 %2621
      %2623 = vrot.lane.b32.xlu0 %v2490, 64
      %v2624 = vpop.permute.xlu0 %2623
      %2625 = vrot.lane.b32.xlu0 %v2491, 64
      %v2626 = vpop.permute.xlu0 %2625
      %2627 = vrot.lane.b32.xlu0 %v2492, 64
      %v2628 = vpop.permute.xlu0 %2627
      %2629 = vrot.lane.b32.xlu0 %v2493, 64
      %v2630 = vpop.permute.xlu0 %2629
      %2631 = vrot.lane.b32.xlu0 %v2494, 64
      %v2632 = vpop.permute.xlu0 %2631
      %2633 = vrot.lane.b32.xlu0 %v2495, 64
      %v2634 = vpop.permute.xlu0 %2633
      %2635 = vrot.lane.b32.xlu0 %v2496, 64
      %v2636 = vpop.permute.xlu0 %2635
      %2637 = vrot.lane.b32.xlu0 %v2497, 64
      %v2638 = vpop.permute.xlu0 %2637
      %2639 = vrot.lane.b32.xlu0 %v2498, 64
      %v2640 = vpop.permute.xlu0 %2639
      %2641 = vrot.lane.b32.xlu0 %v2499, 64
      %v2642 = vpop.permute.xlu0 %2641
      %2643 = vrot.lane.b32.xlu0 %v2500, 64
      %v2644 = vpop.permute.xlu0 %2643
      %2645 = vrot.lane.b32.xlu0 %v2501, 64
      %v2646 = vpop.permute.xlu0 %2645
      %2647 = vrot.lane.b32.xlu0 %v2502, 64
      %v2648 = vpop.permute.xlu0 %2647
      %2649 = vrot.lane.b32.xlu0 %v2503, 64
      %v2650 = vpop.permute.xlu0 %2649
      %2651 = vrot.lane.b32.xlu0 %v2504, 64
      %v2652 = vpop.permute.xlu0 %2651
      %2653 = vrot.lane.b32.xlu0 %v2505, 64
      %v2654 = vpop.permute.xlu0 %2653
      %2655 = vrot.lane.b32.xlu0 %v2506, 64
      %v2656 = vpop.permute.xlu0 %2655
      %2657 = vrot.lane.b32.xlu0 %v2507, 64
      %v2658 = vpop.permute.xlu0 %2657
      %2659 = vrot.lane.b32.xlu0 %v2508, 64
      %v2660 = vpop.permute.xlu0 %2659
      %2661 = vrot.lane.b32.xlu0 %v2509, 64
      %v2662 = vpop.permute.xlu0 %2661
      %2663 = vrot.lane.b32.xlu0 %v2510, 64
      %v2664 = vpop.permute.xlu0 %2663
      %2665 = vrot.lane.b32.xlu0 %v2511, 64
      %v2666 = vpop.permute.xlu0 %2665
      %2667 = vrot.lane.b32.xlu0 %v2512, 64
      %v2668 = vpop.permute.xlu0 %2667
      %2669 = vrot.lane.b32.xlu0 %v2513, 64
      %v2670 = vpop.permute.xlu0 %2669
      %2671 = vrot.lane.b32.xlu0 %v2514, 64
      %v2672 = vpop.permute.xlu0 %2671
      %2673 = vrot.lane.b32.xlu0 %v2515, 64
      %v2674 = vpop.permute.xlu0 %2673
      %2675 = vrot.lane.b32.xlu0 %v2516, 64
      %v2676 = vpop.permute.xlu0 %2675
      %2677 = vrot.lane.b32.xlu0 %v2517, 64
      %v2678 = vpop.permute.xlu0 %2677
      %2679 = vrot.lane.b32.xlu0 %v2518, 64
      %v2680 = vpop.permute.xlu0 %2679
      %2681 = vrot.lane.b32.xlu0 %v2519, 64
      %v2682 = vpop.permute.xlu0 %2681
      %2683 = vrot.lane.b32.xlu0 %v2520, 64
      %v2684 = vpop.permute.xlu0 %2683
      %2685 = vrot.lane.b32.xlu0 %v2521, 64
      %v2686 = vpop.permute.xlu0 %2685
      %2687 = vrot.lane.b32.xlu0 %v2522, 64
      %v2688 = vpop.permute.xlu0 %2687
      %2689 = vrot.lane.b32.xlu0 %v2523, 64
      %v2690 = vpop.permute.xlu0 %2689
      %2691 = vrot.lane.b32.xlu0 %v2524, 64
      %v2692 = vpop.permute.xlu0 %2691
      %2693 = vrot.lane.b32.xlu0 %v2525, 64
      %v2694 = vpop.permute.xlu0 %2693
      %2695 = vrot.lane.b32.xlu0 %v2526, 64
      %v2696 = vpop.permute.xlu0 %2695
      %2697 = vrot.lane.b32.xlu0 %v2527, 64
      %v2698 = vpop.permute.xlu0 %2697
      %2699 = vrot.lane.b32.xlu0 %v2528, 64
      %v2700 = vpop.permute.xlu0 %2699
      %2701 = vrot.lane.b32.xlu0 %v2529, 64
      %v2702 = vpop.permute.xlu0 %2701
      %2703 = vrot.lane.b32.xlu0 %v2530, 64
      %v2704 = vpop.permute.xlu0 %2703
      %2705 = vrot.lane.b32.xlu0 %v2531, 64
      %v2706 = vpop.permute.xlu0 %2705
      %2707 = vrot.lane.b32.xlu0 %v2532, 64
      %v2708 = vpop.permute.xlu0 %2707
      %2709 = vrot.lane.b32.xlu0 %v2533, 64
      %v2710 = vpop.permute.xlu0 %2709
      %2711 = vrot.lane.b32.xlu0 %v2534, 64
      %v2712 = vpop.permute.xlu0 %2711
      %2713 = vrot.lane.b32.xlu0 %v2535, 64
      %v2714 = vpop.permute.xlu0 %2713
      %2715 = vrot.lane.b32.xlu0 %v2536, 64
      %v2716 = vpop.permute.xlu0 %2715
      %2777 = vst.msk [vmem:[#allocation3 + $0x8] sm:$0xff] %vm2296, %v2598
      %2778 = vst.msk [vmem:[#allocation3 + $0x20] sm:$0xff] %vm2296, %v2600
      %2779 = vst.msk [vmem:[#allocation3 + $0x38] sm:$0xff] %vm2296, %v2602
      %2780 = vst.msk [vmem:[#allocation3 + $0x50] sm:$0xff] %vm2296, %v2604
      %2781 = vst.msk [vmem:[#allocation3 + $0x68] sm:$0xff] %vm2296, %v2606
      %2782 = vst.msk [vmem:[#allocation3 + $0x80] sm:$0xff] %vm2296, %v2608
      %2783 = vst.msk [vmem:[#allocation3 + $0x98] sm:$0xff] %vm2296, %v2610
      %2784 = vst.msk [vmem:[#allocation3 + $0xb0] sm:$0xff] %vm2296, %v2612
      %2785 = vst.msk [vmem:[#allocation3 + $0xc8] sm:$0xff] %vm2296, %v2614
      %2786 = vst.msk [vmem:[#allocation3 + $0xe0] sm:$0xff] %vm2296, %v2616
      %2787 = vst.msk [vmem:[#allocation3 + $0xf8] sm:$0xff] %vm2296, %v2618
      %2788 = vst.msk [vmem:[#allocation3 + $0x110] sm:$0xff] %vm2296, %v2620
      %2789 = vst.msk [vmem:[#allocation3 + $0x128] sm:$0xff] %vm2296, %v2622
      %2790 = vst.msk [vmem:[#allocation3 + $0x140] sm:$0xff] %vm2296, %v2624
      %2791 = vst.msk [vmem:[#allocation3 + $0x158] sm:$0xff] %vm2296, %v2626
      %2792 = vst.msk [vmem:[#allocation3 + $0x170] sm:$0xff] %vm2296, %v2628
      %2793 = vst.msk [vmem:[#allocation3 + $0x188] sm:$0xff] %vm2296, %v2630
      %2794 = vst.msk [vmem:[#allocation3 + $0x1a0] sm:$0xff] %vm2296, %v2632
      %2795 = vst.msk [vmem:[#allocation3 + $0x1b8] sm:$0xff] %vm2296, %v2634
      %2796 = vst.msk [vmem:[#allocation3 + $0x1d0] sm:$0xff] %vm2296, %v2636
      %2797 = vst.msk [vmem:[#allocation3 + $0x1e8] sm:$0xff] %vm2296, %v2638
      %2798 = vst.msk [vmem:[#allocation3 + $0x200] sm:$0xff] %vm2296, %v2640
      %2799 = vst.msk [vmem:[#allocation3 + $0x218] sm:$0xff] %vm2296, %v2642
      %2800 = vst.msk [vmem:[#allocation3 + $0x230] sm:$0xff] %vm2296, %v2644
      %2801 = vst.msk [vmem:[#allocation3 + $0x248] sm:$0xff] %vm2296, %v2646
      %2802 = vst.msk [vmem:[#allocation3 + $0x260] sm:$0xff] %vm2296, %v2648
      %2803 = vst.msk [vmem:[#allocation3 + $0x278] sm:$0xff] %vm2296, %v2650
      %2804 = vst.msk [vmem:[#allocation3 + $0x290] sm:$0xff] %vm2296, %v2652
      %2805 = vst.msk [vmem:[#allocation3 + $0x2a8] sm:$0xff] %vm2296, %v2654
      %2806 = vst.msk [vmem:[#allocation3 + $0x2c0] sm:$0xff] %vm2296, %v2656
      %2807 = vst.msk [vmem:[#allocation3 + $0x2d8] sm:$0xff] %vm2296, %v2658
      %2808 = vst.msk [vmem:[#allocation3 + $0x2f0] sm:$0xff] %vm2296, %v2660
      %2809 = vst.msk [vmem:[#allocation3 + $0x308] sm:$0xff] %vm2296, %v2662
      %2810 = vst.msk [vmem:[#allocation3 + $0x320] sm:$0xff] %vm2296, %v2664
      %2811 = vst.msk [vmem:[#allocation3 + $0x338] sm:$0xff] %vm2296, %v2666
      %2812 = vst.msk [vmem:[#allocation3 + $0x350] sm:$0xff] %vm2296, %v2668
      %2813 = vst.msk [vmem:[#allocation3 + $0x368] sm:$0xff] %vm2296, %v2670
      %2814 = vst.msk [vmem:[#allocation3 + $0x380] sm:$0xff] %vm2296, %v2672
      %2815 = vst.msk [vmem:[#allocation3 + $0x398] sm:$0xff] %vm2296, %v2674
      %2816 = vst.msk [vmem:[#allocation3 + $0x3b0] sm:$0xff] %vm2296, %v2676
      %2817 = vst.msk [vmem:[#allocation3 + $0x3c8] sm:$0xff] %vm2296, %v2678
      %2818 = vst.msk [vmem:[#allocation3 + $0x3e0] sm:$0xff] %vm2296, %v2680
      %2819 = vst.msk [vmem:[#allocation3 + $0x3f8] sm:$0xff] %vm2296, %v2682
      %2820 = vst.msk [vmem:[#allocation3 + $0x410] sm:$0xff] %vm2296, %v2684
      %2821 = vst.msk [vmem:[#allocation3 + $0x428] sm:$0xff] %vm2296, %v2686
      %2822 = vst.msk [vmem:[#allocation3 + $0x440] sm:$0xff] %vm2296, %v2688
      %2823 = vst.msk [vmem:[#allocation3 + $0x458] sm:$0xff] %vm2296, %v2690
      %2824 = vst.msk [vmem:[#allocation3 + $0x470] sm:$0xff] %vm2296, %v2692
      %2825 = vst.msk [vmem:[#allocation3 + $0x488] sm:$0xff] %vm2296, %v2694
      %2826 = vst.msk [vmem:[#allocation3 + $0x4a0] sm:$0xff] %vm2296, %v2696
      %2827 = vst.msk [vmem:[#allocation3 + $0x4b8] sm:$0xff] %vm2296, %v2698
      %2828 = vst.msk [vmem:[#allocation3 + $0x4d0] sm:$0xff] %vm2296, %v2700
      %2829 = vst.msk [vmem:[#allocation3 + $0x4e8] sm:$0xff] %vm2296, %v2702
      %2830 = vst.msk [vmem:[#allocation3 + $0x500] sm:$0xff] %vm2296, %v2704
      %2831 = vst.msk [vmem:[#allocation3 + $0x518] sm:$0xff] %vm2296, %v2706
      %2832 = vst.msk [vmem:[#allocation3 + $0x530] sm:$0xff] %vm2296, %v2708
      %2833 = vst.msk [vmem:[#allocation3 + $0x548] sm:$0xff] %vm2296, %v2710
      %2834 = vst.msk [vmem:[#allocation3 + $0x560] sm:$0xff] %vm2296, %v2712
      %2835 = vst.msk [vmem:[#allocation3 + $0x578] sm:$0xff] %vm2296, %v2714
      %2836 = vst.msk [vmem:[#allocation3 + $0x590] sm:$0xff] %vm2296, %v2716
      %v2837 = vld [vmem:[#allocation2 + $0x3a] sm:$0xff]
      %v2838 = vld [vmem:[#allocation2 + $0x42] sm:$0xff]
      %v2839 = vld [vmem:[#allocation2 + $0x4a] sm:$0xff]
      %v2840 = vld [vmem:[#allocation2 + $0x52] sm:$0xff]
      %v2841 = vld [vmem:[#allocation2 + $0x5a] sm:$0xff]
      %v2842 = vld [vmem:[#allocation2 + $0x62] sm:$0xff]
      %v2843 = vld [vmem:[#allocation2 + $0x6a] sm:$0xff]
      %v2844 = vld [vmem:[#allocation2 + $0x72] sm:$0xff]
      %v2845 = vld [vmem:[#allocation2 + $0x7a] sm:$0xff]
      %v2846 = vld [vmem:[#allocation2 + $0x82] sm:$0xff]
      %v2847 = vld [vmem:[#allocation2 + $0x8a] sm:$0xff]
      %v2848 = vld [vmem:[#allocation2 + $0x92] sm:$0xff]
      %v2849 = vld [vmem:[#allocation2 + $0x9a] sm:$0xff]
      %v2850 = vld [vmem:[#allocation2 + $0xa2] sm:$0xff]
      %v2851 = vld [vmem:[#allocation2 + $0xaa] sm:$0xff]
      %v2852 = vld [vmem:[#allocation2 + $0xb2] sm:$0xff]
      %v2853 = vld [vmem:[#allocation2 + $0xba] sm:$0xff]
      %v2854 = vld [vmem:[#allocation2 + $0xc2] sm:$0xff]
      %v2855 = vld [vmem:[#allocation2 + $0xca] sm:$0xff]
      %v2856 = vld [vmem:[#allocation2 + $0xd2] sm:$0xff]
      %v2857 = vld [vmem:[#allocation2 + $0xda] sm:$0xff]
      %v2858 = vld [vmem:[#allocation2 + $0xe2] sm:$0xff]
      %v2859 = vld [vmem:[#allocation2 + $0xea] sm:$0xff]
      %v2860 = vld [vmem:[#allocation2 + $0xf2] sm:$0xff]
      %v2861 = vld [vmem:[#allocation2 + $0xfa] sm:$0xff]
      %v2862 = vld [vmem:[#allocation2 + $0x102] sm:$0xff]
      %v2863 = vld [vmem:[#allocation2 + $0x10a] sm:$0xff]
      %v2864 = vld [vmem:[#allocation2 + $0x112] sm:$0xff]
      %v2865 = vld [vmem:[#allocation2 + $0x11a] sm:$0xff]
      %v2866 = vld [vmem:[#allocation2 + $0x122] sm:$0xff]
      %v2867 = vld [vmem:[#allocation2 + $0x12a] sm:$0xff]
      %v2868 = vld [vmem:[#allocation2 + $0x132] sm:$0xff]
      %v2869 = vld [vmem:[#allocation2 + $0x13a] sm:$0xff]
      %v2870 = vld [vmem:[#allocation2 + $0x142] sm:$0xff]
      %v2871 = vld [vmem:[#allocation2 + $0x14a] sm:$0xff]
      %v2872 = vld [vmem:[#allocation2 + $0x152] sm:$0xff]
      %v2873 = vld [vmem:[#allocation2 + $0x15a] sm:$0xff]
      %v2874 = vld [vmem:[#allocation2 + $0x162] sm:$0xff]
      %v2875 = vld [vmem:[#allocation2 + $0x16a] sm:$0xff]
      %v2876 = vld [vmem:[#allocation2 + $0x172] sm:$0xff]
      %v2877 = vld [vmem:[#allocation2 + $0x17a] sm:$0xff]
      %v2878 = vld [vmem:[#allocation2 + $0x182] sm:$0xff]
      %v2879 = vld [vmem:[#allocation2 + $0x18a] sm:$0xff]
      %v2880 = vld [vmem:[#allocation2 + $0x192] sm:$0xff]
      %v2881 = vld [vmem:[#allocation2 + $0x19a] sm:$0xff]
      %v2882 = vld [vmem:[#allocation2 + $0x1a2] sm:$0xff]
      %v2883 = vld [vmem:[#allocation2 + $0x1aa] sm:$0xff]
      %v2884 = vld [vmem:[#allocation2 + $0x1b2] sm:$0xff]
      %v2885 = vld [vmem:[#allocation2 + $0x1ba] sm:$0xff]
      %v2886 = vld [vmem:[#allocation2 + $0x1c2] sm:$0xff]
      %v2887 = vld [vmem:[#allocation2 + $0x1ca] sm:$0xff]
      %v2888 = vld [vmem:[#allocation2 + $0x1d2] sm:$0xff]
      %v2889 = vld [vmem:[#allocation2 + $0x1da] sm:$0xff]
      %v2890 = vld [vmem:[#allocation2 + $0x1e2] sm:$0xff]
      %v2891 = vld [vmem:[#allocation2 + $0x1ea] sm:$0xff]
      %v2892 = vld [vmem:[#allocation2 + $0x1f2] sm:$0xff]
      %v2893 = vld [vmem:[#allocation2 + $0x1fa] sm:$0xff]
      %v2894 = vld [vmem:[#allocation2 + $0x202] sm:$0xff]
      %v2895 = vld [vmem:[#allocation2 + $0x20a] sm:$0xff]
      %v2896 = vld [vmem:[#allocation2 + $0x212] sm:$0xff]
      %2897 = vst.msk [vmem:[#allocation3 + $0x10] sm:$0xff] %vm1144, %v2837
      %2898 = vst.msk [vmem:[#allocation3 + $0x28] sm:$0xff] %vm1144, %v2838
      %2899 = vst.msk [vmem:[#allocation3 + $0x40] sm:$0xff] %vm1144, %v2839
      %2900 = vst.msk [vmem:[#allocation3 + $0x58] sm:$0xff] %vm1144, %v2840
      %2901 = vst.msk [vmem:[#allocation3 + $0x70] sm:$0xff] %vm1144, %v2841
      %2902 = vst.msk [vmem:[#allocation3 + $0x88] sm:$0xff] %vm1144, %v2842
      %2903 = vst.msk [vmem:[#allocation3 + $0xa0] sm:$0xff] %vm1144, %v2843
      %2904 = vst.msk [vmem:[#allocation3 + $0xb8] sm:$0xff] %vm1144, %v2844
      %2905 = vst.msk [vmem:[#allocation3 + $0xd0] sm:$0xff] %vm1144, %v2845
      %2906 = vst.msk [vmem:[#allocation3 + $0xe8] sm:$0xff] %vm1144, %v2846
      %2907 = vst.msk [vmem:[#allocation3 + $0x100] sm:$0xff] %vm1144, %v2847
      %2908 = vst.msk [vmem:[#allocation3 + $0x118] sm:$0xff] %vm1144, %v2848
      %2909 = vst.msk [vmem:[#allocation3 + $0x130] sm:$0xff] %vm1144, %v2849
      %2910 = vst.msk [vmem:[#allocation3 + $0x148] sm:$0xff] %vm1144, %v2850
      %2911 = vst.msk [vmem:[#allocation3 + $0x160] sm:$0xff] %vm1144, %v2851
      %2912 = vst.msk [vmem:[#allocation3 + $0x178] sm:$0xff] %vm1144, %v2852
      %2913 = vst.msk [vmem:[#allocation3 + $0x190] sm:$0xff] %vm1144, %v2853
      %2914 = vst.msk [vmem:[#allocation3 + $0x1a8] sm:$0xff] %vm1144, %v2854
      %2915 = vst.msk [vmem:[#allocation3 + $0x1c0] sm:$0xff] %vm1144, %v2855
      %2916 = vst.msk [vmem:[#allocation3 + $0x1d8] sm:$0xff] %vm1144, %v2856
      %2917 = vst.msk [vmem:[#allocation3 + $0x1f0] sm:$0xff] %vm1144, %v2857
      %2918 = vst.msk [vmem:[#allocation3 + $0x208] sm:$0xff] %vm1144, %v2858
      %2919 = vst.msk [vmem:[#allocation3 + $0x220] sm:$0xff] %vm1144, %v2859
      %2920 = vst.msk [vmem:[#allocation3 + $0x238] sm:$0xff] %vm1144, %v2860
      %2921 = vst.msk [vmem:[#allocation3 + $0x250] sm:$0xff] %vm1144, %v2861
      %2922 = vst.msk [vmem:[#allocation3 + $0x268] sm:$0xff] %vm1144, %v2862
      %2923 = vst.msk [vmem:[#allocation3 + $0x280] sm:$0xff] %vm1144, %v2863
      %2924 = vst.msk [vmem:[#allocation3 + $0x298] sm:$0xff] %vm1144, %v2864
      %2925 = vst.msk [vmem:[#allocation3 + $0x2b0] sm:$0xff] %vm1144, %v2865
      %2926 = vst.msk [vmem:[#allocation3 + $0x2c8] sm:$0xff] %vm1144, %v2866
      %2927 = vst.msk [vmem:[#allocation3 + $0x2e0] sm:$0xff] %vm1144, %v2867
      %2928 = vst.msk [vmem:[#allocation3 + $0x2f8] sm:$0xff] %vm1144, %v2868
      %2929 = vst.msk [vmem:[#allocation3 + $0x310] sm:$0xff] %vm1144, %v2869
      %2930 = vst.msk [vmem:[#allocation3 + $0x328] sm:$0xff] %vm1144, %v2870
      %2931 = vst.msk [vmem:[#allocation3 + $0x340] sm:$0xff] %vm1144, %v2871
      %2932 = vst.msk [vmem:[#allocation3 + $0x358] sm:$0xff] %vm1144, %v2872
      %2933 = vst.msk [vmem:[#allocation3 + $0x370] sm:$0xff] %vm1144, %v2873
      %2934 = vst.msk [vmem:[#allocation3 + $0x388] sm:$0xff] %vm1144, %v2874
      %2935 = vst.msk [vmem:[#allocation3 + $0x3a0] sm:$0xff] %vm1144, %v2875
      %2936 = vst.msk [vmem:[#allocation3 + $0x3b8] sm:$0xff] %vm1144, %v2876
      %2937 = vst.msk [vmem:[#allocation3 + $0x3d0] sm:$0xff] %vm1144, %v2877
      %2938 = vst.msk [vmem:[#allocation3 + $0x3e8] sm:$0xff] %vm1144, %v2878
      %2939 = vst.msk [vmem:[#allocation3 + $0x400] sm:$0xff] %vm1144, %v2879
      %2940 = vst.msk [vmem:[#allocation3 + $0x418] sm:$0xff] %vm1144, %v2880
      %2941 = vst.msk [vmem:[#allocation3 + $0x430] sm:$0xff] %vm1144, %v2881
      %2942 = vst.msk [vmem:[#allocation3 + $0x448] sm:$0xff] %vm1144, %v2882
      %2943 = vst.msk [vmem:[#allocation3 + $0x460] sm:$0xff] %vm1144, %v2883
      %2944 = vst.msk [vmem:[#allocation3 + $0x478] sm:$0xff] %vm1144, %v2884
      %2945 = vst.msk [vmem:[#allocation3 + $0x490] sm:$0xff] %vm1144, %v2885
      %2946 = vst.msk [vmem:[#allocation3 + $0x4a8] sm:$0xff] %vm1144, %v2886
      %2947 = vst.msk [vmem:[#allocation3 + $0x4c0] sm:$0xff] %vm1144, %v2887
      %2948 = vst.msk [vmem:[#allocation3 + $0x4d8] sm:$0xff] %vm1144, %v2888
      %2949 = vst.msk [vmem:[#allocation3 + $0x4f0] sm:$0xff] %vm1144, %v2889
      %2950 = vst.msk [vmem:[#allocation3 + $0x508] sm:$0xff] %vm1144, %v2890
      %2951 = vst.msk [vmem:[#allocation3 + $0x520] sm:$0xff] %vm1144, %v2891
      %2952 = vst.msk [vmem:[#allocation3 + $0x538] sm:$0xff] %vm1144, %v2892
      %2953 = vst.msk [vmem:[#allocation3 + $0x550] sm:$0xff] %vm1144, %v2893
      %2954 = vst.msk [vmem:[#allocation3 + $0x568] sm:$0xff] %vm1144, %v2894
      %2955 = vst.msk [vmem:[#allocation3 + $0x580] sm:$0xff] %vm1144, %v2895
      %2956 = vst.msk [vmem:[#allocation3 + $0x598] sm:$0xff] %vm1144, %v2896
      %v2957 = vld [vmem:[#allocation3] sm:$0xff]
      %v2958 = vld [vmem:[#allocation3 + $0x8] sm:$0xff]
      %v2959 = vld [vmem:[#allocation3 + $0x10] sm:$0xff]
      %v2960 = vld [vmem:[#allocation3 + $0x18] sm:$0xff]
      %v2961 = vld [vmem:[#allocation3 + $0x20] sm:$0xff]
      %v2962 = vld [vmem:[#allocation3 + $0x28] sm:$0xff]
      %v2963 = vld [vmem:[#allocation3 + $0x30] sm:$0xff]
      %v2964 = vld [vmem:[#allocation3 + $0x38] sm:$0xff]
      %v2965 = vld [vmem:[#allocation3 + $0x40] sm:$0xff]
      %v2966 = vld [vmem:[#allocation3 + $0x48] sm:$0xff]
      %v2967 = vld [vmem:[#allocation3 + $0x50] sm:$0xff]
      %v2968 = vld [vmem:[#allocation3 + $0x58] sm:$0xff]
      %v2969 = vld [vmem:[#allocation3 + $0x60] sm:$0xff]
      %v2970 = vld [vmem:[#allocation3 + $0x68] sm:$0xff]
      %v2971 = vld [vmem:[#allocation3 + $0x70] sm:$0xff]
      %v2972 = vld [vmem:[#allocation3 + $0x78] sm:$0xff]
      %v2973 = vld [vmem:[#allocation3 + $0x80] sm:$0xff]
      %v2974 = vld [vmem:[#allocation3 + $0x88] sm:$0xff]
      %v2975 = vld [vmem:[#allocation3 + $0x90] sm:$0xff]
      %v2976 = vld [vmem:[#allocation3 + $0x98] sm:$0xff]
      %v2977 = vld [vmem:[#allocation3 + $0xa0] sm:$0xff]
      %v2978 = vld [vmem:[#allocation3 + $0xa8] sm:$0xff]
      %v2979 = vld [vmem:[#allocation3 + $0xb0] sm:$0xff]
      %v2980 = vld [vmem:[#allocation3 + $0xb8] sm:$0xff]
      %v2981 = vld [vmem:[#allocation3 + $0xc0] sm:$0xff]
      %v2982 = vld [vmem:[#allocation3 + $0xc8] sm:$0xff]
      %v2983 = vld [vmem:[#allocation3 + $0xd0] sm:$0xff]
      %v2984 = vld [vmem:[#allocation3 + $0xd8] sm:$0xff]
      %v2985 = vld [vmem:[#allocation3 + $0xe0] sm:$0xff]
      %v2986 = vld [vmem:[#allocation3 + $0xe8] sm:$0xff]
      %v2987 = vld [vmem:[#allocation3 + $0xf0] sm:$0xff]
      %v2988 = vld [vmem:[#allocation3 + $0xf8] sm:$0xff]
      %v2989 = vld [vmem:[#allocation3 + $0x100] sm:$0xff]
      %v2990 = vld [vmem:[#allocation3 + $0x108] sm:$0xff]
      %v2991 = vld [vmem:[#allocation3 + $0x110] sm:$0xff]
      %v2992 = vld [vmem:[#allocation3 + $0x118] sm:$0xff]
      %v2993 = vld [vmem:[#allocation3 + $0x120] sm:$0xff]
      %v2994 = vld [vmem:[#allocation3 + $0x128] sm:$0xff]
      %v2995 = vld [vmem:[#allocation3 + $0x130] sm:$0xff]
      %v2996 = vld [vmem:[#allocation3 + $0x138] sm:$0xff]
      %v2997 = vld [vmem:[#allocation3 + $0x140] sm:$0xff]
      %v2998 = vld [vmem:[#allocation3 + $0x148] sm:$0xff]
      %v2999 = vld [vmem:[#allocation3 + $0x150] sm:$0xff]
      %v3000 = vld [vmem:[#allocation3 + $0x158] sm:$0xff]
      %v3001 = vld [vmem:[#allocation3 + $0x160] sm:$0xff]
      %v3002 = vld [vmem:[#allocation3 + $0x168] sm:$0xff]
      %v3003 = vld [vmem:[#allocation3 + $0x170] sm:$0xff]
      %v3004 = vld [vmem:[#allocation3 + $0x178] sm:$0xff]
      %v3005 = vld [vmem:[#allocation3 + $0x180] sm:$0xff]
      %v3006 = vld [vmem:[#allocation3 + $0x188] sm:$0xff]
      %v3007 = vld [vmem:[#allocation3 + $0x190] sm:$0xff]
      %v3008 = vld [vmem:[#allocation3 + $0x198] sm:$0xff]
      %v3009 = vld [vmem:[#allocation3 + $0x1a0] sm:$0xff]
      %v3010 = vld [vmem:[#allocation3 + $0x1a8] sm:$0xff]
      %v3011 = vld [vmem:[#allocation3 + $0x1b0] sm:$0xff]
      %v3012 = vld [vmem:[#allocation3 + $0x1b8] sm:$0xff]
      %v3013 = vld [vmem:[#allocation3 + $0x1c0] sm:$0xff]
      %v3014 = vld [vmem:[#allocation3 + $0x1c8] sm:$0xff]
      %v3015 = vld [vmem:[#allocation3 + $0x1d0] sm:$0xff]
      %v3016 = vld [vmem:[#allocation3 + $0x1d8] sm:$0xff]
      %v3017 = vld [vmem:[#allocation3 + $0x1e0] sm:$0xff]
      %v3018 = vld [vmem:[#allocation3 + $0x1e8] sm:$0xff]
      %v3019 = vld [vmem:[#allocation3 + $0x1f0] sm:$0xff]
      %v3020 = vld [vmem:[#allocation3 + $0x1f8] sm:$0xff]
      %v3021 = vld [vmem:[#allocation3 + $0x200] sm:$0xff]
      %v3022 = vld [vmem:[#allocation3 + $0x208] sm:$0xff]
      %v3023 = vld [vmem:[#allocation3 + $0x210] sm:$0xff]
      %v3024 = vld [vmem:[#allocation3 + $0x218] sm:$0xff]
      %v3025 = vld [vmem:[#allocation3 + $0x220] sm:$0xff]
      %v3026 = vld [vmem:[#allocation3 + $0x228] sm:$0xff]
      %v3027 = vld [vmem:[#allocation3 + $0x230] sm:$0xff]
      %v3028 = vld [vmem:[#allocation3 + $0x238] sm:$0xff]
      %v3029 = vld [vmem:[#allocation3 + $0x240] sm:$0xff]
      %v3030 = vld [vmem:[#allocation3 + $0x248] sm:$0xff]
      %v3031 = vld [vmem:[#allocation3 + $0x250] sm:$0xff]
      %v3032 = vld [vmem:[#allocation3 + $0x258] sm:$0xff]
      %v3033 = vld [vmem:[#allocation3 + $0x260] sm:$0xff]
      %v3034 = vld [vmem:[#allocation3 + $0x268] sm:$0xff]
      %v3035 = vld [vmem:[#allocation3 + $0x270] sm:$0xff]
      %v3036 = vld [vmem:[#allocation3 + $0x278] sm:$0xff]
      %v3037 = vld [vmem:[#allocation3 + $0x280] sm:$0xff]
      %v3038 = vld [vmem:[#allocation3 + $0x288] sm:$0xff]
      %v3039 = vld [vmem:[#allocation3 + $0x290] sm:$0xff]
      %v3040 = vld [vmem:[#allocation3 + $0x298] sm:$0xff]
      %v3041 = vld [vmem:[#allocation3 + $0x2a0] sm:$0xff]
      %v3042 = vld [vmem:[#allocation3 + $0x2a8] sm:$0xff]
      %v3043 = vld [vmem:[#allocation3 + $0x2b0] sm:$0xff]
      %v3044 = vld [vmem:[#allocation3 + $0x2b8] sm:$0xff]
      %v3045 = vld [vmem:[#allocation3 + $0x2c0] sm:$0xff]
      %v3046 = vld [vmem:[#allocation3 + $0x2c8] sm:$0xff]
      %v3047 = vld [vmem:[#allocation3 + $0x2d0] sm:$0xff]
      %v3048 = vld [vmem:[#allocation3 + $0x2d8] sm:$0xff]
      %v3049 = vld [vmem:[#allocation3 + $0x2e0] sm:$0xff]
      %v3050 = vld [vmem:[#allocation3 + $0x2e8] sm:$0xff]
      %v3051 = vld [vmem:[#allocation3 + $0x2f0] sm:$0xff]
      %v3052 = vld [vmem:[#allocation3 + $0x2f8] sm:$0xff]
      %v3053 = vld [vmem:[#allocation3 + $0x300] sm:$0xff]
      %v3054 = vld [vmem:[#allocation3 + $0x308] sm:$0xff]
      %v3055 = vld [vmem:[#allocation3 + $0x310] sm:$0xff]
      %v3056 = vld [vmem:[#allocation3 + $0x318] sm:$0xff]
      %v3057 = vld [vmem:[#allocation3 + $0x320] sm:$0xff]
      %v3058 = vld [vmem:[#allocation3 + $0x328] sm:$0xff]
      %v3059 = vld [vmem:[#allocation3 + $0x330] sm:$0xff]
      %v3060 = vld [vmem:[#allocation3 + $0x338] sm:$0xff]
      %v3061 = vld [vmem:[#allocation3 + $0x340] sm:$0xff]
      %v3062 = vld [vmem:[#allocation3 + $0x348] sm:$0xff]
      %v3063 = vld [vmem:[#allocation3 + $0x350] sm:$0xff]
      %v3064 = vld [vmem:[#allocation3 + $0x358] sm:$0xff]
      %v3065 = vld [vmem:[#allocation3 + $0x360] sm:$0xff]
      %v3066 = vld [vmem:[#allocation3 + $0x368] sm:$0xff]
      %v3067 = vld [vmem:[#allocation3 + $0x370] sm:$0xff]
      %v3068 = vld [vmem:[#allocation3 + $0x378] sm:$0xff]
      %v3069 = vld [vmem:[#allocation3 + $0x380] sm:$0xff]
      %v3070 = vld [vmem:[#allocation3 + $0x388] sm:$0xff]
      %v3071 = vld [vmem:[#allocation3 + $0x390] sm:$0xff]
      %v3072 = vld [vmem:[#allocation3 + $0x398] sm:$0xff]
      %v3073 = vld [vmem:[#allocation3 + $0x3a0] sm:$0xff]
      %v3074 = vld [vmem:[#allocation3 + $0x3a8] sm:$0xff]
      %v3075 = vld [vmem:[#allocation3 + $0x3b0] sm:$0xff]
      %v3076 = vld [vmem:[#allocation3 + $0x3b8] sm:$0xff]
      %v3077 = vld [vmem:[#allocation3 + $0x3c0] sm:$0xff]
      %v3078 = vld [vmem:[#allocation3 + $0x3c8] sm:$0xff]
      %v3079 = vld [vmem:[#allocation3 + $0x3d0] sm:$0xff]
      %v3080 = vld [vmem:[#allocation3 + $0x3d8] sm:$0xff]
      %v3081 = vld [vmem:[#allocation3 + $0x3e0] sm:$0xff]
      %v3082 = vld [vmem:[#allocation3 + $0x3e8] sm:$0xff]
      %v3083 = vld [vmem:[#allocation3 + $0x3f0] sm:$0xff]
      %v3084 = vld [vmem:[#allocation3 + $0x3f8] sm:$0xff]
      %v3085 = vld [vmem:[#allocation3 + $0x400] sm:$0xff]
      %v3086 = vld [vmem:[#allocation3 + $0x408] sm:$0xff]
      %v3087 = vld [vmem:[#allocation3 + $0x410] sm:$0xff]
      %v3088 = vld [vmem:[#allocation3 + $0x418] sm:$0xff]
      %v3089 = vld [vmem:[#allocation3 + $0x420] sm:$0xff]
      %v3090 = vld [vmem:[#allocation3 + $0x428] sm:$0xff]
      %v3091 = vld [vmem:[#allocation3 + $0x430] sm:$0xff]
      %v3092 = vld [vmem:[#allocation3 + $0x438] sm:$0xff]
      %v3093 = vld [vmem:[#allocation3 + $0x440] sm:$0xff]
      %v3094 = vld [vmem:[#allocation3 + $0x448] sm:$0xff]
      %v3095 = vld [vmem:[#allocation3 + $0x450] sm:$0xff]
      %v3096 = vld [vmem:[#allocation3 + $0x458] sm:$0xff]
      %v3097 = vld [vmem:[#allocation3 + $0x460] sm:$0xff]
      %v3098 = vld [vmem:[#allocation3 + $0x468] sm:$0xff]
      %v3099 = vld [vmem:[#allocation3 + $0x470] sm:$0xff]
      %v3100 = vld [vmem:[#allocation3 + $0x478] sm:$0xff]
      %v3101 = vld [vmem:[%s3] sm:$0xff]
      %v3102 = vld [vmem:[%s3 + $0x8] sm:$0xff]
      %v3103 = vld [vmem:[%s3 + $0x10] sm:$0xff]
      %v3104 = vld [vmem:[%s3 + $0x18] sm:$0xff]
      %v3105 = vld [vmem:[%s3 + $0x20] sm:$0xff]
      %v3106 = vld [vmem:[%s3 + $0x28] sm:$0xff]
      %v3107 = vld [vmem:[%s3 + $0x30] sm:$0xff]
      %v3108 = vld [vmem:[%s3 + $0x38] sm:$0xff]
      %v3109 = vld [vmem:[%s3 + $0x40] sm:$0xff]
      %v3110 = vld [vmem:[%s3 + $0x48] sm:$0xff]
      %v3111 = vld [vmem:[%s3 + $0x50] sm:$0xff]
      %v3112 = vld [vmem:[%s3 + $0x58] sm:$0xff]
      %v3113 = vld [vmem:[%s3 + $0x60] sm:$0xff]
      %v3114 = vld [vmem:[%s3 + $0x68] sm:$0xff]
      %v3115 = vld [vmem:[%s3 + $0x70] sm:$0xff]
      %v3116 = vld [vmem:[%s3 + $0x78] sm:$0xff]
      %v3117 = vld [vmem:[%s3 + $0x80] sm:$0xff]
      %v3118 = vld [vmem:[%s3 + $0x88] sm:$0xff]
      %v3119 = vld [vmem:[%s3 + $0x90] sm:$0xff]
      %v3120 = vld [vmem:[%s3 + $0x98] sm:$0xff]
      %v3121 = vld [vmem:[%s3 + $0xa0] sm:$0xff]
      %v3122 = vld [vmem:[%s3 + $0xa8] sm:$0xff]
      %v3123 = vld [vmem:[%s3 + $0xb0] sm:$0xff]
      %v3124 = vld [vmem:[%s3 + $0xb8] sm:$0xff]
      %v3125 = vld [vmem:[%s3 + $0xc0] sm:$0xff]
      %v3126 = vld [vmem:[%s3 + $0xc8] sm:$0xff]
      %v3127 = vld [vmem:[%s3 + $0xd0] sm:$0xff]
      %v3128 = vld [vmem:[%s3 + $0xd8] sm:$0xff]
      %v3129 = vld [vmem:[%s3 + $0xe0] sm:$0xff]
      %v3130 = vld [vmem:[%s3 + $0xe8] sm:$0xff]
      %v3131 = vld [vmem:[%s3 + $0xf0] sm:$0xff]
      %v3132 = vld [vmem:[%s3 + $0xf8] sm:$0xff]
      %v3133 = vld [vmem:[%s3 + $0x100] sm:$0xff]
      %v3134 = vld [vmem:[%s3 + $0x108] sm:$0xff]
      %v3135 = vld [vmem:[%s3 + $0x110] sm:$0xff]
      %v3136 = vld [vmem:[%s3 + $0x118] sm:$0xff]
      %v3137 = vld [vmem:[%s3 + $0x120] sm:$0xff]
      %v3138 = vld [vmem:[%s3 + $0x128] sm:$0xff]
      %v3139 = vld [vmem:[%s3 + $0x130] sm:$0xff]
      %v3140 = vld [vmem:[%s3 + $0x138] sm:$0xff]
      %v3141 = vld [vmem:[#allocation3 + $0x480] sm:$0xff]
      %v3142 = vld [vmem:[#allocation3 + $0x488] sm:$0xff]
      %v3143 = vld [vmem:[#allocation3 + $0x490] sm:$0xff]
      %v3144 = vld [vmem:[#allocation3 + $0x498] sm:$0xff]
      %v3145 = vld [vmem:[#allocation3 + $0x4a0] sm:$0xff]
      %v3146 = vld [vmem:[#allocation3 + $0x4a8] sm:$0xff]
      %v3147 = vld [vmem:[#allocation3 + $0x4b0] sm:$0xff]
      %v3148 = vld [vmem:[#allocation3 + $0x4b8] sm:$0xff]
      %v3149 = vld [vmem:[#allocation3 + $0x4c0] sm:$0xff]
      %s3150 = scalar_lea.vmem %s3, 320
      %v3151 = vld [vmem:[%s3150] sm:$0xff]
      %v3152 = vld [vmem:[%s3150 + $0x8] sm:$0xff]
      %v3153 = vld [vmem:[%s3150 + $0x10] sm:$0xff]
      %v3154 = vld [vmem:[%s3150 + $0x18] sm:$0xff]
      %v3155 = vld [vmem:[%s3150 + $0x20] sm:$0xff]
      %v3156 = vld [vmem:[%s3150 + $0x28] sm:$0xff]
      %v3157 = vld [vmem:[%s3150 + $0x30] sm:$0xff]
      %v3158 = vld [vmem:[%s3150 + $0x38] sm:$0xff]
      %v3159 = vld [vmem:[%s3150 + $0x40] sm:$0xff]
      %v3160 = vld [vmem:[%s3150 + $0x48] sm:$0xff]
      %v3161 = vld [vmem:[%s3150 + $0x50] sm:$0xff]
      %v3162 = vld [vmem:[%s3150 + $0x58] sm:$0xff]
      %v3163 = vld [vmem:[%s3150 + $0x60] sm:$0xff]
      %v3164 = vld [vmem:[%s3150 + $0x68] sm:$0xff]
      %v3165 = vld [vmem:[%s3150 + $0x70] sm:$0xff]
      %v3166 = vld [vmem:[%s3150 + $0x78] sm:$0xff]
      %v3167 = vld [vmem:[%s3150 + $0x80] sm:$0xff]
      %v3168 = vld [vmem:[%s3150 + $0x88] sm:$0xff]
      %v3169 = vld [vmem:[%s3150 + $0x90] sm:$0xff]
      %v3170 = vld [vmem:[%s3150 + $0x98] sm:$0xff]
      %v3171 = vld [vmem:[%s3150 + $0xa0] sm:$0xff]
      %v3172 = vld [vmem:[%s3150 + $0xa8] sm:$0xff]
      %v3173 = vld [vmem:[%s3150 + $0xb0] sm:$0xff]
      %v3174 = vld [vmem:[%s3150 + $0xb8] sm:$0xff]
      %v3175 = vld [vmem:[%s3150 + $0xc0] sm:$0xff]
      %v3176 = vld [vmem:[%s3150 + $0xc8] sm:$0xff]
      %v3177 = vld [vmem:[%s3150 + $0xd0] sm:$0xff]
      %v3178 = vld [vmem:[%s3150 + $0xd8] sm:$0xff]
      %v3179 = vld [vmem:[%s3150 + $0xe0] sm:$0xff]
      %v3180 = vld [vmem:[%s3150 + $0xe8] sm:$0xff]
      %v3181 = vld [vmem:[%s3150 + $0xf0] sm:$0xff]
      %v3182 = vld [vmem:[%s3150 + $0xf8] sm:$0xff]
      %v3183 = vld [vmem:[%s3150 + $0x100] sm:$0xff]
      %v3184 = vld [vmem:[%s3150 + $0x108] sm:$0xff]
      %v3185 = vld [vmem:[%s3150 + $0x110] sm:$0xff]
      %v3186 = vld [vmem:[%s3150 + $0x118] sm:$0xff]
      %v3187 = vld [vmem:[%s3150 + $0x120] sm:$0xff]
      %v3188 = vld [vmem:[%s3150 + $0x128] sm:$0xff]
      %v3189 = vld [vmem:[%s3150 + $0x130] sm:$0xff]
      %v3190 = vld [vmem:[%s3150 + $0x138] sm:$0xff]
      %v3192 = vsel %vm1144, %v2968, 0
      %v3195 = vsel %vm1144, %v2971, 0
      %v3198 = vsel %vm1144, %v2974, 0
      %v3201 = vsel %vm1144, %v2977, 0
      %v3204 = vsel %vm1144, %v2980, 0
      %v3207 = vsel %vm1144, %v2983, 0
      %v3210 = vsel %vm1144, %v2986, 0
      %v3213 = vsel %vm1144, %v2989, 0
      %v3216 = vsel %vm1144, %v2992, 0
      %v3219 = vsel %vm1144, %v2995, 0
      %v3222 = vsel %vm1144, %v2998, 0
      %v3225 = vsel %vm1144, %v3001, 0
      %v3228 = vsel %vm1144, %v3004, 0
      %v3231 = vsel %vm1144, %v3007, 0
      %v3234 = vsel %vm1144, %v3010, 0
      %v3237 = vsel %vm1144, %v3013, 0
      %v3240 = vsel %vm1144, %v3016, 0
      %v3243 = vsel %vm1144, %v3019, 0
      %v3246 = vsel %vm1144, %v3022, 0
      %v3249 = vsel %vm1144, %v3025, 0
      %v3252 = vsel %vm1144, %v3028, 0
      %v3255 = vsel %vm1144, %v3031, 0
      %v3258 = vsel %vm1144, %v3034, 0
      %v3261 = vsel %vm1144, %v3037, 0
      %v3264 = vsel %vm1144, %v3040, 0
      %v3267 = vsel %vm1144, %v3043, 0
      %v3270 = vsel %vm1144, %v3046, 0
      %v3273 = vsel %vm1144, %v3049, 0
      %v3276 = vsel %vm1144, %v3052, 0
      %v3279 = vsel %vm1144, %v3055, 0
      %v3282 = vsel %vm1144, %v3058, 0
      %v3285 = vsel %vm1144, %v3061, 0
      %v3288 = vsel %vm1144, %v3064, 0
      %v3291 = vsel %vm1144, %v3067, 0
      %v3294 = vsel %vm1144, %v3070, 0
      %v3297 = vsel %vm1144, %v3073, 0
      %v3300 = vsel %vm1144, %v3076, 0
      %v3303 = vsel %vm1144, %v3079, 0
      %v3306 = vsel %vm1144, %v3082, 0
      %v3309 = vsel %vm1144, %v3085, 0
      %v3312 = vsel %vm1144, %v3088, 0
      %v3315 = vsel %vm1144, %v3091, 0
      %v3318 = vsel %vm1144, %v3094, 0
      %v3321 = vsel %vm1144, %v3097, 0
      %v3324 = vsel %vm1144, %v3100, 0
      %v3327 = vsel %vm1144, %v3143, 0
      %v3330 = vsel %vm1144, %v3146, 0
      %v3333 = vsel %vm1144, %v3149, 0
      %3335 = vmatprep.subr.mxu0 0.0
      %3336 = vmatpush1.msra.mxu0 %v3166
      %3337 = vmatprep.subr.mxu0 0.0
      %3338 = vmatpush1.msra.mxu0 %v3165
      %3339 = vmatprep.subr.mxu0 0.0
      %3340 = vmatpush1.msra.mxu0 %v3164
      %3341 = vmatprep.subr.mxu0 0.0
      %3342 = vmatpush1.msra.mxu0 %v3163
      %3343 = vmatprep.subr.mxu0 0.0
      %3344 = vmatpush1.msra.mxu0 %v3162
      %3345 = vmatprep.subr.mxu0 0.0
      %3346 = vmatpush1.msra.mxu0 %v3161
      %3347 = vmatprep.subr.mxu0 0.0
      %3348 = vmatpush1.msra.mxu0 %v3160
      %3349 = vmatprep.subr.mxu0 0.0
      %3350 = vmatpush1.msra.mxu0 %v3159
      %3351 = vmatprep.subr.mxu0 0.0
      %3352 = vmatpush1.msra.mxu0 %v3158
      %3353 = vmatprep.subr.mxu0 0.0
      %3354 = vmatpush1.msra.mxu0 %v3157
      %3355 = vmatprep.subr.mxu0 0.0
      %3356 = vmatpush1.msra.mxu0 %v3156
      %3357 = vmatprep.subr.mxu0 0.0
      %3358 = vmatpush1.msra.mxu0 %v3155
      %3359 = vmatprep.subr.mxu0 0.0
      %3360 = vmatpush1.msra.mxu0 %v3154
      %3361 = vmatprep.subr.mxu0 0.0
      %3362 = vmatpush1.msra.mxu0 %v3153
      %3363 = vmatprep.subr.mxu0 0.0
      %3364 = vmatpush1.msra.mxu0 %v3152
      %3365 = vmatprep.subr.mxu0 0.0
      %3366 = vmatpush1.msra.mxu0 %v3151
      %3367 = vmatprep.subr.mxu0 0.0
      %3368 = vmatpush2.msra.mxu0 %v3182
      %3369 = vmatprep.subr.mxu0 0.0
      %3370 = vmatpush2.msra.mxu0 %v3181
      %3371 = vmatprep.subr.mxu0 0.0
      %3372 = vmatpush2.msra.mxu0 %v3180
      %3373 = vmatprep.subr.mxu0 0.0
      %3374 = vmatpush2.msra.mxu0 %v3179
      %3375 = vmatprep.subr.mxu0 0.0
      %3376 = vmatpush2.msra.mxu0 %v3178
      %3377 = vmatprep.subr.mxu0 0.0
      %3378 = vmatpush2.msra.mxu0 %v3177
      %3379 = vmatprep.subr.mxu0 0.0
      %3380 = vmatpush2.msra.mxu0 %v3176
      %3381 = vmatprep.subr.mxu0 0.0
      %3382 = vmatpush2.msra.mxu0 %v3175
      %3383 = vmatprep.subr.mxu0 0.0
      %3384 = vmatpush2.msra.mxu0 %v3174
      %3385 = vmatprep.subr.mxu0 0.0
      %3386 = vmatpush2.msra.mxu0 %v3173
      %3387 = vmatprep.subr.mxu0 0.0
      %3388 = vmatpush2.msra.mxu0 %v3172
      %3389 = vmatprep.subr.mxu0 0.0
      %3390 = vmatpush2.msra.mxu0 %v3171
      %3391 = vmatprep.subr.mxu0 0.0
      %3392 = vmatpush2.msra.mxu0 %v3170
      %3393 = vmatprep.subr.mxu0 0.0
      %3394 = vmatpush2.msra.mxu0 %v3169
      %3395 = vmatprep.subr.mxu0 0.0
      %3396 = vmatpush2.msra.mxu0 %v3168
      %3397 = vmatprep.subr.mxu0 0.0
      %3398 = vmatpush2.msra.mxu0 %v3167
      %3399 = vmatprep.mubr.f32.mxu0 %v2967
      %3400 = vmatmul.mubr.f32.gmra.mxu0 %v2966
      %v3401 = vpop.f32.mrf.mxu0
      %v3402 = vadd.f32 0.0, %v3401
      %v3403 = vpop.f32.mrf.mxu0
      %3404 = vmatprep.mubr.f32.mxu0 %v2970
      %3405 = vmatmul.mubr.f32.gmra.mxu0 %v2969
      %v3406 = vpop.f32.mrf.mxu0
      %v3407 = vadd.f32 0.0, %v3406
      %v3408 = vpop.f32.mrf.mxu0
      %3409 = vmatprep.mubr.f32.mxu0 %v2973
      %3410 = vmatmul.mubr.f32.gmra.mxu0 %v2972
      %v3411 = vpop.f32.mrf.mxu0
      %v3412 = vadd.f32 0.0, %v3411
      %v3413 = vpop.f32.mrf.mxu0
      %3414 = vmatprep.mubr.f32.mxu0 %v2976
      %3415 = vmatmul.mubr.f32.gmra.mxu0 %v2975
      %v3416 = vpop.f32.mrf.mxu0
      %v3417 = vadd.f32 0.0, %v3416
      %v3418 = vpop.f32.mrf.mxu0
      %3419 = vmatprep.mubr.f32.mxu0 %v2979
      %3420 = vmatmul.mubr.f32.gmra.mxu0 %v2978
      %v3421 = vpop.f32.mrf.mxu0
      %v3422 = vadd.f32 0.0, %v3421
      %v3423 = vpop.f32.mrf.mxu0
      %3424 = vmatprep.mubr.f32.mxu0 %v2982
      %3425 = vmatmul.mubr.f32.gmra.mxu0 %v2981
      %v3426 = vpop.f32.mrf.mxu0
      %v3427 = vadd.f32 0.0, %v3426
      %v3428 = vpop.f32.mrf.mxu0
      %3429 = vmatprep.mubr.f32.mxu0 %v2985
      %3430 = vmatmul.mubr.f32.gmra.mxu0 %v2984
      %v3431 = vpop.f32.mrf.mxu0
      %v3432 = vadd.f32 0.0, %v3431
      %v3433 = vpop.f32.mrf.mxu0
      %3434 = vmatprep.mubr.f32.mxu0 %v2988
      %3435 = vmatmul.mubr.f32.gmra.mxu0 %v2987
      %v3436 = vpop.f32.mrf.mxu0
      %v3437 = vadd.f32 0.0, %v3436
      %v3438 = vpop.f32.mrf.mxu0
      %3439 = vmatprep.mubr.f32.mxu0 %v2991
      %3440 = vmatmul.mubr.f32.gmra.mxu0 %v2990
      %v3441 = vpop.f32.mrf.mxu0
      %v3442 = vadd.f32 0.0, %v3441
      %v3443 = vpop.f32.mrf.mxu0
      %3444 = vmatprep.mubr.f32.mxu0 %v2994
      %3445 = vmatmul.mubr.f32.gmra.mxu0 %v2993
      %v3446 = vpop.f32.mrf.mxu0
      %v3447 = vadd.f32 0.0, %v3446
      %v3448 = vpop.f32.mrf.mxu0
      %3449 = vmatprep.mubr.f32.mxu0 %v2997
      %3450 = vmatmul.mubr.f32.gmra.mxu0 %v2996
      %v3451 = vpop.f32.mrf.mxu0
      %v3452 = vadd.f32 0.0, %v3451
      %v3453 = vpop.f32.mrf.mxu0
      %3454 = vmatprep.mubr.f32.mxu0 %v3000
      %3455 = vmatmul.mubr.f32.gmra.mxu0 %v2999
      %v3456 = vpop.f32.mrf.mxu0
      %v3457 = vadd.f32 0.0, %v3456
      %v3458 = vpop.f32.mrf.mxu0
      %3459 = vmatprep.mubr.f32.mxu0 %v3003
      %3460 = vmatmul.mubr.f32.gmra.mxu0 %v3002
      %v3461 = vpop.f32.mrf.mxu0
      %v3462 = vadd.f32 0.0, %v3461
      %v3463 = vpop.f32.mrf.mxu0
      %3464 = vmatprep.mubr.f32.mxu0 %v3006
      %3465 = vmatmul.mubr.f32.gmra.mxu0 %v3005
      %v3466 = vpop.f32.mrf.mxu0
      %v3467 = vadd.f32 0.0, %v3466
      %v3468 = vpop.f32.mrf.mxu0
      %3469 = vmatprep.mubr.f32.mxu0 %v3009
      %3470 = vmatmul.mubr.f32.gmra.mxu0 %v3008
      %v3471 = vpop.f32.mrf.mxu0
      %v3472 = vadd.f32 0.0, %v3471
      %v3473 = vpop.f32.mrf.mxu0
      %3474 = vmatprep.mubr.f32.mxu0 %v3012
      %3475 = vmatmul.mubr.f32.gmra.mxu0 %v3011
      %v3476 = vpop.f32.mrf.mxu0
      %v3477 = vadd.f32 0.0, %v3476
      %v3478 = vpop.f32.mrf.mxu0
      %3479 = vmatprep.mubr.f32.mxu0 %v3015
      %3480 = vmatmul.mubr.f32.gmra.mxu0 %v3014
      %v3481 = vpop.f32.mrf.mxu0
      %v3482 = vadd.f32 0.0, %v3481
      %v3483 = vpop.f32.mrf.mxu0
      %3484 = vmatprep.mubr.f32.mxu0 %v3018
      %3485 = vmatmul.mubr.f32.gmra.mxu0 %v3017
      %v3486 = vpop.f32.mrf.mxu0
      %v3487 = vadd.f32 0.0, %v3486
      %v3488 = vpop.f32.mrf.mxu0
      %3489 = vmatprep.mubr.f32.mxu0 %v3021
      %3490 = vmatmul.mubr.f32.gmra.mxu0 %v3020
      %v3491 = vpop.f32.mrf.mxu0
      %v3492 = vadd.f32 0.0, %v3491
      %v3493 = vpop.f32.mrf.mxu0
      %3494 = vmatprep.mubr.f32.mxu0 %v3024
      %3495 = vmatmul.mubr.f32.gmra.mxu0 %v3023
      %v3496 = vpop.f32.mrf.mxu0
      %v3497 = vadd.f32 0.0, %v3496
      %v3498 = vpop.f32.mrf.mxu0
      %3499 = vmatprep.mubr.f32.mxu0 %v3027
      %3500 = vmatmul.mubr.f32.gmra.mxu0 %v3026
      %v3501 = vpop.f32.mrf.mxu0
      %v3502 = vadd.f32 0.0, %v3501
      %v3503 = vpop.f32.mrf.mxu0
      %3504 = vmatprep.mubr.f32.mxu0 %v3030
      %3505 = vmatmul.mubr.f32.gmra.mxu0 %v3029
      %v3506 = vpop.f32.mrf.mxu0
      %v3507 = vadd.f32 0.0, %v3506
      %v3508 = vpop.f32.mrf.mxu0
      %3509 = vmatprep.mubr.f32.mxu0 %v3033
      %3510 = vmatmul.mubr.f32.gmra.mxu0 %v3032
      %v3511 = vpop.f32.mrf.mxu0
      %v3512 = vadd.f32 0.0, %v3511
      %v3513 = vpop.f32.mrf.mxu0
      %3514 = vmatprep.mubr.f32.mxu0 %v3036
      %3515 = vmatmul.mubr.f32.gmra.mxu0 %v3035
      %v3516 = vpop.f32.mrf.mxu0
      %v3517 = vadd.f32 0.0, %v3516
      %v3518 = vpop.f32.mrf.mxu0
      %3519 = vmatprep.mubr.f32.mxu0 %v3039
      %3520 = vmatmul.mubr.f32.gmra.mxu0 %v3038
      %v3521 = vpop.f32.mrf.mxu0
      %v3522 = vadd.f32 0.0, %v3521
      %v3523 = vpop.f32.mrf.mxu0
      %3524 = vmatprep.mubr.f32.mxu0 %v3042
      %3525 = vmatmul.mubr.f32.gmra.mxu0 %v3041
      %v3526 = vpop.f32.mrf.mxu0
      %v3527 = vadd.f32 0.0, %v3526
      %v3528 = vpop.f32.mrf.mxu0
      %3529 = vmatprep.mubr.f32.mxu0 %v3045
      %3530 = vmatmul.mubr.f32.gmra.mxu0 %v3044
      %v3531 = vpop.f32.mrf.mxu0
      %v3532 = vadd.f32 0.0, %v3531
      %v3533 = vpop.f32.mrf.mxu0
      %3534 = vmatprep.mubr.f32.mxu0 %v3048
      %3535 = vmatmul.mubr.f32.gmra.mxu0 %v3047
      %v3536 = vpop.f32.mrf.mxu0
      %v3537 = vadd.f32 0.0, %v3536
      %v3538 = vpop.f32.mrf.mxu0
      %3539 = vmatprep.mubr.f32.mxu0 %v3051
      %3540 = vmatmul.mubr.f32.gmra.mxu0 %v3050
      %v3541 = vpop.f32.mrf.mxu0
      %v3542 = vadd.f32 0.0, %v3541
      %v3543 = vpop.f32.mrf.mxu0
      %3544 = vmatprep.mubr.f32.mxu0 %v3054
      %3545 = vmatmul.mubr.f32.gmra.mxu0 %v3053
      %v3546 = vpop.f32.mrf.mxu0
      %v3547 = vadd.f32 0.0, %v3546
      %v3548 = vpop.f32.mrf.mxu0
      %3549 = vmatprep.mubr.f32.mxu0 %v3057
      %3550 = vmatmul.mubr.f32.gmra.mxu0 %v3056
      %v3551 = vpop.f32.mrf.mxu0
      %v3552 = vadd.f32 0.0, %v3551
      %v3553 = vpop.f32.mrf.mxu0
      %3554 = vmatprep.mubr.f32.mxu0 %v3060
      %3555 = vmatmul.mubr.f32.gmra.mxu0 %v3059
      %v3556 = vpop.f32.mrf.mxu0
      %v3557 = vadd.f32 0.0, %v3556
      %v3558 = vpop.f32.mrf.mxu0
      %3559 = vmatprep.mubr.f32.mxu0 %v3063
      %3560 = vmatmul.mubr.f32.gmra.mxu0 %v3062
      %v3561 = vpop.f32.mrf.mxu0
      %v3562 = vadd.f32 0.0, %v3561
      %v3563 = vpop.f32.mrf.mxu0
      %3564 = vmatprep.mubr.f32.mxu0 %v3066
      %3565 = vmatmul.mubr.f32.gmra.mxu0 %v3065
      %v3566 = vpop.f32.mrf.mxu0
      %v3567 = vadd.f32 0.0, %v3566
      %v3568 = vpop.f32.mrf.mxu0
      %3569 = vmatprep.mubr.f32.mxu0 %v3069
      %3570 = vmatmul.mubr.f32.gmra.mxu0 %v3068
      %v3571 = vpop.f32.mrf.mxu0
      %v3572 = vadd.f32 0.0, %v3571
      %v3573 = vpop.f32.mrf.mxu0
      %3574 = vmatprep.mubr.f32.mxu0 %v3072
      %3575 = vmatmul.mubr.f32.gmra.mxu0 %v3071
      %v3576 = vpop.f32.mrf.mxu0
      %v3577 = vadd.f32 0.0, %v3576
      %v3578 = vpop.f32.mrf.mxu0
      %3579 = vmatprep.mubr.f32.mxu0 %v3075
      %3580 = vmatmul.mubr.f32.gmra.mxu0 %v3074
      %v3581 = vpop.f32.mrf.mxu0
      %v3582 = vadd.f32 0.0, %v3581
      %v3583 = vpop.f32.mrf.mxu0
      %3584 = vmatprep.mubr.f32.mxu0 %v3078
      %3585 = vmatmul.mubr.f32.gmra.mxu0 %v3077
      %v3586 = vpop.f32.mrf.mxu0
      %v3587 = vadd.f32 0.0, %v3586
      %v3588 = vpop.f32.mrf.mxu0
      %3589 = vmatprep.mubr.f32.mxu0 %v3081
      %3590 = vmatmul.mubr.f32.gmra.mxu0 %v3080
      %v3591 = vpop.f32.mrf.mxu0
      %v3592 = vadd.f32 0.0, %v3591
      %v3593 = vpop.f32.mrf.mxu0
      %3594 = vmatprep.mubr.f32.mxu0 %v3084
      %3595 = vmatmul.mubr.f32.gmra.mxu0 %v3083
      %v3596 = vpop.f32.mrf.mxu0
      %v3597 = vadd.f32 0.0, %v3596
      %v3598 = vpop.f32.mrf.mxu0
      %3599 = vmatprep.mubr.f32.mxu0 %v3087
      %3600 = vmatmul.mubr.f32.gmra.mxu0 %v3086
      %v3601 = vpop.f32.mrf.mxu0
      %v3602 = vadd.f32 0.0, %v3601
      %v3603 = vpop.f32.mrf.mxu0
      %3604 = vmatprep.mubr.f32.mxu0 %v3090
      %3605 = vmatmul.mubr.f32.gmra.mxu0 %v3089
      %v3606 = vpop.f32.mrf.mxu0
      %v3607 = vadd.f32 0.0, %v3606
      %v3608 = vpop.f32.mrf.mxu0
      %3609 = vmatprep.mubr.f32.mxu0 %v3093
      %3610 = vmatmul.mubr.f32.gmra.mxu0 %v3092
      %v3611 = vpop.f32.mrf.mxu0
      %v3612 = vadd.f32 0.0, %v3611
      %v3613 = vpop.f32.mrf.mxu0
      %3614 = vmatprep.mubr.f32.mxu0 %v3096
      %3615 = vmatmul.mubr.f32.gmra.mxu0 %v3095
      %v3616 = vpop.f32.mrf.mxu0
      %v3617 = vadd.f32 0.0, %v3616
      %v3618 = vpop.f32.mrf.mxu0
      %3619 = vmatprep.mubr.f32.mxu0 %v3099
      %3620 = vmatmul.mubr.f32.gmra.mxu0 %v3098
      %v3621 = vpop.f32.mrf.mxu0
      %v3622 = vadd.f32 0.0, %v3621
      %v3623 = vpop.f32.mrf.mxu0
      %3624 = vmatprep.mubr.f32.mxu0 %v3142
      %3625 = vmatmul.mubr.f32.gmra.mxu0 %v3141
      %v3626 = vpop.f32.mrf.mxu0
      %v3627 = vadd.f32 0.0, %v3626
      %v3628 = vpop.f32.mrf.mxu0
      %3629 = vmatprep.mubr.f32.mxu0 %v3145
      %3630 = vmatmul.mubr.f32.gmra.mxu0 %v3144
      %v3631 = vpop.f32.mrf.mxu0
      %v3632 = vadd.f32 0.0, %v3631
      %v3633 = vpop.f32.mrf.mxu0
      %3634 = vmatprep.mubr.f32.mxu0 %v3148
      %3635 = vmatmul.mubr.f32.gmra.mxu0 %v3147
      %v3636 = vpop.f32.mrf.mxu0
      %v3637 = vadd.f32 0.0, %v3636
      %v3638 = vpop.f32.mrf.mxu0
      %3639 = vdwg.mxu0
      %3640 = vmatprep.subr.mxu0 0.0
      %3641 = vmatpush1.msra.mxu0 0.0
      %3642 = vmatprep.subr.mxu0 0.0
      %3643 = vmatpush1.msra.mxu0 0.0
      %3644 = vmatprep.subr.mxu0 0.0
      %3645 = vmatpush1.msra.mxu0 0.0
      %3646 = vmatprep.subr.mxu0 0.0
      %3647 = vmatpush1.msra.mxu0 0.0
      %3648 = vmatprep.subr.mxu0 0.0
      %3649 = vmatpush1.msra.mxu0 0.0
      %3650 = vmatprep.subr.mxu0 0.0
      %3651 = vmatpush1.msra.mxu0 0.0
      %3652 = vmatprep.subr.mxu0 0.0
      %3653 = vmatpush1.msra.mxu0 0.0
      %3654 = vmatprep.subr.mxu0 0.0
      %3655 = vmatpush1.msra.mxu0 0.0
      %3656 = vmatprep.subr.mxu0 0.0
      %3657 = vmatpush1.msra.mxu0 %v3190
      %3658 = vmatprep.subr.mxu0 0.0
      %3659 = vmatpush1.msra.mxu0 %v3189
      %3660 = vmatprep.subr.mxu0 0.0
      %3661 = vmatpush1.msra.mxu0 %v3188
      %3662 = vmatprep.subr.mxu0 0.0
      %3663 = vmatpush1.msra.mxu0 %v3187
      %3664 = vmatprep.subr.mxu0 0.0
      %3665 = vmatpush1.msra.mxu0 %v3186
      %3666 = vmatprep.subr.mxu0 0.0
      %3667 = vmatpush1.msra.mxu0 %v3185
      %3668 = vmatprep.subr.mxu0 0.0
      %3669 = vmatpush1.msra.mxu0 %v3184
      %3670 = vmatprep.subr.mxu0 0.0
      %3671 = vmatpush1.msra.mxu0 %v3183
      %3672 = vmatprep.subr.mxu0 0.0
      %3673 = vmatpush2.msra.mxu0 0.0
      %3674 = vmatprep.subr.mxu0 0.0
      %3675 = vmatpush2.msra.mxu0 0.0
      %3676 = vmatprep.subr.mxu0 0.0
      %3677 = vmatpush2.msra.mxu0 0.0
      %3678 = vmatprep.subr.mxu0 0.0
      %3679 = vmatpush2.msra.mxu0 0.0
      %3680 = vmatprep.subr.mxu0 0.0
      %3681 = vmatpush2.msra.mxu0 0.0
      %3682 = vmatprep.subr.mxu0 0.0
      %3683 = vmatpush2.msra.mxu0 0.0
      %3684 = vmatprep.subr.mxu0 0.0
      %3685 = vmatpush2.msra.mxu0 0.0
      %3686 = vmatprep.subr.mxu0 0.0
      %3687 = vmatpush2.msra.mxu0 0.0
      %3688 = vmatprep.subr.mxu0 0.0
      %3689 = vmatpush2.msra.mxu0 0.0
      %3690 = vmatprep.subr.mxu0 0.0
      %3691 = vmatpush2.msra.mxu0 0.0
      %3692 = vmatprep.subr.mxu0 0.0
      %3693 = vmatpush2.msra.mxu0 0.0
      %3694 = vmatprep.subr.mxu0 0.0
      %3695 = vmatpush2.msra.mxu0 0.0
      %3696 = vmatprep.subr.mxu0 0.0
      %3697 = vmatpush2.msra.mxu0 0.0
      %3698 = vmatprep.subr.mxu0 0.0
      %3699 = vmatpush2.msra.mxu0 0.0
      %3700 = vmatprep.subr.mxu0 0.0
      %3701 = vmatpush2.msra.mxu0 0.0
      %3702 = vmatprep.subr.mxu0 0.0
      %3703 = vmatpush2.msra.mxu0 0.0
      %3704 = vmatprep.mubr.f32.mxu0 0.0
      %3705 = vmatmul.mubr.f32.gmra.mxu0 %v3192
      %v3706 = vpop.f32.mrf.mxu0
      %v3707 = vadd.f32 %v3402, %v3706
      %v3708 = vpop.f32.mrf.mxu0
      %3709 = vmatprep.mubr.f32.mxu0 0.0
      %3710 = vmatmul.mubr.f32.gmra.mxu0 %v3195
      %v3711 = vpop.f32.mrf.mxu0
      %v3712 = vadd.f32 %v3407, %v3711
      %v3713 = vpop.f32.mrf.mxu0
      %3714 = vmatprep.mubr.f32.mxu0 0.0
      %3715 = vmatmul.mubr.f32.gmra.mxu0 %v3198
      %v3716 = vpop.f32.mrf.mxu0
      %v3717 = vadd.f32 %v3412, %v3716
      %v3718 = vpop.f32.mrf.mxu0
      %3719 = vmatprep.mubr.f32.mxu0 0.0
      %3720 = vmatmul.mubr.f32.gmra.mxu0 %v3201
      %v3721 = vpop.f32.mrf.mxu0
      %v3722 = vadd.f32 %v3417, %v3721
      %v3723 = vpop.f32.mrf.mxu0
      %3724 = vmatprep.mubr.f32.mxu0 0.0
      %3725 = vmatmul.mubr.f32.gmra.mxu0 %v3204
      %v3726 = vpop.f32.mrf.mxu0
      %v3727 = vadd.f32 %v3422, %v3726
      %v3728 = vpop.f32.mrf.mxu0
      %3729 = vmatprep.mubr.f32.mxu0 0.0
      %3730 = vmatmul.mubr.f32.gmra.mxu0 %v3207
      %v3731 = vpop.f32.mrf.mxu0
      %v3732 = vadd.f32 %v3427, %v3731
      %v3733 = vpop.f32.mrf.mxu0
      %3734 = vmatprep.mubr.f32.mxu0 0.0
      %3735 = vmatmul.mubr.f32.gmra.mxu0 %v3210
      %v3736 = vpop.f32.mrf.mxu0
      %v3737 = vadd.f32 %v3432, %v3736
      %v3738 = vpop.f32.mrf.mxu0
      %3739 = vmatprep.mubr.f32.mxu0 0.0
      %3740 = vmatmul.mubr.f32.gmra.mxu0 %v3213
      %v3741 = vpop.f32.mrf.mxu0
      %v3742 = vadd.f32 %v3437, %v3741
      %v3743 = vpop.f32.mrf.mxu0
      %3744 = vmatprep.mubr.f32.mxu0 0.0
      %3745 = vmatmul.mubr.f32.gmra.mxu0 %v3216
      %v3746 = vpop.f32.mrf.mxu0
      %v3747 = vadd.f32 %v3442, %v3746
      %v3748 = vpop.f32.mrf.mxu0
      %3749 = vmatprep.mubr.f32.mxu0 0.0
      %3750 = vmatmul.mubr.f32.gmra.mxu0 %v3219
      %v3751 = vpop.f32.mrf.mxu0
      %v3752 = vadd.f32 %v3447, %v3751
      %v3753 = vpop.f32.mrf.mxu0
      %3754 = vmatprep.mubr.f32.mxu0 0.0
      %3755 = vmatmul.mubr.f32.gmra.mxu0 %v3222
      %v3756 = vpop.f32.mrf.mxu0
      %v3757 = vadd.f32 %v3452, %v3756
      %v3758 = vpop.f32.mrf.mxu0
      %3759 = vmatprep.mubr.f32.mxu0 0.0
      %3760 = vmatmul.mubr.f32.gmra.mxu0 %v3225
      %v3761 = vpop.f32.mrf.mxu0
      %v3762 = vadd.f32 %v3457, %v3761
      %v3763 = vpop.f32.mrf.mxu0
      %3764 = vmatprep.mubr.f32.mxu0 0.0
      %3765 = vmatmul.mubr.f32.gmra.mxu0 %v3228
      %v3766 = vpop.f32.mrf.mxu0
      %v3767 = vadd.f32 %v3462, %v3766
      %v3768 = vpop.f32.mrf.mxu0
      %3769 = vmatprep.mubr.f32.mxu0 0.0
      %3770 = vmatmul.mubr.f32.gmra.mxu0 %v3231
      %v3771 = vpop.f32.mrf.mxu0
      %v3772 = vadd.f32 %v3467, %v3771
      %v3773 = vpop.f32.mrf.mxu0
      %3774 = vmatprep.mubr.f32.mxu0 0.0
      %3775 = vmatmul.mubr.f32.gmra.mxu0 %v3234
      %v3776 = vpop.f32.mrf.mxu0
      %v3777 = vadd.f32 %v3472, %v3776
      %v3778 = vpop.f32.mrf.mxu0
      %3779 = vmatprep.mubr.f32.mxu0 0.0
      %3780 = vmatmul.mubr.f32.gmra.mxu0 %v3237
      %v3781 = vpop.f32.mrf.mxu0
      %v3782 = vadd.f32 %v3477, %v3781
      %v3783 = vpop.f32.mrf.mxu0
      %3784 = vmatprep.mubr.f32.mxu0 0.0
      %3785 = vmatmul.mubr.f32.gmra.mxu0 %v3240
      %v3786 = vpop.f32.mrf.mxu0
      %v3787 = vadd.f32 %v3482, %v3786
      %v3788 = vpop.f32.mrf.mxu0
      %3789 = vmatprep.mubr.f32.mxu0 0.0
      %3790 = vmatmul.mubr.f32.gmra.mxu0 %v3243
      %v3791 = vpop.f32.mrf.mxu0
      %v3792 = vadd.f32 %v3487, %v3791
      %v3793 = vpop.f32.mrf.mxu0
      %3794 = vmatprep.mubr.f32.mxu0 0.0
      %3795 = vmatmul.mubr.f32.gmra.mxu0 %v3246
      %v3796 = vpop.f32.mrf.mxu0
      %v3797 = vadd.f32 %v3492, %v3796
      %v3798 = vpop.f32.mrf.mxu0
      %3799 = vmatprep.mubr.f32.mxu0 0.0
      %3800 = vmatmul.mubr.f32.gmra.mxu0 %v3249
      %v3801 = vpop.f32.mrf.mxu0
      %v3802 = vadd.f32 %v3497, %v3801
      %v3803 = vpop.f32.mrf.mxu0
      %3804 = vmatprep.mubr.f32.mxu0 0.0
      %3805 = vmatmul.mubr.f32.gmra.mxu0 %v3252
      %v3806 = vpop.f32.mrf.mxu0
      %v3807 = vadd.f32 %v3502, %v3806
      %v3808 = vpop.f32.mrf.mxu0
      %3809 = vmatprep.mubr.f32.mxu0 0.0
      %3810 = vmatmul.mubr.f32.gmra.mxu0 %v3255
      %v3811 = vpop.f32.mrf.mxu0
      %v3812 = vadd.f32 %v3507, %v3811
      %v3813 = vpop.f32.mrf.mxu0
      %3814 = vmatprep.mubr.f32.mxu0 0.0
      %3815 = vmatmul.mubr.f32.gmra.mxu0 %v3258
      %v3816 = vpop.f32.mrf.mxu0
      %v3817 = vadd.f32 %v3512, %v3816
      %v3818 = vpop.f32.mrf.mxu0
      %3819 = vmatprep.mubr.f32.mxu0 0.0
      %3820 = vmatmul.mubr.f32.gmra.mxu0 %v3261
      %v3821 = vpop.f32.mrf.mxu0
      %v3822 = vadd.f32 %v3517, %v3821
      %v3823 = vpop.f32.mrf.mxu0
      %3824 = vmatprep.mubr.f32.mxu0 0.0
      %3825 = vmatmul.mubr.f32.gmra.mxu0 %v3264
      %v3826 = vpop.f32.mrf.mxu0
      %v3827 = vadd.f32 %v3522, %v3826
      %v3828 = vpop.f32.mrf.mxu0
      %3829 = vmatprep.mubr.f32.mxu0 0.0
      %3830 = vmatmul.mubr.f32.gmra.mxu0 %v3267
      %v3831 = vpop.f32.mrf.mxu0
      %v3832 = vadd.f32 %v3527, %v3831
      %v3833 = vpop.f32.mrf.mxu0
      %3834 = vmatprep.mubr.f32.mxu0 0.0
      %3835 = vmatmul.mubr.f32.gmra.mxu0 %v3270
      %v3836 = vpop.f32.mrf.mxu0
      %v3837 = vadd.f32 %v3532, %v3836
      %v3838 = vpop.f32.mrf.mxu0
      %3839 = vmatprep.mubr.f32.mxu0 0.0
      %3840 = vmatmul.mubr.f32.gmra.mxu0 %v3273
      %v3841 = vpop.f32.mrf.mxu0
      %v3842 = vadd.f32 %v3537, %v3841
      %v3843 = vpop.f32.mrf.mxu0
      %3844 = vmatprep.mubr.f32.mxu0 0.0
      %3845 = vmatmul.mubr.f32.gmra.mxu0 %v3276
      %v3846 = vpop.f32.mrf.mxu0
      %v3847 = vadd.f32 %v3542, %v3846
      %v3848 = vpop.f32.mrf.mxu0
      %3849 = vmatprep.mubr.f32.mxu0 0.0
      %3850 = vmatmul.mubr.f32.gmra.mxu0 %v3279
      %v3851 = vpop.f32.mrf.mxu0
      %v3852 = vadd.f32 %v3547, %v3851
      %v3853 = vpop.f32.mrf.mxu0
      %3854 = vmatprep.mubr.f32.mxu0 0.0
      %3855 = vmatmul.mubr.f32.gmra.mxu0 %v3282
      %v3856 = vpop.f32.mrf.mxu0
      %v3857 = vadd.f32 %v3552, %v3856
      %v3858 = vpop.f32.mrf.mxu0
      %3859 = vmatprep.mubr.f32.mxu0 0.0
      %3860 = vmatmul.mubr.f32.gmra.mxu0 %v3285
      %v3861 = vpop.f32.mrf.mxu0
      %v3862 = vadd.f32 %v3557, %v3861
      %v3863 = vpop.f32.mrf.mxu0
      %3864 = vmatprep.mubr.f32.mxu0 0.0
      %3865 = vmatmul.mubr.f32.gmra.mxu0 %v3288
      %v3866 = vpop.f32.mrf.mxu0
      %v3867 = vadd.f32 %v3562, %v3866
      %v3868 = vpop.f32.mrf.mxu0
      %3869 = vmatprep.mubr.f32.mxu0 0.0
      %3870 = vmatmul.mubr.f32.gmra.mxu0 %v3291
      %v3871 = vpop.f32.mrf.mxu0
      %v3872 = vadd.f32 %v3567, %v3871
      %v3873 = vpop.f32.mrf.mxu0
      %3874 = vmatprep.mubr.f32.mxu0 0.0
      %3875 = vmatmul.mubr.f32.gmra.mxu0 %v3294
      %v3876 = vpop.f32.mrf.mxu0
      %v3877 = vadd.f32 %v3572, %v3876
      %v3878 = vpop.f32.mrf.mxu0
      %3879 = vmatprep.mubr.f32.mxu0 0.0
      %3880 = vmatmul.mubr.f32.gmra.mxu0 %v3297
      %v3881 = vpop.f32.mrf.mxu0
      %v3882 = vadd.f32 %v3577, %v3881
      %v3883 = vpop.f32.mrf.mxu0
      %3884 = vmatprep.mubr.f32.mxu0 0.0
      %3885 = vmatmul.mubr.f32.gmra.mxu0 %v3300
      %v3886 = vpop.f32.mrf.mxu0
      %v3887 = vadd.f32 %v3582, %v3886
      %v3888 = vpop.f32.mrf.mxu0
      %3889 = vmatprep.mubr.f32.mxu0 0.0
      %3890 = vmatmul.mubr.f32.gmra.mxu0 %v3303
      %v3891 = vpop.f32.mrf.mxu0
      %v3892 = vadd.f32 %v3587, %v3891
      %v3893 = vpop.f32.mrf.mxu0
      %3894 = vmatprep.mubr.f32.mxu0 0.0
      %3895 = vmatmul.mubr.f32.gmra.mxu0 %v3306
      %v3896 = vpop.f32.mrf.mxu0
      %v3897 = vadd.f32 %v3592, %v3896
      %v3898 = vpop.f32.mrf.mxu0
      %3899 = vmatprep.mubr.f32.mxu0 0.0
      %3900 = vmatmul.mubr.f32.gmra.mxu0 %v3309
      %v3901 = vpop.f32.mrf.mxu0
      %v3902 = vadd.f32 %v3597, %v3901
      %v3903 = vpop.f32.mrf.mxu0
      %3904 = vmatprep.mubr.f32.mxu0 0.0
      %3905 = vmatmul.mubr.f32.gmra.mxu0 %v3312
      %v3906 = vpop.f32.mrf.mxu0
      %v3907 = vadd.f32 %v3602, %v3906
      %v3908 = vpop.f32.mrf.mxu0
      %3909 = vmatprep.mubr.f32.mxu0 0.0
      %3910 = vmatmul.mubr.f32.gmra.mxu0 %v3315
      %v3911 = vpop.f32.mrf.mxu0
      %v3912 = vadd.f32 %v3607, %v3911
      %v3913 = vpop.f32.mrf.mxu0
      %3914 = vmatprep.mubr.f32.mxu0 0.0
      %3915 = vmatmul.mubr.f32.gmra.mxu0 %v3318
      %v3916 = vpop.f32.mrf.mxu0
      %v3917 = vadd.f32 %v3612, %v3916
      %v3918 = vpop.f32.mrf.mxu0
      %3919 = vmatprep.mubr.f32.mxu0 0.0
      %3920 = vmatmul.mubr.f32.gmra.mxu0 %v3321
      %v3921 = vpop.f32.mrf.mxu0
      %v3922 = vadd.f32 %v3617, %v3921
      %v3923 = vpop.f32.mrf.mxu0
      %3924 = vmatprep.mubr.f32.mxu0 0.0
      %3925 = vmatmul.mubr.f32.gmra.mxu0 %v3324
      %v3926 = vpop.f32.mrf.mxu0
      %v3927 = vadd.f32 %v3622, %v3926
      %v3928 = vpop.f32.mrf.mxu0
      %3929 = vmatprep.mubr.f32.mxu0 0.0
      %3930 = vmatmul.mubr.f32.gmra.mxu0 %v3327
      %v3931 = vpop.f32.mrf.mxu0
      %v3932 = vadd.f32 %v3627, %v3931
      %v3933 = vpop.f32.mrf.mxu0
      %3934 = vmatprep.mubr.f32.mxu0 0.0
      %3935 = vmatmul.mubr.f32.gmra.mxu0 %v3330
      %v3936 = vpop.f32.mrf.mxu0
      %v3937 = vadd.f32 %v3632, %v3936
      %v3938 = vpop.f32.mrf.mxu0
      %3939 = vmatprep.mubr.f32.mxu0 0.0
      %3940 = vmatmul.mubr.f32.gmra.mxu0 %v3333
      %v3941 = vpop.f32.mrf.mxu0
      %v3942 = vadd.f32 %v3637, %v3941
      %v3943 = vpop.f32.mrf.mxu0
      %3944 = vdwg.mxu0
      %v3946 = vsel %vm1144, %v2959, 0
      %v3949 = vsel %vm1144, %v2962, 0
      %v3952 = vsel %vm1144, %v2965, 0
      %3954 = vmatprep.subr.mxu0 0.0
      %3955 = vmatpush1.msra.mxu0 %v3116
      %3956 = vmatprep.subr.mxu0 0.0
      %3957 = vmatpush1.msra.mxu0 %v3115
      %3958 = vmatprep.subr.mxu0 0.0
      %3959 = vmatpush1.msra.mxu0 %v3114
      %3960 = vmatprep.subr.mxu0 0.0
      %3961 = vmatpush1.msra.mxu0 %v3113
      %3962 = vmatprep.subr.mxu0 0.0
      %3963 = vmatpush1.msra.mxu0 %v3112
      %3964 = vmatprep.subr.mxu0 0.0
      %3965 = vmatpush1.msra.mxu0 %v3111
      %3966 = vmatprep.subr.mxu0 0.0
      %3967 = vmatpush1.msra.mxu0 %v3110
      %3968 = vmatprep.subr.mxu0 0.0
      %3969 = vmatpush1.msra.mxu0 %v3109
      %3970 = vmatprep.subr.mxu0 0.0
      %3971 = vmatpush1.msra.mxu0 %v3108
      %3972 = vmatprep.subr.mxu0 0.0
      %3973 = vmatpush1.msra.mxu0 %v3107
      %3974 = vmatprep.subr.mxu0 0.0
      %3975 = vmatpush1.msra.mxu0 %v3106
      %3976 = vmatprep.subr.mxu0 0.0
      %3977 = vmatpush1.msra.mxu0 %v3105
      %3978 = vmatprep.subr.mxu0 0.0
      %3979 = vmatpush1.msra.mxu0 %v3104
      %3980 = vmatprep.subr.mxu0 0.0
      %3981 = vmatpush1.msra.mxu0 %v3103
      %3982 = vmatprep.subr.mxu0 0.0
      %3983 = vmatpush1.msra.mxu0 %v3102
      %3984 = vmatprep.subr.mxu0 0.0
      %3985 = vmatpush1.msra.mxu0 %v3101
      %3986 = vmatprep.subr.mxu0 0.0
      %3987 = vmatpush2.msra.mxu0 %v3132
      %3988 = vmatprep.subr.mxu0 0.0
      %3989 = vmatpush2.msra.mxu0 %v3131
      %3990 = vmatprep.subr.mxu0 0.0
      %3991 = vmatpush2.msra.mxu0 %v3130
      %3992 = vmatprep.subr.mxu0 0.0
      %3993 = vmatpush2.msra.mxu0 %v3129
      %3994 = vmatprep.subr.mxu0 0.0
      %3995 = vmatpush2.msra.mxu0 %v3128
      %3996 = vmatprep.subr.mxu0 0.0
      %3997 = vmatpush2.msra.mxu0 %v3127
      %3998 = vmatprep.subr.mxu0 0.0
      %3999 = vmatpush2.msra.mxu0 %v3126
      %4000 = vmatprep.subr.mxu0 0.0
      %4001 = vmatpush2.msra.mxu0 %v3125
      %4002 = vmatprep.subr.mxu0 0.0
      %4003 = vmatpush2.msra.mxu0 %v3124
      %4004 = vmatprep.subr.mxu0 0.0
      %4005 = vmatpush2.msra.mxu0 %v3123
      %4006 = vmatprep.subr.mxu0 0.0
      %4007 = vmatpush2.msra.mxu0 %v3122
      %4008 = vmatprep.subr.mxu0 0.0
      %4009 = vmatpush2.msra.mxu0 %v3121
      %4010 = vmatprep.subr.mxu0 0.0
      %4011 = vmatpush2.msra.mxu0 %v3120
      %4012 = vmatprep.subr.mxu0 0.0
      %4013 = vmatpush2.msra.mxu0 %v3119
      %4014 = vmatprep.subr.mxu0 0.0
      %4015 = vmatpush2.msra.mxu0 %v3118
      %4016 = vmatprep.subr.mxu0 0.0
      %4017 = vmatpush2.msra.mxu0 %v3117
      %4018 = vmatprep.mubr.f32.mxu0 %v2958
      %4019 = vmatmul.mubr.f32.gmra.mxu0 %v2957
      %v4020 = vpop.f32.mrf.mxu0
      %v4021 = vadd.f32 %v3707, %v4020
      %v4022 = vpop.f32.mrf.mxu0
      %4023 = vmatprep.mubr.f32.mxu0 %v2961
      %4024 = vmatmul.mubr.f32.gmra.mxu0 %v2960
      %v4025 = vpop.f32.mrf.mxu0
      %v4026 = vadd.f32 %v3712, %v4025
      %v4027 = vpop.f32.mrf.mxu0
      %4028 = vmatprep.mubr.f32.mxu0 %v2964
      %4029 = vmatmul.mubr.f32.gmra.mxu0 %v2963
      %v4030 = vpop.f32.mrf.mxu0
      %v4031 = vadd.f32 %v3717, %v4030
      %v4032 = vpop.f32.mrf.mxu0
      %4033 = vmatprep.mubr.f32.mxu0 %v2967
      %4034 = vmatmul.mubr.f32.gmra.mxu0 %v2966
      %v4035 = vpop.f32.mrf.mxu0
      %v4036 = vadd.f32 %v3722, %v4035
      %v4037 = vpop.f32.mrf.mxu0
      %4038 = vmatprep.mubr.f32.mxu0 %v2970
      %4039 = vmatmul.mubr.f32.gmra.mxu0 %v2969
      %v4040 = vpop.f32.mrf.mxu0
      %v4041 = vadd.f32 %v3727, %v4040
      %v4042 = vpop.f32.mrf.mxu0
      %4043 = vmatprep.mubr.f32.mxu0 %v2973
      %4044 = vmatmul.mubr.f32.gmra.mxu0 %v2972
      %v4045 = vpop.f32.mrf.mxu0
      %v4046 = vadd.f32 %v3732, %v4045
      %v4047 = vpop.f32.mrf.mxu0
      %4048 = vmatprep.mubr.f32.mxu0 %v2976
      %4049 = vmatmul.mubr.f32.gmra.mxu0 %v2975
      %v4050 = vpop.f32.mrf.mxu0
      %v4051 = vadd.f32 %v3737, %v4050
      %v4052 = vpop.f32.mrf.mxu0
      %4053 = vmatprep.mubr.f32.mxu0 %v2979
      %4054 = vmatmul.mubr.f32.gmra.mxu0 %v2978
      %v4055 = vpop.f32.mrf.mxu0
      %v4056 = vadd.f32 %v3742, %v4055
      %v4057 = vpop.f32.mrf.mxu0
      %4058 = vmatprep.mubr.f32.mxu0 %v2982
      %4059 = vmatmul.mubr.f32.gmra.mxu0 %v2981
      %v4060 = vpop.f32.mrf.mxu0
      %v4061 = vadd.f32 %v3747, %v4060
      %v4062 = vpop.f32.mrf.mxu0
      %4063 = vmatprep.mubr.f32.mxu0 %v2985
      %4064 = vmatmul.mubr.f32.gmra.mxu0 %v2984
      %v4065 = vpop.f32.mrf.mxu0
      %v4066 = vadd.f32 %v3752, %v4065
      %v4067 = vpop.f32.mrf.mxu0
      %4068 = vmatprep.mubr.f32.mxu0 %v2988
      %4069 = vmatmul.mubr.f32.gmra.mxu0 %v2987
      %v4070 = vpop.f32.mrf.mxu0
      %v4071 = vadd.f32 %v3757, %v4070
      %v4072 = vpop.f32.mrf.mxu0
      %4073 = vmatprep.mubr.f32.mxu0 %v2991
      %4074 = vmatmul.mubr.f32.gmra.mxu0 %v2990
      %v4075 = vpop.f32.mrf.mxu0
      %v4076 = vadd.f32 %v3762, %v4075
      %v4077 = vpop.f32.mrf.mxu0
      %4078 = vmatprep.mubr.f32.mxu0 %v2994
      %4079 = vmatmul.mubr.f32.gmra.mxu0 %v2993
      %v4080 = vpop.f32.mrf.mxu0
      %v4081 = vadd.f32 %v3767, %v4080
      %v4082 = vpop.f32.mrf.mxu0
      %4083 = vmatprep.mubr.f32.mxu0 %v2997
      %4084 = vmatmul.mubr.f32.gmra.mxu0 %v2996
      %v4085 = vpop.f32.mrf.mxu0
      %v4086 = vadd.f32 %v3772, %v4085
      %v4087 = vpop.f32.mrf.mxu0
      %4088 = vmatprep.mubr.f32.mxu0 %v3000
      %4089 = vmatmul.mubr.f32.gmra.mxu0 %v2999
      %v4090 = vpop.f32.mrf.mxu0
      %v4091 = vadd.f32 %v3777, %v4090
      %v4092 = vpop.f32.mrf.mxu0
      %4093 = vmatprep.mubr.f32.mxu0 %v3003
      %4094 = vmatmul.mubr.f32.gmra.mxu0 %v3002
      %v4095 = vpop.f32.mrf.mxu0
      %v4096 = vadd.f32 %v3782, %v4095
      %v4097 = vpop.f32.mrf.mxu0
      %4098 = vmatprep.mubr.f32.mxu0 %v3006
      %4099 = vmatmul.mubr.f32.gmra.mxu0 %v3005
      %v4100 = vpop.f32.mrf.mxu0
      %v4101 = vadd.f32 %v3787, %v4100
      %v4102 = vpop.f32.mrf.mxu0
      %4103 = vmatprep.mubr.f32.mxu0 %v3009
      %4104 = vmatmul.mubr.f32.gmra.mxu0 %v3008
      %v4105 = vpop.f32.mrf.mxu0
      %v4106 = vadd.f32 %v3792, %v4105
      %v4107 = vpop.f32.mrf.mxu0
      %4108 = vmatprep.mubr.f32.mxu0 %v3012
      %4109 = vmatmul.mubr.f32.gmra.mxu0 %v3011
      %v4110 = vpop.f32.mrf.mxu0
      %v4111 = vadd.f32 %v3797, %v4110
      %v4112 = vpop.f32.mrf.mxu0
      %4113 = vmatprep.mubr.f32.mxu0 %v3015
      %4114 = vmatmul.mubr.f32.gmra.mxu0 %v3014
      %v4115 = vpop.f32.mrf.mxu0
      %v4116 = vadd.f32 %v3802, %v4115
      %v4117 = vpop.f32.mrf.mxu0
      %4118 = vmatprep.mubr.f32.mxu0 %v3018
      %4119 = vmatmul.mubr.f32.gmra.mxu0 %v3017
      %v4120 = vpop.f32.mrf.mxu0
      %v4121 = vadd.f32 %v3807, %v4120
      %v4122 = vpop.f32.mrf.mxu0
      %4123 = vmatprep.mubr.f32.mxu0 %v3021
      %4124 = vmatmul.mubr.f32.gmra.mxu0 %v3020
      %v4125 = vpop.f32.mrf.mxu0
      %v4126 = vadd.f32 %v3812, %v4125
      %v4127 = vpop.f32.mrf.mxu0
      %4128 = vmatprep.mubr.f32.mxu0 %v3024
      %4129 = vmatmul.mubr.f32.gmra.mxu0 %v3023
      %v4130 = vpop.f32.mrf.mxu0
      %v4131 = vadd.f32 %v3817, %v4130
      %v4132 = vpop.f32.mrf.mxu0
      %4133 = vmatprep.mubr.f32.mxu0 %v3027
      %4134 = vmatmul.mubr.f32.gmra.mxu0 %v3026
      %v4135 = vpop.f32.mrf.mxu0
      %v4136 = vadd.f32 %v3822, %v4135
      %v4137 = vpop.f32.mrf.mxu0
      %4138 = vmatprep.mubr.f32.mxu0 %v3030
      %4139 = vmatmul.mubr.f32.gmra.mxu0 %v3029
      %v4140 = vpop.f32.mrf.mxu0
      %v4141 = vadd.f32 %v3827, %v4140
      %v4142 = vpop.f32.mrf.mxu0
      %4143 = vmatprep.mubr.f32.mxu0 %v3033
      %4144 = vmatmul.mubr.f32.gmra.mxu0 %v3032
      %v4145 = vpop.f32.mrf.mxu0
      %v4146 = vadd.f32 %v3832, %v4145
      %v4147 = vpop.f32.mrf.mxu0
      %4148 = vmatprep.mubr.f32.mxu0 %v3036
      %4149 = vmatmul.mubr.f32.gmra.mxu0 %v3035
      %v4150 = vpop.f32.mrf.mxu0
      %v4151 = vadd.f32 %v3837, %v4150
      %v4152 = vpop.f32.mrf.mxu0
      %4153 = vmatprep.mubr.f32.mxu0 %v3039
      %4154 = vmatmul.mubr.f32.gmra.mxu0 %v3038
      %v4155 = vpop.f32.mrf.mxu0
      %v4156 = vadd.f32 %v3842, %v4155
      %v4157 = vpop.f32.mrf.mxu0
      %4158 = vmatprep.mubr.f32.mxu0 %v3042
      %4159 = vmatmul.mubr.f32.gmra.mxu0 %v3041
      %v4160 = vpop.f32.mrf.mxu0
      %v4161 = vadd.f32 %v3847, %v4160
      %v4162 = vpop.f32.mrf.mxu0
      %4163 = vmatprep.mubr.f32.mxu0 %v3045
      %4164 = vmatmul.mubr.f32.gmra.mxu0 %v3044
      %v4165 = vpop.f32.mrf.mxu0
      %v4166 = vadd.f32 %v3852, %v4165
      %v4167 = vpop.f32.mrf.mxu0
      %4168 = vmatprep.mubr.f32.mxu0 %v3048
      %4169 = vmatmul.mubr.f32.gmra.mxu0 %v3047
      %v4170 = vpop.f32.mrf.mxu0
      %v4171 = vadd.f32 %v3857, %v4170
      %v4172 = vpop.f32.mrf.mxu0
      %4173 = vmatprep.mubr.f32.mxu0 %v3051
      %4174 = vmatmul.mubr.f32.gmra.mxu0 %v3050
      %v4175 = vpop.f32.mrf.mxu0
      %v4176 = vadd.f32 %v3862, %v4175
      %v4177 = vpop.f32.mrf.mxu0
      %4178 = vmatprep.mubr.f32.mxu0 %v3054
      %4179 = vmatmul.mubr.f32.gmra.mxu0 %v3053
      %v4180 = vpop.f32.mrf.mxu0
      %v4181 = vadd.f32 %v3867, %v4180
      %v4182 = vpop.f32.mrf.mxu0
      %4183 = vmatprep.mubr.f32.mxu0 %v3057
      %4184 = vmatmul.mubr.f32.gmra.mxu0 %v3056
      %v4185 = vpop.f32.mrf.mxu0
      %v4186 = vadd.f32 %v3872, %v4185
      %v4187 = vpop.f32.mrf.mxu0
      %4188 = vmatprep.mubr.f32.mxu0 %v3060
      %4189 = vmatmul.mubr.f32.gmra.mxu0 %v3059
      %v4190 = vpop.f32.mrf.mxu0
      %v4191 = vadd.f32 %v3877, %v4190
      %v4192 = vpop.f32.mrf.mxu0
      %4193 = vmatprep.mubr.f32.mxu0 %v3063
      %4194 = vmatmul.mubr.f32.gmra.mxu0 %v3062
      %v4195 = vpop.f32.mrf.mxu0
      %v4196 = vadd.f32 %v3882, %v4195
      %v4197 = vpop.f32.mrf.mxu0
      %4198 = vmatprep.mubr.f32.mxu0 %v3066
      %4199 = vmatmul.mubr.f32.gmra.mxu0 %v3065
      %v4200 = vpop.f32.mrf.mxu0
      %v4201 = vadd.f32 %v3887, %v4200
      %v4202 = vpop.f32.mrf.mxu0
      %4203 = vmatprep.mubr.f32.mxu0 %v3069
      %4204 = vmatmul.mubr.f32.gmra.mxu0 %v3068
      %v4205 = vpop.f32.mrf.mxu0
      %v4206 = vadd.f32 %v3892, %v4205
      %v4207 = vpop.f32.mrf.mxu0
      %4208 = vmatprep.mubr.f32.mxu0 %v3072
      %4209 = vmatmul.mubr.f32.gmra.mxu0 %v3071
      %v4210 = vpop.f32.mrf.mxu0
      %v4211 = vadd.f32 %v3897, %v4210
      %v4212 = vpop.f32.mrf.mxu0
      %4213 = vmatprep.mubr.f32.mxu0 %v3075
      %4214 = vmatmul.mubr.f32.gmra.mxu0 %v3074
      %v4215 = vpop.f32.mrf.mxu0
      %v4216 = vadd.f32 %v3902, %v4215
      %v4217 = vpop.f32.mrf.mxu0
      %4218 = vmatprep.mubr.f32.mxu0 %v3078
      %4219 = vmatmul.mubr.f32.gmra.mxu0 %v3077
      %v4220 = vpop.f32.mrf.mxu0
      %v4221 = vadd.f32 %v3907, %v4220
      %v4222 = vpop.f32.mrf.mxu0
      %4223 = vmatprep.mubr.f32.mxu0 %v3081
      %4224 = vmatmul.mubr.f32.gmra.mxu0 %v3080
      %v4225 = vpop.f32.mrf.mxu0
      %v4226 = vadd.f32 %v3912, %v4225
      %v4227 = vpop.f32.mrf.mxu0
      %4228 = vmatprep.mubr.f32.mxu0 %v3084
      %4229 = vmatmul.mubr.f32.gmra.mxu0 %v3083
      %v4230 = vpop.f32.mrf.mxu0
      %v4231 = vadd.f32 %v3917, %v4230
      %v4232 = vpop.f32.mrf.mxu0
      %4233 = vmatprep.mubr.f32.mxu0 %v3087
      %4234 = vmatmul.mubr.f32.gmra.mxu0 %v3086
      %v4235 = vpop.f32.mrf.mxu0
      %v4236 = vadd.f32 %v3922, %v4235
      %v4237 = vpop.f32.mrf.mxu0
      %4238 = vmatprep.mubr.f32.mxu0 %v3090
      %4239 = vmatmul.mubr.f32.gmra.mxu0 %v3089
      %v4240 = vpop.f32.mrf.mxu0
      %v4241 = vadd.f32 %v3927, %v4240
      %v4242 = vpop.f32.mrf.mxu0
      %4243 = vmatprep.mubr.f32.mxu0 %v3093
      %4244 = vmatmul.mubr.f32.gmra.mxu0 %v3092
      %v4245 = vpop.f32.mrf.mxu0
      %v4246 = vadd.f32 %v3932, %v4245
      %v4247 = vpop.f32.mrf.mxu0
      %4248 = vmatprep.mubr.f32.mxu0 %v3096
      %4249 = vmatmul.mubr.f32.gmra.mxu0 %v3095
      %v4250 = vpop.f32.mrf.mxu0
      %v4251 = vadd.f32 %v3937, %v4250
      %v4252 = vpop.f32.mrf.mxu0
      %4253 = vmatprep.mubr.f32.mxu0 %v3099
      %4254 = vmatmul.mubr.f32.gmra.mxu0 %v3098
      %v4255 = vpop.f32.mrf.mxu0
      %v4256 = vadd.f32 %v3942, %v4255
      %v4257 = vpop.f32.mrf.mxu0
      %4258 = vdwg.mxu0
      %4259 = vmatprep.subr.mxu0 0.0
      %4260 = vmatpush1.msra.mxu0 0.0
      %4261 = vmatprep.subr.mxu0 0.0
      %4262 = vmatpush1.msra.mxu0 0.0
      %4263 = vmatprep.subr.mxu0 0.0
      %4264 = vmatpush1.msra.mxu0 0.0
      %4265 = vmatprep.subr.mxu0 0.0
      %4266 = vmatpush1.msra.mxu0 0.0
      %4267 = vmatprep.subr.mxu0 0.0
      %4268 = vmatpush1.msra.mxu0 0.0
      %4269 = vmatprep.subr.mxu0 0.0
      %4270 = vmatpush1.msra.mxu0 0.0
      %4271 = vmatprep.subr.mxu0 0.0
      %4272 = vmatpush1.msra.mxu0 0.0
      %4273 = vmatprep.subr.mxu0 0.0
      %4274 = vmatpush1.msra.mxu0 0.0
      %4275 = vmatprep.subr.mxu0 0.0
      %4276 = vmatpush1.msra.mxu0 %v3140
      %4277 = vmatprep.subr.mxu0 0.0
      %4278 = vmatpush1.msra.mxu0 %v3139
      %4279 = vmatprep.subr.mxu0 0.0
      %4280 = vmatpush1.msra.mxu0 %v3138
      %4281 = vmatprep.subr.mxu0 0.0
      %4282 = vmatpush1.msra.mxu0 %v3137
      %4283 = vmatprep.subr.mxu0 0.0
      %4284 = vmatpush1.msra.mxu0 %v3136
      %4285 = vmatprep.subr.mxu0 0.0
      %4286 = vmatpush1.msra.mxu0 %v3135
      %4287 = vmatprep.subr.mxu0 0.0
      %4288 = vmatpush1.msra.mxu0 %v3134
      %4289 = vmatprep.subr.mxu0 0.0
      %4290 = vmatpush1.msra.mxu0 %v3133
      %4291 = vmatprep.subr.mxu0 0.0
      %4292 = vmatpush2.msra.mxu0 0.0
      %4293 = vmatprep.subr.mxu0 0.0
      %4294 = vmatpush2.msra.mxu0 0.0
      %4295 = vmatprep.subr.mxu0 0.0
      %4296 = vmatpush2.msra.mxu0 0.0
      %4297 = vmatprep.subr.mxu0 0.0
      %4298 = vmatpush2.msra.mxu0 0.0
      %4299 = vmatprep.subr.mxu0 0.0
      %4300 = vmatpush2.msra.mxu0 0.0
      %4301 = vmatprep.subr.mxu0 0.0
      %4302 = vmatpush2.msra.mxu0 0.0
      %4303 = vmatprep.subr.mxu0 0.0
      %4304 = vmatpush2.msra.mxu0 0.0
      %4305 = vmatprep.subr.mxu0 0.0
      %4306 = vmatpush2.msra.mxu0 0.0
      %4307 = vmatprep.subr.mxu0 0.0
      %4308 = vmatpush2.msra.mxu0 0.0
      %4309 = vmatprep.subr.mxu0 0.0
      %4310 = vmatpush2.msra.mxu0 0.0
      %4311 = vmatprep.subr.mxu0 0.0
      %4312 = vmatpush2.msra.mxu0 0.0
      %4313 = vmatprep.subr.mxu0 0.0
      %4314 = vmatpush2.msra.mxu0 0.0
      %4315 = vmatprep.subr.mxu0 0.0
      %4316 = vmatpush2.msra.mxu0 0.0
      %4317 = vmatprep.subr.mxu0 0.0
      %4318 = vmatpush2.msra.mxu0 0.0
      %4319 = vmatprep.subr.mxu0 0.0
      %4320 = vmatpush2.msra.mxu0 0.0
      %4321 = vmatprep.subr.mxu0 0.0
      %4322 = vmatpush2.msra.mxu0 0.0
      %4323 = vmatprep.mubr.f32.mxu0 0.0
      %4324 = vmatmul.mubr.f32.gmra.mxu0 %v3946
      %v4325 = vpop.f32.mrf.mxu0
      %v4326 = vadd.f32 %v4021, %v4325
      %v4327 = vpop.f32.mrf.mxu0
      %4328 = vmatprep.mubr.f32.mxu0 0.0
      %4329 = vmatmul.mubr.f32.gmra.mxu0 %v3949
      %v4330 = vpop.f32.mrf.mxu0
      %v4331 = vadd.f32 %v4026, %v4330
      %v4332 = vpop.f32.mrf.mxu0
      %4333 = vmatprep.mubr.f32.mxu0 0.0
      %4334 = vmatmul.mubr.f32.gmra.mxu0 %v3952
      %v4335 = vpop.f32.mrf.mxu0
      %v4336 = vadd.f32 %v4031, %v4335
      %v4337 = vpop.f32.mrf.mxu0
      %4338 = vmatprep.mubr.f32.mxu0 0.0
      %4339 = vmatmul.mubr.f32.gmra.mxu0 %v3192
      %v4340 = vpop.f32.mrf.mxu0
      %v4341 = vadd.f32 %v4036, %v4340
      %v4342 = vpop.f32.mrf.mxu0
      %4343 = vmatprep.mubr.f32.mxu0 0.0
      %4344 = vmatmul.mubr.f32.gmra.mxu0 %v3195
      %v4345 = vpop.f32.mrf.mxu0
      %v4346 = vadd.f32 %v4041, %v4345
      %v4347 = vpop.f32.mrf.mxu0
      %4348 = vmatprep.mubr.f32.mxu0 0.0
      %4349 = vmatmul.mubr.f32.gmra.mxu0 %v3198
      %v4350 = vpop.f32.mrf.mxu0
      %v4351 = vadd.f32 %v4046, %v4350
      %v4352 = vpop.f32.mrf.mxu0
      %4353 = vmatprep.mubr.f32.mxu0 0.0
      %4354 = vmatmul.mubr.f32.gmra.mxu0 %v3201
      %v4355 = vpop.f32.mrf.mxu0
      %v4356 = vadd.f32 %v4051, %v4355
      %v4357 = vpop.f32.mrf.mxu0
      %4358 = vmatprep.mubr.f32.mxu0 0.0
      %4359 = vmatmul.mubr.f32.gmra.mxu0 %v3204
      %v4360 = vpop.f32.mrf.mxu0
      %v4361 = vadd.f32 %v4056, %v4360
      %v4362 = vpop.f32.mrf.mxu0
      %4363 = vmatprep.mubr.f32.mxu0 0.0
      %4364 = vmatmul.mubr.f32.gmra.mxu0 %v3207
      %v4365 = vpop.f32.mrf.mxu0
      %v4366 = vadd.f32 %v4061, %v4365
      %v4367 = vpop.f32.mrf.mxu0
      %4368 = vmatprep.mubr.f32.mxu0 0.0
      %4369 = vmatmul.mubr.f32.gmra.mxu0 %v3210
      %v4370 = vpop.f32.mrf.mxu0
      %v4371 = vadd.f32 %v4066, %v4370
      %v4372 = vpop.f32.mrf.mxu0
      %4373 = vmatprep.mubr.f32.mxu0 0.0
      %4374 = vmatmul.mubr.f32.gmra.mxu0 %v3213
      %v4375 = vpop.f32.mrf.mxu0
      %v4376 = vadd.f32 %v4071, %v4375
      %v4377 = vpop.f32.mrf.mxu0
      %4378 = vmatprep.mubr.f32.mxu0 0.0
      %4379 = vmatmul.mubr.f32.gmra.mxu0 %v3216
      %v4380 = vpop.f32.mrf.mxu0
      %v4381 = vadd.f32 %v4076, %v4380
      %v4382 = vpop.f32.mrf.mxu0
      %4383 = vmatprep.mubr.f32.mxu0 0.0
      %4384 = vmatmul.mubr.f32.gmra.mxu0 %v3219
      %v4385 = vpop.f32.mrf.mxu0
      %v4386 = vadd.f32 %v4081, %v4385
      %v4387 = vpop.f32.mrf.mxu0
      %4388 = vmatprep.mubr.f32.mxu0 0.0
      %4389 = vmatmul.mubr.f32.gmra.mxu0 %v3222
      %v4390 = vpop.f32.mrf.mxu0
      %v4391 = vadd.f32 %v4086, %v4390
      %v4392 = vpop.f32.mrf.mxu0
      %4393 = vmatprep.mubr.f32.mxu0 0.0
      %4394 = vmatmul.mubr.f32.gmra.mxu0 %v3225
      %v4395 = vpop.f32.mrf.mxu0
      %v4396 = vadd.f32 %v4091, %v4395
      %v4397 = vpop.f32.mrf.mxu0
      %4398 = vmatprep.mubr.f32.mxu0 0.0
      %4399 = vmatmul.mubr.f32.gmra.mxu0 %v3228
      %v4400 = vpop.f32.mrf.mxu0
      %v4401 = vadd.f32 %v4096, %v4400
      %v4402 = vpop.f32.mrf.mxu0
      %4403 = vmatprep.mubr.f32.mxu0 0.0
      %4404 = vmatmul.mubr.f32.gmra.mxu0 %v3231
      %v4405 = vpop.f32.mrf.mxu0
      %v4406 = vadd.f32 %v4101, %v4405
      %v4407 = vpop.f32.mrf.mxu0
      %4408 = vmatprep.mubr.f32.mxu0 0.0
      %4409 = vmatmul.mubr.f32.gmra.mxu0 %v3234
      %v4410 = vpop.f32.mrf.mxu0
      %v4411 = vadd.f32 %v4106, %v4410
      %v4412 = vpop.f32.mrf.mxu0
      %4413 = vmatprep.mubr.f32.mxu0 0.0
      %4414 = vmatmul.mubr.f32.gmra.mxu0 %v3237
      %v4415 = vpop.f32.mrf.mxu0
      %v4416 = vadd.f32 %v4111, %v4415
      %v4417 = vpop.f32.mrf.mxu0
      %4418 = vmatprep.mubr.f32.mxu0 0.0
      %4419 = vmatmul.mubr.f32.gmra.mxu0 %v3240
      %v4420 = vpop.f32.mrf.mxu0
      %v4421 = vadd.f32 %v4116, %v4420
      %v4422 = vpop.f32.mrf.mxu0
      %4423 = vmatprep.mubr.f32.mxu0 0.0
      %4424 = vmatmul.mubr.f32.gmra.mxu0 %v3243
      %v4425 = vpop.f32.mrf.mxu0
      %v4426 = vadd.f32 %v4121, %v4425
      %v4427 = vpop.f32.mrf.mxu0
      %4428 = vmatprep.mubr.f32.mxu0 0.0
      %4429 = vmatmul.mubr.f32.gmra.mxu0 %v3246
      %v4430 = vpop.f32.mrf.mxu0
      %v4431 = vadd.f32 %v4126, %v4430
      %v4432 = vpop.f32.mrf.mxu0
      %4433 = vmatprep.mubr.f32.mxu0 0.0
      %4434 = vmatmul.mubr.f32.gmra.mxu0 %v3249
      %v4435 = vpop.f32.mrf.mxu0
      %v4436 = vadd.f32 %v4131, %v4435
      %v4437 = vpop.f32.mrf.mxu0
      %4438 = vmatprep.mubr.f32.mxu0 0.0
      %4439 = vmatmul.mubr.f32.gmra.mxu0 %v3252
      %v4440 = vpop.f32.mrf.mxu0
      %v4441 = vadd.f32 %v4136, %v4440
      %v4442 = vpop.f32.mrf.mxu0
      %4443 = vmatprep.mubr.f32.mxu0 0.0
      %4444 = vmatmul.mubr.f32.gmra.mxu0 %v3255
      %v4445 = vpop.f32.mrf.mxu0
      %v4446 = vadd.f32 %v4141, %v4445
      %v4447 = vpop.f32.mrf.mxu0
      %4448 = vmatprep.mubr.f32.mxu0 0.0
      %4449 = vmatmul.mubr.f32.gmra.mxu0 %v3258
      %v4450 = vpop.f32.mrf.mxu0
      %v4451 = vadd.f32 %v4146, %v4450
      %v4452 = vpop.f32.mrf.mxu0
      %4453 = vmatprep.mubr.f32.mxu0 0.0
      %4454 = vmatmul.mubr.f32.gmra.mxu0 %v3261
      %v4455 = vpop.f32.mrf.mxu0
      %v4456 = vadd.f32 %v4151, %v4455
      %v4457 = vpop.f32.mrf.mxu0
      %4458 = vmatprep.mubr.f32.mxu0 0.0
      %4459 = vmatmul.mubr.f32.gmra.mxu0 %v3264
      %v4460 = vpop.f32.mrf.mxu0
      %v4461 = vadd.f32 %v4156, %v4460
      %v4462 = vpop.f32.mrf.mxu0
      %4463 = vmatprep.mubr.f32.mxu0 0.0
      %4464 = vmatmul.mubr.f32.gmra.mxu0 %v3267
      %v4465 = vpop.f32.mrf.mxu0
      %v4466 = vadd.f32 %v4161, %v4465
      %v4467 = vpop.f32.mrf.mxu0
      %4468 = vmatprep.mubr.f32.mxu0 0.0
      %4469 = vmatmul.mubr.f32.gmra.mxu0 %v3270
      %v4470 = vpop.f32.mrf.mxu0
      %v4471 = vadd.f32 %v4166, %v4470
      %v4472 = vpop.f32.mrf.mxu0
      %4473 = vmatprep.mubr.f32.mxu0 0.0
      %4474 = vmatmul.mubr.f32.gmra.mxu0 %v3273
      %v4475 = vpop.f32.mrf.mxu0
      %v4476 = vadd.f32 %v4171, %v4475
      %v4477 = vpop.f32.mrf.mxu0
      %4478 = vmatprep.mubr.f32.mxu0 0.0
      %4479 = vmatmul.mubr.f32.gmra.mxu0 %v3276
      %v4480 = vpop.f32.mrf.mxu0
      %v4481 = vadd.f32 %v4176, %v4480
      %v4482 = vpop.f32.mrf.mxu0
      %4483 = vmatprep.mubr.f32.mxu0 0.0
      %4484 = vmatmul.mubr.f32.gmra.mxu0 %v3279
      %v4485 = vpop.f32.mrf.mxu0
      %v4486 = vadd.f32 %v4181, %v4485
      %v4487 = vpop.f32.mrf.mxu0
      %4488 = vmatprep.mubr.f32.mxu0 0.0
      %4489 = vmatmul.mubr.f32.gmra.mxu0 %v3282
      %v4490 = vpop.f32.mrf.mxu0
      %v4491 = vadd.f32 %v4186, %v4490
      %v4492 = vpop.f32.mrf.mxu0
      %4493 = vmatprep.mubr.f32.mxu0 0.0
      %4494 = vmatmul.mubr.f32.gmra.mxu0 %v3285
      %v4495 = vpop.f32.mrf.mxu0
      %v4496 = vadd.f32 %v4191, %v4495
      %v4497 = vpop.f32.mrf.mxu0
      %4498 = vmatprep.mubr.f32.mxu0 0.0
      %4499 = vmatmul.mubr.f32.gmra.mxu0 %v3288
      %v4500 = vpop.f32.mrf.mxu0
      %v4501 = vadd.f32 %v4196, %v4500
      %v4502 = vpop.f32.mrf.mxu0
      %4503 = vmatprep.mubr.f32.mxu0 0.0
      %4504 = vmatmul.mubr.f32.gmra.mxu0 %v3291
      %v4505 = vpop.f32.mrf.mxu0
      %v4506 = vadd.f32 %v4201, %v4505
      %v4507 = vpop.f32.mrf.mxu0
      %4508 = vmatprep.mubr.f32.mxu0 0.0
      %4509 = vmatmul.mubr.f32.gmra.mxu0 %v3294
      %v4510 = vpop.f32.mrf.mxu0
      %v4511 = vadd.f32 %v4206, %v4510
      %v4512 = vpop.f32.mrf.mxu0
      %4513 = vmatprep.mubr.f32.mxu0 0.0
      %4514 = vmatmul.mubr.f32.gmra.mxu0 %v3297
      %v4515 = vpop.f32.mrf.mxu0
      %v4516 = vadd.f32 %v4211, %v4515
      %v4517 = vpop.f32.mrf.mxu0
      %4518 = vmatprep.mubr.f32.mxu0 0.0
      %4519 = vmatmul.mubr.f32.gmra.mxu0 %v3300
      %v4520 = vpop.f32.mrf.mxu0
      %v4521 = vadd.f32 %v4216, %v4520
      %v4522 = vpop.f32.mrf.mxu0
      %4523 = vmatprep.mubr.f32.mxu0 0.0
      %4524 = vmatmul.mubr.f32.gmra.mxu0 %v3303
      %v4525 = vpop.f32.mrf.mxu0
      %v4526 = vadd.f32 %v4221, %v4525
      %v4527 = vpop.f32.mrf.mxu0
      %4528 = vmatprep.mubr.f32.mxu0 0.0
      %4529 = vmatmul.mubr.f32.gmra.mxu0 %v3306
      %v4530 = vpop.f32.mrf.mxu0
      %v4531 = vadd.f32 %v4226, %v4530
      %v4532 = vpop.f32.mrf.mxu0
      %4533 = vmatprep.mubr.f32.mxu0 0.0
      %4534 = vmatmul.mubr.f32.gmra.mxu0 %v3309
      %v4535 = vpop.f32.mrf.mxu0
      %v4536 = vadd.f32 %v4231, %v4535
      %v4537 = vpop.f32.mrf.mxu0
      %4538 = vmatprep.mubr.f32.mxu0 0.0
      %4539 = vmatmul.mubr.f32.gmra.mxu0 %v3312
      %v4540 = vpop.f32.mrf.mxu0
      %v4541 = vadd.f32 %v4236, %v4540
      %v4542 = vpop.f32.mrf.mxu0
      %4543 = vmatprep.mubr.f32.mxu0 0.0
      %4544 = vmatmul.mubr.f32.gmra.mxu0 %v3315
      %v4545 = vpop.f32.mrf.mxu0
      %v4546 = vadd.f32 %v4241, %v4545
      %v4547 = vpop.f32.mrf.mxu0
      %4548 = vmatprep.mubr.f32.mxu0 0.0
      %4549 = vmatmul.mubr.f32.gmra.mxu0 %v3318
      %v4550 = vpop.f32.mrf.mxu0
      %v4551 = vadd.f32 %v4246, %v4550
      %v4552 = vpop.f32.mrf.mxu0
      %4553 = vmatprep.mubr.f32.mxu0 0.0
      %4554 = vmatmul.mubr.f32.gmra.mxu0 %v3321
      %v4555 = vpop.f32.mrf.mxu0
      %v4556 = vadd.f32 %v4251, %v4555
      %v4557 = vpop.f32.mrf.mxu0
      %4558 = vmatprep.mubr.f32.mxu0 0.0
      %4559 = vmatmul.mubr.f32.gmra.mxu0 %v3324
      %v4560 = vpop.f32.mrf.mxu0
      %v4561 = vadd.f32 %v4256, %v4560
      %v4562 = vpop.f32.mrf.mxu0
      %4563 = vdwg.mxu0
      %v4564 = vld [vmem:[#allocation3 + $0x90] sm:$0xff]
      %v4565 = vld [vmem:[#allocation3 + $0x98] sm:$0xff]
      %v4566 = vld [vmem:[#allocation3 + $0xa0] sm:$0xff]
      %v4567 = vld [vmem:[#allocation3 + $0xa8] sm:$0xff]
      %v4568 = vld [vmem:[#allocation3 + $0xb0] sm:$0xff]
      %v4569 = vld [vmem:[#allocation3 + $0xb8] sm:$0xff]
      %v4570 = vld [vmem:[#allocation3 + $0xc0] sm:$0xff]
      %v4571 = vld [vmem:[#allocation3 + $0xc8] sm:$0xff]
      %v4572 = vld [vmem:[#allocation3 + $0xd0] sm:$0xff]
      %v4573 = vld [vmem:[#allocation3 + $0xd8] sm:$0xff]
      %v4574 = vld [vmem:[#allocation3 + $0xe0] sm:$0xff]
      %v4575 = vld [vmem:[#allocation3 + $0xe8] sm:$0xff]
      %v4576 = vld [vmem:[#allocation3 + $0xf0] sm:$0xff]
      %v4577 = vld [vmem:[#allocation3 + $0xf8] sm:$0xff]
      %v4578 = vld [vmem:[#allocation3 + $0x100] sm:$0xff]
      %v4579 = vld [vmem:[#allocation3 + $0x108] sm:$0xff]
      %v4580 = vld [vmem:[#allocation3 + $0x110] sm:$0xff]
      %v4581 = vld [vmem:[#allocation3 + $0x118] sm:$0xff]
      %v4582 = vld [vmem:[#allocation3 + $0x120] sm:$0xff]
      %v4583 = vld [vmem:[#allocation3 + $0x128] sm:$0xff]
      %v4584 = vld [vmem:[#allocation3 + $0x130] sm:$0xff]
      %v4585 = vld [vmem:[#allocation3 + $0x138] sm:$0xff]
      %v4586 = vld [vmem:[#allocation3 + $0x140] sm:$0xff]
      %v4587 = vld [vmem:[#allocation3 + $0x148] sm:$0xff]
      %v4588 = vld [vmem:[#allocation3 + $0x150] sm:$0xff]
      %v4589 = vld [vmem:[#allocation3 + $0x158] sm:$0xff]
      %v4590 = vld [vmem:[#allocation3 + $0x160] sm:$0xff]
      %v4591 = vld [vmem:[#allocation3 + $0x168] sm:$0xff]
      %v4592 = vld [vmem:[#allocation3 + $0x170] sm:$0xff]
      %v4593 = vld [vmem:[#allocation3 + $0x178] sm:$0xff]
      %v4594 = vld [vmem:[#allocation3 + $0x180] sm:$0xff]
      %v4595 = vld [vmem:[#allocation3 + $0x188] sm:$0xff]
      %v4596 = vld [vmem:[#allocation3 + $0x190] sm:$0xff]
      %v4597 = vld [vmem:[#allocation3 + $0x198] sm:$0xff]
      %v4598 = vld [vmem:[#allocation3 + $0x1a0] sm:$0xff]
      %v4599 = vld [vmem:[#allocation3 + $0x1a8] sm:$0xff]
      %v4600 = vld [vmem:[#allocation3 + $0x1b0] sm:$0xff]
      %v4601 = vld [vmem:[#allocation3 + $0x1b8] sm:$0xff]
      %v4602 = vld [vmem:[#allocation3 + $0x1c0] sm:$0xff]
      %v4603 = vld [vmem:[#allocation3 + $0x1c8] sm:$0xff]
      %v4604 = vld [vmem:[#allocation3 + $0x1d0] sm:$0xff]
      %v4605 = vld [vmem:[#allocation3 + $0x1d8] sm:$0xff]
      %v4606 = vld [vmem:[#allocation3 + $0x1e0] sm:$0xff]
      %v4607 = vld [vmem:[#allocation3 + $0x1e8] sm:$0xff]
      %v4608 = vld [vmem:[#allocation3 + $0x1f0] sm:$0xff]
      %v4609 = vld [vmem:[#allocation3 + $0x1f8] sm:$0xff]
      %v4610 = vld [vmem:[#allocation3 + $0x200] sm:$0xff]
      %v4611 = vld [vmem:[#allocation3 + $0x208] sm:$0xff]
      %v4612 = vld [vmem:[#allocation3 + $0x210] sm:$0xff]
      %v4613 = vld [vmem:[#allocation3 + $0x218] sm:$0xff]
      %v4614 = vld [vmem:[#allocation3 + $0x220] sm:$0xff]
      %v4615 = vld [vmem:[#allocation3 + $0x228] sm:$0xff]
      %v4616 = vld [vmem:[#allocation3 + $0x230] sm:$0xff]
      %v4617 = vld [vmem:[#allocation3 + $0x238] sm:$0xff]
      %v4618 = vld [vmem:[#allocation3 + $0x240] sm:$0xff]
      %v4619 = vld [vmem:[#allocation3 + $0x248] sm:$0xff]
      %v4620 = vld [vmem:[#allocation3 + $0x250] sm:$0xff]
      %v4621 = vld [vmem:[#allocation3 + $0x258] sm:$0xff]
      %v4622 = vld [vmem:[#allocation3 + $0x260] sm:$0xff]
      %v4623 = vld [vmem:[#allocation3 + $0x268] sm:$0xff]
      %v4624 = vld [vmem:[#allocation3 + $0x270] sm:$0xff]
      %v4625 = vld [vmem:[#allocation3 + $0x278] sm:$0xff]
      %v4626 = vld [vmem:[#allocation3 + $0x280] sm:$0xff]
      %v4627 = vld [vmem:[#allocation3 + $0x288] sm:$0xff]
      %v4628 = vld [vmem:[#allocation3 + $0x290] sm:$0xff]
      %v4629 = vld [vmem:[#allocation3 + $0x298] sm:$0xff]
      %v4630 = vld [vmem:[#allocation3 + $0x2a0] sm:$0xff]
      %v4631 = vld [vmem:[#allocation3 + $0x2a8] sm:$0xff]
      %v4632 = vld [vmem:[#allocation3 + $0x2b0] sm:$0xff]
      %v4633 = vld [vmem:[#allocation3 + $0x2b8] sm:$0xff]
      %v4634 = vld [vmem:[#allocation3 + $0x2c0] sm:$0xff]
      %v4635 = vld [vmem:[#allocation3 + $0x2c8] sm:$0xff]
      %v4636 = vld [vmem:[#allocation3 + $0x2d0] sm:$0xff]
      %v4637 = vld [vmem:[#allocation3 + $0x2d8] sm:$0xff]
      %v4638 = vld [vmem:[#allocation3 + $0x2e0] sm:$0xff]
      %v4639 = vld [vmem:[#allocation3 + $0x2e8] sm:$0xff]
      %v4640 = vld [vmem:[#allocation3 + $0x2f0] sm:$0xff]
      %v4641 = vld [vmem:[#allocation3 + $0x2f8] sm:$0xff]
      %v4642 = vld [vmem:[#allocation3 + $0x300] sm:$0xff]
      %v4643 = vld [vmem:[#allocation3 + $0x308] sm:$0xff]
      %v4644 = vld [vmem:[#allocation3 + $0x310] sm:$0xff]
      %v4645 = vld [vmem:[#allocation3 + $0x318] sm:$0xff]
      %v4646 = vld [vmem:[#allocation3 + $0x320] sm:$0xff]
      %v4647 = vld [vmem:[#allocation3 + $0x328] sm:$0xff]
      %v4648 = vld [vmem:[#allocation3 + $0x330] sm:$0xff]
      %v4649 = vld [vmem:[#allocation3 + $0x338] sm:$0xff]
      %v4650 = vld [vmem:[#allocation3 + $0x340] sm:$0xff]
      %v4651 = vld [vmem:[#allocation3 + $0x348] sm:$0xff]
      %v4652 = vld [vmem:[#allocation3 + $0x350] sm:$0xff]
      %v4653 = vld [vmem:[#allocation3 + $0x358] sm:$0xff]
      %v4654 = vld [vmem:[#allocation3 + $0x360] sm:$0xff]
      %v4655 = vld [vmem:[#allocation3 + $0x368] sm:$0xff]
      %v4656 = vld [vmem:[#allocation3 + $0x370] sm:$0xff]
      %v4657 = vld [vmem:[#allocation3 + $0x378] sm:$0xff]
      %v4658 = vld [vmem:[#allocation3 + $0x380] sm:$0xff]
      %v4659 = vld [vmem:[#allocation3 + $0x388] sm:$0xff]
      %v4660 = vld [vmem:[#allocation3 + $0x390] sm:$0xff]
      %v4661 = vld [vmem:[#allocation3 + $0x398] sm:$0xff]
      %v4662 = vld [vmem:[#allocation3 + $0x3a0] sm:$0xff]
      %v4663 = vld [vmem:[#allocation3 + $0x3a8] sm:$0xff]
      %v4664 = vld [vmem:[#allocation3 + $0x3b0] sm:$0xff]
      %v4665 = vld [vmem:[#allocation3 + $0x3b8] sm:$0xff]
      %v4666 = vld [vmem:[#allocation3 + $0x3c0] sm:$0xff]
      %v4667 = vld [vmem:[#allocation3 + $0x3c8] sm:$0xff]
      %v4668 = vld [vmem:[#allocation3 + $0x3d0] sm:$0xff]
      %v4669 = vld [vmem:[#allocation3 + $0x3d8] sm:$0xff]
      %v4670 = vld [vmem:[#allocation3 + $0x3e0] sm:$0xff]
      %v4671 = vld [vmem:[#allocation3 + $0x3e8] sm:$0xff]
      %v4672 = vld [vmem:[#allocation3 + $0x3f0] sm:$0xff]
      %v4673 = vld [vmem:[#allocation3 + $0x3f8] sm:$0xff]
      %v4674 = vld [vmem:[#allocation3 + $0x400] sm:$0xff]
      %v4675 = vld [vmem:[#allocation3 + $0x408] sm:$0xff]
      %v4676 = vld [vmem:[#allocation3 + $0x410] sm:$0xff]
      %v4677 = vld [vmem:[#allocation3 + $0x418] sm:$0xff]
      %v4678 = vld [vmem:[#allocation3 + $0x420] sm:$0xff]
      %v4679 = vld [vmem:[#allocation3 + $0x428] sm:$0xff]
      %v4680 = vld [vmem:[#allocation3 + $0x430] sm:$0xff]
      %v4681 = vld [vmem:[#allocation3 + $0x438] sm:$0xff]
      %v4682 = vld [vmem:[#allocation3 + $0x440] sm:$0xff]
      %v4683 = vld [vmem:[#allocation3 + $0x448] sm:$0xff]
      %v4684 = vld [vmem:[#allocation3 + $0x450] sm:$0xff]
      %v4685 = vld [vmem:[#allocation3 + $0x458] sm:$0xff]
      %v4686 = vld [vmem:[#allocation3 + $0x460] sm:$0xff]
      %v4687 = vld [vmem:[#allocation3 + $0x468] sm:$0xff]
      %v4688 = vld [vmem:[#allocation3 + $0x470] sm:$0xff]
      %v4689 = vld [vmem:[#allocation3 + $0x478] sm:$0xff]
      %v4690 = vld [vmem:[#allocation3 + $0x480] sm:$0xff]
      %v4691 = vld [vmem:[#allocation3 + $0x488] sm:$0xff]
      %v4692 = vld [vmem:[#allocation3 + $0x490] sm:$0xff]
      %v4693 = vld [vmem:[#allocation3 + $0x498] sm:$0xff]
      %v4694 = vld [vmem:[#allocation3 + $0x4a0] sm:$0xff]
      %v4695 = vld [vmem:[#allocation3 + $0x4a8] sm:$0xff]
      %v4696 = vld [vmem:[#allocation3 + $0x4b0] sm:$0xff]
      %v4697 = vld [vmem:[#allocation3 + $0x4b8] sm:$0xff]
      %v4698 = vld [vmem:[#allocation3 + $0x4c0] sm:$0xff]
      %v4699 = vld [vmem:[#allocation3 + $0x4c8] sm:$0xff]
      %v4700 = vld [vmem:[#allocation3 + $0x4d0] sm:$0xff]
      %v4701 = vld [vmem:[#allocation3 + $0x4d8] sm:$0xff]
      %v4702 = vld [vmem:[#allocation3 + $0x4e0] sm:$0xff]
      %v4703 = vld [vmem:[#allocation3 + $0x4e8] sm:$0xff]
      %v4704 = vld [vmem:[#allocation3 + $0x4f0] sm:$0xff]
      %v4705 = vld [vmem:[#allocation3 + $0x4f8] sm:$0xff]
      %v4706 = vld [vmem:[#allocation3 + $0x500] sm:$0xff]
      %v4707 = vld [vmem:[#allocation3 + $0x508] sm:$0xff]
      %s4708 = scalar_lea.vmem %s3, 640
      %v4709 = vld [vmem:[%s4708] sm:$0xff]
      %v4710 = vld [vmem:[%s4708 + $0x8] sm:$0xff]
      %v4711 = vld [vmem:[%s4708 + $0x10] sm:$0xff]
      %v4712 = vld [vmem:[%s4708 + $0x18] sm:$0xff]
      %v4713 = vld [vmem:[%s4708 + $0x20] sm:$0xff]
      %v4714 = vld [vmem:[%s4708 + $0x28] sm:$0xff]
      %v4715 = vld [vmem:[%s4708 + $0x30] sm:$0xff]
      %v4716 = vld [vmem:[%s4708 + $0x38] sm:$0xff]
      %v4717 = vld [vmem:[%s4708 + $0x40] sm:$0xff]
      %v4718 = vld [vmem:[%s4708 + $0x48] sm:$0xff]
      %v4719 = vld [vmem:[%s4708 + $0x50] sm:$0xff]
      %v4720 = vld [vmem:[%s4708 + $0x58] sm:$0xff]
      %v4721 = vld [vmem:[%s4708 + $0x60] sm:$0xff]
      %v4722 = vld [vmem:[%s4708 + $0x68] sm:$0xff]
      %v4723 = vld [vmem:[%s4708 + $0x70] sm:$0xff]
      %v4724 = vld [vmem:[%s4708 + $0x78] sm:$0xff]
      %v4725 = vld [vmem:[%s4708 + $0x80] sm:$0xff]
      %v4726 = vld [vmem:[%s4708 + $0x88] sm:$0xff]
      %v4727 = vld [vmem:[%s4708 + $0x90] sm:$0xff]
      %v4728 = vld [vmem:[%s4708 + $0x98] sm:$0xff]
      %v4729 = vld [vmem:[%s4708 + $0xa0] sm:$0xff]
      %v4730 = vld [vmem:[%s4708 + $0xa8] sm:$0xff]
      %v4731 = vld [vmem:[%s4708 + $0xb0] sm:$0xff]
      %v4732 = vld [vmem:[%s4708 + $0xb8] sm:$0xff]
      %v4733 = vld [vmem:[%s4708 + $0xc0] sm:$0xff]
      %v4734 = vld [vmem:[%s4708 + $0xc8] sm:$0xff]
      %v4735 = vld [vmem:[%s4708 + $0xd0] sm:$0xff]
      %v4736 = vld [vmem:[%s4708 + $0xd8] sm:$0xff]
      %v4737 = vld [vmem:[%s4708 + $0xe0] sm:$0xff]
      %v4738 = vld [vmem:[%s4708 + $0xe8] sm:$0xff]
      %v4739 = vld [vmem:[%s4708 + $0xf0] sm:$0xff]
      %v4740 = vld [vmem:[%s4708 + $0xf8] sm:$0xff]
      %v4741 = vld [vmem:[%s4708 + $0x100] sm:$0xff]
      %v4742 = vld [vmem:[%s4708 + $0x108] sm:$0xff]
      %v4743 = vld [vmem:[%s4708 + $0x110] sm:$0xff]
      %v4744 = vld [vmem:[%s4708 + $0x118] sm:$0xff]
      %v4745 = vld [vmem:[%s4708 + $0x120] sm:$0xff]
      %v4746 = vld [vmem:[%s4708 + $0x128] sm:$0xff]
      %v4747 = vld [vmem:[%s4708 + $0x130] sm:$0xff]
      %v4748 = vld [vmem:[%s4708 + $0x138] sm:$0xff]
      %v4750 = vsel %vm1144, %v4566, 0
      %v4753 = vsel %vm1144, %v4569, 0
      %v4756 = vsel %vm1144, %v4572, 0
      %v4759 = vsel %vm1144, %v4575, 0
      %v4762 = vsel %vm1144, %v4578, 0
      %v4765 = vsel %vm1144, %v4581, 0
      %v4768 = vsel %vm1144, %v4584, 0
      %v4771 = vsel %vm1144, %v4587, 0
      %v4774 = vsel %vm1144, %v4590, 0
      %v4777 = vsel %vm1144, %v4593, 0
      %v4780 = vsel %vm1144, %v4596, 0
      %v4783 = vsel %vm1144, %v4599, 0
      %v4786 = vsel %vm1144, %v4602, 0
      %v4789 = vsel %vm1144, %v4605, 0
      %v4792 = vsel %vm1144, %v4608, 0
      %v4795 = vsel %vm1144, %v4611, 0
      %v4798 = vsel %vm1144, %v4614, 0
      %v4801 = vsel %vm1144, %v4617, 0
      %v4804 = vsel %vm1144, %v4620, 0
      %v4807 = vsel %vm1144, %v4623, 0
      %v4810 = vsel %vm1144, %v4626, 0
      %v4813 = vsel %vm1144, %v4629, 0
      %v4816 = vsel %vm1144, %v4632, 0
      %v4819 = vsel %vm1144, %v4635, 0
      %v4822 = vsel %vm1144, %v4638, 0
      %v4825 = vsel %vm1144, %v4641, 0
      %v4828 = vsel %vm1144, %v4644, 0
      %v4831 = vsel %vm1144, %v4647, 0
      %v4834 = vsel %vm1144, %v4650, 0
      %v4837 = vsel %vm1144, %v4653, 0
      %v4840 = vsel %vm1144, %v4656, 0
      %v4843 = vsel %vm1144, %v4659, 0
      %v4846 = vsel %vm1144, %v4662, 0
      %v4849 = vsel %vm1144, %v4665, 0
      %v4852 = vsel %vm1144, %v4668, 0
      %v4855 = vsel %vm1144, %v4671, 0
      %v4858 = vsel %vm1144, %v4674, 0
      %v4861 = vsel %vm1144, %v4677, 0
      %v4864 = vsel %vm1144, %v4680, 0
      %v4867 = vsel %vm1144, %v4683, 0
      %v4870 = vsel %vm1144, %v4686, 0
      %v4873 = vsel %vm1144, %v4689, 0
      %v4876 = vsel %vm1144, %v4692, 0
      %v4879 = vsel %vm1144, %v4695, 0
      %v4882 = vsel %vm1144, %v4698, 0
      %v4885 = vsel %vm1144, %v4701, 0
      %v4888 = vsel %vm1144, %v4704, 0
      %v4891 = vsel %vm1144, %v4707, 0
      %4893 = vmatprep.subr.mxu0 0.0
      %4894 = vmatpush1.msra.mxu0 %v4724
      %4895 = vmatprep.subr.mxu0 0.0
      %4896 = vmatpush1.msra.mxu0 %v4723
      %4897 = vmatprep.subr.mxu0 0.0
      %4898 = vmatpush1.msra.mxu0 %v4722
      %4899 = vmatprep.subr.mxu0 0.0
      %4900 = vmatpush1.msra.mxu0 %v4721
      %4901 = vmatprep.subr.mxu0 0.0
      %4902 = vmatpush1.msra.mxu0 %v4720
      %4903 = vmatprep.subr.mxu0 0.0
      %4904 = vmatpush1.msra.mxu0 %v4719
      %4905 = vmatprep.subr.mxu0 0.0
      %4906 = vmatpush1.msra.mxu0 %v4718
      %4907 = vmatprep.subr.mxu0 0.0
      %4908 = vmatpush1.msra.mxu0 %v4717
      %4909 = vmatprep.subr.mxu0 0.0
      %4910 = vmatpush1.msra.mxu0 %v4716
      %4911 = vmatprep.subr.mxu0 0.0
      %4912 = vmatpush1.msra.mxu0 %v4715
      %4913 = vmatprep.subr.mxu0 0.0
      %4914 = vmatpush1.msra.mxu0 %v4714
      %4915 = vmatprep.subr.mxu0 0.0
      %4916 = vmatpush1.msra.mxu0 %v4713
      %4917 = vmatprep.subr.mxu0 0.0
      %4918 = vmatpush1.msra.mxu0 %v4712
      %4919 = vmatprep.subr.mxu0 0.0
      %4920 = vmatpush1.msra.mxu0 %v4711
      %4921 = vmatprep.subr.mxu0 0.0
      %4922 = vmatpush1.msra.mxu0 %v4710
      %4923 = vmatprep.subr.mxu0 0.0
      %4924 = vmatpush1.msra.mxu0 %v4709
      %4925 = vmatprep.subr.mxu0 0.0
      %4926 = vmatpush2.msra.mxu0 %v4740
      %4927 = vmatprep.subr.mxu0 0.0
      %4928 = vmatpush2.msra.mxu0 %v4739
      %4929 = vmatprep.subr.mxu0 0.0
      %4930 = vmatpush2.msra.mxu0 %v4738
      %4931 = vmatprep.subr.mxu0 0.0
      %4932 = vmatpush2.msra.mxu0 %v4737
      %4933 = vmatprep.subr.mxu0 0.0
      %4934 = vmatpush2.msra.mxu0 %v4736
      %4935 = vmatprep.subr.mxu0 0.0
      %4936 = vmatpush2.msra.mxu0 %v4735
      %4937 = vmatprep.subr.mxu0 0.0
      %4938 = vmatpush2.msra.mxu0 %v4734
      %4939 = vmatprep.subr.mxu0 0.0
      %4940 = vmatpush2.msra.mxu0 %v4733
      %4941 = vmatprep.subr.mxu0 0.0
      %4942 = vmatpush2.msra.mxu0 %v4732
      %4943 = vmatprep.subr.mxu0 0.0
      %4944 = vmatpush2.msra.mxu0 %v4731
      %4945 = vmatprep.subr.mxu0 0.0
      %4946 = vmatpush2.msra.mxu0 %v4730
      %4947 = vmatprep.subr.mxu0 0.0
      %4948 = vmatpush2.msra.mxu0 %v4729
      %4949 = vmatprep.subr.mxu0 0.0
      %4950 = vmatpush2.msra.mxu0 %v4728
      %4951 = vmatprep.subr.mxu0 0.0
      %4952 = vmatpush2.msra.mxu0 %v4727
      %4953 = vmatprep.subr.mxu0 0.0
      %4954 = vmatpush2.msra.mxu0 %v4726
      %4955 = vmatprep.subr.mxu0 0.0
      %4956 = vmatpush2.msra.mxu0 %v4725
      %4957 = vmatprep.mubr.f32.mxu0 %v4565
      %4958 = vmatmul.mubr.f32.gmra.mxu0 %v4564
      %v4959 = vpop.f32.mrf.mxu0
      %v4960 = vadd.f32 0.0, %v4959
      %v4961 = vpop.f32.mrf.mxu0
      %4962 = vmatprep.mubr.f32.mxu0 %v4568
      %4963 = vmatmul.mubr.f32.gmra.mxu0 %v4567
      %v4964 = vpop.f32.mrf.mxu0
      %v4965 = vadd.f32 0.0, %v4964
      %v4966 = vpop.f32.mrf.mxu0
      %4967 = vmatprep.mubr.f32.mxu0 %v4571
      %4968 = vmatmul.mubr.f32.gmra.mxu0 %v4570
      %v4969 = vpop.f32.mrf.mxu0
      %v4970 = vadd.f32 0.0, %v4969
      %v4971 = vpop.f32.mrf.mxu0
      %4972 = vmatprep.mubr.f32.mxu0 %v4574
      %4973 = vmatmul.mubr.f32.gmra.mxu0 %v4573
      %v4974 = vpop.f32.mrf.mxu0
      %v4975 = vadd.f32 0.0, %v4974
      %v4976 = vpop.f32.mrf.mxu0
      %4977 = vmatprep.mubr.f32.mxu0 %v4577
      %4978 = vmatmul.mubr.f32.gmra.mxu0 %v4576
      %v4979 = vpop.f32.mrf.mxu0
      %v4980 = vadd.f32 0.0, %v4979
      %v4981 = vpop.f32.mrf.mxu0
      %4982 = vmatprep.mubr.f32.mxu0 %v4580
      %4983 = vmatmul.mubr.f32.gmra.mxu0 %v4579
      %v4984 = vpop.f32.mrf.mxu0
      %v4985 = vadd.f32 0.0, %v4984
      %v4986 = vpop.f32.mrf.mxu0
      %4987 = vmatprep.mubr.f32.mxu0 %v4583
      %4988 = vmatmul.mubr.f32.gmra.mxu0 %v4582
      %v4989 = vpop.f32.mrf.mxu0
      %v4990 = vadd.f32 0.0, %v4989
      %v4991 = vpop.f32.mrf.mxu0
      %4992 = vmatprep.mubr.f32.mxu0 %v4586
      %4993 = vmatmul.mubr.f32.gmra.mxu0 %v4585
      %v4994 = vpop.f32.mrf.mxu0
      %v4995 = vadd.f32 0.0, %v4994
      %v4996 = vpop.f32.mrf.mxu0
      %4997 = vmatprep.mubr.f32.mxu0 %v4589
      %4998 = vmatmul.mubr.f32.gmra.mxu0 %v4588
      %v4999 = vpop.f32.mrf.mxu0
      %v5000 = vadd.f32 0.0, %v4999
      %v5001 = vpop.f32.mrf.mxu0
      %5002 = vmatprep.mubr.f32.mxu0 %v4592
      %5003 = vmatmul.mubr.f32.gmra.mxu0 %v4591
      %v5004 = vpop.f32.mrf.mxu0
      %v5005 = vadd.f32 0.0, %v5004
      %v5006 = vpop.f32.mrf.mxu0
      %5007 = vmatprep.mubr.f32.mxu0 %v4595
      %5008 = vmatmul.mubr.f32.gmra.mxu0 %v4594
      %v5009 = vpop.f32.mrf.mxu0
      %v5010 = vadd.f32 0.0, %v5009
      %v5011 = vpop.f32.mrf.mxu0
      %5012 = vmatprep.mubr.f32.mxu0 %v4598
      %5013 = vmatmul.mubr.f32.gmra.mxu0 %v4597
      %v5014 = vpop.f32.mrf.mxu0
      %v5015 = vadd.f32 0.0, %v5014
      %v5016 = vpop.f32.mrf.mxu0
      %5017 = vmatprep.mubr.f32.mxu0 %v4601
      %5018 = vmatmul.mubr.f32.gmra.mxu0 %v4600
      %v5019 = vpop.f32.mrf.mxu0
      %v5020 = vadd.f32 0.0, %v5019
      %v5021 = vpop.f32.mrf.mxu0
      %5022 = vmatprep.mubr.f32.mxu0 %v4604
      %5023 = vmatmul.mubr.f32.gmra.mxu0 %v4603
      %v5024 = vpop.f32.mrf.mxu0
      %v5025 = vadd.f32 0.0, %v5024
      %v5026 = vpop.f32.mrf.mxu0
      %5027 = vmatprep.mubr.f32.mxu0 %v4607
      %5028 = vmatmul.mubr.f32.gmra.mxu0 %v4606
      %v5029 = vpop.f32.mrf.mxu0
      %v5030 = vadd.f32 0.0, %v5029
      %v5031 = vpop.f32.mrf.mxu0
      %5032 = vmatprep.mubr.f32.mxu0 %v4610
      %5033 = vmatmul.mubr.f32.gmra.mxu0 %v4609
      %v5034 = vpop.f32.mrf.mxu0
      %v5035 = vadd.f32 0.0, %v5034
      %v5036 = vpop.f32.mrf.mxu0
      %5037 = vmatprep.mubr.f32.mxu0 %v4613
      %5038 = vmatmul.mubr.f32.gmra.mxu0 %v4612
      %v5039 = vpop.f32.mrf.mxu0
      %v5040 = vadd.f32 0.0, %v5039
      %v5041 = vpop.f32.mrf.mxu0
      %5042 = vmatprep.mubr.f32.mxu0 %v4616
      %5043 = vmatmul.mubr.f32.gmra.mxu0 %v4615
      %v5044 = vpop.f32.mrf.mxu0
      %v5045 = vadd.f32 0.0, %v5044
      %v5046 = vpop.f32.mrf.mxu0
      %5047 = vmatprep.mubr.f32.mxu0 %v4619
      %5048 = vmatmul.mubr.f32.gmra.mxu0 %v4618
      %v5049 = vpop.f32.mrf.mxu0
      %v5050 = vadd.f32 0.0, %v5049
      %v5051 = vpop.f32.mrf.mxu0
      %5052 = vmatprep.mubr.f32.mxu0 %v4622
      %5053 = vmatmul.mubr.f32.gmra.mxu0 %v4621
      %v5054 = vpop.f32.mrf.mxu0
      %v5055 = vadd.f32 0.0, %v5054
      %v5056 = vpop.f32.mrf.mxu0
      %5057 = vmatprep.mubr.f32.mxu0 %v4625
      %5058 = vmatmul.mubr.f32.gmra.mxu0 %v4624
      %v5059 = vpop.f32.mrf.mxu0
      %v5060 = vadd.f32 0.0, %v5059
      %v5061 = vpop.f32.mrf.mxu0
      %5062 = vmatprep.mubr.f32.mxu0 %v4628
      %5063 = vmatmul.mubr.f32.gmra.mxu0 %v4627
      %v5064 = vpop.f32.mrf.mxu0
      %v5065 = vadd.f32 0.0, %v5064
      %v5066 = vpop.f32.mrf.mxu0
      %5067 = vmatprep.mubr.f32.mxu0 %v4631
      %5068 = vmatmul.mubr.f32.gmra.mxu0 %v4630
      %v5069 = vpop.f32.mrf.mxu0
      %v5070 = vadd.f32 0.0, %v5069
      %v5071 = vpop.f32.mrf.mxu0
      %5072 = vmatprep.mubr.f32.mxu0 %v4634
      %5073 = vmatmul.mubr.f32.gmra.mxu0 %v4633
      %v5074 = vpop.f32.mrf.mxu0
      %v5075 = vadd.f32 0.0, %v5074
      %v5076 = vpop.f32.mrf.mxu0
      %5077 = vmatprep.mubr.f32.mxu0 %v4637
      %5078 = vmatmul.mubr.f32.gmra.mxu0 %v4636
      %v5079 = vpop.f32.mrf.mxu0
      %v5080 = vadd.f32 0.0, %v5079
      %v5081 = vpop.f32.mrf.mxu0
      %5082 = vmatprep.mubr.f32.mxu0 %v4640
      %5083 = vmatmul.mubr.f32.gmra.mxu0 %v4639
      %v5084 = vpop.f32.mrf.mxu0
      %v5085 = vadd.f32 0.0, %v5084
      %v5086 = vpop.f32.mrf.mxu0
      %5087 = vmatprep.mubr.f32.mxu0 %v4643
      %5088 = vmatmul.mubr.f32.gmra.mxu0 %v4642
      %v5089 = vpop.f32.mrf.mxu0
      %v5090 = vadd.f32 0.0, %v5089
      %v5091 = vpop.f32.mrf.mxu0
      %5092 = vmatprep.mubr.f32.mxu0 %v4646
      %5093 = vmatmul.mubr.f32.gmra.mxu0 %v4645
      %v5094 = vpop.f32.mrf.mxu0
      %v5095 = vadd.f32 0.0, %v5094
      %v5096 = vpop.f32.mrf.mxu0
      %5097 = vmatprep.mubr.f32.mxu0 %v4649
      %5098 = vmatmul.mubr.f32.gmra.mxu0 %v4648
      %v5099 = vpop.f32.mrf.mxu0
      %v5100 = vadd.f32 0.0, %v5099
      %v5101 = vpop.f32.mrf.mxu0
      %5102 = vmatprep.mubr.f32.mxu0 %v4652
      %5103 = vmatmul.mubr.f32.gmra.mxu0 %v4651
      %v5104 = vpop.f32.mrf.mxu0
      %v5105 = vadd.f32 0.0, %v5104
      %v5106 = vpop.f32.mrf.mxu0
      %5107 = vmatprep.mubr.f32.mxu0 %v4655
      %5108 = vmatmul.mubr.f32.gmra.mxu0 %v4654
      %v5109 = vpop.f32.mrf.mxu0
      %v5110 = vadd.f32 0.0, %v5109
      %v5111 = vpop.f32.mrf.mxu0
      %5112 = vmatprep.mubr.f32.mxu0 %v4658
      %5113 = vmatmul.mubr.f32.gmra.mxu0 %v4657
      %v5114 = vpop.f32.mrf.mxu0
      %v5115 = vadd.f32 0.0, %v5114
      %v5116 = vpop.f32.mrf.mxu0
      %5117 = vmatprep.mubr.f32.mxu0 %v4661
      %5118 = vmatmul.mubr.f32.gmra.mxu0 %v4660
      %v5119 = vpop.f32.mrf.mxu0
      %v5120 = vadd.f32 0.0, %v5119
      %v5121 = vpop.f32.mrf.mxu0
      %5122 = vmatprep.mubr.f32.mxu0 %v4664
      %5123 = vmatmul.mubr.f32.gmra.mxu0 %v4663
      %v5124 = vpop.f32.mrf.mxu0
      %v5125 = vadd.f32 0.0, %v5124
      %v5126 = vpop.f32.mrf.mxu0
      %5127 = vmatprep.mubr.f32.mxu0 %v4667
      %5128 = vmatmul.mubr.f32.gmra.mxu0 %v4666
      %v5129 = vpop.f32.mrf.mxu0
      %v5130 = vadd.f32 0.0, %v5129
      %v5131 = vpop.f32.mrf.mxu0
      %5132 = vmatprep.mubr.f32.mxu0 %v4670
      %5133 = vmatmul.mubr.f32.gmra.mxu0 %v4669
      %v5134 = vpop.f32.mrf.mxu0
      %v5135 = vadd.f32 0.0, %v5134
      %v5136 = vpop.f32.mrf.mxu0
      %5137 = vmatprep.mubr.f32.mxu0 %v4673
      %5138 = vmatmul.mubr.f32.gmra.mxu0 %v4672
      %v5139 = vpop.f32.mrf.mxu0
      %v5140 = vadd.f32 0.0, %v5139
      %v5141 = vpop.f32.mrf.mxu0
      %5142 = vmatprep.mubr.f32.mxu0 %v4676
      %5143 = vmatmul.mubr.f32.gmra.mxu0 %v4675
      %v5144 = vpop.f32.mrf.mxu0
      %v5145 = vadd.f32 0.0, %v5144
      %v5146 = vpop.f32.mrf.mxu0
      %5147 = vmatprep.mubr.f32.mxu0 %v4679
      %5148 = vmatmul.mubr.f32.gmra.mxu0 %v4678
      %v5149 = vpop.f32.mrf.mxu0
      %v5150 = vadd.f32 0.0, %v5149
      %v5151 = vpop.f32.mrf.mxu0
      %5152 = vmatprep.mubr.f32.mxu0 %v4682
      %5153 = vmatmul.mubr.f32.gmra.mxu0 %v4681
      %v5154 = vpop.f32.mrf.mxu0
      %v5155 = vadd.f32 0.0, %v5154
      %v5156 = vpop.f32.mrf.mxu0
      %5157 = vmatprep.mubr.f32.mxu0 %v4685
      %5158 = vmatmul.mubr.f32.gmra.mxu0 %v4684
      %v5159 = vpop.f32.mrf.mxu0
      %v5160 = vadd.f32 0.0, %v5159
      %v5161 = vpop.f32.mrf.mxu0
      %5162 = vmatprep.mubr.f32.mxu0 %v4688
      %5163 = vmatmul.mubr.f32.gmra.mxu0 %v4687
      %v5164 = vpop.f32.mrf.mxu0
      %v5165 = vadd.f32 0.0, %v5164
      %v5166 = vpop.f32.mrf.mxu0
      %5167 = vmatprep.mubr.f32.mxu0 %v4691
      %5168 = vmatmul.mubr.f32.gmra.mxu0 %v4690
      %v5169 = vpop.f32.mrf.mxu0
      %v5170 = vadd.f32 0.0, %v5169
      %v5171 = vpop.f32.mrf.mxu0
      %5172 = vmatprep.mubr.f32.mxu0 %v4694
      %5173 = vmatmul.mubr.f32.gmra.mxu0 %v4693
      %v5174 = vpop.f32.mrf.mxu0
      %v5175 = vadd.f32 0.0, %v5174
      %v5176 = vpop.f32.mrf.mxu0
      %5177 = vmatprep.mubr.f32.mxu0 %v4697
      %5178 = vmatmul.mubr.f32.gmra.mxu0 %v4696
      %v5179 = vpop.f32.mrf.mxu0
      %v5180 = vadd.f32 0.0, %v5179
      %v5181 = vpop.f32.mrf.mxu0
      %5182 = vmatprep.mubr.f32.mxu0 %v4700
      %5183 = vmatmul.mubr.f32.gmra.mxu0 %v4699
      %v5184 = vpop.f32.mrf.mxu0
      %v5185 = vadd.f32 0.0, %v5184
      %v5186 = vpop.f32.mrf.mxu0
      %5187 = vmatprep.mubr.f32.mxu0 %v4703
      %5188 = vmatmul.mubr.f32.gmra.mxu0 %v4702
      %v5189 = vpop.f32.mrf.mxu0
      %v5190 = vadd.f32 0.0, %v5189
      %v5191 = vpop.f32.mrf.mxu0
      %5192 = vmatprep.mubr.f32.mxu0 %v4706
      %5193 = vmatmul.mubr.f32.gmra.mxu0 %v4705
      %v5194 = vpop.f32.mrf.mxu0
      %v5195 = vadd.f32 0.0, %v5194
      %v5196 = vpop.f32.mrf.mxu0
      %5197 = vdwg.mxu0
      %5198 = vmatprep.subr.mxu0 0.0
      %5199 = vmatpush1.msra.mxu0 0.0
      %5200 = vmatprep.subr.mxu0 0.0
      %5201 = vmatpush1.msra.mxu0 0.0
      %5202 = vmatprep.subr.mxu0 0.0
      %5203 = vmatpush1.msra.mxu0 0.0
      %5204 = vmatprep.subr.mxu0 0.0
      %5205 = vmatpush1.msra.mxu0 0.0
      %5206 = vmatprep.subr.mxu0 0.0
      %5207 = vmatpush1.msra.mxu0 0.0
      %5208 = vmatprep.subr.mxu0 0.0
      %5209 = vmatpush1.msra.mxu0 0.0
      %5210 = vmatprep.subr.mxu0 0.0
      %5211 = vmatpush1.msra.mxu0 0.0
      %5212 = vmatprep.subr.mxu0 0.0
      %5213 = vmatpush1.msra.mxu0 0.0
      %5214 = vmatprep.subr.mxu0 0.0
      %5215 = vmatpush1.msra.mxu0 %v4748
      %5216 = vmatprep.subr.mxu0 0.0
      %5217 = vmatpush1.msra.mxu0 %v4747
      %5218 = vmatprep.subr.mxu0 0.0
      %5219 = vmatpush1.msra.mxu0 %v4746
      %5220 = vmatprep.subr.mxu0 0.0
      %5221 = vmatpush1.msra.mxu0 %v4745
      %5222 = vmatprep.subr.mxu0 0.0
      %5223 = vmatpush1.msra.mxu0 %v4744
      %5224 = vmatprep.subr.mxu0 0.0
      %5225 = vmatpush1.msra.mxu0 %v4743
      %5226 = vmatprep.subr.mxu0 0.0
      %5227 = vmatpush1.msra.mxu0 %v4742
      %5228 = vmatprep.subr.mxu0 0.0
      %5229 = vmatpush1.msra.mxu0 %v4741
      %5230 = vmatprep.subr.mxu0 0.0
      %5231 = vmatpush2.msra.mxu0 0.0
      %5232 = vmatprep.subr.mxu0 0.0
      %5233 = vmatpush2.msra.mxu0 0.0
      %5234 = vmatprep.subr.mxu0 0.0
      %5235 = vmatpush2.msra.mxu0 0.0
      %5236 = vmatprep.subr.mxu0 0.0
      %5237 = vmatpush2.msra.mxu0 0.0
      %5238 = vmatprep.subr.mxu0 0.0
      %5239 = vmatpush2.msra.mxu0 0.0
      %5240 = vmatprep.subr.mxu0 0.0
      %5241 = vmatpush2.msra.mxu0 0.0
      %5242 = vmatprep.subr.mxu0 0.0
      %5243 = vmatpush2.msra.mxu0 0.0
      %5244 = vmatprep.subr.mxu0 0.0
      %5245 = vmatpush2.msra.mxu0 0.0
      %5246 = vmatprep.subr.mxu0 0.0
      %5247 = vmatpush2.msra.mxu0 0.0
      %5248 = vmatprep.subr.mxu0 0.0
      %5249 = vmatpush2.msra.mxu0 0.0
      %5250 = vmatprep.subr.mxu0 0.0
      %5251 = vmatpush2.msra.mxu0 0.0
      %5252 = vmatprep.subr.mxu0 0.0
      %5253 = vmatpush2.msra.mxu0 0.0
      %5254 = vmatprep.subr.mxu0 0.0
      %5255 = vmatpush2.msra.mxu0 0.0
      %5256 = vmatprep.subr.mxu0 0.0
      %5257 = vmatpush2.msra.mxu0 0.0
      %5258 = vmatprep.subr.mxu0 0.0
      %5259 = vmatpush2.msra.mxu0 0.0
      %5260 = vmatprep.subr.mxu0 0.0
      %5261 = vmatpush2.msra.mxu0 0.0
      %5262 = vmatprep.mubr.f32.mxu0 0.0
      %5263 = vmatmul.mubr.f32.gmra.mxu0 %v4750
      %v5264 = vpop.f32.mrf.mxu0
      %v5265 = vadd.f32 %v4960, %v5264
      %v5266 = vpop.f32.mrf.mxu0
      %5267 = vmatprep.mubr.f32.mxu0 0.0
      %5268 = vmatmul.mubr.f32.gmra.mxu0 %v4753
      %v5269 = vpop.f32.mrf.mxu0
      %v5270 = vadd.f32 %v4965, %v5269
      %v5271 = vpop.f32.mrf.mxu0
      %5272 = vmatprep.mubr.f32.mxu0 0.0
      %5273 = vmatmul.mubr.f32.gmra.mxu0 %v4756
      %v5274 = vpop.f32.mrf.mxu0
      %v5275 = vadd.f32 %v4970, %v5274
      %v5276 = vpop.f32.mrf.mxu0
      %5277 = vmatprep.mubr.f32.mxu0 0.0
      %5278 = vmatmul.mubr.f32.gmra.mxu0 %v4759
      %v5279 = vpop.f32.mrf.mxu0
      %v5280 = vadd.f32 %v4975, %v5279
      %v5281 = vpop.f32.mrf.mxu0
      %5282 = vmatprep.mubr.f32.mxu0 0.0
      %5283 = vmatmul.mubr.f32.gmra.mxu0 %v4762
      %v5284 = vpop.f32.mrf.mxu0
      %v5285 = vadd.f32 %v4980, %v5284
      %v5286 = vpop.f32.mrf.mxu0
      %5287 = vmatprep.mubr.f32.mxu0 0.0
      %5288 = vmatmul.mubr.f32.gmra.mxu0 %v4765
      %v5289 = vpop.f32.mrf.mxu0
      %v5290 = vadd.f32 %v4985, %v5289
      %v5291 = vpop.f32.mrf.mxu0
      %5292 = vmatprep.mubr.f32.mxu0 0.0
      %5293 = vmatmul.mubr.f32.gmra.mxu0 %v4768
      %v5294 = vpop.f32.mrf.mxu0
      %v5295 = vadd.f32 %v4990, %v5294
      %v5296 = vpop.f32.mrf.mxu0
      %5297 = vmatprep.mubr.f32.mxu0 0.0
      %5298 = vmatmul.mubr.f32.gmra.mxu0 %v4771
      %v5299 = vpop.f32.mrf.mxu0
      %v5300 = vadd.f32 %v4995, %v5299
      %v5301 = vpop.f32.mrf.mxu0
      %5302 = vmatprep.mubr.f32.mxu0 0.0
      %5303 = vmatmul.mubr.f32.gmra.mxu0 %v4774
      %v5304 = vpop.f32.mrf.mxu0
      %v5305 = vadd.f32 %v5000, %v5304
      %v5306 = vpop.f32.mrf.mxu0
      %5307 = vmatprep.mubr.f32.mxu0 0.0
      %5308 = vmatmul.mubr.f32.gmra.mxu0 %v4777
      %v5309 = vpop.f32.mrf.mxu0
      %v5310 = vadd.f32 %v5005, %v5309
      %v5311 = vpop.f32.mrf.mxu0
      %5312 = vmatprep.mubr.f32.mxu0 0.0
      %5313 = vmatmul.mubr.f32.gmra.mxu0 %v4780
      %v5314 = vpop.f32.mrf.mxu0
      %v5315 = vadd.f32 %v5010, %v5314
      %v5316 = vpop.f32.mrf.mxu0
      %5317 = vmatprep.mubr.f32.mxu0 0.0
      %5318 = vmatmul.mubr.f32.gmra.mxu0 %v4783
      %v5319 = vpop.f32.mrf.mxu0
      %v5320 = vadd.f32 %v5015, %v5319
      %v5321 = vpop.f32.mrf.mxu0
      %5322 = vmatprep.mubr.f32.mxu0 0.0
      %5323 = vmatmul.mubr.f32.gmra.mxu0 %v4786
      %v5324 = vpop.f32.mrf.mxu0
      %v5325 = vadd.f32 %v5020, %v5324
      %v5326 = vpop.f32.mrf.mxu0
      %5327 = vmatprep.mubr.f32.mxu0 0.0
      %5328 = vmatmul.mubr.f32.gmra.mxu0 %v4789
      %v5329 = vpop.f32.mrf.mxu0
      %v5330 = vadd.f32 %v5025, %v5329
      %v5331 = vpop.f32.mrf.mxu0
      %5332 = vmatprep.mubr.f32.mxu0 0.0
      %5333 = vmatmul.mubr.f32.gmra.mxu0 %v4792
      %v5334 = vpop.f32.mrf.mxu0
      %v5335 = vadd.f32 %v5030, %v5334
      %v5336 = vpop.f32.mrf.mxu0
      %5337 = vmatprep.mubr.f32.mxu0 0.0
      %5338 = vmatmul.mubr.f32.gmra.mxu0 %v4795
      %v5339 = vpop.f32.mrf.mxu0
      %v5340 = vadd.f32 %v5035, %v5339
      %v5341 = vpop.f32.mrf.mxu0
      %5342 = vmatprep.mubr.f32.mxu0 0.0
      %5343 = vmatmul.mubr.f32.gmra.mxu0 %v4798
      %v5344 = vpop.f32.mrf.mxu0
      %v5345 = vadd.f32 %v5040, %v5344
      %v5346 = vpop.f32.mrf.mxu0
      %5347 = vmatprep.mubr.f32.mxu0 0.0
      %5348 = vmatmul.mubr.f32.gmra.mxu0 %v4801
      %v5349 = vpop.f32.mrf.mxu0
      %v5350 = vadd.f32 %v5045, %v5349
      %v5351 = vpop.f32.mrf.mxu0
      %5352 = vmatprep.mubr.f32.mxu0 0.0
      %5353 = vmatmul.mubr.f32.gmra.mxu0 %v4804
      %v5354 = vpop.f32.mrf.mxu0
      %v5355 = vadd.f32 %v5050, %v5354
      %v5356 = vpop.f32.mrf.mxu0
      %5357 = vmatprep.mubr.f32.mxu0 0.0
      %5358 = vmatmul.mubr.f32.gmra.mxu0 %v4807
      %v5359 = vpop.f32.mrf.mxu0
      %v5360 = vadd.f32 %v5055, %v5359
      %v5361 = vpop.f32.mrf.mxu0
      %5362 = vmatprep.mubr.f32.mxu0 0.0
      %5363 = vmatmul.mubr.f32.gmra.mxu0 %v4810
      %v5364 = vpop.f32.mrf.mxu0
      %v5365 = vadd.f32 %v5060, %v5364
      %v5366 = vpop.f32.mrf.mxu0
      %5367 = vmatprep.mubr.f32.mxu0 0.0
      %5368 = vmatmul.mubr.f32.gmra.mxu0 %v4813
      %v5369 = vpop.f32.mrf.mxu0
      %v5370 = vadd.f32 %v5065, %v5369
      %v5371 = vpop.f32.mrf.mxu0
      %5372 = vmatprep.mubr.f32.mxu0 0.0
      %5373 = vmatmul.mubr.f32.gmra.mxu0 %v4816
      %v5374 = vpop.f32.mrf.mxu0
      %v5375 = vadd.f32 %v5070, %v5374
      %v5376 = vpop.f32.mrf.mxu0
      %5377 = vmatprep.mubr.f32.mxu0 0.0
      %5378 = vmatmul.mubr.f32.gmra.mxu0 %v4819
      %v5379 = vpop.f32.mrf.mxu0
      %v5380 = vadd.f32 %v5075, %v5379
      %v5381 = vpop.f32.mrf.mxu0
      %5382 = vmatprep.mubr.f32.mxu0 0.0
      %5383 = vmatmul.mubr.f32.gmra.mxu0 %v4822
      %v5384 = vpop.f32.mrf.mxu0
      %v5385 = vadd.f32 %v5080, %v5384
      %v5386 = vpop.f32.mrf.mxu0
      %5387 = vmatprep.mubr.f32.mxu0 0.0
      %5388 = vmatmul.mubr.f32.gmra.mxu0 %v4825
      %v5389 = vpop.f32.mrf.mxu0
      %v5390 = vadd.f32 %v5085, %v5389
      %v5391 = vpop.f32.mrf.mxu0
      %5392 = vmatprep.mubr.f32.mxu0 0.0
      %5393 = vmatmul.mubr.f32.gmra.mxu0 %v4828
      %v5394 = vpop.f32.mrf.mxu0
      %v5395 = vadd.f32 %v5090, %v5394
      %v5396 = vpop.f32.mrf.mxu0
      %5397 = vmatprep.mubr.f32.mxu0 0.0
      %5398 = vmatmul.mubr.f32.gmra.mxu0 %v4831
      %v5399 = vpop.f32.mrf.mxu0
      %v5400 = vadd.f32 %v5095, %v5399
      %v5401 = vpop.f32.mrf.mxu0
      %5402 = vmatprep.mubr.f32.mxu0 0.0
      %5403 = vmatmul.mubr.f32.gmra.mxu0 %v4834
      %v5404 = vpop.f32.mrf.mxu0
      %v5405 = vadd.f32 %v5100, %v5404
      %v5406 = vpop.f32.mrf.mxu0
      %5407 = vmatprep.mubr.f32.mxu0 0.0
      %5408 = vmatmul.mubr.f32.gmra.mxu0 %v4837
      %v5409 = vpop.f32.mrf.mxu0
      %v5410 = vadd.f32 %v5105, %v5409
      %v5411 = vpop.f32.mrf.mxu0
      %5412 = vmatprep.mubr.f32.mxu0 0.0
      %5413 = vmatmul.mubr.f32.gmra.mxu0 %v4840
      %v5414 = vpop.f32.mrf.mxu0
      %v5415 = vadd.f32 %v5110, %v5414
      %v5416 = vpop.f32.mrf.mxu0
      %5417 = vmatprep.mubr.f32.mxu0 0.0
      %5418 = vmatmul.mubr.f32.gmra.mxu0 %v4843
      %v5419 = vpop.f32.mrf.mxu0
      %v5420 = vadd.f32 %v5115, %v5419
      %v5421 = vpop.f32.mrf.mxu0
      %5422 = vmatprep.mubr.f32.mxu0 0.0
      %5423 = vmatmul.mubr.f32.gmra.mxu0 %v4846
      %v5424 = vpop.f32.mrf.mxu0
      %v5425 = vadd.f32 %v5120, %v5424
      %v5426 = vpop.f32.mrf.mxu0
      %5427 = vmatprep.mubr.f32.mxu0 0.0
      %5428 = vmatmul.mubr.f32.gmra.mxu0 %v4849
      %v5429 = vpop.f32.mrf.mxu0
      %v5430 = vadd.f32 %v5125, %v5429
      %v5431 = vpop.f32.mrf.mxu0
      %5432 = vmatprep.mubr.f32.mxu0 0.0
      %5433 = vmatmul.mubr.f32.gmra.mxu0 %v4852
      %v5434 = vpop.f32.mrf.mxu0
      %v5435 = vadd.f32 %v5130, %v5434
      %v5436 = vpop.f32.mrf.mxu0
      %5437 = vmatprep.mubr.f32.mxu0 0.0
      %5438 = vmatmul.mubr.f32.gmra.mxu0 %v4855
      %v5439 = vpop.f32.mrf.mxu0
      %v5440 = vadd.f32 %v5135, %v5439
      %v5441 = vpop.f32.mrf.mxu0
      %5442 = vmatprep.mubr.f32.mxu0 0.0
      %5443 = vmatmul.mubr.f32.gmra.mxu0 %v4858
      %v5444 = vpop.f32.mrf.mxu0
      %v5445 = vadd.f32 %v5140, %v5444
      %v5446 = vpop.f32.mrf.mxu0
      %5447 = vmatprep.mubr.f32.mxu0 0.0
      %5448 = vmatmul.mubr.f32.gmra.mxu0 %v4861
      %v5449 = vpop.f32.mrf.mxu0
      %v5450 = vadd.f32 %v5145, %v5449
      %v5451 = vpop.f32.mrf.mxu0
      %5452 = vmatprep.mubr.f32.mxu0 0.0
      %5453 = vmatmul.mubr.f32.gmra.mxu0 %v4864
      %v5454 = vpop.f32.mrf.mxu0
      %v5455 = vadd.f32 %v5150, %v5454
      %v5456 = vpop.f32.mrf.mxu0
      %5457 = vmatprep.mubr.f32.mxu0 0.0
      %5458 = vmatmul.mubr.f32.gmra.mxu0 %v4867
      %v5459 = vpop.f32.mrf.mxu0
      %v5460 = vadd.f32 %v5155, %v5459
      %v5461 = vpop.f32.mrf.mxu0
      %5462 = vmatprep.mubr.f32.mxu0 0.0
      %5463 = vmatmul.mubr.f32.gmra.mxu0 %v4870
      %v5464 = vpop.f32.mrf.mxu0
      %v5465 = vadd.f32 %v5160, %v5464
      %v5466 = vpop.f32.mrf.mxu0
      %5467 = vmatprep.mubr.f32.mxu0 0.0
      %5468 = vmatmul.mubr.f32.gmra.mxu0 %v4873
      %v5469 = vpop.f32.mrf.mxu0
      %v5470 = vadd.f32 %v5165, %v5469
      %v5471 = vpop.f32.mrf.mxu0
      %5472 = vmatprep.mubr.f32.mxu0 0.0
      %5473 = vmatmul.mubr.f32.gmra.mxu0 %v4876
      %v5474 = vpop.f32.mrf.mxu0
      %v5475 = vadd.f32 %v5170, %v5474
      %v5476 = vpop.f32.mrf.mxu0
      %5477 = vmatprep.mubr.f32.mxu0 0.0
      %5478 = vmatmul.mubr.f32.gmra.mxu0 %v4879
      %v5479 = vpop.f32.mrf.mxu0
      %v5480 = vadd.f32 %v5175, %v5479
      %v5481 = vpop.f32.mrf.mxu0
      %5482 = vmatprep.mubr.f32.mxu0 0.0
      %5483 = vmatmul.mubr.f32.gmra.mxu0 %v4882
      %v5484 = vpop.f32.mrf.mxu0
      %v5485 = vadd.f32 %v5180, %v5484
      %v5486 = vpop.f32.mrf.mxu0
      %5487 = vmatprep.mubr.f32.mxu0 0.0
      %5488 = vmatmul.mubr.f32.gmra.mxu0 %v4885
      %v5489 = vpop.f32.mrf.mxu0
      %v5490 = vadd.f32 %v5185, %v5489
      %v5491 = vpop.f32.mrf.mxu0
      %5492 = vmatprep.mubr.f32.mxu0 0.0
      %5493 = vmatmul.mubr.f32.gmra.mxu0 %v4888
      %v5494 = vpop.f32.mrf.mxu0
      %v5495 = vadd.f32 %v5190, %v5494
      %v5496 = vpop.f32.mrf.mxu0
      %5497 = vmatprep.mubr.f32.mxu0 0.0
      %5498 = vmatmul.mubr.f32.gmra.mxu0 %v4891
      %v5499 = vpop.f32.mrf.mxu0
      %v5500 = vadd.f32 %v5195, %v5499
      %v5501 = vpop.f32.mrf.mxu0
      %5502 = vdwg.mxu0
      %v5503 = vadd.f32 %v4326, %v5265
      %v5504 = vadd.f32 %v4331, %v5270
      %v5505 = vadd.f32 %v4336, %v5275
      %v5506 = vadd.f32 %v4341, %v5280
      %v5507 = vadd.f32 %v4346, %v5285
      %v5508 = vadd.f32 %v4351, %v5290
      %v5509 = vadd.f32 %v4356, %v5295
      %v5510 = vadd.f32 %v4361, %v5300
      %v5511 = vadd.f32 %v4366, %v5305
      %v5512 = vadd.f32 %v4371, %v5310
      %v5513 = vadd.f32 %v4376, %v5315
      %v5514 = vadd.f32 %v4381, %v5320
      %v5515 = vadd.f32 %v4386, %v5325
      %v5516 = vadd.f32 %v4391, %v5330
      %v5517 = vadd.f32 %v4396, %v5335
      %v5518 = vadd.f32 %v4401, %v5340
      %v5519 = vadd.f32 %v4406, %v5345
      %v5520 = vadd.f32 %v4411, %v5350
      %v5521 = vadd.f32 %v4416, %v5355
      %v5522 = vadd.f32 %v4421, %v5360
      %v5523 = vadd.f32 %v4426, %v5365
      %v5524 = vadd.f32 %v4431, %v5370
      %v5525 = vadd.f32 %v4436, %v5375
      %v5526 = vadd.f32 %v4441, %v5380
      %v5527 = vadd.f32 %v4446, %v5385
      %v5528 = vadd.f32 %v4451, %v5390
      %v5529 = vadd.f32 %v4456, %v5395
      %v5530 = vadd.f32 %v4461, %v5400
      %v5531 = vadd.f32 %v4466, %v5405
      %v5532 = vadd.f32 %v4471, %v5410
      %v5533 = vadd.f32 %v4476, %v5415
      %v5534 = vadd.f32 %v4481, %v5420
      %v5535 = vadd.f32 %v4486, %v5425
      %v5536 = vadd.f32 %v4491, %v5430
      %v5537 = vadd.f32 %v4496, %v5435
      %v5538 = vadd.f32 %v4501, %v5440
      %v5539 = vadd.f32 %v4506, %v5445
      %v5540 = vadd.f32 %v4511, %v5450
      %v5541 = vadd.f32 %v4516, %v5455
      %v5542 = vadd.f32 %v4521, %v5460
      %v5543 = vadd.f32 %v4526, %v5465
      %v5544 = vadd.f32 %v4531, %v5470
      %v5545 = vadd.f32 %v4536, %v5475
      %v5546 = vadd.f32 %v4541, %v5480
      %v5547 = vadd.f32 %v4546, %v5485
      %v5548 = vadd.f32 %v4551, %v5490
      %v5549 = vadd.f32 %v4556, %v5495
      %v5550 = vadd.f32 %v4561, %v5500
      %v5551 = vld [vmem:[#allocation3 + $0xd8] sm:$0xff]
      %v5552 = vld [vmem:[#allocation3 + $0xe0] sm:$0xff]
      %v5553 = vld [vmem:[#allocation3 + $0xe8] sm:$0xff]
      %v5554 = vld [vmem:[#allocation3 + $0xf0] sm:$0xff]
      %v5555 = vld [vmem:[#allocation3 + $0xf8] sm:$0xff]
      %v5556 = vld [vmem:[#allocation3 + $0x100] sm:$0xff]
      %v5557 = vld [vmem:[#allocation3 + $0x108] sm:$0xff]
      %v5558 = vld [vmem:[#allocation3 + $0x110] sm:$0xff]
      %v5559 = vld [vmem:[#allocation3 + $0x118] sm:$0xff]
      %v5560 = vld [vmem:[#allocation3 + $0x120] sm:$0xff]
      %v5561 = vld [vmem:[#allocation3 + $0x128] sm:$0xff]
      %v5562 = vld [vmem:[#allocation3 + $0x130] sm:$0xff]
      %v5563 = vld [vmem:[#allocation3 + $0x138] sm:$0xff]
      %v5564 = vld [vmem:[#allocation3 + $0x140] sm:$0xff]
      %v5565 = vld [vmem:[#allocation3 + $0x148] sm:$0xff]
      %v5566 = vld [vmem:[#allocation3 + $0x150] sm:$0xff]
      %v5567 = vld [vmem:[#allocation3 + $0x158] sm:$0xff]
      %v5568 = vld [vmem:[#allocation3 + $0x160] sm:$0xff]
      %v5569 = vld [vmem:[#allocation3 + $0x168] sm:$0xff]
      %v5570 = vld [vmem:[#allocation3 + $0x170] sm:$0xff]
      %v5571 = vld [vmem:[#allocation3 + $0x178] sm:$0xff]
      %v5572 = vld [vmem:[#allocation3 + $0x180] sm:$0xff]
      %v5573 = vld [vmem:[#allocation3 + $0x188] sm:$0xff]
      %v5574 = vld [vmem:[#allocation3 + $0x190] sm:$0xff]
      %v5575 = vld [vmem:[#allocation3 + $0x198] sm:$0xff]
      %v5576 = vld [vmem:[#allocation3 + $0x1a0] sm:$0xff]
      %v5577 = vld [vmem:[#allocation3 + $0x1a8] sm:$0xff]
      %v5578 = vld [vmem:[#allocation3 + $0x1b0] sm:$0xff]
      %v5579 = vld [vmem:[#allocation3 + $0x1b8] sm:$0xff]
      %v5580 = vld [vmem:[#allocation3 + $0x1c0] sm:$0xff]
      %v5581 = vld [vmem:[#allocation3 + $0x1c8] sm:$0xff]
      %v5582 = vld [vmem:[#allocation3 + $0x1d0] sm:$0xff]
      %v5583 = vld [vmem:[#allocation3 + $0x1d8] sm:$0xff]
      %v5584 = vld [vmem:[#allocation3 + $0x1e0] sm:$0xff]
      %v5585 = vld [vmem:[#allocation3 + $0x1e8] sm:$0xff]
      %v5586 = vld [vmem:[#allocation3 + $0x1f0] sm:$0xff]
      %v5587 = vld [vmem:[#allocation3 + $0x1f8] sm:$0xff]
      %v5588 = vld [vmem:[#allocation3 + $0x200] sm:$0xff]
      %v5589 = vld [vmem:[#allocation3 + $0x208] sm:$0xff]
      %v5590 = vld [vmem:[#allocation3 + $0x210] sm:$0xff]
      %v5591 = vld [vmem:[#allocation3 + $0x218] sm:$0xff]
      %v5592 = vld [vmem:[#allocation3 + $0x220] sm:$0xff]
      %v5593 = vld [vmem:[#allocation3 + $0x228] sm:$0xff]
      %v5594 = vld [vmem:[#allocation3 + $0x230] sm:$0xff]
      %v5595 = vld [vmem:[#allocation3 + $0x238] sm:$0xff]
      %v5596 = vld [vmem:[#allocation3 + $0x240] sm:$0xff]
      %v5597 = vld [vmem:[#allocation3 + $0x248] sm:$0xff]
      %v5598 = vld [vmem:[#allocation3 + $0x250] sm:$0xff]
      %v5599 = vld [vmem:[#allocation3 + $0x258] sm:$0xff]
      %v5600 = vld [vmem:[#allocation3 + $0x260] sm:$0xff]
      %v5601 = vld [vmem:[#allocation3 + $0x268] sm:$0xff]
      %v5602 = vld [vmem:[#allocation3 + $0x270] sm:$0xff]
      %v5603 = vld [vmem:[#allocation3 + $0x278] sm:$0xff]
      %v5604 = vld [vmem:[#allocation3 + $0x280] sm:$0xff]
      %v5605 = vld [vmem:[#allocation3 + $0x288] sm:$0xff]
      %v5606 = vld [vmem:[#allocation3 + $0x290] sm:$0xff]
      %v5607 = vld [vmem:[#allocation3 + $0x298] sm:$0xff]
      %v5608 = vld [vmem:[#allocation3 + $0x2a0] sm:$0xff]
      %v5609 = vld [vmem:[#allocation3 + $0x2a8] sm:$0xff]
      %v5610 = vld [vmem:[#allocation3 + $0x2b0] sm:$0xff]
      %v5611 = vld [vmem:[#allocation3 + $0x2b8] sm:$0xff]
      %v5612 = vld [vmem:[#allocation3 + $0x2c0] sm:$0xff]
      %v5613 = vld [vmem:[#allocation3 + $0x2c8] sm:$0xff]
      %v5614 = vld [vmem:[#allocation3 + $0x2d0] sm:$0xff]
      %v5615 = vld [vmem:[#allocation3 + $0x2d8] sm:$0xff]
      %v5616 = vld [vmem:[#allocation3 + $0x2e0] sm:$0xff]
      %v5617 = vld [vmem:[#allocation3 + $0x2e8] sm:$0xff]
      %v5618 = vld [vmem:[#allocation3 + $0x2f0] sm:$0xff]
      %v5619 = vld [vmem:[#allocation3 + $0x2f8] sm:$0xff]
      %v5620 = vld [vmem:[#allocation3 + $0x300] sm:$0xff]
      %v5621 = vld [vmem:[#allocation3 + $0x308] sm:$0xff]
      %v5622 = vld [vmem:[#allocation3 + $0x310] sm:$0xff]
      %v5623 = vld [vmem:[#allocation3 + $0x318] sm:$0xff]
      %v5624 = vld [vmem:[#allocation3 + $0x320] sm:$0xff]
      %v5625 = vld [vmem:[#allocation3 + $0x328] sm:$0xff]
      %v5626 = vld [vmem:[#allocation3 + $0x330] sm:$0xff]
      %v5627 = vld [vmem:[#allocation3 + $0x338] sm:$0xff]
      %v5628 = vld [vmem:[#allocation3 + $0x340] sm:$0xff]
      %v5629 = vld [vmem:[#allocation3 + $0x348] sm:$0xff]
      %v5630 = vld [vmem:[#allocation3 + $0x350] sm:$0xff]
      %v5631 = vld [vmem:[#allocation3 + $0x358] sm:$0xff]
      %v5632 = vld [vmem:[#allocation3 + $0x360] sm:$0xff]
      %v5633 = vld [vmem:[#allocation3 + $0x368] sm:$0xff]
      %v5634 = vld [vmem:[#allocation3 + $0x370] sm:$0xff]
      %v5635 = vld [vmem:[#allocation3 + $0x378] sm:$0xff]
      %v5636 = vld [vmem:[#allocation3 + $0x380] sm:$0xff]
      %v5637 = vld [vmem:[#allocation3 + $0x388] sm:$0xff]
      %v5638 = vld [vmem:[#allocation3 + $0x390] sm:$0xff]
      %v5639 = vld [vmem:[#allocation3 + $0x398] sm:$0xff]
      %v5640 = vld [vmem:[#allocation3 + $0x3a0] sm:$0xff]
      %v5641 = vld [vmem:[#allocation3 + $0x3a8] sm:$0xff]
      %v5642 = vld [vmem:[#allocation3 + $0x3b0] sm:$0xff]
      %v5643 = vld [vmem:[#allocation3 + $0x3b8] sm:$0xff]
      %v5644 = vld [vmem:[#allocation3 + $0x3c0] sm:$0xff]
      %v5645 = vld [vmem:[#allocation3 + $0x3c8] sm:$0xff]
      %v5646 = vld [vmem:[#allocation3 + $0x3d0] sm:$0xff]
      %v5647 = vld [vmem:[#allocation3 + $0x3d8] sm:$0xff]
      %v5648 = vld [vmem:[#allocation3 + $0x3e0] sm:$0xff]
      %v5649 = vld [vmem:[#allocation3 + $0x3e8] sm:$0xff]
      %v5650 = vld [vmem:[#allocation3 + $0x3f0] sm:$0xff]
      %v5651 = vld [vmem:[#allocation3 + $0x3f8] sm:$0xff]
      %v5652 = vld [vmem:[#allocation3 + $0x400] sm:$0xff]
      %v5653 = vld [vmem:[#allocation3 + $0x408] sm:$0xff]
      %v5654 = vld [vmem:[#allocation3 + $0x410] sm:$0xff]
      %v5655 = vld [vmem:[#allocation3 + $0x418] sm:$0xff]
      %v5656 = vld [vmem:[#allocation3 + $0x420] sm:$0xff]
      %v5657 = vld [vmem:[#allocation3 + $0x428] sm:$0xff]
      %v5658 = vld [vmem:[#allocation3 + $0x430] sm:$0xff]
      %v5659 = vld [vmem:[#allocation3 + $0x438] sm:$0xff]
      %v5660 = vld [vmem:[#allocation3 + $0x440] sm:$0xff]
      %v5661 = vld [vmem:[#allocation3 + $0x448] sm:$0xff]
      %v5662 = vld [vmem:[#allocation3 + $0x450] sm:$0xff]
      %v5663 = vld [vmem:[#allocation3 + $0x458] sm:$0xff]
      %v5664 = vld [vmem:[#allocation3 + $0x460] sm:$0xff]
      %v5665 = vld [vmem:[#allocation3 + $0x468] sm:$0xff]
      %v5666 = vld [vmem:[#allocation3 + $0x470] sm:$0xff]
      %v5667 = vld [vmem:[#allocation3 + $0x478] sm:$0xff]
      %v5668 = vld [vmem:[#allocation3 + $0x480] sm:$0xff]
      %v5669 = vld [vmem:[#allocation3 + $0x488] sm:$0xff]
      %v5670 = vld [vmem:[#allocation3 + $0x490] sm:$0xff]
      %v5671 = vld [vmem:[#allocation3 + $0x498] sm:$0xff]
      %v5672 = vld [vmem:[#allocation3 + $0x4a0] sm:$0xff]
      %v5673 = vld [vmem:[#allocation3 + $0x4a8] sm:$0xff]
      %v5674 = vld [vmem:[#allocation3 + $0x4b0] sm:$0xff]
      %v5675 = vld [vmem:[#allocation3 + $0x4b8] sm:$0xff]
      %v5676 = vld [vmem:[#allocation3 + $0x4c0] sm:$0xff]
      %v5677 = vld [vmem:[#allocation3 + $0x4c8] sm:$0xff]
      %v5678 = vld [vmem:[#allocation3 + $0x4d0] sm:$0xff]
      %v5679 = vld [vmem:[#allocation3 + $0x4d8] sm:$0xff]
      %v5680 = vld [vmem:[#allocation3 + $0x4e0] sm:$0xff]
      %v5681 = vld [vmem:[#allocation3 + $0x4e8] sm:$0xff]
      %v5682 = vld [vmem:[#allocation3 + $0x4f0] sm:$0xff]
      %v5683 = vld [vmem:[#allocation3 + $0x4f8] sm:$0xff]
      %v5684 = vld [vmem:[#allocation3 + $0x500] sm:$0xff]
      %v5685 = vld [vmem:[#allocation3 + $0x508] sm:$0xff]
      %v5686 = vld [vmem:[#allocation3 + $0x510] sm:$0xff]
      %v5687 = vld [vmem:[#allocation3 + $0x518] sm:$0xff]
      %v5688 = vld [vmem:[#allocation3 + $0x520] sm:$0xff]
      %v5689 = vld [vmem:[#allocation3 + $0x528] sm:$0xff]
      %v5690 = vld [vmem:[#allocation3 + $0x530] sm:$0xff]
      %v5691 = vld [vmem:[#allocation3 + $0x538] sm:$0xff]
      %v5692 = vld [vmem:[#allocation3 + $0x540] sm:$0xff]
      %v5693 = vld [vmem:[#allocation3 + $0x548] sm:$0xff]
      %v5694 = vld [vmem:[#allocation3 + $0x550] sm:$0xff]
      %s5695 = scalar_lea.vmem %s3, 960
      %v5696 = vld [vmem:[%s5695] sm:$0xff]
      %v5697 = vld [vmem:[%s5695 + $0x8] sm:$0xff]
      %v5698 = vld [vmem:[%s5695 + $0x10] sm:$0xff]
      %v5699 = vld [vmem:[%s5695 + $0x18] sm:$0xff]
      %v5700 = vld [vmem:[%s5695 + $0x20] sm:$0xff]
      %v5701 = vld [vmem:[%s5695 + $0x28] sm:$0xff]
      %v5702 = vld [vmem:[%s5695 + $0x30] sm:$0xff]
      %v5703 = vld [vmem:[%s5695 + $0x38] sm:$0xff]
      %v5704 = vld [vmem:[%s5695 + $0x40] sm:$0xff]
      %v5705 = vld [vmem:[%s5695 + $0x48] sm:$0xff]
      %v5706 = vld [vmem:[%s5695 + $0x50] sm:$0xff]
      %v5707 = vld [vmem:[%s5695 + $0x58] sm:$0xff]
      %v5708 = vld [vmem:[%s5695 + $0x60] sm:$0xff]
      %v5709 = vld [vmem:[%s5695 + $0x68] sm:$0xff]
      %v5710 = vld [vmem:[%s5695 + $0x70] sm:$0xff]
      %v5711 = vld [vmem:[%s5695 + $0x78] sm:$0xff]
      %v5712 = vld [vmem:[%s5695 + $0x80] sm:$0xff]
      %v5713 = vld [vmem:[%s5695 + $0x88] sm:$0xff]
      %v5714 = vld [vmem:[%s5695 + $0x90] sm:$0xff]
      %v5715 = vld [vmem:[%s5695 + $0x98] sm:$0xff]
      %v5716 = vld [vmem:[%s5695 + $0xa0] sm:$0xff]
      %v5717 = vld [vmem:[%s5695 + $0xa8] sm:$0xff]
      %v5718 = vld [vmem:[%s5695 + $0xb0] sm:$0xff]
      %v5719 = vld [vmem:[%s5695 + $0xb8] sm:$0xff]
      %v5720 = vld [vmem:[%s5695 + $0xc0] sm:$0xff]
      %v5721 = vld [vmem:[%s5695 + $0xc8] sm:$0xff]
      %v5722 = vld [vmem:[%s5695 + $0xd0] sm:$0xff]
      %v5723 = vld [vmem:[%s5695 + $0xd8] sm:$0xff]
      %v5724 = vld [vmem:[%s5695 + $0xe0] sm:$0xff]
      %v5725 = vld [vmem:[%s5695 + $0xe8] sm:$0xff]
      %v5726 = vld [vmem:[%s5695 + $0xf0] sm:$0xff]
      %v5727 = vld [vmem:[%s5695 + $0xf8] sm:$0xff]
      %v5728 = vld [vmem:[%s5695 + $0x100] sm:$0xff]
      %v5729 = vld [vmem:[%s5695 + $0x108] sm:$0xff]
      %v5730 = vld [vmem:[%s5695 + $0x110] sm:$0xff]
      %v5731 = vld [vmem:[%s5695 + $0x118] sm:$0xff]
      %v5732 = vld [vmem:[%s5695 + $0x120] sm:$0xff]
      %v5733 = vld [vmem:[%s5695 + $0x128] sm:$0xff]
      %v5734 = vld [vmem:[%s5695 + $0x130] sm:$0xff]
      %v5735 = vld [vmem:[%s5695 + $0x138] sm:$0xff]
      %v5737 = vsel %vm1144, %v5553, 0
      %v5740 = vsel %vm1144, %v5556, 0
      %v5743 = vsel %vm1144, %v5559, 0
      %v5746 = vsel %vm1144, %v5562, 0
      %v5749 = vsel %vm1144, %v5565, 0
      %v5752 = vsel %vm1144, %v5568, 0
      %v5755 = vsel %vm1144, %v5571, 0
      %v5758 = vsel %vm1144, %v5574, 0
      %v5761 = vsel %vm1144, %v5577, 0
      %v5764 = vsel %vm1144, %v5580, 0
      %v5767 = vsel %vm1144, %v5583, 0
      %v5770 = vsel %vm1144, %v5586, 0
      %v5773 = vsel %vm1144, %v5589, 0
      %v5776 = vsel %vm1144, %v5592, 0
      %v5779 = vsel %vm1144, %v5595, 0
      %v5782 = vsel %vm1144, %v5598, 0
      %v5785 = vsel %vm1144, %v5601, 0
      %v5788 = vsel %vm1144, %v5604, 0
      %v5791 = vsel %vm1144, %v5607, 0
      %v5794 = vsel %vm1144, %v5610, 0
      %v5797 = vsel %vm1144, %v5613, 0
      %v5800 = vsel %vm1144, %v5616, 0
      %v5803 = vsel %vm1144, %v5619, 0
      %v5806 = vsel %vm1144, %v5622, 0
      %v5809 = vsel %vm1144, %v5625, 0
      %v5812 = vsel %vm1144, %v5628, 0
      %v5815 = vsel %vm1144, %v5631, 0
      %v5818 = vsel %vm1144, %v5634, 0
      %v5821 = vsel %vm1144, %v5637, 0
      %v5824 = vsel %vm1144, %v5640, 0
      %v5827 = vsel %vm1144, %v5643, 0
      %v5830 = vsel %vm1144, %v5646, 0
      %v5833 = vsel %vm1144, %v5649, 0
      %v5836 = vsel %vm1144, %v5652, 0
      %v5839 = vsel %vm1144, %v5655, 0
      %v5842 = vsel %vm1144, %v5658, 0
      %v5845 = vsel %vm1144, %v5661, 0
      %v5848 = vsel %vm1144, %v5664, 0
      %v5851 = vsel %vm1144, %v5667, 0
      %v5854 = vsel %vm1144, %v5670, 0
      %v5857 = vsel %vm1144, %v5673, 0
      %v5860 = vsel %vm1144, %v5676, 0
      %v5863 = vsel %vm1144, %v5679, 0
      %v5866 = vsel %vm1144, %v5682, 0
      %v5869 = vsel %vm1144, %v5685, 0
      %v5872 = vsel %vm1144, %v5688, 0
      %v5875 = vsel %vm1144, %v5691, 0
      %v5878 = vsel %vm1144, %v5694, 0
      %5880 = vmatprep.subr.mxu0 0.0
      %5881 = vmatpush1.msra.mxu0 %v5711
      %5882 = vmatprep.subr.mxu0 0.0
      %5883 = vmatpush1.msra.mxu0 %v5710
      %5884 = vmatprep.subr.mxu0 0.0
      %5885 = vmatpush1.msra.mxu0 %v5709
      %5886 = vmatprep.subr.mxu0 0.0
      %5887 = vmatpush1.msra.mxu0 %v5708
      %5888 = vmatprep.subr.mxu0 0.0
      %5889 = vmatpush1.msra.mxu0 %v5707
      %5890 = vmatprep.subr.mxu0 0.0
      %5891 = vmatpush1.msra.mxu0 %v5706
      %5892 = vmatprep.subr.mxu0 0.0
      %5893 = vmatpush1.msra.mxu0 %v5705
      %5894 = vmatprep.subr.mxu0 0.0
      %5895 = vmatpush1.msra.mxu0 %v5704
      %5896 = vmatprep.subr.mxu0 0.0
      %5897 = vmatpush1.msra.mxu0 %v5703
      %5898 = vmatprep.subr.mxu0 0.0
      %5899 = vmatpush1.msra.mxu0 %v5702
      %5900 = vmatprep.subr.mxu0 0.0
      %5901 = vmatpush1.msra.mxu0 %v5701
      %5902 = vmatprep.subr.mxu0 0.0
      %5903 = vmatpush1.msra.mxu0 %v5700
      %5904 = vmatprep.subr.mxu0 0.0
      %5905 = vmatpush1.msra.mxu0 %v5699
      %5906 = vmatprep.subr.mxu0 0.0
      %5907 = vmatpush1.msra.mxu0 %v5698
      %5908 = vmatprep.subr.mxu0 0.0
      %5909 = vmatpush1.msra.mxu0 %v5697
      %5910 = vmatprep.subr.mxu0 0.0
      %5911 = vmatpush1.msra.mxu0 %v5696
      %5912 = vmatprep.subr.mxu0 0.0
      %5913 = vmatpush2.msra.mxu0 %v5727
      %5914 = vmatprep.subr.mxu0 0.0
      %5915 = vmatpush2.msra.mxu0 %v5726
      %5916 = vmatprep.subr.mxu0 0.0
      %5917 = vmatpush2.msra.mxu0 %v5725
      %5918 = vmatprep.subr.mxu0 0.0
      %5919 = vmatpush2.msra.mxu0 %v5724
      %5920 = vmatprep.subr.mxu0 0.0
      %5921 = vmatpush2.msra.mxu0 %v5723
      %5922 = vmatprep.subr.mxu0 0.0
      %5923 = vmatpush2.msra.mxu0 %v5722
      %5924 = vmatprep.subr.mxu0 0.0
      %5925 = vmatpush2.msra.mxu0 %v5721
      %5926 = vmatprep.subr.mxu0 0.0
      %5927 = vmatpush2.msra.mxu0 %v5720
      %5928 = vmatprep.subr.mxu0 0.0
      %5929 = vmatpush2.msra.mxu0 %v5719
      %5930 = vmatprep.subr.mxu0 0.0
      %5931 = vmatpush2.msra.mxu0 %v5718
      %5932 = vmatprep.subr.mxu0 0.0
      %5933 = vmatpush2.msra.mxu0 %v5717
      %5934 = vmatprep.subr.mxu0 0.0
      %5935 = vmatpush2.msra.mxu0 %v5716
      %5936 = vmatprep.subr.mxu0 0.0
      %5937 = vmatpush2.msra.mxu0 %v5715
      %5938 = vmatprep.subr.mxu0 0.0
      %5939 = vmatpush2.msra.mxu0 %v5714
      %5940 = vmatprep.subr.mxu0 0.0
      %5941 = vmatpush2.msra.mxu0 %v5713
      %5942 = vmatprep.subr.mxu0 0.0
      %5943 = vmatpush2.msra.mxu0 %v5712
      %5944 = vmatprep.mubr.f32.mxu0 %v5552
      %5945 = vmatmul.mubr.f32.gmra.mxu0 %v5551
      %v5946 = vpop.f32.mrf.mxu0
      %v5947 = vadd.f32 0.0, %v5946
      %v5948 = vpop.f32.mrf.mxu0
      %5949 = vmatprep.mubr.f32.mxu0 %v5555
      %5950 = vmatmul.mubr.f32.gmra.mxu0 %v5554
      %v5951 = vpop.f32.mrf.mxu0
      %v5952 = vadd.f32 0.0, %v5951
      %v5953 = vpop.f32.mrf.mxu0
      %5954 = vmatprep.mubr.f32.mxu0 %v5558
      %5955 = vmatmul.mubr.f32.gmra.mxu0 %v5557
      %v5956 = vpop.f32.mrf.mxu0
      %v5957 = vadd.f32 0.0, %v5956
      %v5958 = vpop.f32.mrf.mxu0
      %5959 = vmatprep.mubr.f32.mxu0 %v5561
      %5960 = vmatmul.mubr.f32.gmra.mxu0 %v5560
      %v5961 = vpop.f32.mrf.mxu0
      %v5962 = vadd.f32 0.0, %v5961
      %v5963 = vpop.f32.mrf.mxu0
      %5964 = vmatprep.mubr.f32.mxu0 %v5564
      %5965 = vmatmul.mubr.f32.gmra.mxu0 %v5563
      %v5966 = vpop.f32.mrf.mxu0
      %v5967 = vadd.f32 0.0, %v5966
      %v5968 = vpop.f32.mrf.mxu0
      %5969 = vmatprep.mubr.f32.mxu0 %v5567
      %5970 = vmatmul.mubr.f32.gmra.mxu0 %v5566
      %v5971 = vpop.f32.mrf.mxu0
      %v5972 = vadd.f32 0.0, %v5971
      %v5973 = vpop.f32.mrf.mxu0
      %5974 = vmatprep.mubr.f32.mxu0 %v5570
      %5975 = vmatmul.mubr.f32.gmra.mxu0 %v5569
      %v5976 = vpop.f32.mrf.mxu0
      %v5977 = vadd.f32 0.0, %v5976
      %v5978 = vpop.f32.mrf.mxu0
      %5979 = vmatprep.mubr.f32.mxu0 %v5573
      %5980 = vmatmul.mubr.f32.gmra.mxu0 %v5572
      %v5981 = vpop.f32.mrf.mxu0
      %v5982 = vadd.f32 0.0, %v5981
      %v5983 = vpop.f32.mrf.mxu0
      %5984 = vmatprep.mubr.f32.mxu0 %v5576
      %5985 = vmatmul.mubr.f32.gmra.mxu0 %v5575
      %v5986 = vpop.f32.mrf.mxu0
      %v5987 = vadd.f32 0.0, %v5986
      %v5988 = vpop.f32.mrf.mxu0
      %5989 = vmatprep.mubr.f32.mxu0 %v5579
      %5990 = vmatmul.mubr.f32.gmra.mxu0 %v5578
      %v5991 = vpop.f32.mrf.mxu0
      %v5992 = vadd.f32 0.0, %v5991
      %v5993 = vpop.f32.mrf.mxu0
      %5994 = vmatprep.mubr.f32.mxu0 %v5582
      %5995 = vmatmul.mubr.f32.gmra.mxu0 %v5581
      %v5996 = vpop.f32.mrf.mxu0
      %v5997 = vadd.f32 0.0, %v5996
      %v5998 = vpop.f32.mrf.mxu0
      %5999 = vmatprep.mubr.f32.mxu0 %v5585
      %6000 = vmatmul.mubr.f32.gmra.mxu0 %v5584
      %v6001 = vpop.f32.mrf.mxu0
      %v6002 = vadd.f32 0.0, %v6001
      %v6003 = vpop.f32.mrf.mxu0
      %6004 = vmatprep.mubr.f32.mxu0 %v5588
      %6005 = vmatmul.mubr.f32.gmra.mxu0 %v5587
      %v6006 = vpop.f32.mrf.mxu0
      %v6007 = vadd.f32 0.0, %v6006
      %v6008 = vpop.f32.mrf.mxu0
      %6009 = vmatprep.mubr.f32.mxu0 %v5591
      %6010 = vmatmul.mubr.f32.gmra.mxu0 %v5590
      %v6011 = vpop.f32.mrf.mxu0
      %v6012 = vadd.f32 0.0, %v6011
      %v6013 = vpop.f32.mrf.mxu0
      %6014 = vmatprep.mubr.f32.mxu0 %v5594
      %6015 = vmatmul.mubr.f32.gmra.mxu0 %v5593
      %v6016 = vpop.f32.mrf.mxu0
      %v6017 = vadd.f32 0.0, %v6016
      %v6018 = vpop.f32.mrf.mxu0
      %6019 = vmatprep.mubr.f32.mxu0 %v5597
      %6020 = vmatmul.mubr.f32.gmra.mxu0 %v5596
      %v6021 = vpop.f32.mrf.mxu0
      %v6022 = vadd.f32 0.0, %v6021
      %v6023 = vpop.f32.mrf.mxu0
      %6024 = vmatprep.mubr.f32.mxu0 %v5600
      %6025 = vmatmul.mubr.f32.gmra.mxu0 %v5599
      %v6026 = vpop.f32.mrf.mxu0
      %v6027 = vadd.f32 0.0, %v6026
      %v6028 = vpop.f32.mrf.mxu0
      %6029 = vmatprep.mubr.f32.mxu0 %v5603
      %6030 = vmatmul.mubr.f32.gmra.mxu0 %v5602
      %v6031 = vpop.f32.mrf.mxu0
      %v6032 = vadd.f32 0.0, %v6031
      %v6033 = vpop.f32.mrf.mxu0
      %6034 = vmatprep.mubr.f32.mxu0 %v5606
      %6035 = vmatmul.mubr.f32.gmra.mxu0 %v5605
      %v6036 = vpop.f32.mrf.mxu0
      %v6037 = vadd.f32 0.0, %v6036
      %v6038 = vpop.f32.mrf.mxu0
      %6039 = vmatprep.mubr.f32.mxu0 %v5609
      %6040 = vmatmul.mubr.f32.gmra.mxu0 %v5608
      %v6041 = vpop.f32.mrf.mxu0
      %v6042 = vadd.f32 0.0, %v6041
      %v6043 = vpop.f32.mrf.mxu0
      %6044 = vmatprep.mubr.f32.mxu0 %v5612
      %6045 = vmatmul.mubr.f32.gmra.mxu0 %v5611
      %v6046 = vpop.f32.mrf.mxu0
      %v6047 = vadd.f32 0.0, %v6046
      %v6048 = vpop.f32.mrf.mxu0
      %6049 = vmatprep.mubr.f32.mxu0 %v5615
      %6050 = vmatmul.mubr.f32.gmra.mxu0 %v5614
      %v6051 = vpop.f32.mrf.mxu0
      %v6052 = vadd.f32 0.0, %v6051
      %v6053 = vpop.f32.mrf.mxu0
      %6054 = vmatprep.mubr.f32.mxu0 %v5618
      %6055 = vmatmul.mubr.f32.gmra.mxu0 %v5617
      %v6056 = vpop.f32.mrf.mxu0
      %v6057 = vadd.f32 0.0, %v6056
      %v6058 = vpop.f32.mrf.mxu0
      %6059 = vmatprep.mubr.f32.mxu0 %v5621
      %6060 = vmatmul.mubr.f32.gmra.mxu0 %v5620
      %v6061 = vpop.f32.mrf.mxu0
      %v6062 = vadd.f32 0.0, %v6061
      %v6063 = vpop.f32.mrf.mxu0
      %6064 = vmatprep.mubr.f32.mxu0 %v5624
      %6065 = vmatmul.mubr.f32.gmra.mxu0 %v5623
      %v6066 = vpop.f32.mrf.mxu0
      %v6067 = vadd.f32 0.0, %v6066
      %v6068 = vpop.f32.mrf.mxu0
      %6069 = vmatprep.mubr.f32.mxu0 %v5627
      %6070 = vmatmul.mubr.f32.gmra.mxu0 %v5626
      %v6071 = vpop.f32.mrf.mxu0
      %v6072 = vadd.f32 0.0, %v6071
      %v6073 = vpop.f32.mrf.mxu0
      %6074 = vmatprep.mubr.f32.mxu0 %v5630
      %6075 = vmatmul.mubr.f32.gmra.mxu0 %v5629
      %v6076 = vpop.f32.mrf.mxu0
      %v6077 = vadd.f32 0.0, %v6076
      %v6078 = vpop.f32.mrf.mxu0
      %6079 = vmatprep.mubr.f32.mxu0 %v5633
      %6080 = vmatmul.mubr.f32.gmra.mxu0 %v5632
      %v6081 = vpop.f32.mrf.mxu0
      %v6082 = vadd.f32 0.0, %v6081
      %v6083 = vpop.f32.mrf.mxu0
      %6084 = vmatprep.mubr.f32.mxu0 %v5636
      %6085 = vmatmul.mubr.f32.gmra.mxu0 %v5635
      %v6086 = vpop.f32.mrf.mxu0
      %v6087 = vadd.f32 0.0, %v6086
      %v6088 = vpop.f32.mrf.mxu0
      %6089 = vmatprep.mubr.f32.mxu0 %v5639
      %6090 = vmatmul.mubr.f32.gmra.mxu0 %v5638
      %v6091 = vpop.f32.mrf.mxu0
      %v6092 = vadd.f32 0.0, %v6091
      %v6093 = vpop.f32.mrf.mxu0
      %6094 = vmatprep.mubr.f32.mxu0 %v5642
      %6095 = vmatmul.mubr.f32.gmra.mxu0 %v5641
      %v6096 = vpop.f32.mrf.mxu0
      %v6097 = vadd.f32 0.0, %v6096
      %v6098 = vpop.f32.mrf.mxu0
      %6099 = vmatprep.mubr.f32.mxu0 %v5645
      %6100 = vmatmul.mubr.f32.gmra.mxu0 %v5644
      %v6101 = vpop.f32.mrf.mxu0
      %v6102 = vadd.f32 0.0, %v6101
      %v6103 = vpop.f32.mrf.mxu0
      %6104 = vmatprep.mubr.f32.mxu0 %v5648
      %6105 = vmatmul.mubr.f32.gmra.mxu0 %v5647
      %v6106 = vpop.f32.mrf.mxu0
      %v6107 = vadd.f32 0.0, %v6106
      %v6108 = vpop.f32.mrf.mxu0
      %6109 = vmatprep.mubr.f32.mxu0 %v5651
      %6110 = vmatmul.mubr.f32.gmra.mxu0 %v5650
      %v6111 = vpop.f32.mrf.mxu0
      %v6112 = vadd.f32 0.0, %v6111
      %v6113 = vpop.f32.mrf.mxu0
      %6114 = vmatprep.mubr.f32.mxu0 %v5654
      %6115 = vmatmul.mubr.f32.gmra.mxu0 %v5653
      %v6116 = vpop.f32.mrf.mxu0
      %v6117 = vadd.f32 0.0, %v6116
      %v6118 = vpop.f32.mrf.mxu0
      %6119 = vmatprep.mubr.f32.mxu0 %v5657
      %6120 = vmatmul.mubr.f32.gmra.mxu0 %v5656
      %v6121 = vpop.f32.mrf.mxu0
      %v6122 = vadd.f32 0.0, %v6121
      %v6123 = vpop.f32.mrf.mxu0
      %6124 = vmatprep.mubr.f32.mxu0 %v5660
      %6125 = vmatmul.mubr.f32.gmra.mxu0 %v5659
      %v6126 = vpop.f32.mrf.mxu0
      %v6127 = vadd.f32 0.0, %v6126
      %v6128 = vpop.f32.mrf.mxu0
      %6129 = vmatprep.mubr.f32.mxu0 %v5663
      %6130 = vmatmul.mubr.f32.gmra.mxu0 %v5662
      %v6131 = vpop.f32.mrf.mxu0
      %v6132 = vadd.f32 0.0, %v6131
      %v6133 = vpop.f32.mrf.mxu0
      %6134 = vmatprep.mubr.f32.mxu0 %v5666
      %6135 = vmatmul.mubr.f32.gmra.mxu0 %v5665
      %v6136 = vpop.f32.mrf.mxu0
      %v6137 = vadd.f32 0.0, %v6136
      %v6138 = vpop.f32.mrf.mxu0
      %6139 = vmatprep.mubr.f32.mxu0 %v5669
      %6140 = vmatmul.mubr.f32.gmra.mxu0 %v5668
      %v6141 = vpop.f32.mrf.mxu0
      %v6142 = vadd.f32 0.0, %v6141
      %v6143 = vpop.f32.mrf.mxu0
      %6144 = vmatprep.mubr.f32.mxu0 %v5672
      %6145 = vmatmul.mubr.f32.gmra.mxu0 %v5671
      %v6146 = vpop.f32.mrf.mxu0
      %v6147 = vadd.f32 0.0, %v6146
      %v6148 = vpop.f32.mrf.mxu0
      %6149 = vmatprep.mubr.f32.mxu0 %v5675
      %6150 = vmatmul.mubr.f32.gmra.mxu0 %v5674
      %v6151 = vpop.f32.mrf.mxu0
      %v6152 = vadd.f32 0.0, %v6151
      %v6153 = vpop.f32.mrf.mxu0
      %6154 = vmatprep.mubr.f32.mxu0 %v5678
      %6155 = vmatmul.mubr.f32.gmra.mxu0 %v5677
      %v6156 = vpop.f32.mrf.mxu0
      %v6157 = vadd.f32 0.0, %v6156
      %v6158 = vpop.f32.mrf.mxu0
      %6159 = vmatprep.mubr.f32.mxu0 %v5681
      %6160 = vmatmul.mubr.f32.gmra.mxu0 %v5680
      %v6161 = vpop.f32.mrf.mxu0
      %v6162 = vadd.f32 0.0, %v6161
      %v6163 = vpop.f32.mrf.mxu0
      %6164 = vmatprep.mubr.f32.mxu0 %v5684
      %6165 = vmatmul.mubr.f32.gmra.mxu0 %v5683
      %v6166 = vpop.f32.mrf.mxu0
      %v6167 = vadd.f32 0.0, %v6166
      %v6168 = vpop.f32.mrf.mxu0
      %6169 = vmatprep.mubr.f32.mxu0 %v5687
      %6170 = vmatmul.mubr.f32.gmra.mxu0 %v5686
      %v6171 = vpop.f32.mrf.mxu0
      %v6172 = vadd.f32 0.0, %v6171
      %v6173 = vpop.f32.mrf.mxu0
      %6174 = vmatprep.mubr.f32.mxu0 %v5690
      %6175 = vmatmul.mubr.f32.gmra.mxu0 %v5689
      %v6176 = vpop.f32.mrf.mxu0
      %v6177 = vadd.f32 0.0, %v6176
      %v6178 = vpop.f32.mrf.mxu0
      %6179 = vmatprep.mubr.f32.mxu0 %v5693
      %6180 = vmatmul.mubr.f32.gmra.mxu0 %v5692
      %v6181 = vpop.f32.mrf.mxu0
      %v6182 = vadd.f32 0.0, %v6181
      %v6183 = vpop.f32.mrf.mxu0
      %6184 = vdwg.mxu0
      %6185 = vmatprep.subr.mxu0 0.0
      %6186 = vmatpush1.msra.mxu0 0.0
      %6187 = vmatprep.subr.mxu0 0.0
      %6188 = vmatpush1.msra.mxu0 0.0
      %6189 = vmatprep.subr.mxu0 0.0
      %6190 = vmatpush1.msra.mxu0 0.0
      %6191 = vmatprep.subr.mxu0 0.0
      %6192 = vmatpush1.msra.mxu0 0.0
      %6193 = vmatprep.subr.mxu0 0.0
      %6194 = vmatpush1.msra.mxu0 0.0
      %6195 = vmatprep.subr.mxu0 0.0
      %6196 = vmatpush1.msra.mxu0 0.0
      %6197 = vmatprep.subr.mxu0 0.0
      %6198 = vmatpush1.msra.mxu0 0.0
      %6199 = vmatprep.subr.mxu0 0.0
      %6200 = vmatpush1.msra.mxu0 0.0
      %6201 = vmatprep.subr.mxu0 0.0
      %6202 = vmatpush1.msra.mxu0 %v5735
      %6203 = vmatprep.subr.mxu0 0.0
      %6204 = vmatpush1.msra.mxu0 %v5734
      %6205 = vmatprep.subr.mxu0 0.0
      %6206 = vmatpush1.msra.mxu0 %v5733
      %6207 = vmatprep.subr.mxu0 0.0
      %6208 = vmatpush1.msra.mxu0 %v5732
      %6209 = vmatprep.subr.mxu0 0.0
      %6210 = vmatpush1.msra.mxu0 %v5731
      %6211 = vmatprep.subr.mxu0 0.0
      %6212 = vmatpush1.msra.mxu0 %v5730
      %6213 = vmatprep.subr.mxu0 0.0
      %6214 = vmatpush1.msra.mxu0 %v5729
      %6215 = vmatprep.subr.mxu0 0.0
      %6216 = vmatpush1.msra.mxu0 %v5728
      %6217 = vmatprep.subr.mxu0 0.0
      %6218 = vmatpush2.msra.mxu0 0.0
      %6219 = vmatprep.subr.mxu0 0.0
      %6220 = vmatpush2.msra.mxu0 0.0
      %6221 = vmatprep.subr.mxu0 0.0
      %6222 = vmatpush2.msra.mxu0 0.0
      %6223 = vmatprep.subr.mxu0 0.0
      %6224 = vmatpush2.msra.mxu0 0.0
      %6225 = vmatprep.subr.mxu0 0.0
      %6226 = vmatpush2.msra.mxu0 0.0
      %6227 = vmatprep.subr.mxu0 0.0
      %6228 = vmatpush2.msra.mxu0 0.0
      %6229 = vmatprep.subr.mxu0 0.0
      %6230 = vmatpush2.msra.mxu0 0.0
      %6231 = vmatprep.subr.mxu0 0.0
      %6232 = vmatpush2.msra.mxu0 0.0
      %6233 = vmatprep.subr.mxu0 0.0
      %6234 = vmatpush2.msra.mxu0 0.0
      %6235 = vmatprep.subr.mxu0 0.0
      %6236 = vmatpush2.msra.mxu0 0.0
      %6237 = vmatprep.subr.mxu0 0.0
      %6238 = vmatpush2.msra.mxu0 0.0
      %6239 = vmatprep.subr.mxu0 0.0
      %6240 = vmatpush2.msra.mxu0 0.0
      %6241 = vmatprep.subr.mxu0 0.0
      %6242 = vmatpush2.msra.mxu0 0.0
      %6243 = vmatprep.subr.mxu0 0.0
      %6244 = vmatpush2.msra.mxu0 0.0
      %6245 = vmatprep.subr.mxu0 0.0
      %6246 = vmatpush2.msra.mxu0 0.0
      %6247 = vmatprep.subr.mxu0 0.0
      %6248 = vmatpush2.msra.mxu0 0.0
      %6249 = vmatprep.mubr.f32.mxu0 0.0
      %6250 = vmatmul.mubr.f32.gmra.mxu0 %v5737
      %v6251 = vpop.f32.mrf.mxu0
      %v6252 = vadd.f32 %v5947, %v6251
      %v6253 = vpop.f32.mrf.mxu0
      %6254 = vmatprep.mubr.f32.mxu0 0.0
      %6255 = vmatmul.mubr.f32.gmra.mxu0 %v5740
      %v6256 = vpop.f32.mrf.mxu0
      %v6257 = vadd.f32 %v5952, %v6256
      %v6258 = vpop.f32.mrf.mxu0
      %6259 = vmatprep.mubr.f32.mxu0 0.0
      %6260 = vmatmul.mubr.f32.gmra.mxu0 %v5743
      %v6261 = vpop.f32.mrf.mxu0
      %v6262 = vadd.f32 %v5957, %v6261
      %v6263 = vpop.f32.mrf.mxu0
      %6264 = vmatprep.mubr.f32.mxu0 0.0
      %6265 = vmatmul.mubr.f32.gmra.mxu0 %v5746
      %v6266 = vpop.f32.mrf.mxu0
      %v6267 = vadd.f32 %v5962, %v6266
      %v6268 = vpop.f32.mrf.mxu0
      %6269 = vmatprep.mubr.f32.mxu0 0.0
      %6270 = vmatmul.mubr.f32.gmra.mxu0 %v5749
      %v6271 = vpop.f32.mrf.mxu0
      %v6272 = vadd.f32 %v5967, %v6271
      %v6273 = vpop.f32.mrf.mxu0
      %6274 = vmatprep.mubr.f32.mxu0 0.0
      %6275 = vmatmul.mubr.f32.gmra.mxu0 %v5752
      %v6276 = vpop.f32.mrf.mxu0
      %v6277 = vadd.f32 %v5972, %v6276
      %v6278 = vpop.f32.mrf.mxu0
      %6279 = vmatprep.mubr.f32.mxu0 0.0
      %6280 = vmatmul.mubr.f32.gmra.mxu0 %v5755
      %v6281 = vpop.f32.mrf.mxu0
      %v6282 = vadd.f32 %v5977, %v6281
      %v6283 = vpop.f32.mrf.mxu0
      %6284 = vmatprep.mubr.f32.mxu0 0.0
      %6285 = vmatmul.mubr.f32.gmra.mxu0 %v5758
      %v6286 = vpop.f32.mrf.mxu0
      %v6287 = vadd.f32 %v5982, %v6286
      %v6288 = vpop.f32.mrf.mxu0
      %6289 = vmatprep.mubr.f32.mxu0 0.0
      %6290 = vmatmul.mubr.f32.gmra.mxu0 %v5761
      %v6291 = vpop.f32.mrf.mxu0
      %v6292 = vadd.f32 %v5987, %v6291
      %v6293 = vpop.f32.mrf.mxu0
      %6294 = vmatprep.mubr.f32.mxu0 0.0
      %6295 = vmatmul.mubr.f32.gmra.mxu0 %v5764
      %v6296 = vpop.f32.mrf.mxu0
      %v6297 = vadd.f32 %v5992, %v6296
      %v6298 = vpop.f32.mrf.mxu0
      %6299 = vmatprep.mubr.f32.mxu0 0.0
      %6300 = vmatmul.mubr.f32.gmra.mxu0 %v5767
      %v6301 = vpop.f32.mrf.mxu0
      %v6302 = vadd.f32 %v5997, %v6301
      %v6303 = vpop.f32.mrf.mxu0
      %6304 = vmatprep.mubr.f32.mxu0 0.0
      %6305 = vmatmul.mubr.f32.gmra.mxu0 %v5770
      %v6306 = vpop.f32.mrf.mxu0
      %v6307 = vadd.f32 %v6002, %v6306
      %v6308 = vpop.f32.mrf.mxu0
      %6309 = vmatprep.mubr.f32.mxu0 0.0
      %6310 = vmatmul.mubr.f32.gmra.mxu0 %v5773
      %v6311 = vpop.f32.mrf.mxu0
      %v6312 = vadd.f32 %v6007, %v6311
      %v6313 = vpop.f32.mrf.mxu0
      %6314 = vmatprep.mubr.f32.mxu0 0.0
      %6315 = vmatmul.mubr.f32.gmra.mxu0 %v5776
      %v6316 = vpop.f32.mrf.mxu0
      %v6317 = vadd.f32 %v6012, %v6316
      %v6318 = vpop.f32.mrf.mxu0
      %6319 = vmatprep.mubr.f32.mxu0 0.0
      %6320 = vmatmul.mubr.f32.gmra.mxu0 %v5779
      %v6321 = vpop.f32.mrf.mxu0
      %v6322 = vadd.f32 %v6017, %v6321
      %v6323 = vpop.f32.mrf.mxu0
      %6324 = vmatprep.mubr.f32.mxu0 0.0
      %6325 = vmatmul.mubr.f32.gmra.mxu0 %v5782
      %v6326 = vpop.f32.mrf.mxu0
      %v6327 = vadd.f32 %v6022, %v6326
      %v6328 = vpop.f32.mrf.mxu0
      %6329 = vmatprep.mubr.f32.mxu0 0.0
      %6330 = vmatmul.mubr.f32.gmra.mxu0 %v5785
      %v6331 = vpop.f32.mrf.mxu0
      %v6332 = vadd.f32 %v6027, %v6331
      %v6333 = vpop.f32.mrf.mxu0
      %6334 = vmatprep.mubr.f32.mxu0 0.0
      %6335 = vmatmul.mubr.f32.gmra.mxu0 %v5788
      %v6336 = vpop.f32.mrf.mxu0
      %v6337 = vadd.f32 %v6032, %v6336
      %v6338 = vpop.f32.mrf.mxu0
      %6339 = vmatprep.mubr.f32.mxu0 0.0
      %6340 = vmatmul.mubr.f32.gmra.mxu0 %v5791
      %v6341 = vpop.f32.mrf.mxu0
      %v6342 = vadd.f32 %v6037, %v6341
      %v6343 = vpop.f32.mrf.mxu0
      %6344 = vmatprep.mubr.f32.mxu0 0.0
      %6345 = vmatmul.mubr.f32.gmra.mxu0 %v5794
      %v6346 = vpop.f32.mrf.mxu0
      %v6347 = vadd.f32 %v6042, %v6346
      %v6348 = vpop.f32.mrf.mxu0
      %6349 = vmatprep.mubr.f32.mxu0 0.0
      %6350 = vmatmul.mubr.f32.gmra.mxu0 %v5797
      %v6351 = vpop.f32.mrf.mxu0
      %v6352 = vadd.f32 %v6047, %v6351
      %v6353 = vpop.f32.mrf.mxu0
      %6354 = vmatprep.mubr.f32.mxu0 0.0
      %6355 = vmatmul.mubr.f32.gmra.mxu0 %v5800
      %v6356 = vpop.f32.mrf.mxu0
      %v6357 = vadd.f32 %v6052, %v6356
      %v6358 = vpop.f32.mrf.mxu0
      %6359 = vmatprep.mubr.f32.mxu0 0.0
      %6360 = vmatmul.mubr.f32.gmra.mxu0 %v5803
      %v6361 = vpop.f32.mrf.mxu0
      %v6362 = vadd.f32 %v6057, %v6361
      %v6363 = vpop.f32.mrf.mxu0
      %6364 = vmatprep.mubr.f32.mxu0 0.0
      %6365 = vmatmul.mubr.f32.gmra.mxu0 %v5806
      %v6366 = vpop.f32.mrf.mxu0
      %v6367 = vadd.f32 %v6062, %v6366
      %v6368 = vpop.f32.mrf.mxu0
      %6369 = vmatprep.mubr.f32.mxu0 0.0
      %6370 = vmatmul.mubr.f32.gmra.mxu0 %v5809
      %v6371 = vpop.f32.mrf.mxu0
      %v6372 = vadd.f32 %v6067, %v6371
      %v6373 = vpop.f32.mrf.mxu0
      %6374 = vmatprep.mubr.f32.mxu0 0.0
      %6375 = vmatmul.mubr.f32.gmra.mxu0 %v5812
      %v6376 = vpop.f32.mrf.mxu0
      %v6377 = vadd.f32 %v6072, %v6376
      %v6378 = vpop.f32.mrf.mxu0
      %6379 = vmatprep.mubr.f32.mxu0 0.0
      %6380 = vmatmul.mubr.f32.gmra.mxu0 %v5815
      %v6381 = vpop.f32.mrf.mxu0
      %v6382 = vadd.f32 %v6077, %v6381
      %v6383 = vpop.f32.mrf.mxu0
      %6384 = vmatprep.mubr.f32.mxu0 0.0
      %6385 = vmatmul.mubr.f32.gmra.mxu0 %v5818
      %v6386 = vpop.f32.mrf.mxu0
      %v6387 = vadd.f32 %v6082, %v6386
      %v6388 = vpop.f32.mrf.mxu0
      %6389 = vmatprep.mubr.f32.mxu0 0.0
      %6390 = vmatmul.mubr.f32.gmra.mxu0 %v5821
      %v6391 = vpop.f32.mrf.mxu0
      %v6392 = vadd.f32 %v6087, %v6391
      %v6393 = vpop.f32.mrf.mxu0
      %6394 = vmatprep.mubr.f32.mxu0 0.0
      %6395 = vmatmul.mubr.f32.gmra.mxu0 %v5824
      %v6396 = vpop.f32.mrf.mxu0
      %v6397 = vadd.f32 %v6092, %v6396
      %v6398 = vpop.f32.mrf.mxu0
      %6399 = vmatprep.mubr.f32.mxu0 0.0
      %6400 = vmatmul.mubr.f32.gmra.mxu0 %v5827
      %v6401 = vpop.f32.mrf.mxu0
      %v6402 = vadd.f32 %v6097, %v6401
      %v6403 = vpop.f32.mrf.mxu0
      %6404 = vmatprep.mubr.f32.mxu0 0.0
      %6405 = vmatmul.mubr.f32.gmra.mxu0 %v5830
      %v6406 = vpop.f32.mrf.mxu0
      %v6407 = vadd.f32 %v6102, %v6406
      %v6408 = vpop.f32.mrf.mxu0
      %6409 = vmatprep.mubr.f32.mxu0 0.0
      %6410 = vmatmul.mubr.f32.gmra.mxu0 %v5833
      %v6411 = vpop.f32.mrf.mxu0
      %v6412 = vadd.f32 %v6107, %v6411
      %v6413 = vpop.f32.mrf.mxu0
      %6414 = vmatprep.mubr.f32.mxu0 0.0
      %6415 = vmatmul.mubr.f32.gmra.mxu0 %v5836
      %v6416 = vpop.f32.mrf.mxu0
      %v6417 = vadd.f32 %v6112, %v6416
      %v6418 = vpop.f32.mrf.mxu0
      %6419 = vmatprep.mubr.f32.mxu0 0.0
      %6420 = vmatmul.mubr.f32.gmra.mxu0 %v5839
      %v6421 = vpop.f32.mrf.mxu0
      %v6422 = vadd.f32 %v6117, %v6421
      %v6423 = vpop.f32.mrf.mxu0
      %6424 = vmatprep.mubr.f32.mxu0 0.0
      %6425 = vmatmul.mubr.f32.gmra.mxu0 %v5842
      %v6426 = vpop.f32.mrf.mxu0
      %v6427 = vadd.f32 %v6122, %v6426
      %v6428 = vpop.f32.mrf.mxu0
      %6429 = vmatprep.mubr.f32.mxu0 0.0
      %6430 = vmatmul.mubr.f32.gmra.mxu0 %v5845
      %v6431 = vpop.f32.mrf.mxu0
      %v6432 = vadd.f32 %v6127, %v6431
      %v6433 = vpop.f32.mrf.mxu0
      %6434 = vmatprep.mubr.f32.mxu0 0.0
      %6435 = vmatmul.mubr.f32.gmra.mxu0 %v5848
      %v6436 = vpop.f32.mrf.mxu0
      %v6437 = vadd.f32 %v6132, %v6436
      %v6438 = vpop.f32.mrf.mxu0
      %6439 = vmatprep.mubr.f32.mxu0 0.0
      %6440 = vmatmul.mubr.f32.gmra.mxu0 %v5851
      %v6441 = vpop.f32.mrf.mxu0
      %v6442 = vadd.f32 %v6137, %v6441
      %v6443 = vpop.f32.mrf.mxu0
      %6444 = vmatprep.mubr.f32.mxu0 0.0
      %6445 = vmatmul.mubr.f32.gmra.mxu0 %v5854
      %v6446 = vpop.f32.mrf.mxu0
      %v6447 = vadd.f32 %v6142, %v6446
      %v6448 = vpop.f32.mrf.mxu0
      %6449 = vmatprep.mubr.f32.mxu0 0.0
      %6450 = vmatmul.mubr.f32.gmra.mxu0 %v5857
      %v6451 = vpop.f32.mrf.mxu0
      %v6452 = vadd.f32 %v6147, %v6451
      %v6453 = vpop.f32.mrf.mxu0
      %6454 = vmatprep.mubr.f32.mxu0 0.0
      %6455 = vmatmul.mubr.f32.gmra.mxu0 %v5860
      %v6456 = vpop.f32.mrf.mxu0
      %v6457 = vadd.f32 %v6152, %v6456
      %v6458 = vpop.f32.mrf.mxu0
      %6459 = vmatprep.mubr.f32.mxu0 0.0
      %6460 = vmatmul.mubr.f32.gmra.mxu0 %v5863
      %v6461 = vpop.f32.mrf.mxu0
      %v6462 = vadd.f32 %v6157, %v6461
      %v6463 = vpop.f32.mrf.mxu0
      %6464 = vmatprep.mubr.f32.mxu0 0.0
      %6465 = vmatmul.mubr.f32.gmra.mxu0 %v5866
      %v6466 = vpop.f32.mrf.mxu0
      %v6467 = vadd.f32 %v6162, %v6466
      %v6468 = vpop.f32.mrf.mxu0
      %6469 = vmatprep.mubr.f32.mxu0 0.0
      %6470 = vmatmul.mubr.f32.gmra.mxu0 %v5869
      %v6471 = vpop.f32.mrf.mxu0
      %v6472 = vadd.f32 %v6167, %v6471
      %v6473 = vpop.f32.mrf.mxu0
      %6474 = vmatprep.mubr.f32.mxu0 0.0
      %6475 = vmatmul.mubr.f32.gmra.mxu0 %v5872
      %v6476 = vpop.f32.mrf.mxu0
      %v6477 = vadd.f32 %v6172, %v6476
      %v6478 = vpop.f32.mrf.mxu0
      %6479 = vmatprep.mubr.f32.mxu0 0.0
      %6480 = vmatmul.mubr.f32.gmra.mxu0 %v5875
      %v6481 = vpop.f32.mrf.mxu0
      %v6482 = vadd.f32 %v6177, %v6481
      %v6483 = vpop.f32.mrf.mxu0
      %6484 = vmatprep.mubr.f32.mxu0 0.0
      %6485 = vmatmul.mubr.f32.gmra.mxu0 %v5878
      %v6486 = vpop.f32.mrf.mxu0
      %v6487 = vadd.f32 %v6182, %v6486
      %v6488 = vpop.f32.mrf.mxu0
      %6489 = vdwg.mxu0
      %v6490 = vadd.f32 %v5503, %v6252
      %v6491 = vadd.f32 %v5504, %v6257
      %v6492 = vadd.f32 %v5505, %v6262
      %v6493 = vadd.f32 %v5506, %v6267
      %v6494 = vadd.f32 %v5507, %v6272
      %v6495 = vadd.f32 %v5508, %v6277
      %v6496 = vadd.f32 %v5509, %v6282
      %v6497 = vadd.f32 %v5510, %v6287
      %v6498 = vadd.f32 %v5511, %v6292
      %v6499 = vadd.f32 %v5512, %v6297
      %v6500 = vadd.f32 %v5513, %v6302
      %v6501 = vadd.f32 %v5514, %v6307
      %v6502 = vadd.f32 %v5515, %v6312
      %v6503 = vadd.f32 %v5516, %v6317
      %v6504 = vadd.f32 %v5517, %v6322
      %v6505 = vadd.f32 %v5518, %v6327
      %v6506 = vadd.f32 %v5519, %v6332
      %v6507 = vadd.f32 %v5520, %v6337
      %v6508 = vadd.f32 %v5521, %v6342
      %v6509 = vadd.f32 %v5522, %v6347
      %v6510 = vadd.f32 %v5523, %v6352
      %v6511 = vadd.f32 %v5524, %v6357
      %v6512 = vadd.f32 %v5525, %v6362
      %v6513 = vadd.f32 %v5526, %v6367
      %v6514 = vadd.f32 %v5527, %v6372
      %v6515 = vadd.f32 %v5528, %v6377
      %v6516 = vadd.f32 %v5529, %v6382
      %v6517 = vadd.f32 %v5530, %v6387
      %v6518 = vadd.f32 %v5531, %v6392
      %v6519 = vadd.f32 %v5532, %v6397
      %v6520 = vadd.f32 %v5533, %v6402
      %v6521 = vadd.f32 %v5534, %v6407
      %v6522 = vadd.f32 %v5535, %v6412
      %v6523 = vadd.f32 %v5536, %v6417
      %v6524 = vadd.f32 %v5537, %v6422
      %v6525 = vadd.f32 %v5538, %v6427
      %v6526 = vadd.f32 %v5539, %v6432
      %v6527 = vadd.f32 %v5540, %v6437
      %v6528 = vadd.f32 %v5541, %v6442
      %v6529 = vadd.f32 %v5542, %v6447
      %v6530 = vadd.f32 %v5543, %v6452
      %v6531 = vadd.f32 %v5544, %v6457
      %v6532 = vadd.f32 %v5545, %v6462
      %v6533 = vadd.f32 %v5546, %v6467
      %v6534 = vadd.f32 %v5547, %v6472
      %v6535 = vadd.f32 %v5548, %v6477
      %v6536 = vadd.f32 %v5549, %v6482
      %v6537 = vadd.f32 %v5550, %v6487
      %v6538 = vld [vmem:[#allocation3 + $0x120] sm:$0xff]
      %v6539 = vld [vmem:[#allocation3 + $0x128] sm:$0xff]
      %v6540 = vld [vmem:[#allocation3 + $0x130] sm:$0xff]
      %v6541 = vld [vmem:[#allocation3 + $0x138] sm:$0xff]
      %v6542 = vld [vmem:[#allocation3 + $0x140] sm:$0xff]
      %v6543 = vld [vmem:[#allocation3 + $0x148] sm:$0xff]
      %v6544 = vld [vmem:[#allocation3 + $0x150] sm:$0xff]
      %v6545 = vld [vmem:[#allocation3 + $0x158] sm:$0xff]
      %v6546 = vld [vmem:[#allocation3 + $0x160] sm:$0xff]
      %v6547 = vld [vmem:[#allocation3 + $0x168] sm:$0xff]
      %v6548 = vld [vmem:[#allocation3 + $0x170] sm:$0xff]
      %v6549 = vld [vmem:[#allocation3 + $0x178] sm:$0xff]
      %v6550 = vld [vmem:[#allocation3 + $0x180] sm:$0xff]
      %v6551 = vld [vmem:[#allocation3 + $0x188] sm:$0xff]
      %v6552 = vld [vmem:[#allocation3 + $0x190] sm:$0xff]
      %v6553 = vld [vmem:[#allocation3 + $0x198] sm:$0xff]
      %v6554 = vld [vmem:[#allocation3 + $0x1a0] sm:$0xff]
      %v6555 = vld [vmem:[#allocation3 + $0x1a8] sm:$0xff]
      %v6556 = vld [vmem:[#allocation3 + $0x1b0] sm:$0xff]
      %v6557 = vld [vmem:[#allocation3 + $0x1b8] sm:$0xff]
      %v6558 = vld [vmem:[#allocation3 + $0x1c0] sm:$0xff]
      %v6559 = vld [vmem:[#allocation3 + $0x1c8] sm:$0xff]
      %v6560 = vld [vmem:[#allocation3 + $0x1d0] sm:$0xff]
      %v6561 = vld [vmem:[#allocation3 + $0x1d8] sm:$0xff]
      %v6562 = vld [vmem:[#allocation3 + $0x1e0] sm:$0xff]
      %v6563 = vld [vmem:[#allocation3 + $0x1e8] sm:$0xff]
      %v6564 = vld [vmem:[#allocation3 + $0x1f0] sm:$0xff]
      %v6565 = vld [vmem:[#allocation3 + $0x1f8] sm:$0xff]
      %v6566 = vld [vmem:[#allocation3 + $0x200] sm:$0xff]
      %v6567 = vld [vmem:[#allocation3 + $0x208] sm:$0xff]
      %v6568 = vld [vmem:[#allocation3 + $0x210] sm:$0xff]
      %v6569 = vld [vmem:[#allocation3 + $0x218] sm:$0xff]
      %v6570 = vld [vmem:[#allocation3 + $0x220] sm:$0xff]
      %v6571 = vld [vmem:[#allocation3 + $0x228] sm:$0xff]
      %v6572 = vld [vmem:[#allocation3 + $0x230] sm:$0xff]
      %v6573 = vld [vmem:[#allocation3 + $0x238] sm:$0xff]
      %v6574 = vld [vmem:[#allocation3 + $0x240] sm:$0xff]
      %v6575 = vld [vmem:[#allocation3 + $0x248] sm:$0xff]
      %v6576 = vld [vmem:[#allocation3 + $0x250] sm:$0xff]
      %v6577 = vld [vmem:[#allocation3 + $0x258] sm:$0xff]
      %v6578 = vld [vmem:[#allocation3 + $0x260] sm:$0xff]
      %v6579 = vld [vmem:[#allocation3 + $0x268] sm:$0xff]
      %v6580 = vld [vmem:[#allocation3 + $0x270] sm:$0xff]
      %v6581 = vld [vmem:[#allocation3 + $0x278] sm:$0xff]
      %v6582 = vld [vmem:[#allocation3 + $0x280] sm:$0xff]
      %v6583 = vld [vmem:[#allocation3 + $0x288] sm:$0xff]
      %v6584 = vld [vmem:[#allocation3 + $0x290] sm:$0xff]
      %v6585 = vld [vmem:[#allocation3 + $0x298] sm:$0xff]
      %v6586 = vld [vmem:[#allocation3 + $0x2a0] sm:$0xff]
      %v6587 = vld [vmem:[#allocation3 + $0x2a8] sm:$0xff]
      %v6588 = vld [vmem:[#allocation3 + $0x2b0] sm:$0xff]
      %v6589 = vld [vmem:[#allocation3 + $0x2b8] sm:$0xff]
      %v6590 = vld [vmem:[#allocation3 + $0x2c0] sm:$0xff]
      %v6591 = vld [vmem:[#allocation3 + $0x2c8] sm:$0xff]
      %v6592 = vld [vmem:[#allocation3 + $0x2d0] sm:$0xff]
      %v6593 = vld [vmem:[#allocation3 + $0x2d8] sm:$0xff]
      %v6594 = vld [vmem:[#allocation3 + $0x2e0] sm:$0xff]
      %v6595 = vld [vmem:[#allocation3 + $0x2e8] sm:$0xff]
      %v6596 = vld [vmem:[#allocation3 + $0x2f0] sm:$0xff]
      %v6597 = vld [vmem:[#allocation3 + $0x2f8] sm:$0xff]
      %v6598 = vld [vmem:[#allocation3 + $0x300] sm:$0xff]
      %v6599 = vld [vmem:[#allocation3 + $0x308] sm:$0xff]
      %v6600 = vld [vmem:[#allocation3 + $0x310] sm:$0xff]
      %v6601 = vld [vmem:[#allocation3 + $0x318] sm:$0xff]
      %v6602 = vld [vmem:[#allocation3 + $0x320] sm:$0xff]
      %v6603 = vld [vmem:[#allocation3 + $0x328] sm:$0xff]
      %v6604 = vld [vmem:[#allocation3 + $0x330] sm:$0xff]
      %v6605 = vld [vmem:[#allocation3 + $0x338] sm:$0xff]
      %v6606 = vld [vmem:[#allocation3 + $0x340] sm:$0xff]
      %v6607 = vld [vmem:[#allocation3 + $0x348] sm:$0xff]
      %v6608 = vld [vmem:[#allocation3 + $0x350] sm:$0xff]
      %v6609 = vld [vmem:[#allocation3 + $0x358] sm:$0xff]
      %v6610 = vld [vmem:[#allocation3 + $0x360] sm:$0xff]
      %v6611 = vld [vmem:[#allocation3 + $0x368] sm:$0xff]
      %v6612 = vld [vmem:[#allocation3 + $0x370] sm:$0xff]
      %v6613 = vld [vmem:[#allocation3 + $0x378] sm:$0xff]
      %v6614 = vld [vmem:[#allocation3 + $0x380] sm:$0xff]
      %v6615 = vld [vmem:[#allocation3 + $0x388] sm:$0xff]
      %v6616 = vld [vmem:[#allocation3 + $0x390] sm:$0xff]
      %v6617 = vld [vmem:[#allocation3 + $0x398] sm:$0xff]
      %v6618 = vld [vmem:[#allocation3 + $0x3a0] sm:$0xff]
      %v6619 = vld [vmem:[#allocation3 + $0x3a8] sm:$0xff]
      %v6620 = vld [vmem:[#allocation3 + $0x3b0] sm:$0xff]
      %v6621 = vld [vmem:[#allocation3 + $0x3b8] sm:$0xff]
      %v6622 = vld [vmem:[#allocation3 + $0x3c0] sm:$0xff]
      %v6623 = vld [vmem:[#allocation3 + $0x3c8] sm:$0xff]
      %v6624 = vld [vmem:[#allocation3 + $0x3d0] sm:$0xff]
      %v6625 = vld [vmem:[#allocation3 + $0x3d8] sm:$0xff]
      %v6626 = vld [vmem:[#allocation3 + $0x3e0] sm:$0xff]
      %v6627 = vld [vmem:[#allocation3 + $0x3e8] sm:$0xff]
      %v6628 = vld [vmem:[#allocation3 + $0x3f0] sm:$0xff]
      %v6629 = vld [vmem:[#allocation3 + $0x3f8] sm:$0xff]
      %v6630 = vld [vmem:[#allocation3 + $0x400] sm:$0xff]
      %v6631 = vld [vmem:[#allocation3 + $0x408] sm:$0xff]
      %v6632 = vld [vmem:[#allocation3 + $0x410] sm:$0xff]
      %v6633 = vld [vmem:[#allocation3 + $0x418] sm:$0xff]
      %v6634 = vld [vmem:[#allocation3 + $0x420] sm:$0xff]
      %v6635 = vld [vmem:[#allocation3 + $0x428] sm:$0xff]
      %v6636 = vld [vmem:[#allocation3 + $0x430] sm:$0xff]
      %v6637 = vld [vmem:[#allocation3 + $0x438] sm:$0xff]
      %v6638 = vld [vmem:[#allocation3 + $0x440] sm:$0xff]
      %v6639 = vld [vmem:[#allocation3 + $0x448] sm:$0xff]
      %v6640 = vld [vmem:[#allocation3 + $0x450] sm:$0xff]
      %v6641 = vld [vmem:[#allocation3 + $0x458] sm:$0xff]
      %v6642 = vld [vmem:[#allocation3 + $0x460] sm:$0xff]
      %v6643 = vld [vmem:[#allocation3 + $0x468] sm:$0xff]
      %v6644 = vld [vmem:[#allocation3 + $0x470] sm:$0xff]
      %v6645 = vld [vmem:[#allocation3 + $0x478] sm:$0xff]
      %v6646 = vld [vmem:[#allocation3 + $0x480] sm:$0xff]
      %v6647 = vld [vmem:[#allocation3 + $0x488] sm:$0xff]
      %v6648 = vld [vmem:[#allocation3 + $0x490] sm:$0xff]
      %v6649 = vld [vmem:[#allocation3 + $0x498] sm:$0xff]
      %v6650 = vld [vmem:[#allocation3 + $0x4a0] sm:$0xff]
      %v6651 = vld [vmem:[#allocation3 + $0x4a8] sm:$0xff]
      %v6652 = vld [vmem:[#allocation3 + $0x4b0] sm:$0xff]
      %v6653 = vld [vmem:[#allocation3 + $0x4b8] sm:$0xff]
      %v6654 = vld [vmem:[#allocation3 + $0x4c0] sm:$0xff]
      %v6655 = vld [vmem:[#allocation3 + $0x4c8] sm:$0xff]
      %v6656 = vld [vmem:[#allocation3 + $0x4d0] sm:$0xff]
      %v6657 = vld [vmem:[#allocation3 + $0x4d8] sm:$0xff]
      %v6658 = vld [vmem:[#allocation3 + $0x4e0] sm:$0xff]
      %v6659 = vld [vmem:[#allocation3 + $0x4e8] sm:$0xff]
      %v6660 = vld [vmem:[#allocation3 + $0x4f0] sm:$0xff]
      %v6661 = vld [vmem:[#allocation3 + $0x4f8] sm:$0xff]
      %v6662 = vld [vmem:[#allocation3 + $0x500] sm:$0xff]
      %v6663 = vld [vmem:[#allocation3 + $0x508] sm:$0xff]
      %v6664 = vld [vmem:[#allocation3 + $0x510] sm:$0xff]
      %v6665 = vld [vmem:[#allocation3 + $0x518] sm:$0xff]
      %v6666 = vld [vmem:[#allocation3 + $0x520] sm:$0xff]
      %v6667 = vld [vmem:[#allocation3 + $0x528] sm:$0xff]
      %v6668 = vld [vmem:[#allocation3 + $0x530] sm:$0xff]
      %v6669 = vld [vmem:[#allocation3 + $0x538] sm:$0xff]
      %v6670 = vld [vmem:[#allocation3 + $0x540] sm:$0xff]
      %v6671 = vld [vmem:[#allocation3 + $0x548] sm:$0xff]
      %v6672 = vld [vmem:[#allocation3 + $0x550] sm:$0xff]
      %v6673 = vld [vmem:[#allocation3 + $0x558] sm:$0xff]
      %v6674 = vld [vmem:[#allocation3 + $0x560] sm:$0xff]
      %v6675 = vld [vmem:[#allocation3 + $0x568] sm:$0xff]
      %v6676 = vld [vmem:[#allocation3 + $0x570] sm:$0xff]
      %v6677 = vld [vmem:[#allocation3 + $0x578] sm:$0xff]
      %v6678 = vld [vmem:[#allocation3 + $0x580] sm:$0xff]
      %v6679 = vld [vmem:[#allocation3 + $0x588] sm:$0xff]
      %v6680 = vld [vmem:[#allocation3 + $0x590] sm:$0xff]
      %v6681 = vld [vmem:[#allocation3 + $0x598] sm:$0xff]
      %s6682 = scalar_lea.vmem %s3, 1280
      %v6683 = vld [vmem:[%s6682] sm:$0xff]
      %v6684 = vld [vmem:[%s6682 + $0x8] sm:$0xff]
      %v6685 = vld [vmem:[%s6682 + $0x10] sm:$0xff]
      %v6686 = vld [vmem:[%s6682 + $0x18] sm:$0xff]
      %v6687 = vld [vmem:[%s6682 + $0x20] sm:$0xff]
      %v6688 = vld [vmem:[%s6682 + $0x28] sm:$0xff]
      %v6689 = vld [vmem:[%s6682 + $0x30] sm:$0xff]
      %v6690 = vld [vmem:[%s6682 + $0x38] sm:$0xff]
      %v6691 = vld [vmem:[%s6682 + $0x40] sm:$0xff]
      %v6692 = vld [vmem:[%s6682 + $0x48] sm:$0xff]
      %v6693 = vld [vmem:[%s6682 + $0x50] sm:$0xff]
      %v6694 = vld [vmem:[%s6682 + $0x58] sm:$0xff]
      %v6695 = vld [vmem:[%s6682 + $0x60] sm:$0xff]
      %v6696 = vld [vmem:[%s6682 + $0x68] sm:$0xff]
      %v6697 = vld [vmem:[%s6682 + $0x70] sm:$0xff]
      %v6698 = vld [vmem:[%s6682 + $0x78] sm:$0xff]
      %v6699 = vld [vmem:[%s6682 + $0x80] sm:$0xff]
      %v6700 = vld [vmem:[%s6682 + $0x88] sm:$0xff]
      %v6701 = vld [vmem:[%s6682 + $0x90] sm:$0xff]
      %v6702 = vld [vmem:[%s6682 + $0x98] sm:$0xff]
      %v6703 = vld [vmem:[%s6682 + $0xa0] sm:$0xff]
      %v6704 = vld [vmem:[%s6682 + $0xa8] sm:$0xff]
      %v6705 = vld [vmem:[%s6682 + $0xb0] sm:$0xff]
      %v6706 = vld [vmem:[%s6682 + $0xb8] sm:$0xff]
      %v6707 = vld [vmem:[%s6682 + $0xc0] sm:$0xff]
      %v6708 = vld [vmem:[%s6682 + $0xc8] sm:$0xff]
      %v6709 = vld [vmem:[%s6682 + $0xd0] sm:$0xff]
      %v6710 = vld [vmem:[%s6682 + $0xd8] sm:$0xff]
      %v6711 = vld [vmem:[%s6682 + $0xe0] sm:$0xff]
      %v6712 = vld [vmem:[%s6682 + $0xe8] sm:$0xff]
      %v6713 = vld [vmem:[%s6682 + $0xf0] sm:$0xff]
      %v6714 = vld [vmem:[%s6682 + $0xf8] sm:$0xff]
      %v6715 = vld [vmem:[%s6682 + $0x100] sm:$0xff]
      %v6716 = vld [vmem:[%s6682 + $0x108] sm:$0xff]
      %v6717 = vld [vmem:[%s6682 + $0x110] sm:$0xff]
      %v6718 = vld [vmem:[%s6682 + $0x118] sm:$0xff]
      %v6719 = vld [vmem:[%s6682 + $0x120] sm:$0xff]
      %v6720 = vld [vmem:[%s6682 + $0x128] sm:$0xff]
      %v6721 = vld [vmem:[%s6682 + $0x130] sm:$0xff]
      %v6722 = vld [vmem:[%s6682 + $0x138] sm:$0xff]
      %v6724 = vsel %vm1144, %v6540, 0
      %v6727 = vsel %vm1144, %v6543, 0
      %v6730 = vsel %vm1144, %v6546, 0
      %v6733 = vsel %vm1144, %v6549, 0
      %v6736 = vsel %vm1144, %v6552, 0
      %v6739 = vsel %vm1144, %v6555, 0
      %v6742 = vsel %vm1144, %v6558, 0
      %v6745 = vsel %vm1144, %v6561, 0
      %v6748 = vsel %vm1144, %v6564, 0
      %v6751 = vsel %vm1144, %v6567, 0
      %v6754 = vsel %vm1144, %v6570, 0
      %v6757 = vsel %vm1144, %v6573, 0
      %v6760 = vsel %vm1144, %v6576, 0
      %v6763 = vsel %vm1144, %v6579, 0
      %v6766 = vsel %vm1144, %v6582, 0
      %v6769 = vsel %vm1144, %v6585, 0
      %v6772 = vsel %vm1144, %v6588, 0
      %v6775 = vsel %vm1144, %v6591, 0
      %v6778 = vsel %vm1144, %v6594, 0
      %v6781 = vsel %vm1144, %v6597, 0
      %v6784 = vsel %vm1144, %v6600, 0
      %v6787 = vsel %vm1144, %v6603, 0
      %v6790 = vsel %vm1144, %v6606, 0
      %v6793 = vsel %vm1144, %v6609, 0
      %v6796 = vsel %vm1144, %v6612, 0
      %v6799 = vsel %vm1144, %v6615, 0
      %v6802 = vsel %vm1144, %v6618, 0
      %v6805 = vsel %vm1144, %v6621, 0
      %v6808 = vsel %vm1144, %v6624, 0
      %v6811 = vsel %vm1144, %v6627, 0
      %v6814 = vsel %vm1144, %v6630, 0
      %v6817 = vsel %vm1144, %v6633, 0
      %v6820 = vsel %vm1144, %v6636, 0
      %v6823 = vsel %vm1144, %v6639, 0
      %v6826 = vsel %vm1144, %v6642, 0
      %v6829 = vsel %vm1144, %v6645, 0
      %v6832 = vsel %vm1144, %v6648, 0
      %v6835 = vsel %vm1144, %v6651, 0
      %v6838 = vsel %vm1144, %v6654, 0
      %v6841 = vsel %vm1144, %v6657, 0
      %v6844 = vsel %vm1144, %v6660, 0
      %v6847 = vsel %vm1144, %v6663, 0
      %v6850 = vsel %vm1144, %v6666, 0
      %v6853 = vsel %vm1144, %v6669, 0
      %v6856 = vsel %vm1144, %v6672, 0
      %v6859 = vsel %vm1144, %v6675, 0
      %v6862 = vsel %vm1144, %v6678, 0
      %v6865 = vsel %vm1144, %v6681, 0
      %6867 = vmatprep.subr.mxu0 0.0
      %6868 = vmatpush1.msra.mxu0 %v6698
      %6869 = vmatprep.subr.mxu0 0.0
      %6870 = vmatpush1.msra.mxu0 %v6697
      %6871 = vmatprep.subr.mxu0 0.0
      %6872 = vmatpush1.msra.mxu0 %v6696
      %6873 = vmatprep.subr.mxu0 0.0
      %6874 = vmatpush1.msra.mxu0 %v6695
      %6875 = vmatprep.subr.mxu0 0.0
      %6876 = vmatpush1.msra.mxu0 %v6694
      %6877 = vmatprep.subr.mxu0 0.0
      %6878 = vmatpush1.msra.mxu0 %v6693
      %6879 = vmatprep.subr.mxu0 0.0
      %6880 = vmatpush1.msra.mxu0 %v6692
      %6881 = vmatprep.subr.mxu0 0.0
      %6882 = vmatpush1.msra.mxu0 %v6691
      %6883 = vmatprep.subr.mxu0 0.0
      %6884 = vmatpush1.msra.mxu0 %v6690
      %6885 = vmatprep.subr.mxu0 0.0
      %6886 = vmatpush1.msra.mxu0 %v6689
      %6887 = vmatprep.subr.mxu0 0.0
      %6888 = vmatpush1.msra.mxu0 %v6688
      %6889 = vmatprep.subr.mxu0 0.0
      %6890 = vmatpush1.msra.mxu0 %v6687
      %6891 = vmatprep.subr.mxu0 0.0
      %6892 = vmatpush1.msra.mxu0 %v6686
      %6893 = vmatprep.subr.mxu0 0.0
      %6894 = vmatpush1.msra.mxu0 %v6685
      %6895 = vmatprep.subr.mxu0 0.0
      %6896 = vmatpush1.msra.mxu0 %v6684
      %6897 = vmatprep.subr.mxu0 0.0
      %6898 = vmatpush1.msra.mxu0 %v6683
      %6899 = vmatprep.subr.mxu0 0.0
      %6900 = vmatpush2.msra.mxu0 %v6714
      %6901 = vmatprep.subr.mxu0 0.0
      %6902 = vmatpush2.msra.mxu0 %v6713
      %6903 = vmatprep.subr.mxu0 0.0
      %6904 = vmatpush2.msra.mxu0 %v6712
      %6905 = vmatprep.subr.mxu0 0.0
      %6906 = vmatpush2.msra.mxu0 %v6711
      %6907 = vmatprep.subr.mxu0 0.0
      %6908 = vmatpush2.msra.mxu0 %v6710
      %6909 = vmatprep.subr.mxu0 0.0
      %6910 = vmatpush2.msra.mxu0 %v6709
      %6911 = vmatprep.subr.mxu0 0.0
      %6912 = vmatpush2.msra.mxu0 %v6708
      %6913 = vmatprep.subr.mxu0 0.0
      %6914 = vmatpush2.msra.mxu0 %v6707
      %6915 = vmatprep.subr.mxu0 0.0
      %6916 = vmatpush2.msra.mxu0 %v6706
      %6917 = vmatprep.subr.mxu0 0.0
      %6918 = vmatpush2.msra.mxu0 %v6705
      %6919 = vmatprep.subr.mxu0 0.0
      %6920 = vmatpush2.msra.mxu0 %v6704
      %6921 = vmatprep.subr.mxu0 0.0
      %6922 = vmatpush2.msra.mxu0 %v6703
      %6923 = vmatprep.subr.mxu0 0.0
      %6924 = vmatpush2.msra.mxu0 %v6702
      %6925 = vmatprep.subr.mxu0 0.0
      %6926 = vmatpush2.msra.mxu0 %v6701
      %6927 = vmatprep.subr.mxu0 0.0
      %6928 = vmatpush2.msra.mxu0 %v6700
      %6929 = vmatprep.subr.mxu0 0.0
      %6930 = vmatpush2.msra.mxu0 %v6699
      %6931 = vmatprep.mubr.f32.mxu0 %v6539
      %6932 = vmatmul.mubr.f32.gmra.mxu0 %v6538
      %v6933 = vpop.f32.mrf.mxu0
      %v6934 = vadd.f32 0.0, %v6933
      %v6935 = vpop.f32.mrf.mxu0
      %6936 = vmatprep.mubr.f32.mxu0 %v6542
      %6937 = vmatmul.mubr.f32.gmra.mxu0 %v6541
      %v6938 = vpop.f32.mrf.mxu0
      %v6939 = vadd.f32 0.0, %v6938
      %v6940 = vpop.f32.mrf.mxu0
      %6941 = vmatprep.mubr.f32.mxu0 %v6545
      %6942 = vmatmul.mubr.f32.gmra.mxu0 %v6544
      %v6943 = vpop.f32.mrf.mxu0
      %v6944 = vadd.f32 0.0, %v6943
      %v6945 = vpop.f32.mrf.mxu0
      %6946 = vmatprep.mubr.f32.mxu0 %v6548
      %6947 = vmatmul.mubr.f32.gmra.mxu0 %v6547
      %v6948 = vpop.f32.mrf.mxu0
      %v6949 = vadd.f32 0.0, %v6948
      %v6950 = vpop.f32.mrf.mxu0
      %6951 = vmatprep.mubr.f32.mxu0 %v6551
      %6952 = vmatmul.mubr.f32.gmra.mxu0 %v6550
      %v6953 = vpop.f32.mrf.mxu0
      %v6954 = vadd.f32 0.0, %v6953
      %v6955 = vpop.f32.mrf.mxu0
      %6956 = vmatprep.mubr.f32.mxu0 %v6554
      %6957 = vmatmul.mubr.f32.gmra.mxu0 %v6553
      %v6958 = vpop.f32.mrf.mxu0
      %v6959 = vadd.f32 0.0, %v6958
      %v6960 = vpop.f32.mrf.mxu0
      %6961 = vmatprep.mubr.f32.mxu0 %v6557
      %6962 = vmatmul.mubr.f32.gmra.mxu0 %v6556
      %v6963 = vpop.f32.mrf.mxu0
      %v6964 = vadd.f32 0.0, %v6963
      %v6965 = vpop.f32.mrf.mxu0
      %6966 = vmatprep.mubr.f32.mxu0 %v6560
      %6967 = vmatmul.mubr.f32.gmra.mxu0 %v6559
      %v6968 = vpop.f32.mrf.mxu0
      %v6969 = vadd.f32 0.0, %v6968
      %v6970 = vpop.f32.mrf.mxu0
      %6971 = vmatprep.mubr.f32.mxu0 %v6563
      %6972 = vmatmul.mubr.f32.gmra.mxu0 %v6562
      %v6973 = vpop.f32.mrf.mxu0
      %v6974 = vadd.f32 0.0, %v6973
      %v6975 = vpop.f32.mrf.mxu0
      %6976 = vmatprep.mubr.f32.mxu0 %v6566
      %6977 = vmatmul.mubr.f32.gmra.mxu0 %v6565
      %v6978 = vpop.f32.mrf.mxu0
      %v6979 = vadd.f32 0.0, %v6978
      %v6980 = vpop.f32.mrf.mxu0
      %6981 = vmatprep.mubr.f32.mxu0 %v6569
      %6982 = vmatmul.mubr.f32.gmra.mxu0 %v6568
      %v6983 = vpop.f32.mrf.mxu0
      %v6984 = vadd.f32 0.0, %v6983
      %v6985 = vpop.f32.mrf.mxu0
      %6986 = vmatprep.mubr.f32.mxu0 %v6572
      %6987 = vmatmul.mubr.f32.gmra.mxu0 %v6571
      %v6988 = vpop.f32.mrf.mxu0
      %v6989 = vadd.f32 0.0, %v6988
      %v6990 = vpop.f32.mrf.mxu0
      %6991 = vmatprep.mubr.f32.mxu0 %v6575
      %6992 = vmatmul.mubr.f32.gmra.mxu0 %v6574
      %v6993 = vpop.f32.mrf.mxu0
      %v6994 = vadd.f32 0.0, %v6993
      %v6995 = vpop.f32.mrf.mxu0
      %6996 = vmatprep.mubr.f32.mxu0 %v6578
      %6997 = vmatmul.mubr.f32.gmra.mxu0 %v6577
      %v6998 = vpop.f32.mrf.mxu0
      %v6999 = vadd.f32 0.0, %v6998
      %v7000 = vpop.f32.mrf.mxu0
      %7001 = vmatprep.mubr.f32.mxu0 %v6581
      %7002 = vmatmul.mubr.f32.gmra.mxu0 %v6580
      %v7003 = vpop.f32.mrf.mxu0
      %v7004 = vadd.f32 0.0, %v7003
      %v7005 = vpop.f32.mrf.mxu0
      %7006 = vmatprep.mubr.f32.mxu0 %v6584
      %7007 = vmatmul.mubr.f32.gmra.mxu0 %v6583
      %v7008 = vpop.f32.mrf.mxu0
      %v7009 = vadd.f32 0.0, %v7008
      %v7010 = vpop.f32.mrf.mxu0
      %7011 = vmatprep.mubr.f32.mxu0 %v6587
      %7012 = vmatmul.mubr.f32.gmra.mxu0 %v6586
      %v7013 = vpop.f32.mrf.mxu0
      %v7014 = vadd.f32 0.0, %v7013
      %v7015 = vpop.f32.mrf.mxu0
      %7016 = vmatprep.mubr.f32.mxu0 %v6590
      %7017 = vmatmul.mubr.f32.gmra.mxu0 %v6589
      %v7018 = vpop.f32.mrf.mxu0
      %v7019 = vadd.f32 0.0, %v7018
      %v7020 = vpop.f32.mrf.mxu0
      %7021 = vmatprep.mubr.f32.mxu0 %v6593
      %7022 = vmatmul.mubr.f32.gmra.mxu0 %v6592
      %v7023 = vpop.f32.mrf.mxu0
      %v7024 = vadd.f32 0.0, %v7023
      %v7025 = vpop.f32.mrf.mxu0
      %7026 = vmatprep.mubr.f32.mxu0 %v6596
      %7027 = vmatmul.mubr.f32.gmra.mxu0 %v6595
      %v7028 = vpop.f32.mrf.mxu0
      %v7029 = vadd.f32 0.0, %v7028
      %v7030 = vpop.f32.mrf.mxu0
      %7031 = vmatprep.mubr.f32.mxu0 %v6599
      %7032 = vmatmul.mubr.f32.gmra.mxu0 %v6598
      %v7033 = vpop.f32.mrf.mxu0
      %v7034 = vadd.f32 0.0, %v7033
      %v7035 = vpop.f32.mrf.mxu0
      %7036 = vmatprep.mubr.f32.mxu0 %v6602
      %7037 = vmatmul.mubr.f32.gmra.mxu0 %v6601
      %v7038 = vpop.f32.mrf.mxu0
      %v7039 = vadd.f32 0.0, %v7038
      %v7040 = vpop.f32.mrf.mxu0
      %7041 = vmatprep.mubr.f32.mxu0 %v6605
      %7042 = vmatmul.mubr.f32.gmra.mxu0 %v6604
      %v7043 = vpop.f32.mrf.mxu0
      %v7044 = vadd.f32 0.0, %v7043
      %v7045 = vpop.f32.mrf.mxu0
      %7046 = vmatprep.mubr.f32.mxu0 %v6608
      %7047 = vmatmul.mubr.f32.gmra.mxu0 %v6607
      %v7048 = vpop.f32.mrf.mxu0
      %v7049 = vadd.f32 0.0, %v7048
      %v7050 = vpop.f32.mrf.mxu0
      %7051 = vmatprep.mubr.f32.mxu0 %v6611
      %7052 = vmatmul.mubr.f32.gmra.mxu0 %v6610
      %v7053 = vpop.f32.mrf.mxu0
      %v7054 = vadd.f32 0.0, %v7053
      %v7055 = vpop.f32.mrf.mxu0
      %7056 = vmatprep.mubr.f32.mxu0 %v6614
      %7057 = vmatmul.mubr.f32.gmra.mxu0 %v6613
      %v7058 = vpop.f32.mrf.mxu0
      %v7059 = vadd.f32 0.0, %v7058
      %v7060 = vpop.f32.mrf.mxu0
      %7061 = vmatprep.mubr.f32.mxu0 %v6617
      %7062 = vmatmul.mubr.f32.gmra.mxu0 %v6616
      %v7063 = vpop.f32.mrf.mxu0
      %v7064 = vadd.f32 0.0, %v7063
      %v7065 = vpop.f32.mrf.mxu0
      %7066 = vmatprep.mubr.f32.mxu0 %v6620
      %7067 = vmatmul.mubr.f32.gmra.mxu0 %v6619
      %v7068 = vpop.f32.mrf.mxu0
      %v7069 = vadd.f32 0.0, %v7068
      %v7070 = vpop.f32.mrf.mxu0
      %7071 = vmatprep.mubr.f32.mxu0 %v6623
      %7072 = vmatmul.mubr.f32.gmra.mxu0 %v6622
      %v7073 = vpop.f32.mrf.mxu0
      %v7074 = vadd.f32 0.0, %v7073
      %v7075 = vpop.f32.mrf.mxu0
      %7076 = vmatprep.mubr.f32.mxu0 %v6626
      %7077 = vmatmul.mubr.f32.gmra.mxu0 %v6625
      %v7078 = vpop.f32.mrf.mxu0
      %v7079 = vadd.f32 0.0, %v7078
      %v7080 = vpop.f32.mrf.mxu0
      %7081 = vmatprep.mubr.f32.mxu0 %v6629
      %7082 = vmatmul.mubr.f32.gmra.mxu0 %v6628
      %v7083 = vpop.f32.mrf.mxu0
      %v7084 = vadd.f32 0.0, %v7083
      %v7085 = vpop.f32.mrf.mxu0
      %7086 = vmatprep.mubr.f32.mxu0 %v6632
      %7087 = vmatmul.mubr.f32.gmra.mxu0 %v6631
      %v7088 = vpop.f32.mrf.mxu0
      %v7089 = vadd.f32 0.0, %v7088
      %v7090 = vpop.f32.mrf.mxu0
      %7091 = vmatprep.mubr.f32.mxu0 %v6635
      %7092 = vmatmul.mubr.f32.gmra.mxu0 %v6634
      %v7093 = vpop.f32.mrf.mxu0
      %v7094 = vadd.f32 0.0, %v7093
      %v7095 = vpop.f32.mrf.mxu0
      %7096 = vmatprep.mubr.f32.mxu0 %v6638
      %7097 = vmatmul.mubr.f32.gmra.mxu0 %v6637
      %v7098 = vpop.f32.mrf.mxu0
      %v7099 = vadd.f32 0.0, %v7098
      %v7100 = vpop.f32.mrf.mxu0
      %7101 = vmatprep.mubr.f32.mxu0 %v6641
      %7102 = vmatmul.mubr.f32.gmra.mxu0 %v6640
      %v7103 = vpop.f32.mrf.mxu0
      %v7104 = vadd.f32 0.0, %v7103
      %v7105 = vpop.f32.mrf.mxu0
      %7106 = vmatprep.mubr.f32.mxu0 %v6644
      %7107 = vmatmul.mubr.f32.gmra.mxu0 %v6643
      %v7108 = vpop.f32.mrf.mxu0
      %v7109 = vadd.f32 0.0, %v7108
      %v7110 = vpop.f32.mrf.mxu0
      %7111 = vmatprep.mubr.f32.mxu0 %v6647
      %7112 = vmatmul.mubr.f32.gmra.mxu0 %v6646
      %v7113 = vpop.f32.mrf.mxu0
      %v7114 = vadd.f32 0.0, %v7113
      %v7115 = vpop.f32.mrf.mxu0
      %7116 = vmatprep.mubr.f32.mxu0 %v6650
      %7117 = vmatmul.mubr.f32.gmra.mxu0 %v6649
      %v7118 = vpop.f32.mrf.mxu0
      %v7119 = vadd.f32 0.0, %v7118
      %v7120 = vpop.f32.mrf.mxu0
      %7121 = vmatprep.mubr.f32.mxu0 %v6653
      %7122 = vmatmul.mubr.f32.gmra.mxu0 %v6652
      %v7123 = vpop.f32.mrf.mxu0
      %v7124 = vadd.f32 0.0, %v7123
      %v7125 = vpop.f32.mrf.mxu0
      %7126 = vmatprep.mubr.f32.mxu0 %v6656
      %7127 = vmatmul.mubr.f32.gmra.mxu0 %v6655
      %v7128 = vpop.f32.mrf.mxu0
      %v7129 = vadd.f32 0.0, %v7128
      %v7130 = vpop.f32.mrf.mxu0
      %7131 = vmatprep.mubr.f32.mxu0 %v6659
      %7132 = vmatmul.mubr.f32.gmra.mxu0 %v6658
      %v7133 = vpop.f32.mrf.mxu0
      %v7134 = vadd.f32 0.0, %v7133
      %v7135 = vpop.f32.mrf.mxu0
      %7136 = vmatprep.mubr.f32.mxu0 %v6662
      %7137 = vmatmul.mubr.f32.gmra.mxu0 %v6661
      %v7138 = vpop.f32.mrf.mxu0
      %v7139 = vadd.f32 0.0, %v7138
      %v7140 = vpop.f32.mrf.mxu0
      %7141 = vmatprep.mubr.f32.mxu0 %v6665
      %7142 = vmatmul.mubr.f32.gmra.mxu0 %v6664
      %v7143 = vpop.f32.mrf.mxu0
      %v7144 = vadd.f32 0.0, %v7143
      %v7145 = vpop.f32.mrf.mxu0
      %7146 = vmatprep.mubr.f32.mxu0 %v6668
      %7147 = vmatmul.mubr.f32.gmra.mxu0 %v6667
      %v7148 = vpop.f32.mrf.mxu0
      %v7149 = vadd.f32 0.0, %v7148
      %v7150 = vpop.f32.mrf.mxu0
      %7151 = vmatprep.mubr.f32.mxu0 %v6671
      %7152 = vmatmul.mubr.f32.gmra.mxu0 %v6670
      %v7153 = vpop.f32.mrf.mxu0
      %v7154 = vadd.f32 0.0, %v7153
      %v7155 = vpop.f32.mrf.mxu0
      %7156 = vmatprep.mubr.f32.mxu0 %v6674
      %7157 = vmatmul.mubr.f32.gmra.mxu0 %v6673
      %v7158 = vpop.f32.mrf.mxu0
      %v7159 = vadd.f32 0.0, %v7158
      %v7160 = vpop.f32.mrf.mxu0
      %7161 = vmatprep.mubr.f32.mxu0 %v6677
      %7162 = vmatmul.mubr.f32.gmra.mxu0 %v6676
      %v7163 = vpop.f32.mrf.mxu0
      %v7164 = vadd.f32 0.0, %v7163
      %v7165 = vpop.f32.mrf.mxu0
      %7166 = vmatprep.mubr.f32.mxu0 %v6680
      %7167 = vmatmul.mubr.f32.gmra.mxu0 %v6679
      %v7168 = vpop.f32.mrf.mxu0
      %v7169 = vadd.f32 0.0, %v7168
      %v7170 = vpop.f32.mrf.mxu0
      %7171 = vdwg.mxu0
      %7172 = vmatprep.subr.mxu0 0.0
      %7173 = vmatpush1.msra.mxu0 0.0
      %7174 = vmatprep.subr.mxu0 0.0
      %7175 = vmatpush1.msra.mxu0 0.0
      %7176 = vmatprep.subr.mxu0 0.0
      %7177 = vmatpush1.msra.mxu0 0.0
      %7178 = vmatprep.subr.mxu0 0.0
      %7179 = vmatpush1.msra.mxu0 0.0
      %7180 = vmatprep.subr.mxu0 0.0
      %7181 = vmatpush1.msra.mxu0 0.0
      %7182 = vmatprep.subr.mxu0 0.0
      %7183 = vmatpush1.msra.mxu0 0.0
      %7184 = vmatprep.subr.mxu0 0.0
      %7185 = vmatpush1.msra.mxu0 0.0
      %7186 = vmatprep.subr.mxu0 0.0
      %7187 = vmatpush1.msra.mxu0 0.0
      %7188 = vmatprep.subr.mxu0 0.0
      %7189 = vmatpush1.msra.mxu0 %v6722
      %7190 = vmatprep.subr.mxu0 0.0
      %7191 = vmatpush1.msra.mxu0 %v6721
      %7192 = vmatprep.subr.mxu0 0.0
      %7193 = vmatpush1.msra.mxu0 %v6720
      %7194 = vmatprep.subr.mxu0 0.0
      %7195 = vmatpush1.msra.mxu0 %v6719
      %7196 = vmatprep.subr.mxu0 0.0
      %7197 = vmatpush1.msra.mxu0 %v6718
      %7198 = vmatprep.subr.mxu0 0.0
      %7199 = vmatpush1.msra.mxu0 %v6717
      %7200 = vmatprep.subr.mxu0 0.0
      %7201 = vmatpush1.msra.mxu0 %v6716
      %7202 = vmatprep.subr.mxu0 0.0
      %7203 = vmatpush1.msra.mxu0 %v6715
      %7204 = vmatprep.subr.mxu0 0.0
      %7205 = vmatpush2.msra.mxu0 0.0
      %7206 = vmatprep.subr.mxu0 0.0
      %7207 = vmatpush2.msra.mxu0 0.0
      %7208 = vmatprep.subr.mxu0 0.0
      %7209 = vmatpush2.msra.mxu0 0.0
      %7210 = vmatprep.subr.mxu0 0.0
      %7211 = vmatpush2.msra.mxu0 0.0
      %7212 = vmatprep.subr.mxu0 0.0
      %7213 = vmatpush2.msra.mxu0 0.0
      %7214 = vmatprep.subr.mxu0 0.0
      %7215 = vmatpush2.msra.mxu0 0.0
      %7216 = vmatprep.subr.mxu0 0.0
      %7217 = vmatpush2.msra.mxu0 0.0
      %7218 = vmatprep.subr.mxu0 0.0
      %7219 = vmatpush2.msra.mxu0 0.0
      %7220 = vmatprep.subr.mxu0 0.0
      %7221 = vmatpush2.msra.mxu0 0.0
      %7222 = vmatprep.subr.mxu0 0.0
      %7223 = vmatpush2.msra.mxu0 0.0
      %7224 = vmatprep.subr.mxu0 0.0
      %7225 = vmatpush2.msra.mxu0 0.0
      %7226 = vmatprep.subr.mxu0 0.0
      %7227 = vmatpush2.msra.mxu0 0.0
      %7228 = vmatprep.subr.mxu0 0.0
      %7229 = vmatpush2.msra.mxu0 0.0
      %7230 = vmatprep.subr.mxu0 0.0
      %7231 = vmatpush2.msra.mxu0 0.0
      %7232 = vmatprep.subr.mxu0 0.0
      %7233 = vmatpush2.msra.mxu0 0.0
      %7234 = vmatprep.subr.mxu0 0.0
      %7235 = vmatpush2.msra.mxu0 0.0
      %7236 = vmatprep.mubr.f32.mxu0 0.0
      %7237 = vmatmul.mubr.f32.gmra.mxu0 %v6724
      %v7238 = vpop.f32.mrf.mxu0
      %v7239 = vadd.f32 %v6934, %v7238
      %v7240 = vpop.f32.mrf.mxu0
      %7241 = vmatprep.mubr.f32.mxu0 0.0
      %7242 = vmatmul.mubr.f32.gmra.mxu0 %v6727
      %v7243 = vpop.f32.mrf.mxu0
      %v7244 = vadd.f32 %v6939, %v7243
      %v7245 = vpop.f32.mrf.mxu0
      %7246 = vmatprep.mubr.f32.mxu0 0.0
      %7247 = vmatmul.mubr.f32.gmra.mxu0 %v6730
      %v7248 = vpop.f32.mrf.mxu0
      %v7249 = vadd.f32 %v6944, %v7248
      %v7250 = vpop.f32.mrf.mxu0
      %7251 = vmatprep.mubr.f32.mxu0 0.0
      %7252 = vmatmul.mubr.f32.gmra.mxu0 %v6733
      %v7253 = vpop.f32.mrf.mxu0
      %v7254 = vadd.f32 %v6949, %v7253
      %v7255 = vpop.f32.mrf.mxu0
      %7256 = vmatprep.mubr.f32.mxu0 0.0
      %7257 = vmatmul.mubr.f32.gmra.mxu0 %v6736
      %v7258 = vpop.f32.mrf.mxu0
      %v7259 = vadd.f32 %v6954, %v7258
      %v7260 = vpop.f32.mrf.mxu0
      %7261 = vmatprep.mubr.f32.mxu0 0.0
      %7262 = vmatmul.mubr.f32.gmra.mxu0 %v6739
      %v7263 = vpop.f32.mrf.mxu0
      %v7264 = vadd.f32 %v6959, %v7263
      %v7265 = vpop.f32.mrf.mxu0
      %7266 = vmatprep.mubr.f32.mxu0 0.0
      %7267 = vmatmul.mubr.f32.gmra.mxu0 %v6742
      %v7268 = vpop.f32.mrf.mxu0
      %v7269 = vadd.f32 %v6964, %v7268
      %v7270 = vpop.f32.mrf.mxu0
      %7271 = vmatprep.mubr.f32.mxu0 0.0
      %7272 = vmatmul.mubr.f32.gmra.mxu0 %v6745
      %v7273 = vpop.f32.mrf.mxu0
      %v7274 = vadd.f32 %v6969, %v7273
      %v7275 = vpop.f32.mrf.mxu0
      %7276 = vmatprep.mubr.f32.mxu0 0.0
      %7277 = vmatmul.mubr.f32.gmra.mxu0 %v6748
      %v7278 = vpop.f32.mrf.mxu0
      %v7279 = vadd.f32 %v6974, %v7278
      %v7280 = vpop.f32.mrf.mxu0
      %7281 = vmatprep.mubr.f32.mxu0 0.0
      %7282 = vmatmul.mubr.f32.gmra.mxu0 %v6751
      %v7283 = vpop.f32.mrf.mxu0
      %v7284 = vadd.f32 %v6979, %v7283
      %v7285 = vpop.f32.mrf.mxu0
      %7286 = vmatprep.mubr.f32.mxu0 0.0
      %7287 = vmatmul.mubr.f32.gmra.mxu0 %v6754
      %v7288 = vpop.f32.mrf.mxu0
      %v7289 = vadd.f32 %v6984, %v7288
      %v7290 = vpop.f32.mrf.mxu0
      %7291 = vmatprep.mubr.f32.mxu0 0.0
      %7292 = vmatmul.mubr.f32.gmra.mxu0 %v6757
      %v7293 = vpop.f32.mrf.mxu0
      %v7294 = vadd.f32 %v6989, %v7293
      %v7295 = vpop.f32.mrf.mxu0
      %7296 = vmatprep.mubr.f32.mxu0 0.0
      %7297 = vmatmul.mubr.f32.gmra.mxu0 %v6760
      %v7298 = vpop.f32.mrf.mxu0
      %v7299 = vadd.f32 %v6994, %v7298
      %v7300 = vpop.f32.mrf.mxu0
      %7301 = vmatprep.mubr.f32.mxu0 0.0
      %7302 = vmatmul.mubr.f32.gmra.mxu0 %v6763
      %v7303 = vpop.f32.mrf.mxu0
      %v7304 = vadd.f32 %v6999, %v7303
      %v7305 = vpop.f32.mrf.mxu0
      %7306 = vmatprep.mubr.f32.mxu0 0.0
      %7307 = vmatmul.mubr.f32.gmra.mxu0 %v6766
      %v7308 = vpop.f32.mrf.mxu0
      %v7309 = vadd.f32 %v7004, %v7308
      %v7310 = vpop.f32.mrf.mxu0
      %7311 = vmatprep.mubr.f32.mxu0 0.0
      %7312 = vmatmul.mubr.f32.gmra.mxu0 %v6769
      %v7313 = vpop.f32.mrf.mxu0
      %v7314 = vadd.f32 %v7009, %v7313
      %v7315 = vpop.f32.mrf.mxu0
      %7316 = vmatprep.mubr.f32.mxu0 0.0
      %7317 = vmatmul.mubr.f32.gmra.mxu0 %v6772
      %v7318 = vpop.f32.mrf.mxu0
      %v7319 = vadd.f32 %v7014, %v7318
      %v7320 = vpop.f32.mrf.mxu0
      %7321 = vmatprep.mubr.f32.mxu0 0.0
      %7322 = vmatmul.mubr.f32.gmra.mxu0 %v6775
      %v7323 = vpop.f32.mrf.mxu0
      %v7324 = vadd.f32 %v7019, %v7323
      %v7325 = vpop.f32.mrf.mxu0
      %7326 = vmatprep.mubr.f32.mxu0 0.0
      %7327 = vmatmul.mubr.f32.gmra.mxu0 %v6778
      %v7328 = vpop.f32.mrf.mxu0
      %v7329 = vadd.f32 %v7024, %v7328
      %v7330 = vpop.f32.mrf.mxu0
      %7331 = vmatprep.mubr.f32.mxu0 0.0
      %7332 = vmatmul.mubr.f32.gmra.mxu0 %v6781
      %v7333 = vpop.f32.mrf.mxu0
      %v7334 = vadd.f32 %v7029, %v7333
      %v7335 = vpop.f32.mrf.mxu0
      %7336 = vmatprep.mubr.f32.mxu0 0.0
      %7337 = vmatmul.mubr.f32.gmra.mxu0 %v6784
      %v7338 = vpop.f32.mrf.mxu0
      %v7339 = vadd.f32 %v7034, %v7338
      %v7340 = vpop.f32.mrf.mxu0
      %7341 = vmatprep.mubr.f32.mxu0 0.0
      %7342 = vmatmul.mubr.f32.gmra.mxu0 %v6787
      %v7343 = vpop.f32.mrf.mxu0
      %v7344 = vadd.f32 %v7039, %v7343
      %v7345 = vpop.f32.mrf.mxu0
      %7346 = vmatprep.mubr.f32.mxu0 0.0
      %7347 = vmatmul.mubr.f32.gmra.mxu0 %v6790
      %v7348 = vpop.f32.mrf.mxu0
      %v7349 = vadd.f32 %v7044, %v7348
      %v7350 = vpop.f32.mrf.mxu0
      %7351 = vmatprep.mubr.f32.mxu0 0.0
      %7352 = vmatmul.mubr.f32.gmra.mxu0 %v6793
      %v7353 = vpop.f32.mrf.mxu0
      %v7354 = vadd.f32 %v7049, %v7353
      %v7355 = vpop.f32.mrf.mxu0
      %7356 = vmatprep.mubr.f32.mxu0 0.0
      %7357 = vmatmul.mubr.f32.gmra.mxu0 %v6796
      %v7358 = vpop.f32.mrf.mxu0
      %v7359 = vadd.f32 %v7054, %v7358
      %v7360 = vpop.f32.mrf.mxu0
      %7361 = vmatprep.mubr.f32.mxu0 0.0
      %7362 = vmatmul.mubr.f32.gmra.mxu0 %v6799
      %v7363 = vpop.f32.mrf.mxu0
      %v7364 = vadd.f32 %v7059, %v7363
      %v7365 = vpop.f32.mrf.mxu0
      %7366 = vmatprep.mubr.f32.mxu0 0.0
      %7367 = vmatmul.mubr.f32.gmra.mxu0 %v6802
      %v7368 = vpop.f32.mrf.mxu0
      %v7369 = vadd.f32 %v7064, %v7368
      %v7370 = vpop.f32.mrf.mxu0
      %7371 = vmatprep.mubr.f32.mxu0 0.0
      %7372 = vmatmul.mubr.f32.gmra.mxu0 %v6805
      %v7373 = vpop.f32.mrf.mxu0
      %v7374 = vadd.f32 %v7069, %v7373
      %v7375 = vpop.f32.mrf.mxu0
      %7376 = vmatprep.mubr.f32.mxu0 0.0
      %7377 = vmatmul.mubr.f32.gmra.mxu0 %v6808
      %v7378 = vpop.f32.mrf.mxu0
      %v7379 = vadd.f32 %v7074, %v7378
      %v7380 = vpop.f32.mrf.mxu0
      %7381 = vmatprep.mubr.f32.mxu0 0.0
      %7382 = vmatmul.mubr.f32.gmra.mxu0 %v6811
      %v7383 = vpop.f32.mrf.mxu0
      %v7384 = vadd.f32 %v7079, %v7383
      %v7385 = vpop.f32.mrf.mxu0
      %7386 = vmatprep.mubr.f32.mxu0 0.0
      %7387 = vmatmul.mubr.f32.gmra.mxu0 %v6814
      %v7388 = vpop.f32.mrf.mxu0
      %v7389 = vadd.f32 %v7084, %v7388
      %v7390 = vpop.f32.mrf.mxu0
      %7391 = vmatprep.mubr.f32.mxu0 0.0
      %7392 = vmatmul.mubr.f32.gmra.mxu0 %v6817
      %v7393 = vpop.f32.mrf.mxu0
      %v7394 = vadd.f32 %v7089, %v7393
      %v7395 = vpop.f32.mrf.mxu0
      %7396 = vmatprep.mubr.f32.mxu0 0.0
      %7397 = vmatmul.mubr.f32.gmra.mxu0 %v6820
      %v7398 = vpop.f32.mrf.mxu0
      %v7399 = vadd.f32 %v7094, %v7398
      %v7400 = vpop.f32.mrf.mxu0
      %7401 = vmatprep.mubr.f32.mxu0 0.0
      %7402 = vmatmul.mubr.f32.gmra.mxu0 %v6823
      %v7403 = vpop.f32.mrf.mxu0
      %v7404 = vadd.f32 %v7099, %v7403
      %v7405 = vpop.f32.mrf.mxu0
      %7406 = vmatprep.mubr.f32.mxu0 0.0
      %7407 = vmatmul.mubr.f32.gmra.mxu0 %v6826
      %v7408 = vpop.f32.mrf.mxu0
      %v7409 = vadd.f32 %v7104, %v7408
      %v7410 = vpop.f32.mrf.mxu0
      %7411 = vmatprep.mubr.f32.mxu0 0.0
      %7412 = vmatmul.mubr.f32.gmra.mxu0 %v6829
      %v7413 = vpop.f32.mrf.mxu0
      %v7414 = vadd.f32 %v7109, %v7413
      %v7415 = vpop.f32.mrf.mxu0
      %7416 = vmatprep.mubr.f32.mxu0 0.0
      %7417 = vmatmul.mubr.f32.gmra.mxu0 %v6832
      %v7418 = vpop.f32.mrf.mxu0
      %v7419 = vadd.f32 %v7114, %v7418
      %v7420 = vpop.f32.mrf.mxu0
      %7421 = vmatprep.mubr.f32.mxu0 0.0
      %7422 = vmatmul.mubr.f32.gmra.mxu0 %v6835
      %v7423 = vpop.f32.mrf.mxu0
      %v7424 = vadd.f32 %v7119, %v7423
      %v7425 = vpop.f32.mrf.mxu0
      %7426 = vmatprep.mubr.f32.mxu0 0.0
      %7427 = vmatmul.mubr.f32.gmra.mxu0 %v6838
      %v7428 = vpop.f32.mrf.mxu0
      %v7429 = vadd.f32 %v7124, %v7428
      %v7430 = vpop.f32.mrf.mxu0
      %7431 = vmatprep.mubr.f32.mxu0 0.0
      %7432 = vmatmul.mubr.f32.gmra.mxu0 %v6841
      %v7433 = vpop.f32.mrf.mxu0
      %v7434 = vadd.f32 %v7129, %v7433
      %v7435 = vpop.f32.mrf.mxu0
      %7436 = vmatprep.mubr.f32.mxu0 0.0
      %7437 = vmatmul.mubr.f32.gmra.mxu0 %v6844
      %v7438 = vpop.f32.mrf.mxu0
      %v7439 = vadd.f32 %v7134, %v7438
      %v7440 = vpop.f32.mrf.mxu0
      %7441 = vmatprep.mubr.f32.mxu0 0.0
      %7442 = vmatmul.mubr.f32.gmra.mxu0 %v6847
      %v7443 = vpop.f32.mrf.mxu0
      %v7444 = vadd.f32 %v7139, %v7443
      %v7445 = vpop.f32.mrf.mxu0
      %7446 = vmatprep.mubr.f32.mxu0 0.0
      %7447 = vmatmul.mubr.f32.gmra.mxu0 %v6850
      %v7448 = vpop.f32.mrf.mxu0
      %v7449 = vadd.f32 %v7144, %v7448
      %v7450 = vpop.f32.mrf.mxu0
      %7451 = vmatprep.mubr.f32.mxu0 0.0
      %7452 = vmatmul.mubr.f32.gmra.mxu0 %v6853
      %v7453 = vpop.f32.mrf.mxu0
      %v7454 = vadd.f32 %v7149, %v7453
      %v7455 = vpop.f32.mrf.mxu0
      %7456 = vmatprep.mubr.f32.mxu0 0.0
      %7457 = vmatmul.mubr.f32.gmra.mxu0 %v6856
      %v7458 = vpop.f32.mrf.mxu0
      %v7459 = vadd.f32 %v7154, %v7458
      %v7460 = vpop.f32.mrf.mxu0
      %7461 = vmatprep.mubr.f32.mxu0 0.0
      %7462 = vmatmul.mubr.f32.gmra.mxu0 %v6859
      %v7463 = vpop.f32.mrf.mxu0
      %v7464 = vadd.f32 %v7159, %v7463
      %v7465 = vpop.f32.mrf.mxu0
      %7466 = vmatprep.mubr.f32.mxu0 0.0
      %7467 = vmatmul.mubr.f32.gmra.mxu0 %v6862
      %v7468 = vpop.f32.mrf.mxu0
      %v7469 = vadd.f32 %v7164, %v7468
      %v7470 = vpop.f32.mrf.mxu0
      %7471 = vmatprep.mubr.f32.mxu0 0.0
      %7472 = vmatmul.mubr.f32.gmra.mxu0 %v6865
      %v7473 = vpop.f32.mrf.mxu0
      %v7474 = vadd.f32 %v7169, %v7473
      %v7475 = vpop.f32.mrf.mxu0
      %7476 = vdwg.mxu0
      %v7477 = vadd.f32 %v6490, %v7239
      %v7478 = vadd.f32 %v6491, %v7244
      %v7479 = vadd.f32 %v6492, %v7249
      %v7480 = vadd.f32 %v6493, %v7254
      %v7481 = vadd.f32 %v6494, %v7259
      %v7482 = vadd.f32 %v6495, %v7264
      %v7483 = vadd.f32 %v6496, %v7269
      %v7484 = vadd.f32 %v6497, %v7274
      %v7485 = vadd.f32 %v6498, %v7279
      %v7486 = vadd.f32 %v6499, %v7284
      %v7487 = vadd.f32 %v6500, %v7289
      %v7488 = vadd.f32 %v6501, %v7294
      %v7489 = vadd.f32 %v6502, %v7299
      %v7490 = vadd.f32 %v6503, %v7304
      %v7491 = vadd.f32 %v6504, %v7309
      %v7492 = vadd.f32 %v6505, %v7314
      %v7493 = vadd.f32 %v6506, %v7319
      %v7494 = vadd.f32 %v6507, %v7324
      %v7495 = vadd.f32 %v6508, %v7329
      %v7496 = vadd.f32 %v6509, %v7334
      %v7497 = vadd.f32 %v6510, %v7339
      %v7498 = vadd.f32 %v6511, %v7344
      %v7499 = vadd.f32 %v6512, %v7349
      %v7500 = vadd.f32 %v6513, %v7354
      %v7501 = vadd.f32 %v6514, %v7359
      %v7502 = vadd.f32 %v6515, %v7364
      %v7503 = vadd.f32 %v6516, %v7369
      %v7504 = vadd.f32 %v6517, %v7374
      %v7505 = vadd.f32 %v6518, %v7379
      %v7506 = vadd.f32 %v6519, %v7384
      %v7507 = vadd.f32 %v6520, %v7389
      %v7508 = vadd.f32 %v6521, %v7394
      %v7509 = vadd.f32 %v6522, %v7399
      %v7510 = vadd.f32 %v6523, %v7404
      %v7511 = vadd.f32 %v6524, %v7409
      %v7512 = vadd.f32 %v6525, %v7414
      %v7513 = vadd.f32 %v6526, %v7419
      %v7514 = vadd.f32 %v6527, %v7424
      %v7515 = vadd.f32 %v6528, %v7429
      %v7516 = vadd.f32 %v6529, %v7434
      %v7517 = vadd.f32 %v6530, %v7439
      %v7518 = vadd.f32 %v6531, %v7444
      %v7519 = vadd.f32 %v6532, %v7449
      %v7520 = vadd.f32 %v6533, %v7454
      %v7521 = vadd.f32 %v6534, %v7459
      %v7522 = vadd.f32 %v6535, %v7464
      %v7523 = vadd.f32 %v6536, %v7469
      %v7524 = vadd.f32 %v6537, %v7474
      %v7525 = vld [vmem:[%s4] sm:$0x1]
      %v7527 = vlaneseq
      %v7528 = vshrl.u32 %v7527, 7
      %v7529 = vsub.s32 0, %v7528
      %v7530 = vrot.slane %v7525, %v7529
      %v7532 = vadd.f32 %v7477, %v7530
      %v7533 = vadd.f32 %v7478, %v7530
      %v7534 = vadd.f32 %v7479, %v7530
      %v7535 = vadd.f32 %v7480, %v7530
      %v7536 = vadd.f32 %v7481, %v7530
      %v7537 = vadd.f32 %v7482, %v7530
      %v7538 = vadd.f32 %v7483, %v7530
      %v7539 = vadd.f32 %v7484, %v7530
      %v7540 = vadd.f32 %v7485, %v7530
      %v7541 = vadd.f32 %v7486, %v7530
      %v7542 = vadd.f32 %v7487, %v7530
      %v7543 = vadd.f32 %v7488, %v7530
      %v7544 = vadd.f32 %v7489, %v7530
      %v7545 = vadd.f32 %v7490, %v7530
      %v7546 = vadd.f32 %v7491, %v7530
      %v7547 = vadd.f32 %v7492, %v7530
      %v7548 = vadd.f32 %v7493, %v7530
      %v7549 = vadd.f32 %v7494, %v7530
      %v7550 = vadd.f32 %v7495, %v7530
      %v7551 = vadd.f32 %v7496, %v7530
      %v7552 = vadd.f32 %v7497, %v7530
      %v7553 = vadd.f32 %v7498, %v7530
      %v7554 = vadd.f32 %v7499, %v7530
      %v7555 = vadd.f32 %v7500, %v7530
      %v7556 = vadd.f32 %v7501, %v7530
      %v7557 = vadd.f32 %v7502, %v7530
      %v7558 = vadd.f32 %v7503, %v7530
      %v7559 = vadd.f32 %v7504, %v7530
      %v7560 = vadd.f32 %v7505, %v7530
      %v7561 = vadd.f32 %v7506, %v7530
      %v7562 = vadd.f32 %v7507, %v7530
      %v7563 = vadd.f32 %v7508, %v7530
      %v7564 = vadd.f32 %v7509, %v7530
      %v7565 = vadd.f32 %v7510, %v7530
      %v7566 = vadd.f32 %v7511, %v7530
      %v7567 = vadd.f32 %v7512, %v7530
      %v7568 = vadd.f32 %v7513, %v7530
      %v7569 = vadd.f32 %v7514, %v7530
      %v7570 = vadd.f32 %v7515, %v7530
      %v7571 = vadd.f32 %v7516, %v7530
      %v7572 = vadd.f32 %v7517, %v7530
      %v7573 = vadd.f32 %v7518, %v7530
      %v7574 = vadd.f32 %v7519, %v7530
      %v7575 = vadd.f32 %v7520, %v7530
      %v7576 = vadd.f32 %v7521, %v7530
      %v7577 = vadd.f32 %v7522, %v7530
      %v7578 = vadd.f32 %v7523, %v7530
      %v7579 = vadd.f32 %v7524, %v7530
      %v7580 = vmax.f32 %v7532, 0.0
      %v7581 = vmax.f32 %v7533, 0.0
      %v7582 = vmax.f32 %v7534, 0.0
      %v7583 = vmax.f32 %v7535, 0.0
      %v7584 = vmax.f32 %v7536, 0.0
      %v7585 = vmax.f32 %v7537, 0.0
      %v7586 = vmax.f32 %v7538, 0.0
      %v7587 = vmax.f32 %v7539, 0.0
      %v7588 = vmax.f32 %v7540, 0.0
      %v7589 = vmax.f32 %v7541, 0.0
      %v7590 = vmax.f32 %v7542, 0.0
      %v7591 = vmax.f32 %v7543, 0.0
      %v7592 = vmax.f32 %v7544, 0.0
      %v7593 = vmax.f32 %v7545, 0.0
      %v7594 = vmax.f32 %v7546, 0.0
      %v7595 = vmax.f32 %v7547, 0.0
      %v7596 = vmax.f32 %v7548, 0.0
      %v7597 = vmax.f32 %v7549, 0.0
      %v7598 = vmax.f32 %v7550, 0.0
      %v7599 = vmax.f32 %v7551, 0.0
      %v7600 = vmax.f32 %v7552, 0.0
      %v7601 = vmax.f32 %v7553, 0.0
      %v7602 = vmax.f32 %v7554, 0.0
      %v7603 = vmax.f32 %v7555, 0.0
      %v7604 = vmax.f32 %v7556, 0.0
      %v7605 = vmax.f32 %v7557, 0.0
      %v7606 = vmax.f32 %v7558, 0.0
      %v7607 = vmax.f32 %v7559, 0.0
      %v7608 = vmax.f32 %v7560, 0.0
      %v7609 = vmax.f32 %v7561, 0.0
      %v7610 = vmax.f32 %v7562, 0.0
      %v7611 = vmax.f32 %v7563, 0.0
      %v7612 = vmax.f32 %v7564, 0.0
      %v7613 = vmax.f32 %v7565, 0.0
      %v7614 = vmax.f32 %v7566, 0.0
      %v7615 = vmax.f32 %v7567, 0.0
      %v7616 = vmax.f32 %v7568, 0.0
      %v7617 = vmax.f32 %v7569, 0.0
      %v7618 = vmax.f32 %v7570, 0.0
      %v7619 = vmax.f32 %v7571, 0.0
      %v7620 = vmax.f32 %v7572, 0.0
      %v7621 = vmax.f32 %v7573, 0.0
      %v7622 = vmax.f32 %v7574, 0.0
      %v7623 = vmax.f32 %v7575, 0.0
      %v7624 = vmax.f32 %v7576, 0.0
      %v7625 = vmax.f32 %v7577, 0.0
      %v7626 = vmax.f32 %v7578, 0.0
      %v7627 = vmax.f32 %v7579, 0.0
      %v7628 = vsel %vm1732, %v7580, 0.0
      %v7629 = vsel %vm1733, %v7581, 0.0
      %v7630 = vsel %vm1734, %v7582, 0.0
      %v7631 = vsel %vm1735, %v7583, 0.0
      %v7632 = vsel %vm1736, %v7584, 0.0
      %v7633 = vsel %vm1737, %v7585, 0.0
      %v7634 = vsel %vm1738, %v7586, 0.0
      %v7635 = vsel %vm1739, %v7587, 0.0
      %v7636 = vsel %vm1740, %v7588, 0.0
      %v7637 = vsel %vm1741, %v7589, 0.0
      %v7638 = vsel %vm1742, %v7590, 0.0
      %v7639 = vsel %vm1743, %v7591, 0.0
      %v7640 = vsel %vm1744, %v7592, 0.0
      %v7641 = vsel %vm1745, %v7593, 0.0
      %v7642 = vsel %vm1746, %v7594, 0.0
      %v7643 = vsel %vm1747, %v7595, 0.0
      %v7644 = vsel %vm1748, %v7596, 0.0
      %v7645 = vsel %vm1749, %v7597, 0.0
      %v7646 = vsel %vm1750, %v7598, 0.0
      %v7647 = vsel %vm1751, %v7599, 0.0
      %v7648 = vsel %vm1752, %v7600, 0.0
      %v7649 = vsel %vm1753, %v7601, 0.0
      %v7650 = vsel %vm1754, %v7602, 0.0
      %v7651 = vsel %vm1755, %v7603, 0.0
      %v7652 = vsel %vm1756, %v7604, 0.0
      %v7653 = vsel %vm1757, %v7605, 0.0
      %v7654 = vsel %vm1758, %v7606, 0.0
      %v7655 = vsel %vm1759, %v7607, 0.0
      %v7656 = vsel %vm1760, %v7608, 0.0
      %v7657 = vsel %vm1761, %v7609, 0.0
      %v7658 = vsel %vm1762, %v7610, 0.0
      %v7659 = vsel %vm1763, %v7611, 0.0
      %v7660 = vsel %vm1764, %v7612, 0.0
      %v7661 = vsel %vm1765, %v7613, 0.0
      %v7662 = vsel %vm1766, %v7614, 0.0
      %v7663 = vsel %vm1767, %v7615, 0.0
      %v7664 = vsel %vm1768, %v7616, 0.0
      %v7665 = vsel %vm1769, %v7617, 0.0
      %v7666 = vsel %vm1770, %v7618, 0.0
      %v7667 = vsel %vm1771, %v7619, 0.0
      %v7668 = vsel %vm1772, %v7620, 0.0
      %v7669 = vsel %vm1773, %v7621, 0.0
      %v7670 = vsel %vm1774, %v7622, 0.0
      %v7671 = vsel %vm1775, %v7623, 0.0
      %v7672 = vsel %vm1776, %v7624, 0.0
      %v7673 = vsel %vm1777, %v7625, 0.0
      %v7674 = vsel %vm1778, %v7626, 0.0
      %v7675 = vsel %vm1779, %v7627, 0.0
      %7676 = vst.msk [vmem:[#allocation4 + $0x68] sm:$0xff] %vm1170, %v7628
      %7677 = vst.msk [vmem:[#allocation4 + $0x70] sm:$0xff] %vm1170, %v7629
      %7678 = vst.msk [vmem:[#allocation4 + $0x78] sm:$0xff] %vm1170, %v7630
      %7679 = vst.msk [vmem:[#allocation4 + $0x80] sm:$0xff] %vm1170, %v7631
      %7680 = vst.msk [vmem:[#allocation4 + $0x88] sm:$0xff] %vm1170, %v7632
      %7681 = vst.msk [vmem:[#allocation4 + $0x90] sm:$0xff] %vm1170, %v7633
      %7682 = vst.msk [vmem:[#allocation4 + $0x98] sm:$0xff] %vm1170, %v7634
      %7683 = vst.msk [vmem:[#allocation4 + $0xa0] sm:$0xff] %vm1170, %v7635
      %7684 = vst.msk [vmem:[#allocation4 + $0xa8] sm:$0xff] %vm1170, %v7636
      %7685 = vst.msk [vmem:[#allocation4 + $0xb0] sm:$0xff] %vm1170, %v7637
      %7686 = vst.msk [vmem:[#allocation4 + $0xb8] sm:$0xff] %vm1170, %v7638
      %7687 = vst.msk [vmem:[#allocation4 + $0xc0] sm:$0xff] %vm1170, %v7639
      %7688 = vst.msk [vmem:[#allocation4 + $0xc8] sm:$0xff] %vm1170, %v7640
      %7689 = vst.msk [vmem:[#allocation4 + $0xd0] sm:$0xff] %vm1170, %v7641
      %7690 = vst.msk [vmem:[#allocation4 + $0xd8] sm:$0xff] %vm1170, %v7642
      %7691 = vst.msk [vmem:[#allocation4 + $0xe0] sm:$0xff] %vm1170, %v7643
      %7692 = vst.msk [vmem:[#allocation4 + $0xe8] sm:$0xff] %vm1170, %v7644
      %7693 = vst.msk [vmem:[#allocation4 + $0xf0] sm:$0xff] %vm1170, %v7645
      %7694 = vst.msk [vmem:[#allocation4 + $0xf8] sm:$0xff] %vm1170, %v7646
      %7695 = vst.msk [vmem:[#allocation4 + $0x100] sm:$0xff] %vm1170, %v7647
      %7696 = vst.msk [vmem:[#allocation4 + $0x108] sm:$0xff] %vm1170, %v7648
      %7697 = vst.msk [vmem:[#allocation4 + $0x110] sm:$0xff] %vm1170, %v7649
      %7698 = vst.msk [vmem:[#allocation4 + $0x118] sm:$0xff] %vm1170, %v7650
      %7699 = vst.msk [vmem:[#allocation4 + $0x120] sm:$0xff] %vm1170, %v7651
      %7700 = vst.msk [vmem:[#allocation4 + $0x128] sm:$0xff] %vm1170, %v7652
      %7701 = vst.msk [vmem:[#allocation4 + $0x130] sm:$0xff] %vm1170, %v7653
      %7702 = vst.msk [vmem:[#allocation4 + $0x138] sm:$0xff] %vm1170, %v7654
      %7703 = vst.msk [vmem:[#allocation4 + $0x140] sm:$0xff] %vm1170, %v7655
      %7704 = vst.msk [vmem:[#allocation4 + $0x148] sm:$0xff] %vm1170, %v7656
      %7705 = vst.msk [vmem:[#allocation4 + $0x150] sm:$0xff] %vm1170, %v7657
      %7706 = vst.msk [vmem:[#allocation4 + $0x158] sm:$0xff] %vm1170, %v7658
      %7707 = vst.msk [vmem:[#allocation4 + $0x160] sm:$0xff] %vm1170, %v7659
      %7708 = vst.msk [vmem:[#allocation4 + $0x168] sm:$0xff] %vm1170, %v7660
      %7709 = vst.msk [vmem:[#allocation4 + $0x170] sm:$0xff] %vm1170, %v7661
      %7710 = vst.msk [vmem:[#allocation4 + $0x178] sm:$0xff] %vm1170, %v7662
      %7711 = vst.msk [vmem:[#allocation4 + $0x180] sm:$0xff] %vm1170, %v7663
      %7712 = vst.msk [vmem:[#allocation4 + $0x188] sm:$0xff] %vm1170, %v7664
      %7713 = vst.msk [vmem:[#allocation4 + $0x190] sm:$0xff] %vm1170, %v7665
      %7714 = vst.msk [vmem:[#allocation4 + $0x198] sm:$0xff] %vm1170, %v7666
      %7715 = vst.msk [vmem:[#allocation4 + $0x1a0] sm:$0xff] %vm1170, %v7667
      %7716 = vst.msk [vmem:[#allocation4 + $0x1a8] sm:$0xff] %vm1170, %v7668
      %7717 = vst.msk [vmem:[#allocation4 + $0x1b0] sm:$0xff] %vm1170, %v7669
      %7718 = vst.msk [vmem:[#allocation4 + $0x1b8] sm:$0xff] %vm1170, %v7670
      %7719 = vst.msk [vmem:[#allocation4 + $0x1c0] sm:$0xff] %vm1170, %v7671
      %7720 = vst.msk [vmem:[#allocation4 + $0x1c8] sm:$0xff] %vm1170, %v7672
      %7721 = vst.msk [vmem:[#allocation4 + $0x1d0] sm:$0xff] %vm1170, %v7673
      %7722 = vst.msk [vmem:[#allocation4 + $0x1d8] sm:$0xff] %vm1170, %v7674
      %7723 = vst.msk [vmem:[#allocation4 + $0x1e0] sm:$0xff] %vm1170, %v7675
      %v7724 = vld [vmem:[#allocation4 + $0x36] sm:$0xff]
      %v7725 = vld [vmem:[#allocation4 + $0x3e] sm:$0xff]
      %v7726 = vld [vmem:[#allocation4 + $0x46] sm:$0xff]
      %v7727 = vld [vmem:[#allocation4 + $0x4e] sm:$0xff]
      %v7728 = vld [vmem:[#allocation4 + $0x56] sm:$0xff]
      %v7729 = vld [vmem:[#allocation4 + $0x5e] sm:$0xff]
      %v7730 = vld [vmem:[#allocation4 + $0x66] sm:$0xff]
      %v7731 = vld [vmem:[#allocation4 + $0x6e] sm:$0xff]
      %v7732 = vld [vmem:[#allocation4 + $0x76] sm:$0xff]
      %v7733 = vld [vmem:[#allocation4 + $0x7e] sm:$0xff]
      %v7734 = vld [vmem:[#allocation4 + $0x86] sm:$0xff]
      %v7735 = vld [vmem:[#allocation4 + $0x8e] sm:$0xff]
      %v7736 = vld [vmem:[#allocation4 + $0x96] sm:$0xff]
      %v7737 = vld [vmem:[#allocation4 + $0x9e] sm:$0xff]
      %v7738 = vld [vmem:[#allocation4 + $0xa6] sm:$0xff]
      %v7739 = vld [vmem:[#allocation4 + $0xae] sm:$0xff]
      %v7740 = vld [vmem:[#allocation4 + $0xb6] sm:$0xff]
      %v7741 = vld [vmem:[#allocation4 + $0xbe] sm:$0xff]
      %v7742 = vld [vmem:[#allocation4 + $0xc6] sm:$0xff]
      %v7743 = vld [vmem:[#allocation4 + $0xce] sm:$0xff]
      %v7744 = vld [vmem:[#allocation4 + $0xd6] sm:$0xff]
      %v7745 = vld [vmem:[#allocation4 + $0xde] sm:$0xff]
      %v7746 = vld [vmem:[#allocation4 + $0xe6] sm:$0xff]
      %v7747 = vld [vmem:[#allocation4 + $0xee] sm:$0xff]
      %v7748 = vld [vmem:[#allocation4 + $0xf6] sm:$0xff]
      %v7749 = vld [vmem:[#allocation4 + $0xfe] sm:$0xff]
      %v7750 = vld [vmem:[#allocation4 + $0x106] sm:$0xff]
      %v7751 = vld [vmem:[#allocation4 + $0x10e] sm:$0xff]
      %v7752 = vld [vmem:[#allocation4 + $0x116] sm:$0xff]
      %v7753 = vld [vmem:[#allocation4 + $0x11e] sm:$0xff]
      %v7754 = vld [vmem:[#allocation4 + $0x126] sm:$0xff]
      %v7755 = vld [vmem:[#allocation4 + $0x12e] sm:$0xff]
      %v7756 = vld [vmem:[#allocation4 + $0x136] sm:$0xff]
      %v7757 = vld [vmem:[#allocation4 + $0x13e] sm:$0xff]
      %v7758 = vld [vmem:[#allocation4 + $0x146] sm:$0xff]
      %v7759 = vld [vmem:[#allocation4 + $0x14e] sm:$0xff]
      %v7760 = vld [vmem:[#allocation4 + $0x156] sm:$0xff]
      %v7761 = vld [vmem:[#allocation4 + $0x15e] sm:$0xff]
      %v7762 = vld [vmem:[#allocation4 + $0x166] sm:$0xff]
      %v7763 = vld [vmem:[#allocation4 + $0x16e] sm:$0xff]
      %v7764 = vld [vmem:[#allocation4 + $0x176] sm:$0xff]
      %v7765 = vld [vmem:[#allocation4 + $0x17e] sm:$0xff]
      %v7766 = vld [vmem:[#allocation4 + $0x186] sm:$0xff]
      %v7767 = vld [vmem:[#allocation4 + $0x18e] sm:$0xff]
      %v7768 = vld [vmem:[#allocation4 + $0x196] sm:$0xff]
      %v7769 = vld [vmem:[#allocation4 + $0x19e] sm:$0xff]
      %v7770 = vld [vmem:[#allocation4 + $0x1a6] sm:$0xff]
      %v7771 = vld [vmem:[#allocation4 + $0x1ae] sm:$0xff]
      %v7772 = vld [vmem:[#allocation4 + $0x1b6] sm:$0xff]
      %v7773 = vld [vmem:[#allocation4 + $0x1be] sm:$0xff]
      %v7774 = vld [vmem:[#allocation4 + $0x1c6] sm:$0xff]
      %v7775 = vld [vmem:[#allocation4 + $0x1ce] sm:$0xff]
      %v7776 = vld [vmem:[#allocation4 + $0x1d6] sm:$0xff]
      %v7777 = vld [vmem:[#allocation4 + $0x1de] sm:$0xff]
      %v7778 = vld [vmem:[#allocation4 + $0x1e6] sm:$0xff]
      %v7779 = vld [vmem:[#allocation4 + $0x1ee] sm:$0xff]
      %v7780 = vld [vmem:[#allocation4 + $0x1f6] sm:$0xff]
      %v7781 = vld [vmem:[#allocation4 + $0x1fe] sm:$0xff]
      %v7782 = vld [vmem:[#allocation4 + $0x206] sm:$0xff]
      %v7783 = vld [vmem:[#allocation4 + $0x20e] sm:$0xff]
      %7784 = vst.msk [vmem:[#allocation5] sm:$0xff] %vm1170, %v7724
      %7785 = vst.msk [vmem:[#allocation5 + $0x10] sm:$0xff] %vm1170, %v7725
      %7786 = vst.msk [vmem:[#allocation5 + $0x20] sm:$0xff] %vm1170, %v7726
      %7787 = vst.msk [vmem:[#allocation5 + $0x30] sm:$0xff] %vm1170, %v7727
      %7788 = vst.msk [vmem:[#allocation5 + $0x40] sm:$0xff] %vm1170, %v7728
      %7789 = vst.msk [vmem:[#allocation5 + $0x50] sm:$0xff] %vm1170, %v7729
      %7790 = vst.msk [vmem:[#allocation5 + $0x60] sm:$0xff] %vm1170, %v7730
      %7791 = vst.msk [vmem:[#allocation5 + $0x70] sm:$0xff] %vm1170, %v7731
      %7792 = vst.msk [vmem:[#allocation5 + $0x80] sm:$0xff] %vm1170, %v7732
      %7793 = vst.msk [vmem:[#allocation5 + $0x90] sm:$0xff] %vm1170, %v7733
      %7794 = vst.msk [vmem:[#allocation5 + $0xa0] sm:$0xff] %vm1170, %v7734
      %7795 = vst.msk [vmem:[#allocation5 + $0xb0] sm:$0xff] %vm1170, %v7735
      %7796 = vst.msk [vmem:[#allocation5 + $0xc0] sm:$0xff] %vm1170, %v7736
      %7797 = vst.msk [vmem:[#allocation5 + $0xd0] sm:$0xff] %vm1170, %v7737
      %7798 = vst.msk [vmem:[#allocation5 + $0xe0] sm:$0xff] %vm1170, %v7738
      %7799 = vst.msk [vmem:[#allocation5 + $0xf0] sm:$0xff] %vm1170, %v7739
      %7800 = vst.msk [vmem:[#allocation5 + $0x100] sm:$0xff] %vm1170, %v7740
      %7801 = vst.msk [vmem:[#allocation5 + $0x110] sm:$0xff] %vm1170, %v7741
      %7802 = vst.msk [vmem:[#allocation5 + $0x120] sm:$0xff] %vm1170, %v7742
      %7803 = vst.msk [vmem:[#allocation5 + $0x130] sm:$0xff] %vm1170, %v7743
      %7804 = vst.msk [vmem:[#allocation5 + $0x140] sm:$0xff] %vm1170, %v7744
      %7805 = vst.msk [vmem:[#allocation5 + $0x150] sm:$0xff] %vm1170, %v7745
      %7806 = vst.msk [vmem:[#allocation5 + $0x160] sm:$0xff] %vm1170, %v7746
      %7807 = vst.msk [vmem:[#allocation5 + $0x170] sm:$0xff] %vm1170, %v7747
      %7808 = vst.msk [vmem:[#allocation5 + $0x180] sm:$0xff] %vm1170, %v7748
      %7809 = vst.msk [vmem:[#allocation5 + $0x190] sm:$0xff] %vm1170, %v7749
      %7810 = vst.msk [vmem:[#allocation5 + $0x1a0] sm:$0xff] %vm1170, %v7750
      %7811 = vst.msk [vmem:[#allocation5 + $0x1b0] sm:$0xff] %vm1170, %v7751
      %7812 = vst.msk [vmem:[#allocation5 + $0x1c0] sm:$0xff] %vm1170, %v7752
      %7813 = vst.msk [vmem:[#allocation5 + $0x1d0] sm:$0xff] %vm1170, %v7753
      %7814 = vst.msk [vmem:[#allocation5 + $0x1e0] sm:$0xff] %vm1170, %v7754
      %7815 = vst.msk [vmem:[#allocation5 + $0x1f0] sm:$0xff] %vm1170, %v7755
      %7816 = vst.msk [vmem:[#allocation5 + $0x200] sm:$0xff] %vm1170, %v7756
      %7817 = vst.msk [vmem:[#allocation5 + $0x210] sm:$0xff] %vm1170, %v7757
      %7818 = vst.msk [vmem:[#allocation5 + $0x220] sm:$0xff] %vm1170, %v7758
      %7819 = vst.msk [vmem:[#allocation5 + $0x230] sm:$0xff] %vm1170, %v7759
      %7820 = vst.msk [vmem:[#allocation5 + $0x240] sm:$0xff] %vm1170, %v7760
      %7821 = vst.msk [vmem:[#allocation5 + $0x250] sm:$0xff] %vm1170, %v7761
      %7822 = vst.msk [vmem:[#allocation5 + $0x260] sm:$0xff] %vm1170, %v7762
      %7823 = vst.msk [vmem:[#allocation5 + $0x270] sm:$0xff] %vm1170, %v7763
      %7824 = vst.msk [vmem:[#allocation5 + $0x280] sm:$0xff] %vm1170, %v7764
      %7825 = vst.msk [vmem:[#allocation5 + $0x290] sm:$0xff] %vm1170, %v7765
      %7826 = vst.msk [vmem:[#allocation5 + $0x2a0] sm:$0xff] %vm1170, %v7766
      %7827 = vst.msk [vmem:[#allocation5 + $0x2b0] sm:$0xff] %vm1170, %v7767
      %7828 = vst.msk [vmem:[#allocation5 + $0x2c0] sm:$0xff] %vm1170, %v7768
      %7829 = vst.msk [vmem:[#allocation5 + $0x2d0] sm:$0xff] %vm1170, %v7769
      %7830 = vst.msk [vmem:[#allocation5 + $0x2e0] sm:$0xff] %vm1170, %v7770
      %7831 = vst.msk [vmem:[#allocation5 + $0x2f0] sm:$0xff] %vm1170, %v7771
      %7832 = vst.msk [vmem:[#allocation5 + $0x300] sm:$0xff] %vm1170, %v7772
      %7833 = vst.msk [vmem:[#allocation5 + $0x310] sm:$0xff] %vm1170, %v7773
      %7834 = vst.msk [vmem:[#allocation5 + $0x320] sm:$0xff] %vm1170, %v7774
      %7835 = vst.msk [vmem:[#allocation5 + $0x330] sm:$0xff] %vm1170, %v7775
      %7836 = vst.msk [vmem:[#allocation5 + $0x340] sm:$0xff] %vm1170, %v7776
      %7837 = vst.msk [vmem:[#allocation5 + $0x350] sm:$0xff] %vm1170, %v7777
      %7838 = vst.msk [vmem:[#allocation5 + $0x360] sm:$0xff] %vm1170, %v7778
      %7839 = vst.msk [vmem:[#allocation5 + $0x370] sm:$0xff] %vm1170, %v7779
      %7840 = vst.msk [vmem:[#allocation5 + $0x380] sm:$0xff] %vm1170, %v7780
      %7841 = vst.msk [vmem:[#allocation5 + $0x390] sm:$0xff] %vm1170, %v7781
      %7842 = vst.msk [vmem:[#allocation5 + $0x3a0] sm:$0xff] %vm1170, %v7782
      %7843 = vst.msk [vmem:[#allocation5 + $0x3b0] sm:$0xff] %vm1170, %v7783
      %v7844 = vld [vmem:[#allocation4 + $0x37] sm:$0xff]
      %v7845 = vld [vmem:[#allocation4 + $0x3f] sm:$0xff]
      %v7846 = vld [vmem:[#allocation4 + $0x47] sm:$0xff]
      %v7847 = vld [vmem:[#allocation4 + $0x4f] sm:$0xff]
      %v7848 = vld [vmem:[#allocation4 + $0x57] sm:$0xff]
      %v7849 = vld [vmem:[#allocation4 + $0x5f] sm:$0xff]
      %v7850 = vld [vmem:[#allocation4 + $0x67] sm:$0xff]
      %v7851 = vld [vmem:[#allocation4 + $0x6f] sm:$0xff]
      %v7852 = vld [vmem:[#allocation4 + $0x77] sm:$0xff]
      %v7853 = vld [vmem:[#allocation4 + $0x7f] sm:$0xff]
      %v7854 = vld [vmem:[#allocation4 + $0x87] sm:$0xff]
      %v7855 = vld [vmem:[#allocation4 + $0x8f] sm:$0xff]
      %v7856 = vld [vmem:[#allocation4 + $0x97] sm:$0xff]
      %v7857 = vld [vmem:[#allocation4 + $0x9f] sm:$0xff]
      %v7858 = vld [vmem:[#allocation4 + $0xa7] sm:$0xff]
      %v7859 = vld [vmem:[#allocation4 + $0xaf] sm:$0xff]
      %v7860 = vld [vmem:[#allocation4 + $0xb7] sm:$0xff]
      %v7861 = vld [vmem:[#allocation4 + $0xbf] sm:$0xff]
      %v7862 = vld [vmem:[#allocation4 + $0xc7] sm:$0xff]
      %v7863 = vld [vmem:[#allocation4 + $0xcf] sm:$0xff]
      %v7864 = vld [vmem:[#allocation4 + $0xd7] sm:$0xff]
      %v7865 = vld [vmem:[#allocation4 + $0xdf] sm:$0xff]
      %v7866 = vld [vmem:[#allocation4 + $0xe7] sm:$0xff]
      %v7867 = vld [vmem:[#allocation4 + $0xef] sm:$0xff]
      %v7868 = vld [vmem:[#allocation4 + $0xf7] sm:$0xff]
      %v7869 = vld [vmem:[#allocation4 + $0xff] sm:$0xff]
      %v7870 = vld [vmem:[#allocation4 + $0x107] sm:$0xff]
      %v7871 = vld [vmem:[#allocation4 + $0x10f] sm:$0xff]
      %v7872 = vld [vmem:[#allocation4 + $0x117] sm:$0xff]
      %v7873 = vld [vmem:[#allocation4 + $0x11f] sm:$0xff]
      %v7874 = vld [vmem:[#allocation4 + $0x127] sm:$0xff]
      %v7875 = vld [vmem:[#allocation4 + $0x12f] sm:$0xff]
      %v7876 = vld [vmem:[#allocation4 + $0x137] sm:$0xff]
      %v7877 = vld [vmem:[#allocation4 + $0x13f] sm:$0xff]
      %v7878 = vld [vmem:[#allocation4 + $0x147] sm:$0xff]
      %v7879 = vld [vmem:[#allocation4 + $0x14f] sm:$0xff]
      %v7880 = vld [vmem:[#allocation4 + $0x157] sm:$0xff]
      %v7881 = vld [vmem:[#allocation4 + $0x15f] sm:$0xff]
      %v7882 = vld [vmem:[#allocation4 + $0x167] sm:$0xff]
      %v7883 = vld [vmem:[#allocation4 + $0x16f] sm:$0xff]
      %v7884 = vld [vmem:[#allocation4 + $0x177] sm:$0xff]
      %v7885 = vld [vmem:[#allocation4 + $0x17f] sm:$0xff]
      %v7886 = vld [vmem:[#allocation4 + $0x187] sm:$0xff]
      %v7887 = vld [vmem:[#allocation4 + $0x18f] sm:$0xff]
      %v7888 = vld [vmem:[#allocation4 + $0x197] sm:$0xff]
      %v7889 = vld [vmem:[#allocation4 + $0x19f] sm:$0xff]
      %v7890 = vld [vmem:[#allocation4 + $0x1a7] sm:$0xff]
      %v7891 = vld [vmem:[#allocation4 + $0x1af] sm:$0xff]
      %v7892 = vld [vmem:[#allocation4 + $0x1b7] sm:$0xff]
      %v7893 = vld [vmem:[#allocation4 + $0x1bf] sm:$0xff]
      %v7894 = vld [vmem:[#allocation4 + $0x1c7] sm:$0xff]
      %v7895 = vld [vmem:[#allocation4 + $0x1cf] sm:$0xff]
      %v7896 = vld [vmem:[#allocation4 + $0x1d7] sm:$0xff]
      %v7897 = vld [vmem:[#allocation4 + $0x1df] sm:$0xff]
      %v7898 = vld [vmem:[#allocation4 + $0x1e7] sm:$0xff]
      %v7899 = vld [vmem:[#allocation4 + $0x1ef] sm:$0xff]
      %v7900 = vld [vmem:[#allocation4 + $0x1f7] sm:$0xff]
      %v7901 = vld [vmem:[#allocation4 + $0x1ff] sm:$0xff]
      %v7902 = vld [vmem:[#allocation4 + $0x207] sm:$0xff]
      %v7903 = vld [vmem:[#allocation4 + $0x20f] sm:$0xff]
      %7964 = vrot.lane.b32.xlu0 %v7844, 32
      %v7965 = vpop.permute.xlu0 %7964
      %7966 = vrot.lane.b32.xlu0 %v7845, 32
      %v7967 = vpop.permute.xlu0 %7966
      %7968 = vrot.lane.b32.xlu0 %v7846, 32
      %v7969 = vpop.permute.xlu0 %7968
      %7970 = vrot.lane.b32.xlu0 %v7847, 32
      %v7971 = vpop.permute.xlu0 %7970
      %7972 = vrot.lane.b32.xlu0 %v7848, 32
      %v7973 = vpop.permute.xlu0 %7972
      %7974 = vrot.lane.b32.xlu0 %v7849, 32
      %v7975 = vpop.permute.xlu0 %7974
      %7976 = vrot.lane.b32.xlu0 %v7850, 32
      %v7977 = vpop.permute.xlu0 %7976
      %7978 = vrot.lane.b32.xlu0 %v7851, 32
      %v7979 = vpop.permute.xlu0 %7978
      %7980 = vrot.lane.b32.xlu0 %v7852, 32
      %v7981 = vpop.permute.xlu0 %7980
      %7982 = vrot.lane.b32.xlu0 %v7853, 32
      %v7983 = vpop.permute.xlu0 %7982
      %7984 = vrot.lane.b32.xlu0 %v7854, 32
      %v7985 = vpop.permute.xlu0 %7984
      %7986 = vrot.lane.b32.xlu0 %v7855, 32
      %v7987 = vpop.permute.xlu0 %7986
      %7988 = vrot.lane.b32.xlu0 %v7856, 32
      %v7989 = vpop.permute.xlu0 %7988
      %7990 = vrot.lane.b32.xlu0 %v7857, 32
      %v7991 = vpop.permute.xlu0 %7990
      %7992 = vrot.lane.b32.xlu0 %v7858, 32
      %v7993 = vpop.permute.xlu0 %7992
      %7994 = vrot.lane.b32.xlu0 %v7859, 32
      %v7995 = vpop.permute.xlu0 %7994
      %7996 = vrot.lane.b32.xlu0 %v7860, 32
      %v7997 = vpop.permute.xlu0 %7996
      %7998 = vrot.lane.b32.xlu0 %v7861, 32
      %v7999 = vpop.permute.xlu0 %7998
      %8000 = vrot.lane.b32.xlu0 %v7862, 32
      %v8001 = vpop.permute.xlu0 %8000
      %8002 = vrot.lane.b32.xlu0 %v7863, 32
      %v8003 = vpop.permute.xlu0 %8002
      %8004 = vrot.lane.b32.xlu0 %v7864, 32
      %v8005 = vpop.permute.xlu0 %8004
      %8006 = vrot.lane.b32.xlu0 %v7865, 32
      %v8007 = vpop.permute.xlu0 %8006
      %8008 = vrot.lane.b32.xlu0 %v7866, 32
      %v8009 = vpop.permute.xlu0 %8008
      %8010 = vrot.lane.b32.xlu0 %v7867, 32
      %v8011 = vpop.permute.xlu0 %8010
      %8012 = vrot.lane.b32.xlu0 %v7868, 32
      %v8013 = vpop.permute.xlu0 %8012
      %8014 = vrot.lane.b32.xlu0 %v7869, 32
      %v8015 = vpop.permute.xlu0 %8014
      %8016 = vrot.lane.b32.xlu0 %v7870, 32
      %v8017 = vpop.permute.xlu0 %8016
      %8018 = vrot.lane.b32.xlu0 %v7871, 32
      %v8019 = vpop.permute.xlu0 %8018
      %8020 = vrot.lane.b32.xlu0 %v7872, 32
      %v8021 = vpop.permute.xlu0 %8020
      %8022 = vrot.lane.b32.xlu0 %v7873, 32
      %v8023 = vpop.permute.xlu0 %8022
      %8024 = vrot.lane.b32.xlu0 %v7874, 32
      %v8025 = vpop.permute.xlu0 %8024
      %8026 = vrot.lane.b32.xlu0 %v7875, 32
      %v8027 = vpop.permute.xlu0 %8026
      %8028 = vrot.lane.b32.xlu0 %v7876, 32
      %v8029 = vpop.permute.xlu0 %8028
      %8030 = vrot.lane.b32.xlu0 %v7877, 32
      %v8031 = vpop.permute.xlu0 %8030
      %8032 = vrot.lane.b32.xlu0 %v7878, 32
      %v8033 = vpop.permute.xlu0 %8032
      %8034 = vrot.lane.b32.xlu0 %v7879, 32
      %v8035 = vpop.permute.xlu0 %8034
      %8036 = vrot.lane.b32.xlu0 %v7880, 32
      %v8037 = vpop.permute.xlu0 %8036
      %8038 = vrot.lane.b32.xlu0 %v7881, 32
      %v8039 = vpop.permute.xlu0 %8038
      %8040 = vrot.lane.b32.xlu0 %v7882, 32
      %v8041 = vpop.permute.xlu0 %8040
      %8042 = vrot.lane.b32.xlu0 %v7883, 32
      %v8043 = vpop.permute.xlu0 %8042
      %8044 = vrot.lane.b32.xlu0 %v7884, 32
      %v8045 = vpop.permute.xlu0 %8044
      %8046 = vrot.lane.b32.xlu0 %v7885, 32
      %v8047 = vpop.permute.xlu0 %8046
      %8048 = vrot.lane.b32.xlu0 %v7886, 32
      %v8049 = vpop.permute.xlu0 %8048
      %8050 = vrot.lane.b32.xlu0 %v7887, 32
      %v8051 = vpop.permute.xlu0 %8050
      %8052 = vrot.lane.b32.xlu0 %v7888, 32
      %v8053 = vpop.permute.xlu0 %8052
      %8054 = vrot.lane.b32.xlu0 %v7889, 32
      %v8055 = vpop.permute.xlu0 %8054
      %8056 = vrot.lane.b32.xlu0 %v7890, 32
      %v8057 = vpop.permute.xlu0 %8056
      %8058 = vrot.lane.b32.xlu0 %v7891, 32
      %v8059 = vpop.permute.xlu0 %8058
      %8060 = vrot.lane.b32.xlu0 %v7892, 32
      %v8061 = vpop.permute.xlu0 %8060
      %8062 = vrot.lane.b32.xlu0 %v7893, 32
      %v8063 = vpop.permute.xlu0 %8062
      %8064 = vrot.lane.b32.xlu0 %v7894, 32
      %v8065 = vpop.permute.xlu0 %8064
      %8066 = vrot.lane.b32.xlu0 %v7895, 32
      %v8067 = vpop.permute.xlu0 %8066
      %8068 = vrot.lane.b32.xlu0 %v7896, 32
      %v8069 = vpop.permute.xlu0 %8068
      %8070 = vrot.lane.b32.xlu0 %v7897, 32
      %v8071 = vpop.permute.xlu0 %8070
      %8072 = vrot.lane.b32.xlu0 %v7898, 32
      %v8073 = vpop.permute.xlu0 %8072
      %8074 = vrot.lane.b32.xlu0 %v7899, 32
      %v8075 = vpop.permute.xlu0 %8074
      %8076 = vrot.lane.b32.xlu0 %v7900, 32
      %v8077 = vpop.permute.xlu0 %8076
      %8078 = vrot.lane.b32.xlu0 %v7901, 32
      %v8079 = vpop.permute.xlu0 %8078
      %8080 = vrot.lane.b32.xlu0 %v7902, 32
      %v8081 = vpop.permute.xlu0 %8080
      %8082 = vrot.lane.b32.xlu0 %v7903, 32
      %v8083 = vpop.permute.xlu0 %8082
      %vm8144 = vcmask 523520
      %8145 = vst.msk [vmem:[#allocation5] sm:$0xff] %vm8144, %v7965
      %8146 = vst.msk [vmem:[#allocation5 + $0x10] sm:$0xff] %vm8144, %v7967
      %8147 = vst.msk [vmem:[#allocation5 + $0x20] sm:$0xff] %vm8144, %v7969
      %8148 = vst.msk [vmem:[#allocation5 + $0x30] sm:$0xff] %vm8144, %v7971
      %8149 = vst.msk [vmem:[#allocation5 + $0x40] sm:$0xff] %vm8144, %v7973
      %8150 = vst.msk [vmem:[#allocation5 + $0x50] sm:$0xff] %vm8144, %v7975
      %8151 = vst.msk [vmem:[#allocation5 + $0x60] sm:$0xff] %vm8144, %v7977
      %8152 = vst.msk [vmem:[#allocation5 + $0x70] sm:$0xff] %vm8144, %v7979
      %8153 = vst.msk [vmem:[#allocation5 + $0x80] sm:$0xff] %vm8144, %v7981
      %8154 = vst.msk [vmem:[#allocation5 + $0x90] sm:$0xff] %vm8144, %v7983
      %8155 = vst.msk [vmem:[#allocation5 + $0xa0] sm:$0xff] %vm8144, %v7985
      %8156 = vst.msk [vmem:[#allocation5 + $0xb0] sm:$0xff] %vm8144, %v7987
      %8157 = vst.msk [vmem:[#allocation5 + $0xc0] sm:$0xff] %vm8144, %v7989
      %8158 = vst.msk [vmem:[#allocation5 + $0xd0] sm:$0xff] %vm8144, %v7991
      %8159 = vst.msk [vmem:[#allocation5 + $0xe0] sm:$0xff] %vm8144, %v7993
      %8160 = vst.msk [vmem:[#allocation5 + $0xf0] sm:$0xff] %vm8144, %v7995
      %8161 = vst.msk [vmem:[#allocation5 + $0x100] sm:$0xff] %vm8144, %v7997
      %8162 = vst.msk [vmem:[#allocation5 + $0x110] sm:$0xff] %vm8144, %v7999
      %8163 = vst.msk [vmem:[#allocation5 + $0x120] sm:$0xff] %vm8144, %v8001
      %8164 = vst.msk [vmem:[#allocation5 + $0x130] sm:$0xff] %vm8144, %v8003
      %8165 = vst.msk [vmem:[#allocation5 + $0x140] sm:$0xff] %vm8144, %v8005
      %8166 = vst.msk [vmem:[#allocation5 + $0x150] sm:$0xff] %vm8144, %v8007
      %8167 = vst.msk [vmem:[#allocation5 + $0x160] sm:$0xff] %vm8144, %v8009
      %8168 = vst.msk [vmem:[#allocation5 + $0x170] sm:$0xff] %vm8144, %v8011
      %8169 = vst.msk [vmem:[#allocation5 + $0x180] sm:$0xff] %vm8144, %v8013
      %8170 = vst.msk [vmem:[#allocation5 + $0x190] sm:$0xff] %vm8144, %v8015
      %8171 = vst.msk [vmem:[#allocation5 + $0x1a0] sm:$0xff] %vm8144, %v8017
      %8172 = vst.msk [vmem:[#allocation5 + $0x1b0] sm:$0xff] %vm8144, %v8019
      %8173 = vst.msk [vmem:[#allocation5 + $0x1c0] sm:$0xff] %vm8144, %v8021
      %8174 = vst.msk [vmem:[#allocation5 + $0x1d0] sm:$0xff] %vm8144, %v8023
      %8175 = vst.msk [vmem:[#allocation5 + $0x1e0] sm:$0xff] %vm8144, %v8025
      %8176 = vst.msk [vmem:[#allocation5 + $0x1f0] sm:$0xff] %vm8144, %v8027
      %8177 = vst.msk [vmem:[#allocation5 + $0x200] sm:$0xff] %vm8144, %v8029
      %8178 = vst.msk [vmem:[#allocation5 + $0x210] sm:$0xff] %vm8144, %v8031
      %8179 = vst.msk [vmem:[#allocation5 + $0x220] sm:$0xff] %vm8144, %v8033
      %8180 = vst.msk [vmem:[#allocation5 + $0x230] sm:$0xff] %vm8144, %v8035
      %8181 = vst.msk [vmem:[#allocation5 + $0x240] sm:$0xff] %vm8144, %v8037
      %8182 = vst.msk [vmem:[#allocation5 + $0x250] sm:$0xff] %vm8144, %v8039
      %8183 = vst.msk [vmem:[#allocation5 + $0x260] sm:$0xff] %vm8144, %v8041
      %8184 = vst.msk [vmem:[#allocation5 + $0x270] sm:$0xff] %vm8144, %v8043
      %8185 = vst.msk [vmem:[#allocation5 + $0x280] sm:$0xff] %vm8144, %v8045
      %8186 = vst.msk [vmem:[#allocation5 + $0x290] sm:$0xff] %vm8144, %v8047
      %8187 = vst.msk [vmem:[#allocation5 + $0x2a0] sm:$0xff] %vm8144, %v8049
      %8188 = vst.msk [vmem:[#allocation5 + $0x2b0] sm:$0xff] %vm8144, %v8051
      %8189 = vst.msk [vmem:[#allocation5 + $0x2c0] sm:$0xff] %vm8144, %v8053
      %8190 = vst.msk [vmem:[#allocation5 + $0x2d0] sm:$0xff] %vm8144, %v8055
      %8191 = vst.msk [vmem:[#allocation5 + $0x2e0] sm:$0xff] %vm8144, %v8057
      %8192 = vst.msk [vmem:[#allocation5 + $0x2f0] sm:$0xff] %vm8144, %v8059
      %8193 = vst.msk [vmem:[#allocation5 + $0x300] sm:$0xff] %vm8144, %v8061
      %8194 = vst.msk [vmem:[#allocation5 + $0x310] sm:$0xff] %vm8144, %v8063
      %8195 = vst.msk [vmem:[#allocation5 + $0x320] sm:$0xff] %vm8144, %v8065
      %8196 = vst.msk [vmem:[#allocation5 + $0x330] sm:$0xff] %vm8144, %v8067
      %8197 = vst.msk [vmem:[#allocation5 + $0x340] sm:$0xff] %vm8144, %v8069
      %8198 = vst.msk [vmem:[#allocation5 + $0x350] sm:$0xff] %vm8144, %v8071
      %8199 = vst.msk [vmem:[#allocation5 + $0x360] sm:$0xff] %vm8144, %v8073
      %8200 = vst.msk [vmem:[#allocation5 + $0x370] sm:$0xff] %vm8144, %v8075
      %8201 = vst.msk [vmem:[#allocation5 + $0x380] sm:$0xff] %vm8144, %v8077
      %8202 = vst.msk [vmem:[#allocation5 + $0x390] sm:$0xff] %vm8144, %v8079
      %8203 = vst.msk [vmem:[#allocation5 + $0x3a0] sm:$0xff] %vm8144, %v8081
      %8204 = vst.msk [vmem:[#allocation5 + $0x3b0] sm:$0xff] %vm8144, %v8083
      %v8205 = vld [vmem:[#allocation4 + $0x38] sm:$0xff]
      %v8206 = vld [vmem:[#allocation4 + $0x40] sm:$0xff]
      %v8207 = vld [vmem:[#allocation4 + $0x48] sm:$0xff]
      %v8208 = vld [vmem:[#allocation4 + $0x50] sm:$0xff]
      %v8209 = vld [vmem:[#allocation4 + $0x58] sm:$0xff]
      %v8210 = vld [vmem:[#allocation4 + $0x60] sm:$0xff]
      %v8211 = vld [vmem:[#allocation4 + $0x68] sm:$0xff]
      %v8212 = vld [vmem:[#allocation4 + $0x70] sm:$0xff]
      %v8213 = vld [vmem:[#allocation4 + $0x78] sm:$0xff]
      %v8214 = vld [vmem:[#allocation4 + $0x80] sm:$0xff]
      %v8215 = vld [vmem:[#allocation4 + $0x88] sm:$0xff]
      %v8216 = vld [vmem:[#allocation4 + $0x90] sm:$0xff]
      %v8217 = vld [vmem:[#allocation4 + $0x98] sm:$0xff]
      %v8218 = vld [vmem:[#allocation4 + $0xa0] sm:$0xff]
      %v8219 = vld [vmem:[#allocation4 + $0xa8] sm:$0xff]
      %v8220 = vld [vmem:[#allocation4 + $0xb0] sm:$0xff]
      %v8221 = vld [vmem:[#allocation4 + $0xb8] sm:$0xff]
      %v8222 = vld [vmem:[#allocation4 + $0xc0] sm:$0xff]
      %v8223 = vld [vmem:[#allocation4 + $0xc8] sm:$0xff]
      %v8224 = vld [vmem:[#allocation4 + $0xd0] sm:$0xff]
      %v8225 = vld [vmem:[#allocation4 + $0xd8] sm:$0xff]
      %v8226 = vld [vmem:[#allocation4 + $0xe0] sm:$0xff]
      %v8227 = vld [vmem:[#allocation4 + $0xe8] sm:$0xff]
      %v8228 = vld [vmem:[#allocation4 + $0xf0] sm:$0xff]
      %v8229 = vld [vmem:[#allocation4 + $0xf8] sm:$0xff]
      %v8230 = vld [vmem:[#allocation4 + $0x100] sm:$0xff]
      %v8231 = vld [vmem:[#allocation4 + $0x108] sm:$0xff]
      %v8232 = vld [vmem:[#allocation4 + $0x110] sm:$0xff]
      %v8233 = vld [vmem:[#allocation4 + $0x118] sm:$0xff]
      %v8234 = vld [vmem:[#allocation4 + $0x120] sm:$0xff]
      %v8235 = vld [vmem:[#allocation4 + $0x128] sm:$0xff]
      %v8236 = vld [vmem:[#allocation4 + $0x130] sm:$0xff]
      %v8237 = vld [vmem:[#allocation4 + $0x138] sm:$0xff]
      %v8238 = vld [vmem:[#allocation4 + $0x140] sm:$0xff]
      %v8239 = vld [vmem:[#allocation4 + $0x148] sm:$0xff]
      %v8240 = vld [vmem:[#allocation4 + $0x150] sm:$0xff]
      %v8241 = vld [vmem:[#allocation4 + $0x158] sm:$0xff]
      %v8242 = vld [vmem:[#allocation4 + $0x160] sm:$0xff]
      %v8243 = vld [vmem:[#allocation4 + $0x168] sm:$0xff]
      %v8244 = vld [vmem:[#allocation4 + $0x170] sm:$0xff]
      %v8245 = vld [vmem:[#allocation4 + $0x178] sm:$0xff]
      %v8246 = vld [vmem:[#allocation4 + $0x180] sm:$0xff]
      %v8247 = vld [vmem:[#allocation4 + $0x188] sm:$0xff]
      %v8248 = vld [vmem:[#allocation4 + $0x190] sm:$0xff]
      %v8249 = vld [vmem:[#allocation4 + $0x198] sm:$0xff]
      %v8250 = vld [vmem:[#allocation4 + $0x1a0] sm:$0xff]
      %v8251 = vld [vmem:[#allocation4 + $0x1a8] sm:$0xff]
      %v8252 = vld [vmem:[#allocation4 + $0x1b0] sm:$0xff]
      %v8253 = vld [vmem:[#allocation4 + $0x1b8] sm:$0xff]
      %v8254 = vld [vmem:[#allocation4 + $0x1c0] sm:$0xff]
      %v8255 = vld [vmem:[#allocation4 + $0x1c8] sm:$0xff]
      %v8256 = vld [vmem:[#allocation4 + $0x1d0] sm:$0xff]
      %v8257 = vld [vmem:[#allocation4 + $0x1d8] sm:$0xff]
      %v8258 = vld [vmem:[#allocation4 + $0x1e0] sm:$0xff]
      %v8259 = vld [vmem:[#allocation4 + $0x1e8] sm:$0xff]
      %v8260 = vld [vmem:[#allocation4 + $0x1f0] sm:$0xff]
      %v8261 = vld [vmem:[#allocation4 + $0x1f8] sm:$0xff]
      %v8262 = vld [vmem:[#allocation4 + $0x200] sm:$0xff]
      %v8263 = vld [vmem:[#allocation4 + $0x208] sm:$0xff]
      %v8264 = vld [vmem:[#allocation4 + $0x210] sm:$0xff]
      %8325 = vrot.lane.b32.xlu0 %v8205, 64
      %v8326 = vpop.permute.xlu0 %8325
      %8327 = vrot.lane.b32.xlu0 %v8206, 64
      %v8328 = vpop.permute.xlu0 %8327
      %8329 = vrot.lane.b32.xlu0 %v8207, 64
      %v8330 = vpop.permute.xlu0 %8329
      %8331 = vrot.lane.b32.xlu0 %v8208, 64
      %v8332 = vpop.permute.xlu0 %8331
      %8333 = vrot.lane.b32.xlu0 %v8209, 64
      %v8334 = vpop.permute.xlu0 %8333
      %8335 = vrot.lane.b32.xlu0 %v8210, 64
      %v8336 = vpop.permute.xlu0 %8335
      %8337 = vrot.lane.b32.xlu0 %v8211, 64
      %v8338 = vpop.permute.xlu0 %8337
      %8339 = vrot.lane.b32.xlu0 %v8212, 64
      %v8340 = vpop.permute.xlu0 %8339
      %8341 = vrot.lane.b32.xlu0 %v8213, 64
      %v8342 = vpop.permute.xlu0 %8341
      %8343 = vrot.lane.b32.xlu0 %v8214, 64
      %v8344 = vpop.permute.xlu0 %8343
      %8345 = vrot.lane.b32.xlu0 %v8215, 64
      %v8346 = vpop.permute.xlu0 %8345
      %8347 = vrot.lane.b32.xlu0 %v8216, 64
      %v8348 = vpop.permute.xlu0 %8347
      %8349 = vrot.lane.b32.xlu0 %v8217, 64
      %v8350 = vpop.permute.xlu0 %8349
      %8351 = vrot.lane.b32.xlu0 %v8218, 64
      %v8352 = vpop.permute.xlu0 %8351
      %8353 = vrot.lane.b32.xlu0 %v8219, 64
      %v8354 = vpop.permute.xlu0 %8353
      %8355 = vrot.lane.b32.xlu0 %v8220, 64
      %v8356 = vpop.permute.xlu0 %8355
      %8357 = vrot.lane.b32.xlu0 %v8221, 64
      %v8358 = vpop.permute.xlu0 %8357
      %8359 = vrot.lane.b32.xlu0 %v8222, 64
      %v8360 = vpop.permute.xlu0 %8359
      %8361 = vrot.lane.b32.xlu0 %v8223, 64
      %v8362 = vpop.permute.xlu0 %8361
      %8363 = vrot.lane.b32.xlu0 %v8224, 64
      %v8364 = vpop.permute.xlu0 %8363
      %8365 = vrot.lane.b32.xlu0 %v8225, 64
      %v8366 = vpop.permute.xlu0 %8365
      %8367 = vrot.lane.b32.xlu0 %v8226, 64
      %v8368 = vpop.permute.xlu0 %8367
      %8369 = vrot.lane.b32.xlu0 %v8227, 64
      %v8370 = vpop.permute.xlu0 %8369
      %8371 = vrot.lane.b32.xlu0 %v8228, 64
      %v8372 = vpop.permute.xlu0 %8371
      %8373 = vrot.lane.b32.xlu0 %v8229, 64
      %v8374 = vpop.permute.xlu0 %8373
      %8375 = vrot.lane.b32.xlu0 %v8230, 64
      %v8376 = vpop.permute.xlu0 %8375
      %8377 = vrot.lane.b32.xlu0 %v8231, 64
      %v8378 = vpop.permute.xlu0 %8377
      %8379 = vrot.lane.b32.xlu0 %v8232, 64
      %v8380 = vpop.permute.xlu0 %8379
      %8381 = vrot.lane.b32.xlu0 %v8233, 64
      %v8382 = vpop.permute.xlu0 %8381
      %8383 = vrot.lane.b32.xlu0 %v8234, 64
      %v8384 = vpop.permute.xlu0 %8383
      %8385 = vrot.lane.b32.xlu0 %v8235, 64
      %v8386 = vpop.permute.xlu0 %8385
      %8387 = vrot.lane.b32.xlu0 %v8236, 64
      %v8388 = vpop.permute.xlu0 %8387
      %8389 = vrot.lane.b32.xlu0 %v8237, 64
      %v8390 = vpop.permute.xlu0 %8389
      %8391 = vrot.lane.b32.xlu0 %v8238, 64
      %v8392 = vpop.permute.xlu0 %8391
      %8393 = vrot.lane.b32.xlu0 %v8239, 64
      %v8394 = vpop.permute.xlu0 %8393
      %8395 = vrot.lane.b32.xlu0 %v8240, 64
      %v8396 = vpop.permute.xlu0 %8395
      %8397 = vrot.lane.b32.xlu0 %v8241, 64
      %v8398 = vpop.permute.xlu0 %8397
      %8399 = vrot.lane.b32.xlu0 %v8242, 64
      %v8400 = vpop.permute.xlu0 %8399
      %8401 = vrot.lane.b32.xlu0 %v8243, 64
      %v8402 = vpop.permute.xlu0 %8401
      %8403 = vrot.lane.b32.xlu0 %v8244, 64
      %v8404 = vpop.permute.xlu0 %8403
      %8405 = vrot.lane.b32.xlu0 %v8245, 64
      %v8406 = vpop.permute.xlu0 %8405
      %8407 = vrot.lane.b32.xlu0 %v8246, 64
      %v8408 = vpop.permute.xlu0 %8407
      %8409 = vrot.lane.b32.xlu0 %v8247, 64
      %v8410 = vpop.permute.xlu0 %8409
      %8411 = vrot.lane.b32.xlu0 %v8248, 64
      %v8412 = vpop.permute.xlu0 %8411
      %8413 = vrot.lane.b32.xlu0 %v8249, 64
      %v8414 = vpop.permute.xlu0 %8413
      %8415 = vrot.lane.b32.xlu0 %v8250, 64
      %v8416 = vpop.permute.xlu0 %8415
      %8417 = vrot.lane.b32.xlu0 %v8251, 64
      %v8418 = vpop.permute.xlu0 %8417
      %8419 = vrot.lane.b32.xlu0 %v8252, 64
      %v8420 = vpop.permute.xlu0 %8419
      %8421 = vrot.lane.b32.xlu0 %v8253, 64
      %v8422 = vpop.permute.xlu0 %8421
      %8423 = vrot.lane.b32.xlu0 %v8254, 64
      %v8424 = vpop.permute.xlu0 %8423
      %8425 = vrot.lane.b32.xlu0 %v8255, 64
      %v8426 = vpop.permute.xlu0 %8425
      %8427 = vrot.lane.b32.xlu0 %v8256, 64
      %v8428 = vpop.permute.xlu0 %8427
      %8429 = vrot.lane.b32.xlu0 %v8257, 64
      %v8430 = vpop.permute.xlu0 %8429
      %8431 = vrot.lane.b32.xlu0 %v8258, 64
      %v8432 = vpop.permute.xlu0 %8431
      %8433 = vrot.lane.b32.xlu0 %v8259, 64
      %v8434 = vpop.permute.xlu0 %8433
      %8435 = vrot.lane.b32.xlu0 %v8260, 64
      %v8436 = vpop.permute.xlu0 %8435
      %8437 = vrot.lane.b32.xlu0 %v8261, 64
      %v8438 = vpop.permute.xlu0 %8437
      %8439 = vrot.lane.b32.xlu0 %v8262, 64
      %v8440 = vpop.permute.xlu0 %8439
      %8441 = vrot.lane.b32.xlu0 %v8263, 64
      %v8442 = vpop.permute.xlu0 %8441
      %8443 = vrot.lane.b32.xlu0 %v8264, 64
      %v8444 = vpop.permute.xlu0 %8443
      %vm8505 = vcmask 785920
      %8506 = vst.msk [vmem:[#allocation5] sm:$0xff] %vm8505, %v8326
      %8507 = vst.msk [vmem:[#allocation5 + $0x10] sm:$0xff] %vm8505, %v8328
      %8508 = vst.msk [vmem:[#allocation5 + $0x20] sm:$0xff] %vm8505, %v8330
      %8509 = vst.msk [vmem:[#allocation5 + $0x30] sm:$0xff] %vm8505, %v8332
      %8510 = vst.msk [vmem:[#allocation5 + $0x40] sm:$0xff] %vm8505, %v8334
      %8511 = vst.msk [vmem:[#allocation5 + $0x50] sm:$0xff] %vm8505, %v8336
      %8512 = vst.msk [vmem:[#allocation5 + $0x60] sm:$0xff] %vm8505, %v8338
      %8513 = vst.msk [vmem:[#allocation5 + $0x70] sm:$0xff] %vm8505, %v8340
      %8514 = vst.msk [vmem:[#allocation5 + $0x80] sm:$0xff] %vm8505, %v8342
      %8515 = vst.msk [vmem:[#allocation5 + $0x90] sm:$0xff] %vm8505, %v8344
      %8516 = vst.msk [vmem:[#allocation5 + $0xa0] sm:$0xff] %vm8505, %v8346
      %8517 = vst.msk [vmem:[#allocation5 + $0xb0] sm:$0xff] %vm8505, %v8348
      %8518 = vst.msk [vmem:[#allocation5 + $0xc0] sm:$0xff] %vm8505, %v8350
      %8519 = vst.msk [vmem:[#allocation5 + $0xd0] sm:$0xff] %vm8505, %v8352
      %8520 = vst.msk [vmem:[#allocation5 + $0xe0] sm:$0xff] %vm8505, %v8354
      %8521 = vst.msk [vmem:[#allocation5 + $0xf0] sm:$0xff] %vm8505, %v8356
      %8522 = vst.msk [vmem:[#allocation5 + $0x100] sm:$0xff] %vm8505, %v8358
      %8523 = vst.msk [vmem:[#allocation5 + $0x110] sm:$0xff] %vm8505, %v8360
      %8524 = vst.msk [vmem:[#allocation5 + $0x120] sm:$0xff] %vm8505, %v8362
      %8525 = vst.msk [vmem:[#allocation5 + $0x130] sm:$0xff] %vm8505, %v8364
      %8526 = vst.msk [vmem:[#allocation5 + $0x140] sm:$0xff] %vm8505, %v8366
      %8527 = vst.msk [vmem:[#allocation5 + $0x150] sm:$0xff] %vm8505, %v8368
      %8528 = vst.msk [vmem:[#allocation5 + $0x160] sm:$0xff] %vm8505, %v8370
      %8529 = vst.msk [vmem:[#allocation5 + $0x170] sm:$0xff] %vm8505, %v8372
      %8530 = vst.msk [vmem:[#allocation5 + $0x180] sm:$0xff] %vm8505, %v8374
      %8531 = vst.msk [vmem:[#allocation5 + $0x190] sm:$0xff] %vm8505, %v8376
      %8532 = vst.msk [vmem:[#allocation5 + $0x1a0] sm:$0xff] %vm8505, %v8378
      %8533 = vst.msk [vmem:[#allocation5 + $0x1b0] sm:$0xff] %vm8505, %v8380
      %8534 = vst.msk [vmem:[#allocation5 + $0x1c0] sm:$0xff] %vm8505, %v8382
      %8535 = vst.msk [vmem:[#allocation5 + $0x1d0] sm:$0xff] %vm8505, %v8384
      %8536 = vst.msk [vmem:[#allocation5 + $0x1e0] sm:$0xff] %vm8505, %v8386
      %8537 = vst.msk [vmem:[#allocation5 + $0x1f0] sm:$0xff] %vm8505, %v8388
      %8538 = vst.msk [vmem:[#allocation5 + $0x200] sm:$0xff] %vm8505, %v8390
      %8539 = vst.msk [vmem:[#allocation5 + $0x210] sm:$0xff] %vm8505, %v8392
      %8540 = vst.msk [vmem:[#allocation5 + $0x220] sm:$0xff] %vm8505, %v8394
      %8541 = vst.msk [vmem:[#allocation5 + $0x230] sm:$0xff] %vm8505, %v8396
      %8542 = vst.msk [vmem:[#allocation5 + $0x240] sm:$0xff] %vm8505, %v8398
      %8543 = vst.msk [vmem:[#allocation5 + $0x250] sm:$0xff] %vm8505, %v8400
      %8544 = vst.msk [vmem:[#allocation5 + $0x260] sm:$0xff] %vm8505, %v8402
      %8545 = vst.msk [vmem:[#allocation5 + $0x270] sm:$0xff] %vm8505, %v8404
      %8546 = vst.msk [vmem:[#allocation5 + $0x280] sm:$0xff] %vm8505, %v8406
      %8547 = vst.msk [vmem:[#allocation5 + $0x290] sm:$0xff] %vm8505, %v8408
      %8548 = vst.msk [vmem:[#allocation5 + $0x2a0] sm:$0xff] %vm8505, %v8410
      %8549 = vst.msk [vmem:[#allocation5 + $0x2b0] sm:$0xff] %vm8505, %v8412
      %8550 = vst.msk [vmem:[#allocation5 + $0x2c0] sm:$0xff] %vm8505, %v8414
      %8551 = vst.msk [vmem:[#allocation5 + $0x2d0] sm:$0xff] %vm8505, %v8416
      %8552 = vst.msk [vmem:[#allocation5 + $0x2e0] sm:$0xff] %vm8505, %v8418
      %8553 = vst.msk [vmem:[#allocation5 + $0x2f0] sm:$0xff] %vm8505, %v8420
      %8554 = vst.msk [vmem:[#allocation5 + $0x300] sm:$0xff] %vm8505, %v8422
      %8555 = vst.msk [vmem:[#allocation5 + $0x310] sm:$0xff] %vm8505, %v8424
      %8556 = vst.msk [vmem:[#allocation5 + $0x320] sm:$0xff] %vm8505, %v8426
      %8557 = vst.msk [vmem:[#allocation5 + $0x330] sm:$0xff] %vm8505, %v8428
      %8558 = vst.msk [vmem:[#allocation5 + $0x340] sm:$0xff] %vm8505, %v8430
      %8559 = vst.msk [vmem:[#allocation5 + $0x350] sm:$0xff] %vm8505, %v8432
      %8560 = vst.msk [vmem:[#allocation5 + $0x360] sm:$0xff] %vm8505, %v8434
      %8561 = vst.msk [vmem:[#allocation5 + $0x370] sm:$0xff] %vm8505, %v8436
      %8562 = vst.msk [vmem:[#allocation5 + $0x380] sm:$0xff] %vm8505, %v8438
      %8563 = vst.msk [vmem:[#allocation5 + $0x390] sm:$0xff] %vm8505, %v8440
      %8564 = vst.msk [vmem:[#allocation5 + $0x3a0] sm:$0xff] %vm8505, %v8442
      %8565 = vst.msk [vmem:[#allocation5 + $0x3b0] sm:$0xff] %vm8505, %v8444
      %v8566 = vld [vmem:[#allocation4 + $0x39] sm:$0xff]
      %v8567 = vld [vmem:[#allocation4 + $0x41] sm:$0xff]
      %v8568 = vld [vmem:[#allocation4 + $0x49] sm:$0xff]
      %v8569 = vld [vmem:[#allocation4 + $0x51] sm:$0xff]
      %v8570 = vld [vmem:[#allocation4 + $0x59] sm:$0xff]
      %v8571 = vld [vmem:[#allocation4 + $0x61] sm:$0xff]
      %v8572 = vld [vmem:[#allocation4 + $0x69] sm:$0xff]
      %v8573 = vld [vmem:[#allocation4 + $0x71] sm:$0xff]
      %v8574 = vld [vmem:[#allocation4 + $0x79] sm:$0xff]
      %v8575 = vld [vmem:[#allocation4 + $0x81] sm:$0xff]
      %v8576 = vld [vmem:[#allocation4 + $0x89] sm:$0xff]
      %v8577 = vld [vmem:[#allocation4 + $0x91] sm:$0xff]
      %v8578 = vld [vmem:[#allocation4 + $0x99] sm:$0xff]
      %v8579 = vld [vmem:[#allocation4 + $0xa1] sm:$0xff]
      %v8580 = vld [vmem:[#allocation4 + $0xa9] sm:$0xff]
      %v8581 = vld [vmem:[#allocation4 + $0xb1] sm:$0xff]
      %v8582 = vld [vmem:[#allocation4 + $0xb9] sm:$0xff]
      %v8583 = vld [vmem:[#allocation4 + $0xc1] sm:$0xff]
      %v8584 = vld [vmem:[#allocation4 + $0xc9] sm:$0xff]
      %v8585 = vld [vmem:[#allocation4 + $0xd1] sm:$0xff]
      %v8586 = vld [vmem:[#allocation4 + $0xd9] sm:$0xff]
      %v8587 = vld [vmem:[#allocation4 + $0xe1] sm:$0xff]
      %v8588 = vld [vmem:[#allocation4 + $0xe9] sm:$0xff]
      %v8589 = vld [vmem:[#allocation4 + $0xf1] sm:$0xff]
      %v8590 = vld [vmem:[#allocation4 + $0xf9] sm:$0xff]
      %v8591 = vld [vmem:[#allocation4 + $0x101] sm:$0xff]
      %v8592 = vld [vmem:[#allocation4 + $0x109] sm:$0xff]
      %v8593 = vld [vmem:[#allocation4 + $0x111] sm:$0xff]
      %v8594 = vld [vmem:[#allocation4 + $0x119] sm:$0xff]
      %v8595 = vld [vmem:[#allocation4 + $0x121] sm:$0xff]
      %v8596 = vld [vmem:[#allocation4 + $0x129] sm:$0xff]
      %v8597 = vld [vmem:[#allocation4 + $0x131] sm:$0xff]
      %v8598 = vld [vmem:[#allocation4 + $0x139] sm:$0xff]
      %v8599 = vld [vmem:[#allocation4 + $0x141] sm:$0xff]
      %v8600 = vld [vmem:[#allocation4 + $0x149] sm:$0xff]
      %v8601 = vld [vmem:[#allocation4 + $0x151] sm:$0xff]
      %v8602 = vld [vmem:[#allocation4 + $0x159] sm:$0xff]
      %v8603 = vld [vmem:[#allocation4 + $0x161] sm:$0xff]
      %v8604 = vld [vmem:[#allocation4 + $0x169] sm:$0xff]
      %v8605 = vld [vmem:[#allocation4 + $0x171] sm:$0xff]
      %v8606 = vld [vmem:[#allocation4 + $0x179] sm:$0xff]
      %v8607 = vld [vmem:[#allocation4 + $0x181] sm:$0xff]
      %v8608 = vld [vmem:[#allocation4 + $0x189] sm:$0xff]
      %v8609 = vld [vmem:[#allocation4 + $0x191] sm:$0xff]
      %v8610 = vld [vmem:[#allocation4 + $0x199] sm:$0xff]
      %v8611 = vld [vmem:[#allocation4 + $0x1a1] sm:$0xff]
      %v8612 = vld [vmem:[#allocation4 + $0x1a9] sm:$0xff]
      %v8613 = vld [vmem:[#allocation4 + $0x1b1] sm:$0xff]
      %v8614 = vld [vmem:[#allocation4 + $0x1b9] sm:$0xff]
      %v8615 = vld [vmem:[#allocation4 + $0x1c1] sm:$0xff]
      %v8616 = vld [vmem:[#allocation4 + $0x1c9] sm:$0xff]
      %v8617 = vld [vmem:[#allocation4 + $0x1d1] sm:$0xff]
      %v8618 = vld [vmem:[#allocation4 + $0x1d9] sm:$0xff]
      %v8619 = vld [vmem:[#allocation4 + $0x1e1] sm:$0xff]
      %v8620 = vld [vmem:[#allocation4 + $0x1e9] sm:$0xff]
      %v8621 = vld [vmem:[#allocation4 + $0x1f1] sm:$0xff]
      %v8622 = vld [vmem:[#allocation4 + $0x1f9] sm:$0xff]
      %v8623 = vld [vmem:[#allocation4 + $0x201] sm:$0xff]
      %v8624 = vld [vmem:[#allocation4 + $0x209] sm:$0xff]
      %v8625 = vld [vmem:[#allocation4 + $0x211] sm:$0xff]
      %8686 = vrot.lane.b32.xlu0 %v8566, 96
      %v8687 = vpop.permute.xlu0 %8686
      %8688 = vrot.lane.b32.xlu0 %v8567, 96
      %v8689 = vpop.permute.xlu0 %8688
      %8690 = vrot.lane.b32.xlu0 %v8568, 96
      %v8691 = vpop.permute.xlu0 %8690
      %8692 = vrot.lane.b32.xlu0 %v8569, 96
      %v8693 = vpop.permute.xlu0 %8692
      %8694 = vrot.lane.b32.xlu0 %v8570, 96
      %v8695 = vpop.permute.xlu0 %8694
      %8696 = vrot.lane.b32.xlu0 %v8571, 96
      %v8697 = vpop.permute.xlu0 %8696
      %8698 = vrot.lane.b32.xlu0 %v8572, 96
      %v8699 = vpop.permute.xlu0 %8698
      %8700 = vrot.lane.b32.xlu0 %v8573, 96
      %v8701 = vpop.permute.xlu0 %8700
      %8702 = vrot.lane.b32.xlu0 %v8574, 96
      %v8703 = vpop.permute.xlu0 %8702
      %8704 = vrot.lane.b32.xlu0 %v8575, 96
      %v8705 = vpop.permute.xlu0 %8704
      %8706 = vrot.lane.b32.xlu0 %v8576, 96
      %v8707 = vpop.permute.xlu0 %8706
      %8708 = vrot.lane.b32.xlu0 %v8577, 96
      %v8709 = vpop.permute.xlu0 %8708
      %8710 = vrot.lane.b32.xlu0 %v8578, 96
      %v8711 = vpop.permute.xlu0 %8710
      %8712 = vrot.lane.b32.xlu0 %v8579, 96
      %v8713 = vpop.permute.xlu0 %8712
      %8714 = vrot.lane.b32.xlu0 %v8580, 96
      %v8715 = vpop.permute.xlu0 %8714
      %8716 = vrot.lane.b32.xlu0 %v8581, 96
      %v8717 = vpop.permute.xlu0 %8716
      %8718 = vrot.lane.b32.xlu0 %v8582, 96
      %v8719 = vpop.permute.xlu0 %8718
      %8720 = vrot.lane.b32.xlu0 %v8583, 96
      %v8721 = vpop.permute.xlu0 %8720
      %8722 = vrot.lane.b32.xlu0 %v8584, 96
      %v8723 = vpop.permute.xlu0 %8722
      %8724 = vrot.lane.b32.xlu0 %v8585, 96
      %v8725 = vpop.permute.xlu0 %8724
      %8726 = vrot.lane.b32.xlu0 %v8586, 96
      %v8727 = vpop.permute.xlu0 %8726
      %8728 = vrot.lane.b32.xlu0 %v8587, 96
      %v8729 = vpop.permute.xlu0 %8728
      %8730 = vrot.lane.b32.xlu0 %v8588, 96
      %v8731 = vpop.permute.xlu0 %8730
      %8732 = vrot.lane.b32.xlu0 %v8589, 96
      %v8733 = vpop.permute.xlu0 %8732
      %8734 = vrot.lane.b32.xlu0 %v8590, 96
      %v8735 = vpop.permute.xlu0 %8734
      %8736 = vrot.lane.b32.xlu0 %v8591, 96
      %v8737 = vpop.permute.xlu0 %8736
      %8738 = vrot.lane.b32.xlu0 %v8592, 96
      %v8739 = vpop.permute.xlu0 %8738
      %8740 = vrot.lane.b32.xlu0 %v8593, 96
      %v8741 = vpop.permute.xlu0 %8740
      %8742 = vrot.lane.b32.xlu0 %v8594, 96
      %v8743 = vpop.permute.xlu0 %8742
      %8744 = vrot.lane.b32.xlu0 %v8595, 96
      %v8745 = vpop.permute.xlu0 %8744
      %8746 = vrot.lane.b32.xlu0 %v8596, 96
      %v8747 = vpop.permute.xlu0 %8746
      %8748 = vrot.lane.b32.xlu0 %v8597, 96
      %v8749 = vpop.permute.xlu0 %8748
      %8750 = vrot.lane.b32.xlu0 %v8598, 96
      %v8751 = vpop.permute.xlu0 %8750
      %8752 = vrot.lane.b32.xlu0 %v8599, 96
      %v8753 = vpop.permute.xlu0 %8752
      %8754 = vrot.lane.b32.xlu0 %v8600, 96
      %v8755 = vpop.permute.xlu0 %8754
      %8756 = vrot.lane.b32.xlu0 %v8601, 96
      %v8757 = vpop.permute.xlu0 %8756
      %8758 = vrot.lane.b32.xlu0 %v8602, 96
      %v8759 = vpop.permute.xlu0 %8758
      %8760 = vrot.lane.b32.xlu0 %v8603, 96
      %v8761 = vpop.permute.xlu0 %8760
      %8762 = vrot.lane.b32.xlu0 %v8604, 96
      %v8763 = vpop.permute.xlu0 %8762
      %8764 = vrot.lane.b32.xlu0 %v8605, 96
      %v8765 = vpop.permute.xlu0 %8764
      %8766 = vrot.lane.b32.xlu0 %v8606, 96
      %v8767 = vpop.permute.xlu0 %8766
      %8768 = vrot.lane.b32.xlu0 %v8607, 96
      %v8769 = vpop.permute.xlu0 %8768
      %8770 = vrot.lane.b32.xlu0 %v8608, 96
      %v8771 = vpop.permute.xlu0 %8770
      %8772 = vrot.lane.b32.xlu0 %v8609, 96
      %v8773 = vpop.permute.xlu0 %8772
      %8774 = vrot.lane.b32.xlu0 %v8610, 96
      %v8775 = vpop.permute.xlu0 %8774
      %8776 = vrot.lane.b32.xlu0 %v8611, 96
      %v8777 = vpop.permute.xlu0 %8776
      %8778 = vrot.lane.b32.xlu0 %v8612, 96
      %v8779 = vpop.permute.xlu0 %8778
      %8780 = vrot.lane.b32.xlu0 %v8613, 96
      %v8781 = vpop.permute.xlu0 %8780
      %8782 = vrot.lane.b32.xlu0 %v8614, 96
      %v8783 = vpop.permute.xlu0 %8782
      %8784 = vrot.lane.b32.xlu0 %v8615, 96
      %v8785 = vpop.permute.xlu0 %8784
      %8786 = vrot.lane.b32.xlu0 %v8616, 96
      %v8787 = vpop.permute.xlu0 %8786
      %8788 = vrot.lane.b32.xlu0 %v8617, 96
      %v8789 = vpop.permute.xlu0 %8788
      %8790 = vrot.lane.b32.xlu0 %v8618, 96
      %v8791 = vpop.permute.xlu0 %8790
      %8792 = vrot.lane.b32.xlu0 %v8619, 96
      %v8793 = vpop.permute.xlu0 %8792
      %8794 = vrot.lane.b32.xlu0 %v8620, 96
      %v8795 = vpop.permute.xlu0 %8794
      %8796 = vrot.lane.b32.xlu0 %v8621, 96
      %v8797 = vpop.permute.xlu0 %8796
      %8798 = vrot.lane.b32.xlu0 %v8622, 96
      %v8799 = vpop.permute.xlu0 %8798
      %8800 = vrot.lane.b32.xlu0 %v8623, 96
      %v8801 = vpop.permute.xlu0 %8800
      %8802 = vrot.lane.b32.xlu0 %v8624, 96
      %v8803 = vpop.permute.xlu0 %8802
      %8804 = vrot.lane.b32.xlu0 %v8625, 96
      %v8805 = vpop.permute.xlu0 %8804
      %vm8866 = vcmask 1048320
      %8867 = vst.msk [vmem:[#allocation5] sm:$0xff] %vm8866, %v8687
      %8868 = vst.msk [vmem:[#allocation5 + $0x10] sm:$0xff] %vm8866, %v8689
      %8869 = vst.msk [vmem:[#allocation5 + $0x20] sm:$0xff] %vm8866, %v8691
      %8870 = vst.msk [vmem:[#allocation5 + $0x30] sm:$0xff] %vm8866, %v8693
      %8871 = vst.msk [vmem:[#allocation5 + $0x40] sm:$0xff] %vm8866, %v8695
      %8872 = vst.msk [vmem:[#allocation5 + $0x50] sm:$0xff] %vm8866, %v8697
      %8873 = vst.msk [vmem:[#allocation5 + $0x60] sm:$0xff] %vm8866, %v8699
      %8874 = vst.msk [vmem:[#allocation5 + $0x70] sm:$0xff] %vm8866, %v8701
      %8875 = vst.msk [vmem:[#allocation5 + $0x80] sm:$0xff] %vm8866, %v8703
      %8876 = vst.msk [vmem:[#allocation5 + $0x90] sm:$0xff] %vm8866, %v8705
      %8877 = vst.msk [vmem:[#allocation5 + $0xa0] sm:$0xff] %vm8866, %v8707
      %8878 = vst.msk [vmem:[#allocation5 + $0xb0] sm:$0xff] %vm8866, %v8709
      %8879 = vst.msk [vmem:[#allocation5 + $0xc0] sm:$0xff] %vm8866, %v8711
      %8880 = vst.msk [vmem:[#allocation5 + $0xd0] sm:$0xff] %vm8866, %v8713
      %8881 = vst.msk [vmem:[#allocation5 + $0xe0] sm:$0xff] %vm8866, %v8715
      %8882 = vst.msk [vmem:[#allocation5 + $0xf0] sm:$0xff] %vm8866, %v8717
      %8883 = vst.msk [vmem:[#allocation5 + $0x100] sm:$0xff] %vm8866, %v8719
      %8884 = vst.msk [vmem:[#allocation5 + $0x110] sm:$0xff] %vm8866, %v8721
      %8885 = vst.msk [vmem:[#allocation5 + $0x120] sm:$0xff] %vm8866, %v8723
      %8886 = vst.msk [vmem:[#allocation5 + $0x130] sm:$0xff] %vm8866, %v8725
      %8887 = vst.msk [vmem:[#allocation5 + $0x140] sm:$0xff] %vm8866, %v8727
      %8888 = vst.msk [vmem:[#allocation5 + $0x150] sm:$0xff] %vm8866, %v8729
      %8889 = vst.msk [vmem:[#allocation5 + $0x160] sm:$0xff] %vm8866, %v8731
      %8890 = vst.msk [vmem:[#allocation5 + $0x170] sm:$0xff] %vm8866, %v8733
      %8891 = vst.msk [vmem:[#allocation5 + $0x180] sm:$0xff] %vm8866, %v8735
      %8892 = vst.msk [vmem:[#allocation5 + $0x190] sm:$0xff] %vm8866, %v8737
      %8893 = vst.msk [vmem:[#allocation5 + $0x1a0] sm:$0xff] %vm8866, %v8739
      %8894 = vst.msk [vmem:[#allocation5 + $0x1b0] sm:$0xff] %vm8866, %v8741
      %8895 = vst.msk [vmem:[#allocation5 + $0x1c0] sm:$0xff] %vm8866, %v8743
      %8896 = vst.msk [vmem:[#allocation5 + $0x1d0] sm:$0xff] %vm8866, %v8745
      %8897 = vst.msk [vmem:[#allocation5 + $0x1e0] sm:$0xff] %vm8866, %v8747
      %8898 = vst.msk [vmem:[#allocation5 + $0x1f0] sm:$0xff] %vm8866, %v8749
      %8899 = vst.msk [vmem:[#allocation5 + $0x200] sm:$0xff] %vm8866, %v8751
      %8900 = vst.msk [vmem:[#allocation5 + $0x210] sm:$0xff] %vm8866, %v8753
      %8901 = vst.msk [vmem:[#allocation5 + $0x220] sm:$0xff] %vm8866, %v8755
      %8902 = vst.msk [vmem:[#allocation5 + $0x230] sm:$0xff] %vm8866, %v8757
      %8903 = vst.msk [vmem:[#allocation5 + $0x240] sm:$0xff] %vm8866, %v8759
      %8904 = vst.msk [vmem:[#allocation5 + $0x250] sm:$0xff] %vm8866, %v8761
      %8905 = vst.msk [vmem:[#allocation5 + $0x260] sm:$0xff] %vm8866, %v8763
      %8906 = vst.msk [vmem:[#allocation5 + $0x270] sm:$0xff] %vm8866, %v8765
      %8907 = vst.msk [vmem:[#allocation5 + $0x280] sm:$0xff] %vm8866, %v8767
      %8908 = vst.msk [vmem:[#allocation5 + $0x290] sm:$0xff] %vm8866, %v8769
      %8909 = vst.msk [vmem:[#allocation5 + $0x2a0] sm:$0xff] %vm8866, %v8771
      %8910 = vst.msk [vmem:[#allocation5 + $0x2b0] sm:$0xff] %vm8866, %v8773
      %8911 = vst.msk [vmem:[#allocation5 + $0x2c0] sm:$0xff] %vm8866, %v8775
      %8912 = vst.msk [vmem:[#allocation5 + $0x2d0] sm:$0xff] %vm8866, %v8777
      %8913 = vst.msk [vmem:[#allocation5 + $0x2e0] sm:$0xff] %vm8866, %v8779
      %8914 = vst.msk [vmem:[#allocation5 + $0x2f0] sm:$0xff] %vm8866, %v8781
      %8915 = vst.msk [vmem:[#allocation5 + $0x300] sm:$0xff] %vm8866, %v8783
      %8916 = vst.msk [vmem:[#allocation5 + $0x310] sm:$0xff] %vm8866, %v8785
      %8917 = vst.msk [vmem:[#allocation5 + $0x320] sm:$0xff] %vm8866, %v8787
      %8918 = vst.msk [vmem:[#allocation5 + $0x330] sm:$0xff] %vm8866, %v8789
      %8919 = vst.msk [vmem:[#allocation5 + $0x340] sm:$0xff] %vm8866, %v8791
      %8920 = vst.msk [vmem:[#allocation5 + $0x350] sm:$0xff] %vm8866, %v8793
      %8921 = vst.msk [vmem:[#allocation5 + $0x360] sm:$0xff] %vm8866, %v8795
      %8922 = vst.msk [vmem:[#allocation5 + $0x370] sm:$0xff] %vm8866, %v8797
      %8923 = vst.msk [vmem:[#allocation5 + $0x380] sm:$0xff] %vm8866, %v8799
      %8924 = vst.msk [vmem:[#allocation5 + $0x390] sm:$0xff] %vm8866, %v8801
      %8925 = vst.msk [vmem:[#allocation5 + $0x3a0] sm:$0xff] %vm8866, %v8803
      %8926 = vst.msk [vmem:[#allocation5 + $0x3b0] sm:$0xff] %vm8866, %v8805
      %v8927 = vld [vmem:[#allocation4 + $0x3a] sm:$0xff]
      %v8928 = vld [vmem:[#allocation4 + $0x42] sm:$0xff]
      %v8929 = vld [vmem:[#allocation4 + $0x4a] sm:$0xff]
      %v8930 = vld [vmem:[#allocation4 + $0x52] sm:$0xff]
      %v8931 = vld [vmem:[#allocation4 + $0x5a] sm:$0xff]
      %v8932 = vld [vmem:[#allocation4 + $0x62] sm:$0xff]
      %v8933 = vld [vmem:[#allocation4 + $0x6a] sm:$0xff]
      %v8934 = vld [vmem:[#allocation4 + $0x72] sm:$0xff]
      %v8935 = vld [vmem:[#allocation4 + $0x7a] sm:$0xff]
      %v8936 = vld [vmem:[#allocation4 + $0x82] sm:$0xff]
      %v8937 = vld [vmem:[#allocation4 + $0x8a] sm:$0xff]
      %v8938 = vld [vmem:[#allocation4 + $0x92] sm:$0xff]
      %v8939 = vld [vmem:[#allocation4 + $0x9a] sm:$0xff]
      %v8940 = vld [vmem:[#allocation4 + $0xa2] sm:$0xff]
      %v8941 = vld [vmem:[#allocation4 + $0xaa] sm:$0xff]
      %v8942 = vld [vmem:[#allocation4 + $0xb2] sm:$0xff]
      %v8943 = vld [vmem:[#allocation4 + $0xba] sm:$0xff]
      %v8944 = vld [vmem:[#allocation4 + $0xc2] sm:$0xff]
      %v8945 = vld [vmem:[#allocation4 + $0xca] sm:$0xff]
      %v8946 = vld [vmem:[#allocation4 + $0xd2] sm:$0xff]
      %v8947 = vld [vmem:[#allocation4 + $0xda] sm:$0xff]
      %v8948 = vld [vmem:[#allocation4 + $0xe2] sm:$0xff]
      %v8949 = vld [vmem:[#allocation4 + $0xea] sm:$0xff]
      %v8950 = vld [vmem:[#allocation4 + $0xf2] sm:$0xff]
      %v8951 = vld [vmem:[#allocation4 + $0xfa] sm:$0xff]
      %v8952 = vld [vmem:[#allocation4 + $0x102] sm:$0xff]
      %v8953 = vld [vmem:[#allocation4 + $0x10a] sm:$0xff]
      %v8954 = vld [vmem:[#allocation4 + $0x112] sm:$0xff]
      %v8955 = vld [vmem:[#allocation4 + $0x11a] sm:$0xff]
      %v8956 = vld [vmem:[#allocation4 + $0x122] sm:$0xff]
      %v8957 = vld [vmem:[#allocation4 + $0x12a] sm:$0xff]
      %v8958 = vld [vmem:[#allocation4 + $0x132] sm:$0xff]
      %v8959 = vld [vmem:[#allocation4 + $0x13a] sm:$0xff]
      %v8960 = vld [vmem:[#allocation4 + $0x142] sm:$0xff]
      %v8961 = vld [vmem:[#allocation4 + $0x14a] sm:$0xff]
      %v8962 = vld [vmem:[#allocation4 + $0x152] sm:$0xff]
      %v8963 = vld [vmem:[#allocation4 + $0x15a] sm:$0xff]
      %v8964 = vld [vmem:[#allocation4 + $0x162] sm:$0xff]
      %v8965 = vld [vmem:[#allocation4 + $0x16a] sm:$0xff]
      %v8966 = vld [vmem:[#allocation4 + $0x172] sm:$0xff]
      %v8967 = vld [vmem:[#allocation4 + $0x17a] sm:$0xff]
      %v8968 = vld [vmem:[#allocation4 + $0x182] sm:$0xff]
      %v8969 = vld [vmem:[#allocation4 + $0x18a] sm:$0xff]
      %v8970 = vld [vmem:[#allocation4 + $0x192] sm:$0xff]
      %v8971 = vld [vmem:[#allocation4 + $0x19a] sm:$0xff]
      %v8972 = vld [vmem:[#allocation4 + $0x1a2] sm:$0xff]
      %v8973 = vld [vmem:[#allocation4 + $0x1aa] sm:$0xff]
      %v8974 = vld [vmem:[#allocation4 + $0x1b2] sm:$0xff]
      %v8975 = vld [vmem:[#allocation4 + $0x1ba] sm:$0xff]
      %v8976 = vld [vmem:[#allocation4 + $0x1c2] sm:$0xff]
      %v8977 = vld [vmem:[#allocation4 + $0x1ca] sm:$0xff]
      %v8978 = vld [vmem:[#allocation4 + $0x1d2] sm:$0xff]
      %v8979 = vld [vmem:[#allocation4 + $0x1da] sm:$0xff]
      %v8980 = vld [vmem:[#allocation4 + $0x1e2] sm:$0xff]
      %v8981 = vld [vmem:[#allocation4 + $0x1ea] sm:$0xff]
      %v8982 = vld [vmem:[#allocation4 + $0x1f2] sm:$0xff]
      %v8983 = vld [vmem:[#allocation4 + $0x1fa] sm:$0xff]
      %v8984 = vld [vmem:[#allocation4 + $0x202] sm:$0xff]
      %v8985 = vld [vmem:[#allocation4 + $0x20a] sm:$0xff]
      %v8986 = vld [vmem:[#allocation4 + $0x212] sm:$0xff]
      %8987 = vst.msk [vmem:[#allocation5 + $0x8] sm:$0xff] %vm1170, %v8927
      %8988 = vst.msk [vmem:[#allocation5 + $0x18] sm:$0xff] %vm1170, %v8928
      %8989 = vst.msk [vmem:[#allocation5 + $0x28] sm:$0xff] %vm1170, %v8929
      %8990 = vst.msk [vmem:[#allocation5 + $0x38] sm:$0xff] %vm1170, %v8930
      %8991 = vst.msk [vmem:[#allocation5 + $0x48] sm:$0xff] %vm1170, %v8931
      %8992 = vst.msk [vmem:[#allocation5 + $0x58] sm:$0xff] %vm1170, %v8932
      %8993 = vst.msk [vmem:[#allocation5 + $0x68] sm:$0xff] %vm1170, %v8933
      %8994 = vst.msk [vmem:[#allocation5 + $0x78] sm:$0xff] %vm1170, %v8934
      %8995 = vst.msk [vmem:[#allocation5 + $0x88] sm:$0xff] %vm1170, %v8935
      %8996 = vst.msk [vmem:[#allocation5 + $0x98] sm:$0xff] %vm1170, %v8936
      %8997 = vst.msk [vmem:[#allocation5 + $0xa8] sm:$0xff] %vm1170, %v8937
      %8998 = vst.msk [vmem:[#allocation5 + $0xb8] sm:$0xff] %vm1170, %v8938
      %8999 = vst.msk [vmem:[#allocation5 + $0xc8] sm:$0xff] %vm1170, %v8939
      %9000 = vst.msk [vmem:[#allocation5 + $0xd8] sm:$0xff] %vm1170, %v8940
      %9001 = vst.msk [vmem:[#allocation5 + $0xe8] sm:$0xff] %vm1170, %v8941
      %9002 = vst.msk [vmem:[#allocation5 + $0xf8] sm:$0xff] %vm1170, %v8942
      %9003 = vst.msk [vmem:[#allocation5 + $0x108] sm:$0xff] %vm1170, %v8943
      %9004 = vst.msk [vmem:[#allocation5 + $0x118] sm:$0xff] %vm1170, %v8944
      %9005 = vst.msk [vmem:[#allocation5 + $0x128] sm:$0xff] %vm1170, %v8945
      %9006 = vst.msk [vmem:[#allocation5 + $0x138] sm:$0xff] %vm1170, %v8946
      %9007 = vst.msk [vmem:[#allocation5 + $0x148] sm:$0xff] %vm1170, %v8947
      %9008 = vst.msk [vmem:[#allocation5 + $0x158] sm:$0xff] %vm1170, %v8948
      %9009 = vst.msk [vmem:[#allocation5 + $0x168] sm:$0xff] %vm1170, %v8949
      %9010 = vst.msk [vmem:[#allocation5 + $0x178] sm:$0xff] %vm1170, %v8950
      %9011 = vst.msk [vmem:[#allocation5 + $0x188] sm:$0xff] %vm1170, %v8951
      %9012 = vst.msk [vmem:[#allocation5 + $0x198] sm:$0xff] %vm1170, %v8952
      %9013 = vst.msk [vmem:[#allocation5 + $0x1a8] sm:$0xff] %vm1170, %v8953
      %9014 = vst.msk [vmem:[#allocation5 + $0x1b8] sm:$0xff] %vm1170, %v8954
      %9015 = vst.msk [vmem:[#allocation5 + $0x1c8] sm:$0xff] %vm1170, %v8955
      %9016 = vst.msk [vmem:[#allocation5 + $0x1d8] sm:$0xff] %vm1170, %v8956
      %9017 = vst.msk [vmem:[#allocation5 + $0x1e8] sm:$0xff] %vm1170, %v8957
      %9018 = vst.msk [vmem:[#allocation5 + $0x1f8] sm:$0xff] %vm1170, %v8958
      %9019 = vst.msk [vmem:[#allocation5 + $0x208] sm:$0xff] %vm1170, %v8959
      %9020 = vst.msk [vmem:[#allocation5 + $0x218] sm:$0xff] %vm1170, %v8960
      %9021 = vst.msk [vmem:[#allocation5 + $0x228] sm:$0xff] %vm1170, %v8961
      %9022 = vst.msk [vmem:[#allocation5 + $0x238] sm:$0xff] %vm1170, %v8962
      %9023 = vst.msk [vmem:[#allocation5 + $0x248] sm:$0xff] %vm1170, %v8963
      %9024 = vst.msk [vmem:[#allocation5 + $0x258] sm:$0xff] %vm1170, %v8964
      %9025 = vst.msk [vmem:[#allocation5 + $0x268] sm:$0xff] %vm1170, %v8965
      %9026 = vst.msk [vmem:[#allocation5 + $0x278] sm:$0xff] %vm1170, %v8966
      %9027 = vst.msk [vmem:[#allocation5 + $0x288] sm:$0xff] %vm1170, %v8967
      %9028 = vst.msk [vmem:[#allocation5 + $0x298] sm:$0xff] %vm1170, %v8968
      %9029 = vst.msk [vmem:[#allocation5 + $0x2a8] sm:$0xff] %vm1170, %v8969
      %9030 = vst.msk [vmem:[#allocation5 + $0x2b8] sm:$0xff] %vm1170, %v8970
      %9031 = vst.msk [vmem:[#allocation5 + $0x2c8] sm:$0xff] %vm1170, %v8971
      %9032 = vst.msk [vmem:[#allocation5 + $0x2d8] sm:$0xff] %vm1170, %v8972
      %9033 = vst.msk [vmem:[#allocation5 + $0x2e8] sm:$0xff] %vm1170, %v8973
      %9034 = vst.msk [vmem:[#allocation5 + $0x2f8] sm:$0xff] %vm1170, %v8974
      %9035 = vst.msk [vmem:[#allocation5 + $0x308] sm:$0xff] %vm1170, %v8975
      %9036 = vst.msk [vmem:[#allocation5 + $0x318] sm:$0xff] %vm1170, %v8976
      %9037 = vst.msk [vmem:[#allocation5 + $0x328] sm:$0xff] %vm1170, %v8977
      %9038 = vst.msk [vmem:[#allocation5 + $0x338] sm:$0xff] %vm1170, %v8978
      %9039 = vst.msk [vmem:[#allocation5 + $0x348] sm:$0xff] %vm1170, %v8979
      %9040 = vst.msk [vmem:[#allocation5 + $0x358] sm:$0xff] %vm1170, %v8980
      %9041 = vst.msk [vmem:[#allocation5 + $0x368] sm:$0xff] %vm1170, %v8981
      %9042 = vst.msk [vmem:[#allocation5 + $0x378] sm:$0xff] %vm1170, %v8982
      %9043 = vst.msk [vmem:[#allocation5 + $0x388] sm:$0xff] %vm1170, %v8983
      %9044 = vst.msk [vmem:[#allocation5 + $0x398] sm:$0xff] %vm1170, %v8984
      %9045 = vst.msk [vmem:[#allocation5 + $0x3a8] sm:$0xff] %vm1170, %v8985
      %9046 = vst.msk [vmem:[#allocation5 + $0x3b8] sm:$0xff] %vm1170, %v8986
      %v9047 = vld [vmem:[%s5] sm:$0xff]
      %v9048 = vld [vmem:[%s5 + $0x8] sm:$0xff]
      %v9049 = vld [vmem:[#allocation5] sm:$0xff]
      %v9050 = vld [vmem:[#allocation5 + $0x8] sm:$0xff]
      %v9051 = vld [vmem:[#allocation5 + $0x10] sm:$0xff]
      %v9052 = vld [vmem:[#allocation5 + $0x18] sm:$0xff]
      %v9053 = vld [vmem:[#allocation5 + $0x20] sm:$0xff]
      %v9054 = vld [vmem:[#allocation5 + $0x28] sm:$0xff]
      %v9055 = vld [vmem:[#allocation5 + $0x30] sm:$0xff]
      %v9056 = vld [vmem:[#allocation5 + $0x38] sm:$0xff]
      %v9057 = vld [vmem:[#allocation5 + $0x40] sm:$0xff]
      %v9058 = vld [vmem:[#allocation5 + $0x48] sm:$0xff]
      %v9059 = vld [vmem:[#allocation5 + $0x50] sm:$0xff]
      %v9060 = vld [vmem:[#allocation5 + $0x58] sm:$0xff]
      %v9061 = vld [vmem:[#allocation5 + $0x60] sm:$0xff]
      %v9062 = vld [vmem:[#allocation5 + $0x68] sm:$0xff]
      %v9063 = vld [vmem:[#allocation5 + $0x70] sm:$0xff]
      %v9064 = vld [vmem:[#allocation5 + $0x78] sm:$0xff]
      %v9065 = vld [vmem:[#allocation5 + $0x80] sm:$0xff]
      %v9066 = vld [vmem:[#allocation5 + $0x88] sm:$0xff]
      %v9067 = vld [vmem:[#allocation5 + $0x90] sm:$0xff]
      %v9068 = vld [vmem:[#allocation5 + $0x98] sm:$0xff]
      %v9069 = vld [vmem:[#allocation5 + $0xa0] sm:$0xff]
      %v9070 = vld [vmem:[#allocation5 + $0xa8] sm:$0xff]
      %v9071 = vld [vmem:[#allocation5 + $0xb0] sm:$0xff]
      %v9072 = vld [vmem:[#allocation5 + $0xb8] sm:$0xff]
      %v9073 = vld [vmem:[#allocation5 + $0xc0] sm:$0xff]
      %v9074 = vld [vmem:[#allocation5 + $0xc8] sm:$0xff]
      %v9075 = vld [vmem:[#allocation5 + $0xd0] sm:$0xff]
      %v9076 = vld [vmem:[#allocation5 + $0xd8] sm:$0xff]
      %v9077 = vld [vmem:[#allocation5 + $0xe0] sm:$0xff]
      %v9078 = vld [vmem:[#allocation5 + $0xe8] sm:$0xff]
      %v9079 = vld [vmem:[#allocation5 + $0xf0] sm:$0xff]
      %v9080 = vld [vmem:[#allocation5 + $0xf8] sm:$0xff]
      %v9081 = vld [vmem:[#allocation5 + $0x100] sm:$0xff]
      %v9082 = vld [vmem:[#allocation5 + $0x108] sm:$0xff]
      %v9083 = vld [vmem:[#allocation5 + $0x110] sm:$0xff]
      %v9084 = vld [vmem:[#allocation5 + $0x118] sm:$0xff]
      %v9085 = vld [vmem:[#allocation5 + $0x120] sm:$0xff]
      %v9086 = vld [vmem:[#allocation5 + $0x128] sm:$0xff]
      %v9087 = vld [vmem:[#allocation5 + $0x130] sm:$0xff]
      %v9088 = vld [vmem:[#allocation5 + $0x138] sm:$0xff]
      %v9089 = vld [vmem:[#allocation5 + $0x140] sm:$0xff]
      %v9090 = vld [vmem:[#allocation5 + $0x148] sm:$0xff]
      %v9091 = vld [vmem:[#allocation5 + $0x150] sm:$0xff]
      %v9092 = vld [vmem:[#allocation5 + $0x158] sm:$0xff]
      %v9093 = vld [vmem:[#allocation5 + $0x160] sm:$0xff]
      %v9094 = vld [vmem:[#allocation5 + $0x168] sm:$0xff]
      %v9095 = vld [vmem:[#allocation5 + $0x170] sm:$0xff]
      %v9096 = vld [vmem:[#allocation5 + $0x178] sm:$0xff]
      %v9097 = vld [vmem:[#allocation5 + $0x180] sm:$0xff]
      %v9098 = vld [vmem:[#allocation5 + $0x188] sm:$0xff]
      %v9099 = vld [vmem:[#allocation5 + $0x190] sm:$0xff]
      %v9100 = vld [vmem:[#allocation5 + $0x198] sm:$0xff]
      %v9101 = vld [vmem:[#allocation5 + $0x1a0] sm:$0xff]
      %v9102 = vld [vmem:[#allocation5 + $0x1a8] sm:$0xff]
      %v9103 = vld [vmem:[#allocation5 + $0x1b0] sm:$0xff]
      %v9104 = vld [vmem:[#allocation5 + $0x1b8] sm:$0xff]
      %v9105 = vld [vmem:[#allocation5 + $0x1c0] sm:$0xff]
      %v9106 = vld [vmem:[#allocation5 + $0x1c8] sm:$0xff]
      %v9107 = vld [vmem:[#allocation5 + $0x1d0] sm:$0xff]
      %v9108 = vld [vmem:[#allocation5 + $0x1d8] sm:$0xff]
      %v9109 = vld [vmem:[#allocation5 + $0x1e0] sm:$0xff]
      %v9110 = vld [vmem:[#allocation5 + $0x1e8] sm:$0xff]
      %v9111 = vld [vmem:[#allocation5 + $0x1f0] sm:$0xff]
      %v9112 = vld [vmem:[#allocation5 + $0x1f8] sm:$0xff]
      %v9113 = vld [vmem:[#allocation5 + $0x200] sm:$0xff]
      %v9114 = vld [vmem:[#allocation5 + $0x208] sm:$0xff]
      %v9115 = vld [vmem:[#allocation5 + $0x210] sm:$0xff]
      %v9116 = vld [vmem:[#allocation5 + $0x218] sm:$0xff]
      %v9117 = vld [vmem:[#allocation5 + $0x220] sm:$0xff]
      %v9118 = vld [vmem:[#allocation5 + $0x228] sm:$0xff]
      %v9119 = vld [vmem:[#allocation5 + $0x230] sm:$0xff]
      %v9120 = vld [vmem:[#allocation5 + $0x238] sm:$0xff]
      %v9121 = vld [vmem:[#allocation5 + $0x240] sm:$0xff]
      %v9122 = vld [vmem:[#allocation5 + $0x248] sm:$0xff]
      %v9123 = vld [vmem:[#allocation5 + $0x250] sm:$0xff]
      %v9124 = vld [vmem:[#allocation5 + $0x258] sm:$0xff]
      %v9125 = vld [vmem:[#allocation5 + $0x260] sm:$0xff]
      %v9126 = vld [vmem:[#allocation5 + $0x268] sm:$0xff]
      %v9127 = vld [vmem:[#allocation5 + $0x270] sm:$0xff]
      %v9128 = vld [vmem:[#allocation5 + $0x278] sm:$0xff]
      %v9129 = vld [vmem:[#allocation5 + $0x280] sm:$0xff]
      %v9130 = vld [vmem:[#allocation5 + $0x288] sm:$0xff]
      %v9131 = vld [vmem:[#allocation5 + $0x290] sm:$0xff]
      %v9132 = vld [vmem:[#allocation5 + $0x298] sm:$0xff]
      %v9133 = vld [vmem:[#allocation5 + $0x2a0] sm:$0xff]
      %v9134 = vld [vmem:[#allocation5 + $0x2a8] sm:$0xff]
      %v9135 = vld [vmem:[#allocation5 + $0x2b0] sm:$0xff]
      %v9136 = vld [vmem:[#allocation5 + $0x2b8] sm:$0xff]
      %v9137 = vld [vmem:[#allocation5 + $0x2c0] sm:$0xff]
      %v9138 = vld [vmem:[#allocation5 + $0x2c8] sm:$0xff]
      %v9139 = vld [vmem:[#allocation5 + $0x2d0] sm:$0xff]
      %v9140 = vld [vmem:[#allocation5 + $0x2d8] sm:$0xff]
      %v9141 = vld [vmem:[#allocation5 + $0x2e0] sm:$0xff]
      %v9142 = vld [vmem:[#allocation5 + $0x2e8] sm:$0xff]
      %v9143 = vld [vmem:[#allocation5 + $0x2f0] sm:$0xff]
      %v9144 = vld [vmem:[#allocation5 + $0x2f8] sm:$0xff]
      %s9145 = scalar_lea.vmem %s5, 16
      %v9146 = vld [vmem:[%s9145] sm:$0xff]
      %v9147 = vld [vmem:[%s9145 + $0x8] sm:$0xff]
      %v9148 = vld [vmem:[#allocation5 + $0x300] sm:$0xff]
      %v9149 = vld [vmem:[#allocation5 + $0x308] sm:$0xff]
      %v9150 = vld [vmem:[#allocation5 + $0x310] sm:$0xff]
      %v9151 = vld [vmem:[#allocation5 + $0x318] sm:$0xff]
      %v9152 = vld [vmem:[#allocation5 + $0x320] sm:$0xff]
      %v9153 = vld [vmem:[#allocation5 + $0x328] sm:$0xff]
      %v9155 = vsel %vm1170, %v9147, 0
      %v9158 = vsel %vm1170, %v9056, 0
      %v9161 = vsel %vm1170, %v9058, 0
      %v9164 = vsel %vm1170, %v9060, 0
      %v9167 = vsel %vm1170, %v9062, 0
      %v9170 = vsel %vm1170, %v9064, 0
      %v9173 = vsel %vm1170, %v9066, 0
      %v9176 = vsel %vm1170, %v9068, 0
      %v9179 = vsel %vm1170, %v9070, 0
      %v9182 = vsel %vm1170, %v9072, 0
      %v9185 = vsel %vm1170, %v9074, 0
      %v9188 = vsel %vm1170, %v9076, 0
      %v9191 = vsel %vm1170, %v9078, 0
      %v9194 = vsel %vm1170, %v9080, 0
      %v9197 = vsel %vm1170, %v9082, 0
      %v9200 = vsel %vm1170, %v9084, 0
      %v9203 = vsel %vm1170, %v9086, 0
      %v9206 = vsel %vm1170, %v9088, 0
      %v9209 = vsel %vm1170, %v9090, 0
      %v9212 = vsel %vm1170, %v9092, 0
      %v9215 = vsel %vm1170, %v9094, 0
      %v9218 = vsel %vm1170, %v9096, 0
      %v9221 = vsel %vm1170, %v9098, 0
      %v9224 = vsel %vm1170, %v9100, 0
      %v9227 = vsel %vm1170, %v9102, 0
      %v9230 = vsel %vm1170, %v9104, 0
      %v9233 = vsel %vm1170, %v9106, 0
      %v9236 = vsel %vm1170, %v9108, 0
      %v9239 = vsel %vm1170, %v9110, 0
      %v9242 = vsel %vm1170, %v9112, 0
      %v9245 = vsel %vm1170, %v9114, 0
      %v9248 = vsel %vm1170, %v9116, 0
      %v9251 = vsel %vm1170, %v9118, 0
      %v9254 = vsel %vm1170, %v9120, 0
      %v9257 = vsel %vm1170, %v9122, 0
      %v9260 = vsel %vm1170, %v9124, 0
      %v9263 = vsel %vm1170, %v9126, 0
      %v9266 = vsel %vm1170, %v9128, 0
      %v9269 = vsel %vm1170, %v9130, 0
      %v9272 = vsel %vm1170, %v9132, 0
      %v9275 = vsel %vm1170, %v9134, 0
      %v9278 = vsel %vm1170, %v9136, 0
      %v9281 = vsel %vm1170, %v9138, 0
      %v9284 = vsel %vm1170, %v9140, 0
      %v9287 = vsel %vm1170, %v9142, 0
      %v9290 = vsel %vm1170, %v9144, 0
      %v9293 = vsel %vm1170, %v9149, 0
      %v9296 = vsel %vm1170, %v9151, 0
      %v9299 = vsel %vm1170, %v9153, 0
      %9301 = vmatprep.subr.mxu0 %v9203
      %9302 = vmatpush1.xpose.msra.mxu0 %v9085
      %9303 = vmatprep.subr.mxu0 %v9200
      %9304 = vmatpush1.xpose.msra.mxu0 %v9083
      %9305 = vmatprep.subr.mxu0 %v9197
      %9306 = vmatpush1.xpose.msra.mxu0 %v9081
      %9307 = vmatprep.subr.mxu0 %v9194
      %9308 = vmatpush1.xpose.msra.mxu0 %v9079
      %9309 = vmatprep.subr.mxu0 %v9191
      %9310 = vmatpush1.xpose.msra.mxu0 %v9077
      %9311 = vmatprep.subr.mxu0 %v9188
      %9312 = vmatpush1.xpose.msra.mxu0 %v9075
      %9313 = vmatprep.subr.mxu0 %v9185
      %9314 = vmatpush1.xpose.msra.mxu0 %v9073
      %9315 = vmatprep.subr.mxu0 %v9182
      %9316 = vmatpush1.xpose.msra.mxu0 %v9071
      %9317 = vmatprep.subr.mxu0 %v9179
      %9318 = vmatpush1.xpose.msra.mxu0 %v9069
      %9319 = vmatprep.subr.mxu0 %v9176
      %9320 = vmatpush1.xpose.msra.mxu0 %v9067
      %9321 = vmatprep.subr.mxu0 %v9173
      %9322 = vmatpush1.xpose.msra.mxu0 %v9065
      %9323 = vmatprep.subr.mxu0 %v9170
      %9324 = vmatpush1.xpose.msra.mxu0 %v9063
      %9325 = vmatprep.subr.mxu0 %v9167
      %9326 = vmatpush1.xpose.msra.mxu0 %v9061
      %9327 = vmatprep.subr.mxu0 %v9164
      %9328 = vmatpush1.xpose.msra.mxu0 %v9059
      %9329 = vmatprep.subr.mxu0 %v9161
      %9330 = vmatpush1.xpose.msra.mxu0 %v9057
      %9331 = vmatprep.subr.mxu0 %v9158
      %9332 = vmatpush1.xpose.msra.mxu0 %v9055
      %9333 = vmatprep.subr.mxu0 %v9251
      %9334 = vmatpush2.xpose.msra.mxu0 %v9117
      %9335 = vmatprep.subr.mxu0 %v9248
      %9336 = vmatpush2.xpose.msra.mxu0 %v9115
      %9337 = vmatprep.subr.mxu0 %v9245
      %9338 = vmatpush2.xpose.msra.mxu0 %v9113
      %9339 = vmatprep.subr.mxu0 %v9242
      %9340 = vmatpush2.xpose.msra.mxu0 %v9111
      %9341 = vmatprep.subr.mxu0 %v9239
      %9342 = vmatpush2.xpose.msra.mxu0 %v9109
      %9343 = vmatprep.subr.mxu0 %v9236
      %9344 = vmatpush2.xpose.msra.mxu0 %v9107
      %9345 = vmatprep.subr.mxu0 %v9233
      %9346 = vmatpush2.xpose.msra.mxu0 %v9105
      %9347 = vmatprep.subr.mxu0 %v9230
      %9348 = vmatpush2.xpose.msra.mxu0 %v9103
      %9349 = vmatprep.subr.mxu0 %v9227
      %9350 = vmatpush2.xpose.msra.mxu0 %v9101
      %9351 = vmatprep.subr.mxu0 %v9224
      %9352 = vmatpush2.xpose.msra.mxu0 %v9099
      %9353 = vmatprep.subr.mxu0 %v9221
      %9354 = vmatpush2.xpose.msra.mxu0 %v9097
      %9355 = vmatprep.subr.mxu0 %v9218
      %9356 = vmatpush2.xpose.msra.mxu0 %v9095
      %9357 = vmatprep.subr.mxu0 %v9215
      %9358 = vmatpush2.xpose.msra.mxu0 %v9093
      %9359 = vmatprep.subr.mxu0 %v9212
      %9360 = vmatpush2.xpose.msra.mxu0 %v9091
      %9361 = vmatprep.subr.mxu0 %v9209
      %9362 = vmatpush2.xpose.msra.mxu0 %v9089
      %9363 = vmatprep.subr.mxu0 %v9206
      %9364 = vmatpush2.xpose.msra.mxu0 %v9087
      %9365 = vmatprep.mubr.f32.mxu0 %v9155
      %9366 = vmatmul.mubr.f32.gmra.mxu0 %v9146
      %v9367 = vpop.f32.mrf.mxu0
      %v9368 = vadd.f32 0.0, %v9367
      %v9369 = vpop.f32.mrf.mxu0
      %v9370 = vadd.f32 0.0, %v9369
      %9371 = vdwg.mxu0
      %9372 = vmatprep.subr.mxu0 %v9299
      %9373 = vmatpush1.xpose.msra.mxu0 %v9152
      %9374 = vmatprep.subr.mxu0 %v9296
      %9375 = vmatpush1.xpose.msra.mxu0 %v9150
      %9376 = vmatprep.subr.mxu0 %v9293
      %9377 = vmatpush1.xpose.msra.mxu0 %v9148
      %9378 = vmatprep.subr.mxu0 %v9290
      %9379 = vmatpush1.xpose.msra.mxu0 %v9143
      %9380 = vmatprep.subr.mxu0 %v9287
      %9381 = vmatpush1.xpose.msra.mxu0 %v9141
      %9382 = vmatprep.subr.mxu0 %v9284
      %9383 = vmatpush1.xpose.msra.mxu0 %v9139
      %9384 = vmatprep.subr.mxu0 %v9281
      %9385 = vmatpush1.xpose.msra.mxu0 %v9137
      %9386 = vmatprep.subr.mxu0 %v9278
      %9387 = vmatpush1.xpose.msra.mxu0 %v9135
      %9388 = vmatprep.subr.mxu0 %v9275
      %9389 = vmatpush1.xpose.msra.mxu0 %v9133
      %9390 = vmatprep.subr.mxu0 %v9272
      %9391 = vmatpush1.xpose.msra.mxu0 %v9131
      %9392 = vmatprep.subr.mxu0 %v9269
      %9393 = vmatpush1.xpose.msra.mxu0 %v9129
      %9394 = vmatprep.subr.mxu0 %v9266
      %9395 = vmatpush1.xpose.msra.mxu0 %v9127
      %9396 = vmatprep.subr.mxu0 %v9263
      %9397 = vmatpush1.xpose.msra.mxu0 %v9125
      %9398 = vmatprep.subr.mxu0 %v9260
      %9399 = vmatpush1.xpose.msra.mxu0 %v9123
      %9400 = vmatprep.subr.mxu0 %v9257
      %9401 = vmatpush1.xpose.msra.mxu0 %v9121
      %9402 = vmatprep.subr.mxu0 %v9254
      %9403 = vmatpush1.xpose.msra.mxu0 %v9119
      %9404 = vmatprep.subr.mxu0 0.0
      %9405 = vmatpush2.xpose.msra.mxu0 0.0
      %9406 = vmatprep.subr.mxu0 0.0
      %9407 = vmatpush2.xpose.msra.mxu0 0.0
      %9408 = vmatprep.subr.mxu0 0.0
      %9409 = vmatpush2.xpose.msra.mxu0 0.0
      %9410 = vmatprep.subr.mxu0 0.0
      %9411 = vmatpush2.xpose.msra.mxu0 0.0
      %9412 = vmatprep.subr.mxu0 0.0
      %9413 = vmatpush2.xpose.msra.mxu0 0.0
      %9414 = vmatprep.subr.mxu0 0.0
      %9415 = vmatpush2.xpose.msra.mxu0 0.0
      %9416 = vmatprep.subr.mxu0 0.0
      %9417 = vmatpush2.xpose.msra.mxu0 0.0
      %9418 = vmatprep.subr.mxu0 0.0
      %9419 = vmatpush2.xpose.msra.mxu0 0.0
      %9420 = vmatprep.subr.mxu0 0.0
      %9421 = vmatpush2.xpose.msra.mxu0 0.0
      %9422 = vmatprep.subr.mxu0 0.0
      %9423 = vmatpush2.xpose.msra.mxu0 0.0
      %9424 = vmatprep.subr.mxu0 0.0
      %9425 = vmatpush2.xpose.msra.mxu0 0.0
      %9426 = vmatprep.subr.mxu0 0.0
      %9427 = vmatpush2.xpose.msra.mxu0 0.0
      %9428 = vmatprep.subr.mxu0 0.0
      %9429 = vmatpush2.xpose.msra.mxu0 0.0
      %9430 = vmatprep.subr.mxu0 0.0
      %9431 = vmatpush2.xpose.msra.mxu0 0.0
      %9432 = vmatprep.subr.mxu0 0.0
      %9433 = vmatpush2.xpose.msra.mxu0 0.0
      %9434 = vmatprep.subr.mxu0 0.0
      %9435 = vmatpush2.xpose.msra.mxu0 0.0
      %9436 = vmatprep.mubr.f32.mxu0 %v9155
      %9437 = vmatmul.mubr.f32.gmra.mxu0 %v9146
      %v9438 = vpop.f32.mrf.mxu0
      %v9439 = vadd.f32 0.0, %v9438
      %v9440 = vpop.f32.mrf.mxu0
      %9441 = vdwg.mxu0
      %v9443 = vsel %vm1170, %v9048, 0
      %v9446 = vsel %vm1170, %v9050, 0
      %v9449 = vsel %vm1170, %v9052, 0
      %v9452 = vsel %vm1170, %v9054, 0
      %9454 = vmatprep.subr.mxu0 %v9194
      %9455 = vmatpush1.xpose.msra.mxu0 %v9079
      %9456 = vmatprep.subr.mxu0 %v9191
      %9457 = vmatpush1.xpose.msra.mxu0 %v9077
      %9458 = vmatprep.subr.mxu0 %v9188
      %9459 = vmatpush1.xpose.msra.mxu0 %v9075
      %9460 = vmatprep.subr.mxu0 %v9185
      %9461 = vmatpush1.xpose.msra.mxu0 %v9073
      %9462 = vmatprep.subr.mxu0 %v9182
      %9463 = vmatpush1.xpose.msra.mxu0 %v9071
      %9464 = vmatprep.subr.mxu0 %v9179
      %9465 = vmatpush1.xpose.msra.mxu0 %v9069
      %9466 = vmatprep.subr.mxu0 %v9176
      %9467 = vmatpush1.xpose.msra.mxu0 %v9067
      %9468 = vmatprep.subr.mxu0 %v9173
      %9469 = vmatpush1.xpose.msra.mxu0 %v9065
      %9470 = vmatprep.subr.mxu0 %v9170
      %9471 = vmatpush1.xpose.msra.mxu0 %v9063
      %9472 = vmatprep.subr.mxu0 %v9167
      %9473 = vmatpush1.xpose.msra.mxu0 %v9061
      %9474 = vmatprep.subr.mxu0 %v9164
      %9475 = vmatpush1.xpose.msra.mxu0 %v9059
      %9476 = vmatprep.subr.mxu0 %v9161
      %9477 = vmatpush1.xpose.msra.mxu0 %v9057
      %9478 = vmatprep.subr.mxu0 %v9158
      %9479 = vmatpush1.xpose.msra.mxu0 %v9055
      %9480 = vmatprep.subr.mxu0 %v9452
      %9481 = vmatpush1.xpose.msra.mxu0 %v9053
      %9482 = vmatprep.subr.mxu0 %v9449
      %9483 = vmatpush1.xpose.msra.mxu0 %v9051
      %9484 = vmatprep.subr.mxu0 %v9446
      %9485 = vmatpush1.xpose.msra.mxu0 %v9049
      %9486 = vmatprep.subr.mxu0 %v9242
      %9487 = vmatpush2.xpose.msra.mxu0 %v9111
      %9488 = vmatprep.subr.mxu0 %v9239
      %9489 = vmatpush2.xpose.msra.mxu0 %v9109
      %9490 = vmatprep.subr.mxu0 %v9236
      %9491 = vmatpush2.xpose.msra.mxu0 %v9107
      %9492 = vmatprep.subr.mxu0 %v9233
      %9493 = vmatpush2.xpose.msra.mxu0 %v9105
      %9494 = vmatprep.subr.mxu0 %v9230
      %9495 = vmatpush2.xpose.msra.mxu0 %v9103
      %9496 = vmatprep.subr.mxu0 %v9227
      %9497 = vmatpush2.xpose.msra.mxu0 %v9101
      %9498 = vmatprep.subr.mxu0 %v9224
      %9499 = vmatpush2.xpose.msra.mxu0 %v9099
      %9500 = vmatprep.subr.mxu0 %v9221
      %9501 = vmatpush2.xpose.msra.mxu0 %v9097
      %9502 = vmatprep.subr.mxu0 %v9218
      %9503 = vmatpush2.xpose.msra.mxu0 %v9095
      %9504 = vmatprep.subr.mxu0 %v9215
      %9505 = vmatpush2.xpose.msra.mxu0 %v9093
      %9506 = vmatprep.subr.mxu0 %v9212
      %9507 = vmatpush2.xpose.msra.mxu0 %v9091
      %9508 = vmatprep.subr.mxu0 %v9209
      %9509 = vmatpush2.xpose.msra.mxu0 %v9089
      %9510 = vmatprep.subr.mxu0 %v9206
      %9511 = vmatpush2.xpose.msra.mxu0 %v9087
      %9512 = vmatprep.subr.mxu0 %v9203
      %9513 = vmatpush2.xpose.msra.mxu0 %v9085
      %9514 = vmatprep.subr.mxu0 %v9200
      %9515 = vmatpush2.xpose.msra.mxu0 %v9083
      %9516 = vmatprep.subr.mxu0 %v9197
      %9517 = vmatpush2.xpose.msra.mxu0 %v9081
      %9518 = vmatprep.mubr.f32.mxu0 %v9443
      %9519 = vmatmul.mubr.f32.gmra.mxu0 %v9047
      %v9520 = vpop.f32.mrf.mxu0
      %v9521 = vadd.f32 %v9368, %v9520
      %v9522 = vpop.f32.mrf.mxu0
      %v9523 = vadd.f32 %v9370, %v9522
      %9524 = vdwg.mxu0
      %9525 = vmatprep.subr.mxu0 %v9290
      %9526 = vmatpush1.xpose.msra.mxu0 %v9143
      %9527 = vmatprep.subr.mxu0 %v9287
      %9528 = vmatpush1.xpose.msra.mxu0 %v9141
      %9529 = vmatprep.subr.mxu0 %v9284
      %9530 = vmatpush1.xpose.msra.mxu0 %v9139
      %9531 = vmatprep.subr.mxu0 %v9281
      %9532 = vmatpush1.xpose.msra.mxu0 %v9137
      %9533 = vmatprep.subr.mxu0 %v9278
      %9534 = vmatpush1.xpose.msra.mxu0 %v9135
      %9535 = vmatprep.subr.mxu0 %v9275
      %9536 = vmatpush1.xpose.msra.mxu0 %v9133
      %9537 = vmatprep.subr.mxu0 %v9272
      %9538 = vmatpush1.xpose.msra.mxu0 %v9131
      %9539 = vmatprep.subr.mxu0 %v9269
      %9540 = vmatpush1.xpose.msra.mxu0 %v9129
      %9541 = vmatprep.subr.mxu0 %v9266
      %9542 = vmatpush1.xpose.msra.mxu0 %v9127
      %9543 = vmatprep.subr.mxu0 %v9263
      %9544 = vmatpush1.xpose.msra.mxu0 %v9125
      %9545 = vmatprep.subr.mxu0 %v9260
      %9546 = vmatpush1.xpose.msra.mxu0 %v9123
      %9547 = vmatprep.subr.mxu0 %v9257
      %9548 = vmatpush1.xpose.msra.mxu0 %v9121
      %9549 = vmatprep.subr.mxu0 %v9254
      %9550 = vmatpush1.xpose.msra.mxu0 %v9119
      %9551 = vmatprep.subr.mxu0 %v9251
      %9552 = vmatpush1.xpose.msra.mxu0 %v9117
      %9553 = vmatprep.subr.mxu0 %v9248
      %9554 = vmatpush1.xpose.msra.mxu0 %v9115
      %9555 = vmatprep.subr.mxu0 %v9245
      %9556 = vmatpush1.xpose.msra.mxu0 %v9113
      %9557 = vmatprep.subr.mxu0 0.0
      %9558 = vmatpush2.xpose.msra.mxu0 0.0
      %9559 = vmatprep.subr.mxu0 0.0
      %9560 = vmatpush2.xpose.msra.mxu0 0.0
      %9561 = vmatprep.subr.mxu0 0.0
      %9562 = vmatpush2.xpose.msra.mxu0 0.0
      %9563 = vmatprep.subr.mxu0 0.0
      %9564 = vmatpush2.xpose.msra.mxu0 0.0
      %9565 = vmatprep.subr.mxu0 0.0
      %9566 = vmatpush2.xpose.msra.mxu0 0.0
      %9567 = vmatprep.subr.mxu0 0.0
      %9568 = vmatpush2.xpose.msra.mxu0 0.0
      %9569 = vmatprep.subr.mxu0 0.0
      %9570 = vmatpush2.xpose.msra.mxu0 0.0
      %9571 = vmatprep.subr.mxu0 0.0
      %9572 = vmatpush2.xpose.msra.mxu0 0.0
      %9573 = vmatprep.subr.mxu0 0.0
      %9574 = vmatpush2.xpose.msra.mxu0 0.0
      %9575 = vmatprep.subr.mxu0 0.0
      %9576 = vmatpush2.xpose.msra.mxu0 0.0
      %9577 = vmatprep.subr.mxu0 0.0
      %9578 = vmatpush2.xpose.msra.mxu0 0.0
      %9579 = vmatprep.subr.mxu0 0.0
      %9580 = vmatpush2.xpose.msra.mxu0 0.0
      %9581 = vmatprep.subr.mxu0 0.0
      %9582 = vmatpush2.xpose.msra.mxu0 0.0
      %9583 = vmatprep.subr.mxu0 0.0
      %9584 = vmatpush2.xpose.msra.mxu0 0.0
      %9585 = vmatprep.subr.mxu0 0.0
      %9586 = vmatpush2.xpose.msra.mxu0 0.0
      %9587 = vmatprep.subr.mxu0 0.0
      %9588 = vmatpush2.xpose.msra.mxu0 0.0
      %9589 = vmatprep.mubr.f32.mxu0 %v9443
      %9590 = vmatmul.mubr.f32.gmra.mxu0 %v9047
      %v9591 = vpop.f32.mrf.mxu0
      %v9592 = vadd.f32 %v9439, %v9591
      %v9593 = vpop.f32.mrf.mxu0
      %9594 = vdwg.mxu0
      %s9595 = scalar_lea.vmem %s5, 32
      %v9596 = vld [vmem:[%s9595] sm:$0xff]
      %v9597 = vld [vmem:[%s9595 + $0x8] sm:$0xff]
      %v9598 = vld [vmem:[#allocation5 + $0x60] sm:$0xff]
      %v9599 = vld [vmem:[#allocation5 + $0x68] sm:$0xff]
      %v9600 = vld [vmem:[#allocation5 + $0x70] sm:$0xff]
      %v9601 = vld [vmem:[#allocation5 + $0x78] sm:$0xff]
      %v9602 = vld [vmem:[#allocation5 + $0x80] sm:$0xff]
      %v9603 = vld [vmem:[#allocation5 + $0x88] sm:$0xff]
      %v9604 = vld [vmem:[#allocation5 + $0x90] sm:$0xff]
      %v9605 = vld [vmem:[#allocation5 + $0x98] sm:$0xff]
      %v9606 = vld [vmem:[#allocation5 + $0xa0] sm:$0xff]
      %v9607 = vld [vmem:[#allocation5 + $0xa8] sm:$0xff]
      %v9608 = vld [vmem:[#allocation5 + $0xb0] sm:$0xff]
      %v9609 = vld [vmem:[#allocation5 + $0xb8] sm:$0xff]
      %v9610 = vld [vmem:[#allocation5 + $0xc0] sm:$0xff]
      %v9611 = vld [vmem:[#allocation5 + $0xc8] sm:$0xff]
      %v9612 = vld [vmem:[#allocation5 + $0xd0] sm:$0xff]
      %v9613 = vld [vmem:[#allocation5 + $0xd8] sm:$0xff]
      %v9614 = vld [vmem:[#allocation5 + $0xe0] sm:$0xff]
      %v9615 = vld [vmem:[#allocation5 + $0xe8] sm:$0xff]
      %v9616 = vld [vmem:[#allocation5 + $0xf0] sm:$0xff]
      %v9617 = vld [vmem:[#allocation5 + $0xf8] sm:$0xff]
      %v9618 = vld [vmem:[#allocation5 + $0x100] sm:$0xff]
      %v9619 = vld [vmem:[#allocation5 + $0x108] sm:$0xff]
      %v9620 = vld [vmem:[#allocation5 + $0x110] sm:$0xff]
      %v9621 = vld [vmem:[#allocation5 + $0x118] sm:$0xff]
      %v9622 = vld [vmem:[#allocation5 + $0x120] sm:$0xff]
      %v9623 = vld [vmem:[#allocation5 + $0x128] sm:$0xff]
      %v9624 = vld [vmem:[#allocation5 + $0x130] sm:$0xff]
      %v9625 = vld [vmem:[#allocation5 + $0x138] sm:$0xff]
      %v9626 = vld [vmem:[#allocation5 + $0x140] sm:$0xff]
      %v9627 = vld [vmem:[#allocation5 + $0x148] sm:$0xff]
      %v9628 = vld [vmem:[#allocation5 + $0x150] sm:$0xff]
      %v9629 = vld [vmem:[#allocation5 + $0x158] sm:$0xff]
      %v9630 = vld [vmem:[#allocation5 + $0x160] sm:$0xff]
      %v9631 = vld [vmem:[#allocation5 + $0x168] sm:$0xff]
      %v9632 = vld [vmem:[#allocation5 + $0x170] sm:$0xff]
      %v9633 = vld [vmem:[#allocation5 + $0x178] sm:$0xff]
      %v9634 = vld [vmem:[#allocation5 + $0x180] sm:$0xff]
      %v9635 = vld [vmem:[#allocation5 + $0x188] sm:$0xff]
      %v9636 = vld [vmem:[#allocation5 + $0x190] sm:$0xff]
      %v9637 = vld [vmem:[#allocation5 + $0x198] sm:$0xff]
      %v9638 = vld [vmem:[#allocation5 + $0x1a0] sm:$0xff]
      %v9639 = vld [vmem:[#allocation5 + $0x1a8] sm:$0xff]
      %v9640 = vld [vmem:[#allocation5 + $0x1b0] sm:$0xff]
      %v9641 = vld [vmem:[#allocation5 + $0x1b8] sm:$0xff]
      %v9642 = vld [vmem:[#allocation5 + $0x1c0] sm:$0xff]
      %v9643 = vld [vmem:[#allocation5 + $0x1c8] sm:$0xff]
      %v9644 = vld [vmem:[#allocation5 + $0x1d0] sm:$0xff]
      %v9645 = vld [vmem:[#allocation5 + $0x1d8] sm:$0xff]
      %v9646 = vld [vmem:[#allocation5 + $0x1e0] sm:$0xff]
      %v9647 = vld [vmem:[#allocation5 + $0x1e8] sm:$0xff]
      %v9648 = vld [vmem:[#allocation5 + $0x1f0] sm:$0xff]
      %v9649 = vld [vmem:[#allocation5 + $0x1f8] sm:$0xff]
      %v9650 = vld [vmem:[#allocation5 + $0x200] sm:$0xff]
      %v9651 = vld [vmem:[#allocation5 + $0x208] sm:$0xff]
      %v9652 = vld [vmem:[#allocation5 + $0x210] sm:$0xff]
      %v9653 = vld [vmem:[#allocation5 + $0x218] sm:$0xff]
      %v9654 = vld [vmem:[#allocation5 + $0x220] sm:$0xff]
      %v9655 = vld [vmem:[#allocation5 + $0x228] sm:$0xff]
      %v9656 = vld [vmem:[#allocation5 + $0x230] sm:$0xff]
      %v9657 = vld [vmem:[#allocation5 + $0x238] sm:$0xff]
      %v9658 = vld [vmem:[#allocation5 + $0x240] sm:$0xff]
      %v9659 = vld [vmem:[#allocation5 + $0x248] sm:$0xff]
      %v9660 = vld [vmem:[#allocation5 + $0x250] sm:$0xff]
      %v9661 = vld [vmem:[#allocation5 + $0x258] sm:$0xff]
      %v9662 = vld [vmem:[#allocation5 + $0x260] sm:$0xff]
      %v9663 = vld [vmem:[#allocation5 + $0x268] sm:$0xff]
      %v9664 = vld [vmem:[#allocation5 + $0x270] sm:$0xff]
      %v9665 = vld [vmem:[#allocation5 + $0x278] sm:$0xff]
      %v9666 = vld [vmem:[#allocation5 + $0x280] sm:$0xff]
      %v9667 = vld [vmem:[#allocation5 + $0x288] sm:$0xff]
      %v9668 = vld [vmem:[#allocation5 + $0x290] sm:$0xff]
      %v9669 = vld [vmem:[#allocation5 + $0x298] sm:$0xff]
      %v9670 = vld [vmem:[#allocation5 + $0x2a0] sm:$0xff]
      %v9671 = vld [vmem:[#allocation5 + $0x2a8] sm:$0xff]
      %v9672 = vld [vmem:[#allocation5 + $0x2b0] sm:$0xff]
      %v9673 = vld [vmem:[#allocation5 + $0x2b8] sm:$0xff]
      %v9674 = vld [vmem:[#allocation5 + $0x2c0] sm:$0xff]
      %v9675 = vld [vmem:[#allocation5 + $0x2c8] sm:$0xff]
      %v9676 = vld [vmem:[#allocation5 + $0x2d0] sm:$0xff]
      %v9677 = vld [vmem:[#allocation5 + $0x2d8] sm:$0xff]
      %v9678 = vld [vmem:[#allocation5 + $0x2e0] sm:$0xff]
      %v9679 = vld [vmem:[#allocation5 + $0x2e8] sm:$0xff]
      %v9680 = vld [vmem:[#allocation5 + $0x2f0] sm:$0xff]
      %v9681 = vld [vmem:[#allocation5 + $0x2f8] sm:$0xff]
      %v9682 = vld [vmem:[#allocation5 + $0x300] sm:$0xff]
      %v9683 = vld [vmem:[#allocation5 + $0x308] sm:$0xff]
      %v9684 = vld [vmem:[#allocation5 + $0x310] sm:$0xff]
      %v9685 = vld [vmem:[#allocation5 + $0x318] sm:$0xff]
      %v9686 = vld [vmem:[#allocation5 + $0x320] sm:$0xff]
      %v9687 = vld [vmem:[#allocation5 + $0x328] sm:$0xff]
      %v9688 = vld [vmem:[#allocation5 + $0x330] sm:$0xff]
      %v9689 = vld [vmem:[#allocation5 + $0x338] sm:$0xff]
      %v9690 = vld [vmem:[#allocation5 + $0x340] sm:$0xff]
      %v9691 = vld [vmem:[#allocation5 + $0x348] sm:$0xff]
      %v9692 = vld [vmem:[#allocation5 + $0x350] sm:$0xff]
      %v9693 = vld [vmem:[#allocation5 + $0x358] sm:$0xff]
      %v9695 = vsel %vm1170, %v9597, 0
      %v9698 = vsel %vm1170, %v9599, 0
      %v9701 = vsel %vm1170, %v9601, 0
      %v9704 = vsel %vm1170, %v9603, 0
      %v9707 = vsel %vm1170, %v9605, 0
      %v9710 = vsel %vm1170, %v9607, 0
      %v9713 = vsel %vm1170, %v9609, 0
      %v9716 = vsel %vm1170, %v9611, 0
      %v9719 = vsel %vm1170, %v9613, 0
      %v9722 = vsel %vm1170, %v9615, 0
      %v9725 = vsel %vm1170, %v9617, 0
      %v9728 = vsel %vm1170, %v9619, 0
      %v9731 = vsel %vm1170, %v9621, 0
      %v9734 = vsel %vm1170, %v9623, 0
      %v9737 = vsel %vm1170, %v9625, 0
      %v9740 = vsel %vm1170, %v9627, 0
      %v9743 = vsel %vm1170, %v9629, 0
      %v9746 = vsel %vm1170, %v9631, 0
      %v9749 = vsel %vm1170, %v9633, 0
      %v9752 = vsel %vm1170, %v9635, 0
      %v9755 = vsel %vm1170, %v9637, 0
      %v9758 = vsel %vm1170, %v9639, 0
      %v9761 = vsel %vm1170, %v9641, 0
      %v9764 = vsel %vm1170, %v9643, 0
      %v9767 = vsel %vm1170, %v9645, 0
      %v9770 = vsel %vm1170, %v9647, 0
      %v9773 = vsel %vm1170, %v9649, 0
      %v9776 = vsel %vm1170, %v9651, 0
      %v9779 = vsel %vm1170, %v9653, 0
      %v9782 = vsel %vm1170, %v9655, 0
      %v9785 = vsel %vm1170, %v9657, 0
      %v9788 = vsel %vm1170, %v9659, 0
      %v9791 = vsel %vm1170, %v9661, 0
      %v9794 = vsel %vm1170, %v9663, 0
      %v9797 = vsel %vm1170, %v9665, 0
      %v9800 = vsel %vm1170, %v9667, 0
      %v9803 = vsel %vm1170, %v9669, 0
      %v9806 = vsel %vm1170, %v9671, 0
      %v9809 = vsel %vm1170, %v9673, 0
      %v9812 = vsel %vm1170, %v9675, 0
      %v9815 = vsel %vm1170, %v9677, 0
      %v9818 = vsel %vm1170, %v9679, 0
      %v9821 = vsel %vm1170, %v9681, 0
      %v9824 = vsel %vm1170, %v9683, 0
      %v9827 = vsel %vm1170, %v9685, 0
      %v9830 = vsel %vm1170, %v9687, 0
      %v9833 = vsel %vm1170, %v9689, 0
      %v9836 = vsel %vm1170, %v9691, 0
      %v9839 = vsel %vm1170, %v9693, 0
      %9841 = vmatprep.subr.mxu0 %v9743
      %9842 = vmatpush1.xpose.msra.mxu0 %v9628
      %9843 = vmatprep.subr.mxu0 %v9740
      %9844 = vmatpush1.xpose.msra.mxu0 %v9626
      %9845 = vmatprep.subr.mxu0 %v9737
      %9846 = vmatpush1.xpose.msra.mxu0 %v9624
      %9847 = vmatprep.subr.mxu0 %v9734
      %9848 = vmatpush1.xpose.msra.mxu0 %v9622
      %9849 = vmatprep.subr.mxu0 %v9731
      %9850 = vmatpush1.xpose.msra.mxu0 %v9620
      %9851 = vmatprep.subr.mxu0 %v9728
      %9852 = vmatpush1.xpose.msra.mxu0 %v9618
      %9853 = vmatprep.subr.mxu0 %v9725
      %9854 = vmatpush1.xpose.msra.mxu0 %v9616
      %9855 = vmatprep.subr.mxu0 %v9722
      %9856 = vmatpush1.xpose.msra.mxu0 %v9614
      %9857 = vmatprep.subr.mxu0 %v9719
      %9858 = vmatpush1.xpose.msra.mxu0 %v9612
      %9859 = vmatprep.subr.mxu0 %v9716
      %9860 = vmatpush1.xpose.msra.mxu0 %v9610
      %9861 = vmatprep.subr.mxu0 %v9713
      %9862 = vmatpush1.xpose.msra.mxu0 %v9608
      %9863 = vmatprep.subr.mxu0 %v9710
      %9864 = vmatpush1.xpose.msra.mxu0 %v9606
      %9865 = vmatprep.subr.mxu0 %v9707
      %9866 = vmatpush1.xpose.msra.mxu0 %v9604
      %9867 = vmatprep.subr.mxu0 %v9704
      %9868 = vmatpush1.xpose.msra.mxu0 %v9602
      %9869 = vmatprep.subr.mxu0 %v9701
      %9870 = vmatpush1.xpose.msra.mxu0 %v9600
      %9871 = vmatprep.subr.mxu0 %v9698
      %9872 = vmatpush1.xpose.msra.mxu0 %v9598
      %9873 = vmatprep.subr.mxu0 %v9791
      %9874 = vmatpush2.xpose.msra.mxu0 %v9660
      %9875 = vmatprep.subr.mxu0 %v9788
      %9876 = vmatpush2.xpose.msra.mxu0 %v9658
      %9877 = vmatprep.subr.mxu0 %v9785
      %9878 = vmatpush2.xpose.msra.mxu0 %v9656
      %9879 = vmatprep.subr.mxu0 %v9782
      %9880 = vmatpush2.xpose.msra.mxu0 %v9654
      %9881 = vmatprep.subr.mxu0 %v9779
      %9882 = vmatpush2.xpose.msra.mxu0 %v9652
      %9883 = vmatprep.subr.mxu0 %v9776
      %9884 = vmatpush2.xpose.msra.mxu0 %v9650
      %9885 = vmatprep.subr.mxu0 %v9773
      %9886 = vmatpush2.xpose.msra.mxu0 %v9648
      %9887 = vmatprep.subr.mxu0 %v9770
      %9888 = vmatpush2.xpose.msra.mxu0 %v9646
      %9889 = vmatprep.subr.mxu0 %v9767
      %9890 = vmatpush2.xpose.msra.mxu0 %v9644
      %9891 = vmatprep.subr.mxu0 %v9764
      %9892 = vmatpush2.xpose.msra.mxu0 %v9642
      %9893 = vmatprep.subr.mxu0 %v9761
      %9894 = vmatpush2.xpose.msra.mxu0 %v9640
      %9895 = vmatprep.subr.mxu0 %v9758
      %9896 = vmatpush2.xpose.msra.mxu0 %v9638
      %9897 = vmatprep.subr.mxu0 %v9755
      %9898 = vmatpush2.xpose.msra.mxu0 %v9636
      %9899 = vmatprep.subr.mxu0 %v9752
      %9900 = vmatpush2.xpose.msra.mxu0 %v9634
      %9901 = vmatprep.subr.mxu0 %v9749
      %9902 = vmatpush2.xpose.msra.mxu0 %v9632
      %9903 = vmatprep.subr.mxu0 %v9746
      %9904 = vmatpush2.xpose.msra.mxu0 %v9630
      %9905 = vmatprep.mubr.f32.mxu0 %v9695
      %9906 = vmatmul.mubr.f32.gmra.mxu0 %v9596
      %v9907 = vpop.f32.mrf.mxu0
      %v9908 = vadd.f32 0.0, %v9907
      %v9909 = vpop.f32.mrf.mxu0
      %v9910 = vadd.f32 0.0, %v9909
      %9911 = vdwg.mxu0
      %9912 = vmatprep.subr.mxu0 %v9839
      %9913 = vmatpush1.xpose.msra.mxu0 %v9692
      %9914 = vmatprep.subr.mxu0 %v9836
      %9915 = vmatpush1.xpose.msra.mxu0 %v9690
      %9916 = vmatprep.subr.mxu0 %v9833
      %9917 = vmatpush1.xpose.msra.mxu0 %v9688
      %9918 = vmatprep.subr.mxu0 %v9830
      %9919 = vmatpush1.xpose.msra.mxu0 %v9686
      %9920 = vmatprep.subr.mxu0 %v9827
      %9921 = vmatpush1.xpose.msra.mxu0 %v9684
      %9922 = vmatprep.subr.mxu0 %v9824
      %9923 = vmatpush1.xpose.msra.mxu0 %v9682
      %9924 = vmatprep.subr.mxu0 %v9821
      %9925 = vmatpush1.xpose.msra.mxu0 %v9680
      %9926 = vmatprep.subr.mxu0 %v9818
      %9927 = vmatpush1.xpose.msra.mxu0 %v9678
      %9928 = vmatprep.subr.mxu0 %v9815
      %9929 = vmatpush1.xpose.msra.mxu0 %v9676
      %9930 = vmatprep.subr.mxu0 %v9812
      %9931 = vmatpush1.xpose.msra.mxu0 %v9674
      %9932 = vmatprep.subr.mxu0 %v9809
      %9933 = vmatpush1.xpose.msra.mxu0 %v9672
      %9934 = vmatprep.subr.mxu0 %v9806
      %9935 = vmatpush1.xpose.msra.mxu0 %v9670
      %9936 = vmatprep.subr.mxu0 %v9803
      %9937 = vmatpush1.xpose.msra.mxu0 %v9668
      %9938 = vmatprep.subr.mxu0 %v9800
      %9939 = vmatpush1.xpose.msra.mxu0 %v9666
      %9940 = vmatprep.subr.mxu0 %v9797
      %9941 = vmatpush1.xpose.msra.mxu0 %v9664
      %9942 = vmatprep.subr.mxu0 %v9794
      %9943 = vmatpush1.xpose.msra.mxu0 %v9662
      %9944 = vmatprep.subr.mxu0 0.0
      %9945 = vmatpush2.xpose.msra.mxu0 0.0
      %9946 = vmatprep.subr.mxu0 0.0
      %9947 = vmatpush2.xpose.msra.mxu0 0.0
      %9948 = vmatprep.subr.mxu0 0.0
      %9949 = vmatpush2.xpose.msra.mxu0 0.0
      %9950 = vmatprep.subr.mxu0 0.0
      %9951 = vmatpush2.xpose.msra.mxu0 0.0
      %9952 = vmatprep.subr.mxu0 0.0
      %9953 = vmatpush2.xpose.msra.mxu0 0.0
      %9954 = vmatprep.subr.mxu0 0.0
      %9955 = vmatpush2.xpose.msra.mxu0 0.0
      %9956 = vmatprep.subr.mxu0 0.0
      %9957 = vmatpush2.xpose.msra.mxu0 0.0
      %9958 = vmatprep.subr.mxu0 0.0
      %9959 = vmatpush2.xpose.msra.mxu0 0.0
      %9960 = vmatprep.subr.mxu0 0.0
      %9961 = vmatpush2.xpose.msra.mxu0 0.0
      %9962 = vmatprep.subr.mxu0 0.0
      %9963 = vmatpush2.xpose.msra.mxu0 0.0
      %9964 = vmatprep.subr.mxu0 0.0
      %9965 = vmatpush2.xpose.msra.mxu0 0.0
      %9966 = vmatprep.subr.mxu0 0.0
      %9967 = vmatpush2.xpose.msra.mxu0 0.0
      %9968 = vmatprep.subr.mxu0 0.0
      %9969 = vmatpush2.xpose.msra.mxu0 0.0
      %9970 = vmatprep.subr.mxu0 0.0
      %9971 = vmatpush2.xpose.msra.mxu0 0.0
      %9972 = vmatprep.subr.mxu0 0.0
      %9973 = vmatpush2.xpose.msra.mxu0 0.0
      %9974 = vmatprep.subr.mxu0 0.0
      %9975 = vmatpush2.xpose.msra.mxu0 0.0
      %9976 = vmatprep.mubr.f32.mxu0 %v9695
      %9977 = vmatmul.mubr.f32.gmra.mxu0 %v9596
      %v9978 = vpop.f32.mrf.mxu0
      %v9979 = vadd.f32 0.0, %v9978
      %v9980 = vpop.f32.mrf.mxu0
      %9981 = vdwg.mxu0
      %v9982 = vadd.f32 %v9521, %v9908
      %v9983 = vadd.f32 %v9523, %v9910
      %v9984 = vadd.f32 %v9592, %v9979
      %s9985 = scalar_lea.vmem %s5, 48
      %v9986 = vld [vmem:[%s9985] sm:$0xff]
      %v9987 = vld [vmem:[%s9985 + $0x8] sm:$0xff]
      %v9988 = vld [vmem:[#allocation5 + $0x90] sm:$0xff]
      %v9989 = vld [vmem:[#allocation5 + $0x98] sm:$0xff]
      %v9990 = vld [vmem:[#allocation5 + $0xa0] sm:$0xff]
      %v9991 = vld [vmem:[#allocation5 + $0xa8] sm:$0xff]
      %v9992 = vld [vmem:[#allocation5 + $0xb0] sm:$0xff]
      %v9993 = vld [vmem:[#allocation5 + $0xb8] sm:$0xff]
      %v9994 = vld [vmem:[#allocation5 + $0xc0] sm:$0xff]
      %v9995 = vld [vmem:[#allocation5 + $0xc8] sm:$0xff]
      %v9996 = vld [vmem:[#allocation5 + $0xd0] sm:$0xff]
      %v9997 = vld [vmem:[#allocation5 + $0xd8] sm:$0xff]
      %v9998 = vld [vmem:[#allocation5 + $0xe0] sm:$0xff]
      %v9999 = vld [vmem:[#allocation5 + $0xe8] sm:$0xff]
      %v10000 = vld [vmem:[#allocation5 + $0xf0] sm:$0xff]
      %v10001 = vld [vmem:[#allocation5 + $0xf8] sm:$0xff]
      %v10002 = vld [vmem:[#allocation5 + $0x100] sm:$0xff]
      %v10003 = vld [vmem:[#allocation5 + $0x108] sm:$0xff]
      %v10004 = vld [vmem:[#allocation5 + $0x110] sm:$0xff]
      %v10005 = vld [vmem:[#allocation5 + $0x118] sm:$0xff]
      %v10006 = vld [vmem:[#allocation5 + $0x120] sm:$0xff]
      %v10007 = vld [vmem:[#allocation5 + $0x128] sm:$0xff]
      %v10008 = vld [vmem:[#allocation5 + $0x130] sm:$0xff]
      %v10009 = vld [vmem:[#allocation5 + $0x138] sm:$0xff]
      %v10010 = vld [vmem:[#allocation5 + $0x140] sm:$0xff]
      %v10011 = vld [vmem:[#allocation5 + $0x148] sm:$0xff]
      %v10012 = vld [vmem:[#allocation5 + $0x150] sm:$0xff]
      %v10013 = vld [vmem:[#allocation5 + $0x158] sm:$0xff]
      %v10014 = vld [vmem:[#allocation5 + $0x160] sm:$0xff]
      %v10015 = vld [vmem:[#allocation5 + $0x168] sm:$0xff]
      %v10016 = vld [vmem:[#allocation5 + $0x170] sm:$0xff]
      %v10017 = vld [vmem:[#allocation5 + $0x178] sm:$0xff]
      %v10018 = vld [vmem:[#allocation5 + $0x180] sm:$0xff]
      %v10019 = vld [vmem:[#allocation5 + $0x188] sm:$0xff]
      %v10020 = vld [vmem:[#allocation5 + $0x190] sm:$0xff]
      %v10021 = vld [vmem:[#allocation5 + $0x198] sm:$0xff]
      %v10022 = vld [vmem:[#allocation5 + $0x1a0] sm:$0xff]
      %v10023 = vld [vmem:[#allocation5 + $0x1a8] sm:$0xff]
      %v10024 = vld [vmem:[#allocation5 + $0x1b0] sm:$0xff]
      %v10025 = vld [vmem:[#allocation5 + $0x1b8] sm:$0xff]
      %v10026 = vld [vmem:[#allocation5 + $0x1c0] sm:$0xff]
      %v10027 = vld [vmem:[#allocation5 + $0x1c8] sm:$0xff]
      %v10028 = vld [vmem:[#allocation5 + $0x1d0] sm:$0xff]
      %v10029 = vld [vmem:[#allocation5 + $0x1d8] sm:$0xff]
      %v10030 = vld [vmem:[#allocation5 + $0x1e0] sm:$0xff]
      %v10031 = vld [vmem:[#allocation5 + $0x1e8] sm:$0xff]
      %v10032 = vld [vmem:[#allocation5 + $0x1f0] sm:$0xff]
      %v10033 = vld [vmem:[#allocation5 + $0x1f8] sm:$0xff]
      %v10034 = vld [vmem:[#allocation5 + $0x200] sm:$0xff]
      %v10035 = vld [vmem:[#allocation5 + $0x208] sm:$0xff]
      %v10036 = vld [vmem:[#allocation5 + $0x210] sm:$0xff]
      %v10037 = vld [vmem:[#allocation5 + $0x218] sm:$0xff]
      %v10038 = vld [vmem:[#allocation5 + $0x220] sm:$0xff]
      %v10039 = vld [vmem:[#allocation5 + $0x228] sm:$0xff]
      %v10040 = vld [vmem:[#allocation5 + $0x230] sm:$0xff]
      %v10041 = vld [vmem:[#allocation5 + $0x238] sm:$0xff]
      %v10042 = vld [vmem:[#allocation5 + $0x240] sm:$0xff]
      %v10043 = vld [vmem:[#allocation5 + $0x248] sm:$0xff]
      %v10044 = vld [vmem:[#allocation5 + $0x250] sm:$0xff]
      %v10045 = vld [vmem:[#allocation5 + $0x258] sm:$0xff]
      %v10046 = vld [vmem:[#allocation5 + $0x260] sm:$0xff]
      %v10047 = vld [vmem:[#allocation5 + $0x268] sm:$0xff]
      %v10048 = vld [vmem:[#allocation5 + $0x270] sm:$0xff]
      %v10049 = vld [vmem:[#allocation5 + $0x278] sm:$0xff]
      %v10050 = vld [vmem:[#allocation5 + $0x280] sm:$0xff]
      %v10051 = vld [vmem:[#allocation5 + $0x288] sm:$0xff]
      %v10052 = vld [vmem:[#allocation5 + $0x290] sm:$0xff]
      %v10053 = vld [vmem:[#allocation5 + $0x298] sm:$0xff]
      %v10054 = vld [vmem:[#allocation5 + $0x2a0] sm:$0xff]
      %v10055 = vld [vmem:[#allocation5 + $0x2a8] sm:$0xff]
      %v10056 = vld [vmem:[#allocation5 + $0x2b0] sm:$0xff]
      %v10057 = vld [vmem:[#allocation5 + $0x2b8] sm:$0xff]
      %v10058 = vld [vmem:[#allocation5 + $0x2c0] sm:$0xff]
      %v10059 = vld [vmem:[#allocation5 + $0x2c8] sm:$0xff]
      %v10060 = vld [vmem:[#allocation5 + $0x2d0] sm:$0xff]
      %v10061 = vld [vmem:[#allocation5 + $0x2d8] sm:$0xff]
      %v10062 = vld [vmem:[#allocation5 + $0x2e0] sm:$0xff]
      %v10063 = vld [vmem:[#allocation5 + $0x2e8] sm:$0xff]
      %v10064 = vld [vmem:[#allocation5 + $0x2f0] sm:$0xff]
      %v10065 = vld [vmem:[#allocation5 + $0x2f8] sm:$0xff]
      %v10066 = vld [vmem:[#allocation5 + $0x300] sm:$0xff]
      %v10067 = vld [vmem:[#allocation5 + $0x308] sm:$0xff]
      %v10068 = vld [vmem:[#allocation5 + $0x310] sm:$0xff]
      %v10069 = vld [vmem:[#allocation5 + $0x318] sm:$0xff]
      %v10070 = vld [vmem:[#allocation5 + $0x320] sm:$0xff]
      %v10071 = vld [vmem:[#allocation5 + $0x328] sm:$0xff]
      %v10072 = vld [vmem:[#allocation5 + $0x330] sm:$0xff]
      %v10073 = vld [vmem:[#allocation5 + $0x338] sm:$0xff]
      %v10074 = vld [vmem:[#allocation5 + $0x340] sm:$0xff]
      %v10075 = vld [vmem:[#allocation5 + $0x348] sm:$0xff]
      %v10076 = vld [vmem:[#allocation5 + $0x350] sm:$0xff]
      %v10077 = vld [vmem:[#allocation5 + $0x358] sm:$0xff]
      %v10078 = vld [vmem:[#allocation5 + $0x360] sm:$0xff]
      %v10079 = vld [vmem:[#allocation5 + $0x368] sm:$0xff]
      %v10080 = vld [vmem:[#allocation5 + $0x370] sm:$0xff]
      %v10081 = vld [vmem:[#allocation5 + $0x378] sm:$0xff]
      %v10082 = vld [vmem:[#allocation5 + $0x380] sm:$0xff]
      %v10083 = vld [vmem:[#allocation5 + $0x388] sm:$0xff]
      %v10085 = vsel %vm1170, %v9987, 0
      %v10088 = vsel %vm1170, %v9989, 0
      %v10091 = vsel %vm1170, %v9991, 0
      %v10094 = vsel %vm1170, %v9993, 0
      %v10097 = vsel %vm1170, %v9995, 0
      %v10100 = vsel %vm1170, %v9997, 0
      %v10103 = vsel %vm1170, %v9999, 0
      %v10106 = vsel %vm1170, %v10001, 0
      %v10109 = vsel %vm1170, %v10003, 0
      %v10112 = vsel %vm1170, %v10005, 0
      %v10115 = vsel %vm1170, %v10007, 0
      %v10118 = vsel %vm1170, %v10009, 0
      %v10121 = vsel %vm1170, %v10011, 0
      %v10124 = vsel %vm1170, %v10013, 0
      %v10127 = vsel %vm1170, %v10015, 0
      %v10130 = vsel %vm1170, %v10017, 0
      %v10133 = vsel %vm1170, %v10019, 0
      %v10136 = vsel %vm1170, %v10021, 0
      %v10139 = vsel %vm1170, %v10023, 0
      %v10142 = vsel %vm1170, %v10025, 0
      %v10145 = vsel %vm1170, %v10027, 0
      %v10148 = vsel %vm1170, %v10029, 0
      %v10151 = vsel %vm1170, %v10031, 0
      %v10154 = vsel %vm1170, %v10033, 0
      %v10157 = vsel %vm1170, %v10035, 0
      %v10160 = vsel %vm1170, %v10037, 0
      %v10163 = vsel %vm1170, %v10039, 0
      %v10166 = vsel %vm1170, %v10041, 0
      %v10169 = vsel %vm1170, %v10043, 0
      %v10172 = vsel %vm1170, %v10045, 0
      %v10175 = vsel %vm1170, %v10047, 0
      %v10178 = vsel %vm1170, %v10049, 0
      %v10181 = vsel %vm1170, %v10051, 0
      %v10184 = vsel %vm1170, %v10053, 0
      %v10187 = vsel %vm1170, %v10055, 0
      %v10190 = vsel %vm1170, %v10057, 0
      %v10193 = vsel %vm1170, %v10059, 0
      %v10196 = vsel %vm1170, %v10061, 0
      %v10199 = vsel %vm1170, %v10063, 0
      %v10202 = vsel %vm1170, %v10065, 0
      %v10205 = vsel %vm1170, %v10067, 0
      %v10208 = vsel %vm1170, %v10069, 0
      %v10211 = vsel %vm1170, %v10071, 0
      %v10214 = vsel %vm1170, %v10073, 0
      %v10217 = vsel %vm1170, %v10075, 0
      %v10220 = vsel %vm1170, %v10077, 0
      %v10223 = vsel %vm1170, %v10079, 0
      %v10226 = vsel %vm1170, %v10081, 0
      %v10229 = vsel %vm1170, %v10083, 0
      %10231 = vmatprep.subr.mxu0 %v10133
      %10232 = vmatpush1.xpose.msra.mxu0 %v10018
      %10233 = vmatprep.subr.mxu0 %v10130
      %10234 = vmatpush1.xpose.msra.mxu0 %v10016
      %10235 = vmatprep.subr.mxu0 %v10127
      %10236 = vmatpush1.xpose.msra.mxu0 %v10014
      %10237 = vmatprep.subr.mxu0 %v10124
      %10238 = vmatpush1.xpose.msra.mxu0 %v10012
      %10239 = vmatprep.subr.mxu0 %v10121
      %10240 = vmatpush1.xpose.msra.mxu0 %v10010
      %10241 = vmatprep.subr.mxu0 %v10118
      %10242 = vmatpush1.xpose.msra.mxu0 %v10008
      %10243 = vmatprep.subr.mxu0 %v10115
      %10244 = vmatpush1.xpose.msra.mxu0 %v10006
      %10245 = vmatprep.subr.mxu0 %v10112
      %10246 = vmatpush1.xpose.msra.mxu0 %v10004
      %10247 = vmatprep.subr.mxu0 %v10109
      %10248 = vmatpush1.xpose.msra.mxu0 %v10002
      %10249 = vmatprep.subr.mxu0 %v10106
      %10250 = vmatpush1.xpose.msra.mxu0 %v10000
      %10251 = vmatprep.subr.mxu0 %v10103
      %10252 = vmatpush1.xpose.msra.mxu0 %v9998
      %10253 = vmatprep.subr.mxu0 %v10100
      %10254 = vmatpush1.xpose.msra.mxu0 %v9996
      %10255 = vmatprep.subr.mxu0 %v10097
      %10256 = vmatpush1.xpose.msra.mxu0 %v9994
      %10257 = vmatprep.subr.mxu0 %v10094
      %10258 = vmatpush1.xpose.msra.mxu0 %v9992
      %10259 = vmatprep.subr.mxu0 %v10091
      %10260 = vmatpush1.xpose.msra.mxu0 %v9990
      %10261 = vmatprep.subr.mxu0 %v10088
      %10262 = vmatpush1.xpose.msra.mxu0 %v9988
      %10263 = vmatprep.subr.mxu0 %v10181
      %10264 = vmatpush2.xpose.msra.mxu0 %v10050
      %10265 = vmatprep.subr.mxu0 %v10178
      %10266 = vmatpush2.xpose.msra.mxu0 %v10048
      %10267 = vmatprep.subr.mxu0 %v10175
      %10268 = vmatpush2.xpose.msra.mxu0 %v10046
      %10269 = vmatprep.subr.mxu0 %v10172
      %10270 = vmatpush2.xpose.msra.mxu0 %v10044
      %10271 = vmatprep.subr.mxu0 %v10169
      %10272 = vmatpush2.xpose.msra.mxu0 %v10042
      %10273 = vmatprep.subr.mxu0 %v10166
      %10274 = vmatpush2.xpose.msra.mxu0 %v10040
      %10275 = vmatprep.subr.mxu0 %v10163
      %10276 = vmatpush2.xpose.msra.mxu0 %v10038
      %10277 = vmatprep.subr.mxu0 %v10160
      %10278 = vmatpush2.xpose.msra.mxu0 %v10036
      %10279 = vmatprep.subr.mxu0 %v10157
      %10280 = vmatpush2.xpose.msra.mxu0 %v10034
      %10281 = vmatprep.subr.mxu0 %v10154
      %10282 = vmatpush2.xpose.msra.mxu0 %v10032
      %10283 = vmatprep.subr.mxu0 %v10151
      %10284 = vmatpush2.xpose.msra.mxu0 %v10030
      %10285 = vmatprep.subr.mxu0 %v10148
      %10286 = vmatpush2.xpose.msra.mxu0 %v10028
      %10287 = vmatprep.subr.mxu0 %v10145
      %10288 = vmatpush2.xpose.msra.mxu0 %v10026
      %10289 = vmatprep.subr.mxu0 %v10142
      %10290 = vmatpush2.xpose.msra.mxu0 %v10024
      %10291 = vmatprep.subr.mxu0 %v10139
      %10292 = vmatpush2.xpose.msra.mxu0 %v10022
      %10293 = vmatprep.subr.mxu0 %v10136
      %10294 = vmatpush2.xpose.msra.mxu0 %v10020
      %10295 = vmatprep.mubr.f32.mxu0 %v10085
      %10296 = vmatmul.mubr.f32.gmra.mxu0 %v9986
      %v10297 = vpop.f32.mrf.mxu0
      %v10298 = vadd.f32 0.0, %v10297
      %v10299 = vpop.f32.mrf.mxu0
      %v10300 = vadd.f32 0.0, %v10299
      %10301 = vdwg.mxu0
      %10302 = vmatprep.subr.mxu0 %v10229
      %10303 = vmatpush1.xpose.msra.mxu0 %v10082
      %10304 = vmatprep.subr.mxu0 %v10226
      %10305 = vmatpush1.xpose.msra.mxu0 %v10080
      %10306 = vmatprep.subr.mxu0 %v10223
      %10307 = vmatpush1.xpose.msra.mxu0 %v10078
      %10308 = vmatprep.subr.mxu0 %v10220
      %10309 = vmatpush1.xpose.msra.mxu0 %v10076
      %10310 = vmatprep.subr.mxu0 %v10217
      %10311 = vmatpush1.xpose.msra.mxu0 %v10074
      %10312 = vmatprep.subr.mxu0 %v10214
      %10313 = vmatpush1.xpose.msra.mxu0 %v10072
      %10314 = vmatprep.subr.mxu0 %v10211
      %10315 = vmatpush1.xpose.msra.mxu0 %v10070
      %10316 = vmatprep.subr.mxu0 %v10208
      %10317 = vmatpush1.xpose.msra.mxu0 %v10068
      %10318 = vmatprep.subr.mxu0 %v10205
      %10319 = vmatpush1.xpose.msra.mxu0 %v10066
      %10320 = vmatprep.subr.mxu0 %v10202
      %10321 = vmatpush1.xpose.msra.mxu0 %v10064
      %10322 = vmatprep.subr.mxu0 %v10199
      %10323 = vmatpush1.xpose.msra.mxu0 %v10062
      %10324 = vmatprep.subr.mxu0 %v10196
      %10325 = vmatpush1.xpose.msra.mxu0 %v10060
      %10326 = vmatprep.subr.mxu0 %v10193
      %10327 = vmatpush1.xpose.msra.mxu0 %v10058
      %10328 = vmatprep.subr.mxu0 %v10190
      %10329 = vmatpush1.xpose.msra.mxu0 %v10056
      %10330 = vmatprep.subr.mxu0 %v10187
      %10331 = vmatpush1.xpose.msra.mxu0 %v10054
      %10332 = vmatprep.subr.mxu0 %v10184
      %10333 = vmatpush1.xpose.msra.mxu0 %v10052
      %10334 = vmatprep.subr.mxu0 0.0
      %10335 = vmatpush2.xpose.msra.mxu0 0.0
      %10336 = vmatprep.subr.mxu0 0.0
      %10337 = vmatpush2.xpose.msra.mxu0 0.0
      %10338 = vmatprep.subr.mxu0 0.0
      %10339 = vmatpush2.xpose.msra.mxu0 0.0
      %10340 = vmatprep.subr.mxu0 0.0
      %10341 = vmatpush2.xpose.msra.mxu0 0.0
      %10342 = vmatprep.subr.mxu0 0.0
      %10343 = vmatpush2.xpose.msra.mxu0 0.0
      %10344 = vmatprep.subr.mxu0 0.0
      %10345 = vmatpush2.xpose.msra.mxu0 0.0
      %10346 = vmatprep.subr.mxu0 0.0
      %10347 = vmatpush2.xpose.msra.mxu0 0.0
      %10348 = vmatprep.subr.mxu0 0.0
      %10349 = vmatpush2.xpose.msra.mxu0 0.0
      %10350 = vmatprep.subr.mxu0 0.0
      %10351 = vmatpush2.xpose.msra.mxu0 0.0
      %10352 = vmatprep.subr.mxu0 0.0
      %10353 = vmatpush2.xpose.msra.mxu0 0.0
      %10354 = vmatprep.subr.mxu0 0.0
      %10355 = vmatpush2.xpose.msra.mxu0 0.0
      %10356 = vmatprep.subr.mxu0 0.0
      %10357 = vmatpush2.xpose.msra.mxu0 0.0
      %10358 = vmatprep.subr.mxu0 0.0
      %10359 = vmatpush2.xpose.msra.mxu0 0.0
      %10360 = vmatprep.subr.mxu0 0.0
      %10361 = vmatpush2.xpose.msra.mxu0 0.0
      %10362 = vmatprep.subr.mxu0 0.0
      %10363 = vmatpush2.xpose.msra.mxu0 0.0
      %10364 = vmatprep.subr.mxu0 0.0
      %10365 = vmatpush2.xpose.msra.mxu0 0.0
      %10366 = vmatprep.mubr.f32.mxu0 %v10085
      %10367 = vmatmul.mubr.f32.gmra.mxu0 %v9986
      %v10368 = vpop.f32.mrf.mxu0
      %v10369 = vadd.f32 0.0, %v10368
      %v10370 = vpop.f32.mrf.mxu0
      %10371 = vdwg.mxu0
      %v10372 = vadd.f32 %v9982, %v10298
      %v10373 = vadd.f32 %v9983, %v10300
      %v10374 = vadd.f32 %v9984, %v10369
      %s10375 = scalar_lea.vmem %s5, 64
      %v10376 = vld [vmem:[%s10375] sm:$0xff]
      %v10377 = vld [vmem:[%s10375 + $0x8] sm:$0xff]
      %v10378 = vld [vmem:[#allocation5 + $0xc0] sm:$0xff]
      %v10379 = vld [vmem:[#allocation5 + $0xc8] sm:$0xff]
      %v10380 = vld [vmem:[#allocation5 + $0xd0] sm:$0xff]
      %v10381 = vld [vmem:[#allocation5 + $0xd8] sm:$0xff]
      %v10382 = vld [vmem:[#allocation5 + $0xe0] sm:$0xff]
      %v10383 = vld [vmem:[#allocation5 + $0xe8] sm:$0xff]
      %v10384 = vld [vmem:[#allocation5 + $0xf0] sm:$0xff]
      %v10385 = vld [vmem:[#allocation5 + $0xf8] sm:$0xff]
      %v10386 = vld [vmem:[#allocation5 + $0x100] sm:$0xff]
      %v10387 = vld [vmem:[#allocation5 + $0x108] sm:$0xff]
      %v10388 = vld [vmem:[#allocation5 + $0x110] sm:$0xff]
      %v10389 = vld [vmem:[#allocation5 + $0x118] sm:$0xff]
      %v10390 = vld [vmem:[#allocation5 + $0x120] sm:$0xff]
      %v10391 = vld [vmem:[#allocation5 + $0x128] sm:$0xff]
      %v10392 = vld [vmem:[#allocation5 + $0x130] sm:$0xff]
      %v10393 = vld [vmem:[#allocation5 + $0x138] sm:$0xff]
      %v10394 = vld [vmem:[#allocation5 + $0x140] sm:$0xff]
      %v10395 = vld [vmem:[#allocation5 + $0x148] sm:$0xff]
      %v10396 = vld [vmem:[#allocation5 + $0x150] sm:$0xff]
      %v10397 = vld [vmem:[#allocation5 + $0x158] sm:$0xff]
      %v10398 = vld [vmem:[#allocation5 + $0x160] sm:$0xff]
      %v10399 = vld [vmem:[#allocation5 + $0x168] sm:$0xff]
      %v10400 = vld [vmem:[#allocation5 + $0x170] sm:$0xff]
      %v10401 = vld [vmem:[#allocation5 + $0x178] sm:$0xff]
      %v10402 = vld [vmem:[#allocation5 + $0x180] sm:$0xff]
      %v10403 = vld [vmem:[#allocation5 + $0x188] sm:$0xff]
      %v10404 = vld [vmem:[#allocation5 + $0x190] sm:$0xff]
      %v10405 = vld [vmem:[#allocation5 + $0x198] sm:$0xff]
      %v10406 = vld [vmem:[#allocation5 + $0x1a0] sm:$0xff]
      %v10407 = vld [vmem:[#allocation5 + $0x1a8] sm:$0xff]
      %v10408 = vld [vmem:[#allocation5 + $0x1b0] sm:$0xff]
      %v10409 = vld [vmem:[#allocation5 + $0x1b8] sm:$0xff]
      %v10410 = vld [vmem:[#allocation5 + $0x1c0] sm:$0xff]
      %v10411 = vld [vmem:[#allocation5 + $0x1c8] sm:$0xff]
      %v10412 = vld [vmem:[#allocation5 + $0x1d0] sm:$0xff]
      %v10413 = vld [vmem:[#allocation5 + $0x1d8] sm:$0xff]
      %v10414 = vld [vmem:[#allocation5 + $0x1e0] sm:$0xff]
      %v10415 = vld [vmem:[#allocation5 + $0x1e8] sm:$0xff]
      %v10416 = vld [vmem:[#allocation5 + $0x1f0] sm:$0xff]
      %v10417 = vld [vmem:[#allocation5 + $0x1f8] sm:$0xff]
      %v10418 = vld [vmem:[#allocation5 + $0x200] sm:$0xff]
      %v10419 = vld [vmem:[#allocation5 + $0x208] sm:$0xff]
      %v10420 = vld [vmem:[#allocation5 + $0x210] sm:$0xff]
      %v10421 = vld [vmem:[#allocation5 + $0x218] sm:$0xff]
      %v10422 = vld [vmem:[#allocation5 + $0x220] sm:$0xff]
      %v10423 = vld [vmem:[#allocation5 + $0x228] sm:$0xff]
      %v10424 = vld [vmem:[#allocation5 + $0x230] sm:$0xff]
      %v10425 = vld [vmem:[#allocation5 + $0x238] sm:$0xff]
      %v10426 = vld [vmem:[#allocation5 + $0x240] sm:$0xff]
      %v10427 = vld [vmem:[#allocation5 + $0x248] sm:$0xff]
      %v10428 = vld [vmem:[#allocation5 + $0x250] sm:$0xff]
      %v10429 = vld [vmem:[#allocation5 + $0x258] sm:$0xff]
      %v10430 = vld [vmem:[#allocation5 + $0x260] sm:$0xff]
      %v10431 = vld [vmem:[#allocation5 + $0x268] sm:$0xff]
      %v10432 = vld [vmem:[#allocation5 + $0x270] sm:$0xff]
      %v10433 = vld [vmem:[#allocation5 + $0x278] sm:$0xff]
      %v10434 = vld [vmem:[#allocation5 + $0x280] sm:$0xff]
      %v10435 = vld [vmem:[#allocation5 + $0x288] sm:$0xff]
      %v10436 = vld [vmem:[#allocation5 + $0x290] sm:$0xff]
      %v10437 = vld [vmem:[#allocation5 + $0x298] sm:$0xff]
      %v10438 = vld [vmem:[#allocation5 + $0x2a0] sm:$0xff]
      %v10439 = vld [vmem:[#allocation5 + $0x2a8] sm:$0xff]
      %v10440 = vld [vmem:[#allocation5 + $0x2b0] sm:$0xff]
      %v10441 = vld [vmem:[#allocation5 + $0x2b8] sm:$0xff]
      %v10442 = vld [vmem:[#allocation5 + $0x2c0] sm:$0xff]
      %v10443 = vld [vmem:[#allocation5 + $0x2c8] sm:$0xff]
      %v10444 = vld [vmem:[#allocation5 + $0x2d0] sm:$0xff]
      %v10445 = vld [vmem:[#allocation5 + $0x2d8] sm:$0xff]
      %v10446 = vld [vmem:[#allocation5 + $0x2e0] sm:$0xff]
      %v10447 = vld [vmem:[#allocation5 + $0x2e8] sm:$0xff]
      %v10448 = vld [vmem:[#allocation5 + $0x2f0] sm:$0xff]
      %v10449 = vld [vmem:[#allocation5 + $0x2f8] sm:$0xff]
      %v10450 = vld [vmem:[#allocation5 + $0x300] sm:$0xff]
      %v10451 = vld [vmem:[#allocation5 + $0x308] sm:$0xff]
      %v10452 = vld [vmem:[#allocation5 + $0x310] sm:$0xff]
      %v10453 = vld [vmem:[#allocation5 + $0x318] sm:$0xff]
      %v10454 = vld [vmem:[#allocation5 + $0x320] sm:$0xff]
      %v10455 = vld [vmem:[#allocation5 + $0x328] sm:$0xff]
      %v10456 = vld [vmem:[#allocation5 + $0x330] sm:$0xff]
      %v10457 = vld [vmem:[#allocation5 + $0x338] sm:$0xff]
      %v10458 = vld [vmem:[#allocation5 + $0x340] sm:$0xff]
      %v10459 = vld [vmem:[#allocation5 + $0x348] sm:$0xff]
      %v10460 = vld [vmem:[#allocation5 + $0x350] sm:$0xff]
      %v10461 = vld [vmem:[#allocation5 + $0x358] sm:$0xff]
      %v10462 = vld [vmem:[#allocation5 + $0x360] sm:$0xff]
      %v10463 = vld [vmem:[#allocation5 + $0x368] sm:$0xff]
      %v10464 = vld [vmem:[#allocation5 + $0x370] sm:$0xff]
      %v10465 = vld [vmem:[#allocation5 + $0x378] sm:$0xff]
      %v10466 = vld [vmem:[#allocation5 + $0x380] sm:$0xff]
      %v10467 = vld [vmem:[#allocation5 + $0x388] sm:$0xff]
      %v10468 = vld [vmem:[#allocation5 + $0x390] sm:$0xff]
      %v10469 = vld [vmem:[#allocation5 + $0x398] sm:$0xff]
      %v10470 = vld [vmem:[#allocation5 + $0x3a0] sm:$0xff]
      %v10471 = vld [vmem:[#allocation5 + $0x3a8] sm:$0xff]
      %v10472 = vld [vmem:[#allocation5 + $0x3b0] sm:$0xff]
      %v10473 = vld [vmem:[#allocation5 + $0x3b8] sm:$0xff]
      %v10475 = vsel %vm1170, %v10377, 0
      %v10478 = vsel %vm1170, %v10379, 0
      %v10481 = vsel %vm1170, %v10381, 0
      %v10484 = vsel %vm1170, %v10383, 0
      %v10487 = vsel %vm1170, %v10385, 0
      %v10490 = vsel %vm1170, %v10387, 0
      %v10493 = vsel %vm1170, %v10389, 0
      %v10496 = vsel %vm1170, %v10391, 0
      %v10499 = vsel %vm1170, %v10393, 0
      %v10502 = vsel %vm1170, %v10395, 0
      %v10505 = vsel %vm1170, %v10397, 0
      %v10508 = vsel %vm1170, %v10399, 0
      %v10511 = vsel %vm1170, %v10401, 0
      %v10514 = vsel %vm1170, %v10403, 0
      %v10517 = vsel %vm1170, %v10405, 0
      %v10520 = vsel %vm1170, %v10407, 0
      %v10523 = vsel %vm1170, %v10409, 0
      %v10526 = vsel %vm1170, %v10411, 0
      %v10529 = vsel %vm1170, %v10413, 0
      %v10532 = vsel %vm1170, %v10415, 0
      %v10535 = vsel %vm1170, %v10417, 0
      %v10538 = vsel %vm1170, %v10419, 0
      %v10541 = vsel %vm1170, %v10421, 0
      %v10544 = vsel %vm1170, %v10423, 0
      %v10547 = vsel %vm1170, %v10425, 0
      %v10550 = vsel %vm1170, %v10427, 0
      %v10553 = vsel %vm1170, %v10429, 0
      %v10556 = vsel %vm1170, %v10431, 0
      %v10559 = vsel %vm1170, %v10433, 0
      %v10562 = vsel %vm1170, %v10435, 0
      %v10565 = vsel %vm1170, %v10437, 0
      %v10568 = vsel %vm1170, %v10439, 0
      %v10571 = vsel %vm1170, %v10441, 0
      %v10574 = vsel %vm1170, %v10443, 0
      %v10577 = vsel %vm1170, %v10445, 0
      %v10580 = vsel %vm1170, %v10447, 0
      %v10583 = vsel %vm1170, %v10449, 0
      %v10586 = vsel %vm1170, %v10451, 0
      %v10589 = vsel %vm1170, %v10453, 0
      %v10592 = vsel %vm1170, %v10455, 0
      %v10595 = vsel %vm1170, %v10457, 0
      %v10598 = vsel %vm1170, %v10459, 0
      %v10601 = vsel %vm1170, %v10461, 0
      %v10604 = vsel %vm1170, %v10463, 0
      %v10607 = vsel %vm1170, %v10465, 0
      %v10610 = vsel %vm1170, %v10467, 0
      %v10613 = vsel %vm1170, %v10469, 0
      %v10616 = vsel %vm1170, %v10471, 0
      %v10619 = vsel %vm1170, %v10473, 0
      %10621 = vmatprep.subr.mxu0 %v10523
      %10622 = vmatpush1.xpose.msra.mxu0 %v10408
      %10623 = vmatprep.subr.mxu0 %v10520
      %10624 = vmatpush1.xpose.msra.mxu0 %v10406
      %10625 = vmatprep.subr.mxu0 %v10517
      %10626 = vmatpush1.xpose.msra.mxu0 %v10404
      %10627 = vmatprep.subr.mxu0 %v10514
      %10628 = vmatpush1.xpose.msra.mxu0 %v10402
      %10629 = vmatprep.subr.mxu0 %v10511
      %10630 = vmatpush1.xpose.msra.mxu0 %v10400
      %10631 = vmatprep.subr.mxu0 %v10508
      %10632 = vmatpush1.xpose.msra.mxu0 %v10398
      %10633 = vmatprep.subr.mxu0 %v10505
      %10634 = vmatpush1.xpose.msra.mxu0 %v10396
      %10635 = vmatprep.subr.mxu0 %v10502
      %10636 = vmatpush1.xpose.msra.mxu0 %v10394
      %10637 = vmatprep.subr.mxu0 %v10499
      %10638 = vmatpush1.xpose.msra.mxu0 %v10392
      %10639 = vmatprep.subr.mxu0 %v10496
      %10640 = vmatpush1.xpose.msra.mxu0 %v10390
      %10641 = vmatprep.subr.mxu0 %v10493
      %10642 = vmatpush1.xpose.msra.mxu0 %v10388
      %10643 = vmatprep.subr.mxu0 %v10490
      %10644 = vmatpush1.xpose.msra.mxu0 %v10386
      %10645 = vmatprep.subr.mxu0 %v10487
      %10646 = vmatpush1.xpose.msra.mxu0 %v10384
      %10647 = vmatprep.subr.mxu0 %v10484
      %10648 = vmatpush1.xpose.msra.mxu0 %v10382
      %10649 = vmatprep.subr.mxu0 %v10481
      %10650 = vmatpush1.xpose.msra.mxu0 %v10380
      %10651 = vmatprep.subr.mxu0 %v10478
      %10652 = vmatpush1.xpose.msra.mxu0 %v10378
      %10653 = vmatprep.subr.mxu0 %v10571
      %10654 = vmatpush2.xpose.msra.mxu0 %v10440
      %10655 = vmatprep.subr.mxu0 %v10568
      %10656 = vmatpush2.xpose.msra.mxu0 %v10438
      %10657 = vmatprep.subr.mxu0 %v10565
      %10658 = vmatpush2.xpose.msra.mxu0 %v10436
      %10659 = vmatprep.subr.mxu0 %v10562
      %10660 = vmatpush2.xpose.msra.mxu0 %v10434
      %10661 = vmatprep.subr.mxu0 %v10559
      %10662 = vmatpush2.xpose.msra.mxu0 %v10432
      %10663 = vmatprep.subr.mxu0 %v10556
      %10664 = vmatpush2.xpose.msra.mxu0 %v10430
      %10665 = vmatprep.subr.mxu0 %v10553
      %10666 = vmatpush2.xpose.msra.mxu0 %v10428
      %10667 = vmatprep.subr.mxu0 %v10550
      %10668 = vmatpush2.xpose.msra.mxu0 %v10426
      %10669 = vmatprep.subr.mxu0 %v10547
      %10670 = vmatpush2.xpose.msra.mxu0 %v10424
      %10671 = vmatprep.subr.mxu0 %v10544
      %10672 = vmatpush2.xpose.msra.mxu0 %v10422
      %10673 = vmatprep.subr.mxu0 %v10541
      %10674 = vmatpush2.xpose.msra.mxu0 %v10420
      %10675 = vmatprep.subr.mxu0 %v10538
      %10676 = vmatpush2.xpose.msra.mxu0 %v10418
      %10677 = vmatprep.subr.mxu0 %v10535
      %10678 = vmatpush2.xpose.msra.mxu0 %v10416
      %10679 = vmatprep.subr.mxu0 %v10532
      %10680 = vmatpush2.xpose.msra.mxu0 %v10414
      %10681 = vmatprep.subr.mxu0 %v10529
      %10682 = vmatpush2.xpose.msra.mxu0 %v10412
      %10683 = vmatprep.subr.mxu0 %v10526
      %10684 = vmatpush2.xpose.msra.mxu0 %v10410
      %10685 = vmatprep.mubr.f32.mxu0 %v10475
      %10686 = vmatmul.mubr.f32.gmra.mxu0 %v10376
      %v10687 = vpop.f32.mrf.mxu0
      %v10688 = vadd.f32 0.0, %v10687
      %v10689 = vpop.f32.mrf.mxu0
      %v10690 = vadd.f32 0.0, %v10689
      %10691 = vdwg.mxu0
      %10692 = vmatprep.subr.mxu0 %v10619
      %10693 = vmatpush1.xpose.msra.mxu0 %v10472
      %10694 = vmatprep.subr.mxu0 %v10616
      %10695 = vmatpush1.xpose.msra.mxu0 %v10470
      %10696 = vmatprep.subr.mxu0 %v10613
      %10697 = vmatpush1.xpose.msra.mxu0 %v10468
      %10698 = vmatprep.subr.mxu0 %v10610
      %10699 = vmatpush1.xpose.msra.mxu0 %v10466
      %10700 = vmatprep.subr.mxu0 %v10607
      %10701 = vmatpush1.xpose.msra.mxu0 %v10464
      %10702 = vmatprep.subr.mxu0 %v10604
      %10703 = vmatpush1.xpose.msra.mxu0 %v10462
      %10704 = vmatprep.subr.mxu0 %v10601
      %10705 = vmatpush1.xpose.msra.mxu0 %v10460
      %10706 = vmatprep.subr.mxu0 %v10598
      %10707 = vmatpush1.xpose.msra.mxu0 %v10458
      %10708 = vmatprep.subr.mxu0 %v10595
      %10709 = vmatpush1.xpose.msra.mxu0 %v10456
      %10710 = vmatprep.subr.mxu0 %v10592
      %10711 = vmatpush1.xpose.msra.mxu0 %v10454
      %10712 = vmatprep.subr.mxu0 %v10589
      %10713 = vmatpush1.xpose.msra.mxu0 %v10452
      %10714 = vmatprep.subr.mxu0 %v10586
      %10715 = vmatpush1.xpose.msra.mxu0 %v10450
      %10716 = vmatprep.subr.mxu0 %v10583
      %10717 = vmatpush1.xpose.msra.mxu0 %v10448
      %10718 = vmatprep.subr.mxu0 %v10580
      %10719 = vmatpush1.xpose.msra.mxu0 %v10446
      %10720 = vmatprep.subr.mxu0 %v10577
      %10721 = vmatpush1.xpose.msra.mxu0 %v10444
      %10722 = vmatprep.subr.mxu0 %v10574
      %10723 = vmatpush1.xpose.msra.mxu0 %v10442
      %10724 = vmatprep.subr.mxu0 0.0
      %10725 = vmatpush2.xpose.msra.mxu0 0.0
      %10726 = vmatprep.subr.mxu0 0.0
      %10727 = vmatpush2.xpose.msra.mxu0 0.0
      %10728 = vmatprep.subr.mxu0 0.0
      %10729 = vmatpush2.xpose.msra.mxu0 0.0
      %10730 = vmatprep.subr.mxu0 0.0
      %10731 = vmatpush2.xpose.msra.mxu0 0.0
      %10732 = vmatprep.subr.mxu0 0.0
      %10733 = vmatpush2.xpose.msra.mxu0 0.0
      %10734 = vmatprep.subr.mxu0 0.0
      %10735 = vmatpush2.xpose.msra.mxu0 0.0
      %10736 = vmatprep.subr.mxu0 0.0
      %10737 = vmatpush2.xpose.msra.mxu0 0.0
      %10738 = vmatprep.subr.mxu0 0.0
      %10739 = vmatpush2.xpose.msra.mxu0 0.0
      %10740 = vmatprep.subr.mxu0 0.0
      %10741 = vmatpush2.xpose.msra.mxu0 0.0
      %10742 = vmatprep.subr.mxu0 0.0
      %10743 = vmatpush2.xpose.msra.mxu0 0.0
      %10744 = vmatprep.subr.mxu0 0.0
      %10745 = vmatpush2.xpose.msra.mxu0 0.0
      %10746 = vmatprep.subr.mxu0 0.0
      %10747 = vmatpush2.xpose.msra.mxu0 0.0
      %10748 = vmatprep.subr.mxu0 0.0
      %10749 = vmatpush2.xpose.msra.mxu0 0.0
      %10750 = vmatprep.subr.mxu0 0.0
      %10751 = vmatpush2.xpose.msra.mxu0 0.0
      %10752 = vmatprep.subr.mxu0 0.0
      %10753 = vmatpush2.xpose.msra.mxu0 0.0
      %10754 = vmatprep.subr.mxu0 0.0
      %10755 = vmatpush2.xpose.msra.mxu0 0.0
      %10756 = vmatprep.mubr.f32.mxu0 %v10475
      %10757 = vmatmul.mubr.f32.gmra.mxu0 %v10376
      %v10758 = vpop.f32.mrf.mxu0
      %v10759 = vadd.f32 0.0, %v10758
      %v10760 = vpop.f32.mrf.mxu0
      %10761 = vdwg.mxu0
      %v10762 = vadd.f32 %v10372, %v10688
      %v10763 = vadd.f32 %v10373, %v10690
      %v10764 = vadd.f32 %v10374, %v10759
      %v10765 = vld [vmem:[%s6] sm:$0xff]
      %10767 = vset.pattern.permute.xlu0 0
      %10768 = vperm.xlu0 %10767, %v10765
      %v10769 = vpop.permute.xlu0 %10768
      %v10771 = vadd.f32 %v10762, %v10769
      %v10772 = vadd.f32 %v10763, %v10769
      %v10773 = vadd.f32 %v10764, %v10769
      %10774 = vst [vmem:[%s278] sm:$0xff] %v10771
      %10775 = vst [vmem:[%s278 + $0x8] sm:$0xff] %v10772
      %10776 = vst [vmem:[%s278 + $0x10] sm:$0xff] %v10773
      %p10777 = scmp.lt.s32.totalorder %s18, 1
      %s10778 = scalar_select %p10777, %s18, 1
      %s10779 = smul.addr %s10778, 3
      %s10780 = smul.addr %s10779, 8
      %s10781 = scalar_lea.vmem %s7, %s10780
      // Predicated region
      $region49: #{sr_cnn_forward.1} parent=47 // pred_check
        %p10782 = pneg %p188
      $region50: #{sr_cnn_forward.1} parent=47 // pred_check_branch
        %10784 = sbr.rel (%p10782) target = $region52
      $region51: #{sr_cnn_forward.1} parent=47 // pred_region
        _
      $region52: #{sr_cnn_forward.1} parent=47 // pred_fallthru
        _
    $region48: #{sr_cnn_forward.1} parent=5 // pred_fallthru
      _
    %p10785 = scmp.le.s32.totalorder 2, %s13
    // Predicated region
    $region53: #{sr_cnn_forward.1} parent=5 // pred_check
      %p10786 = pneg %p10785
    $region54: #{sr_cnn_forward.1} parent=5 // pred_check_branch
      %10788 = sbr.rel (%p10786) target = $region56
    $region55: #{sr_cnn_forward.1} parent=5 // pred_region
      %s10789 = ssub.s32 %s13, 2
      // Predicated region
      $region57: #{sr_cnn_forward.1} parent=55 // pred_check
        %p10790 = pneg %p194
      $region58: #{sr_cnn_forward.1} parent=55 // pred_check_branch
        %10792 = sbr.rel (%p10790) target = $region60
      $region59: #{sr_cnn_forward.1} parent=55 // pred_region
        %p10793 = scmp.lt.s32.totalorder %s19, 1
        %s10794 = scalar_select %p10793, %s19, 1
        %s10795 = smul.addr %s10794, 3
        %s10796 = smul.addr %s10795, 8
        %s10797 = scalar_lea.vmem %s7, %s10796
      $region60: #{sr_cnn_forward.1} parent=55 // pred_fallthru
        _
    $region56: #{sr_cnn_forward.1} parent=5 // pred_fallthru
      _
  $region6: #{sr_cnn_forward.1} parent=0 // loop_footer
    %s17 = sadd.s32 1, %s13
  $region7: #{sr_cnn_forward.1} parent=0 // loop_footer_branch
    %12 = sbr.rel target = $region3
  $region8: #{sr_cnn_forward.1} parent=0 // loop_exit
    _

</llo_original>
